<compile_context>
chip_gen: v5e
topology: v5e:2x2
jax: 0.10.0
libtpu: 0.0.40
codegen_flags: <defaults>
</compile_context>

<pallas_src>
import functools
import math

import jax
import jax.numpy as jnp
from jax import lax
from jax.experimental import pallas as pl
from jax.experimental.pallas import tpu as pltpu


def _encoder_kernel(x_ref, w1_ref, b1_ref, w2_ref, b2_ref, w3_ref, b3_ref,
                    wl1_ref, bl1_ref, wl2_ref, bl2_ref, out_ref, *, block_b):
    B = block_b

    def conv_relu(h, w_ref, b_ref):
        # h: (l_in*B, Cin) position-major rows (row = t*B + b); w_ref: (K, Cin, Cout)
        l_in = h.shape[0] // B
        k_size = w_ref.shape[0]
        l_out = l_in - k_size + 1
        acc = jnp.zeros((l_out * B, w_ref.shape[2]), jnp.float32)
        for k in range(k_size):  # conv as K shifted full-batch matmuls on the MXU
            acc = acc + jnp.dot(h[k * B:(k + l_out) * B, :], w_ref[k],
                                preferred_element_type=jnp.float32)
        return jnp.maximum(acc + b_ref[...], 0.0)

    def nearest_resize(h, size):
        # PyTorch nearest interpolate along length: idx = floor(i * Lin / size).
        l_in = h.shape[0] // B
        if l_in == size:
            return h
        idx = [(i * l_in) // size for i in range(size)]
        # Sublane-aligned B-row slab copies (B % 8 == 0), no cross-lane shuffles.
        return jnp.concatenate([h[j * B:(j + 1) * B, :] for j in idx], axis=0)

    h = conv_relu(x_ref, w1_ref, b1_ref)    # (12B, 24)  (1/100 folded into w1)
    h = nearest_resize(h, 8)                # (8B, 24)
    h = conv_relu(h, w2_ref, b2_ref)        # (4B, 48)
    h = nearest_resize(h, 4)                # identity here
    h = conv_relu(h, w3_ref, b3_ref)        # (2B, 96)
    h = nearest_resize(h, 2)                # identity here

    # Flatten(channel-major) + Linear(192,192): wrapper permuted wl1 rows to
    # time-major (row = t*96 + c), so this is two full-width (B,96)x(96,192)
    # matmuls instead of a per-sample M=1 loop.
    wl1 = wl1_ref[...]
    c = h.shape[1]
    n_t = h.shape[0] // B
    z = jnp.zeros((B, wl1.shape[1]), jnp.float32)
    for t in range(n_t):
        z = z + jnp.dot(h[t * B:(t + 1) * B, :], wl1[t * c:(t + 1) * c, :],
                        preferred_element_type=jnp.float32)
    z = jnp.maximum(z + bl1_ref[...], 0.0)

    # Final Linear into lane-padded output (dim padded to multiple of 128).
    out_ref[...] = (jnp.dot(z, wl2_ref[...], preferred_element_type=jnp.float32)
                    + bl2_ref[...])


def encoder_mri_forward(x, params, *, block_b=128):
    """x: (N, 6, L) float32, PyTorch NCL layout. Returns (N, dim_output)."""
    n, c_in, length = x.shape
    assert c_in == 6 and length >= 5
    assert block_b % 8 == 0
    dim_output = params["lin2_w"].shape[0]

    B = block_b
    num_blocks = pl.cdiv(n, B)
    n_pad = num_blocks * B
    dim_pad = ((dim_output + 127) // 128) * 128

    # ---- glue: layout conversions (pure JAX, outside the kernel) ----
    xt = jnp.transpose(x, (0, 2, 1)).astype(jnp.float32)            # (N, L, 6)
    if n_pad != n:
        xt = jnp.pad(xt, ((0, n_pad - n), (0, 0), (0, 0)))
    # Row order per block: row = t*B + b  (position-major, sample-within-block minor).
    x2 = jnp.transpose(xt.reshape(num_blocks, B, length, 6),
                       (0, 2, 1, 3)).reshape(num_blocks * length * B, 6)

    w1 = jnp.transpose(params["conv1_w"], (2, 1, 0)) * 0.01          # fold x/100 into conv1
    w2 = jnp.transpose(params["conv2_w"], (2, 1, 0))                 # (K, Cin, Cout)
    w3 = jnp.transpose(params["conv3_w"], (2, 1, 0))
    b1 = params["conv1_b"].reshape(1, -1)
    b2 = params["conv2_b"].reshape(1, -1)
    b3 = params["conv3_b"].reshape(1, -1)
    # PyTorch Flatten of (N, 96, 2) is channel-major (idx = c*2 + t); kernel
    # iterates time-major (idx = t*96 + c), so permute Linear-1 input rows.
    wl1 = jnp.transpose(params["lin1_w"].reshape(192, 96, 2),
                        (2, 1, 0)).reshape(192, 192)                 # (192 in_tmajor, 192 out)
    bl1 = params["lin1_b"].reshape(1, -1)
    wl2 = params["lin2_w"].T                                         # (192, dim_output)
    bl2 = params["lin2_b"].reshape(1, -1)
    if dim_pad != dim_output:                                        # lane-dense output
        wl2 = jnp.pad(wl2, ((0, 0), (0, dim_pad - dim_output)))
        bl2 = jnp.pad(bl2, ((0, 0), (0, dim_pad - dim_output)))

    k1, k2, k3 = w1.shape[0], w2.shape[0], w3.shape[0]

    out = pl.pallas_call(
        functools.partial(_encoder_kernel, block_b=B),
        out_shape=jax.ShapeDtypeStruct((n_pad, dim_pad), jnp.float32),
        grid_spec=pltpu.PrefetchScalarGridSpec(
            num_scalar_prefetch=0,
            grid=(num_blocks,),                      # B samples per grid step
            in_specs=[
                pl.BlockSpec((length * B, 6), lambda i: (i, 0)),
                pl.BlockSpec((k1, 6, 24), lambda i: (0, 0, 0)),
                pl.BlockSpec((1, 24), lambda i: (0, 0)),
                pl.BlockSpec((k2, 24, 48), lambda i: (0, 0, 0)),
                pl.BlockSpec((1, 48), lambda i: (0, 0)),
                pl.BlockSpec((k3, 48, 96), lambda i: (0, 0, 0)),
                pl.BlockSpec((1, 96), lambda i: (0, 0)),
                pl.BlockSpec((192, 192), lambda i: (0, 0)),
                pl.BlockSpec((1, 192), lambda i: (0, 0)),
                pl.BlockSpec((192, dim_pad), lambda i: (0, 0)),
                pl.BlockSpec((1, dim_pad), lambda i: (0, 0)),
            ],
            out_specs=pl.BlockSpec((B, dim_pad), lambda i: (i, 0)),
        ),
        compiler_params=pltpu.CompilerParams(dimension_semantics=("parallel",)),
    )(x2, w1, b1, w2, b2, w3, b3, wl1, bl1, wl2, bl2)

    return out[:n, :dim_output]


def _reference_forward(x, params):
    """Pure-JAX reference mirroring the PyTorch module (f32, highest precision)."""
    hp = lax.Precision.HIGHEST
    h = x.astype(jnp.float32) / 100.0                                # (N, 6, L)

    def conv_relu(h, w, b):
        out = lax.conv_general_dilated(h, w, window_strides=(1,), padding='VALID',
                                       dimension_numbers=('NCH', 'OIH', 'NCH'),
                                       precision=hp)
        return jnp.maximum(out + b[None, :, None], 0.0)

    def resize(h, size):
        idx = (jnp.arange(size) * h.shape[-1]) // size               # nearest
        return h[:, :, idx]

    h = resize(conv_relu(h, params["conv1_w"], params["conv1_b"]), 8)
    h = resize(conv_relu(h, params["conv2_w"], params["conv2_b"]), 4)
    h = resize(conv_relu(h, params["conv3_w"], params["conv3_b"]), 2)
    flat = h.reshape(h.shape[0], -1)                                 # channel-major
    z = jnp.maximum(jnp.dot(flat, params["lin1_w"].T, precision=hp)
                    + params["lin1_b"], 0.0)
    return jnp.dot(z, params["lin2_w"].T, precision=hp) + params["lin2_b"]


def init_params(key, dim_output):
    """Deterministic, PyTorch-default-style uniform init (synthetic weights)."""
    keys = jax.random.split(key, 10)

    def u(k, shape, fan_in):
        b = 1.0 / math.sqrt(fan_in)
        return jax.random.uniform(k, shape, jnp.float32, -b, b)

    return {
        "conv1_w": u(keys[0], (24, 6, 5), 6 * 5),
        "conv1_b": u(keys[1], (24,), 6 * 5),
        "conv2_w": u(keys[2], (48, 24, 5), 24 * 5),
        "conv2_b": u(keys[3], (48,), 24 * 5),
        "conv3_w": u(keys[4], (96, 48, 3), 48 * 3),
        "conv3_b": u(keys[5], (96,), 48 * 3),
        "lin1_w": u(keys[6], (192, 192), 192),
        "lin1_b": u(keys[7], (192,), 192),
        "lin2_w": u(keys[8], (dim_output, 192), 192),
        "lin2_b": u(keys[9], (dim_output,), 192),
    }


if __name__ == "__main__":
    key = jax.random.PRNGKey(0)
    k_x, k_p = jax.random.split(key)

    dim_output = 16              # dim_input is stored but unused in forward
    N, L = 200, 16               # input: (N, 6, L) like PyTorch NCL; exercises padding

    x = jax.random.normal(k_x, (N, 6, L), jnp.float32) * 50.0   # MRI-scale values
    params = init_params(k_p, dim_output)

    out = encoder_mri_forward(x, params, block_b=128)
    out = jax.block_until_ready(out)

    assert out.shape == (N, dim_output), out.shape
    assert bool(jnp.all(jnp.isfinite(out)))

    ref = jax.block_until_ready(_reference_forward(x, params))
    assert bool(jnp.allclose(out, ref, atol=1e-3, rtol=1e-3)), \
        float(jnp.max(jnp.abs(out - ref)))

    print("KERNEL_OK")
</pallas_src>

<mosaic_0001>
module attributes {stable_mosaic.version = 11 : i64} {
  func.func @_encoder_kernel(%arg0: i32, %arg1: memref<2048x6xf32, #tpu.memory_space<vmem>>, %arg2: memref<5x6x24xf32, #tpu.memory_space<vmem>>, %arg3: memref<1x24xf32, #tpu.memory_space<vmem>>, %arg4: memref<5x24x48xf32, #tpu.memory_space<vmem>>, %arg5: memref<1x48xf32, #tpu.memory_space<vmem>>, %arg6: memref<3x48x96xf32, #tpu.memory_space<vmem>>, %arg7: memref<1x96xf32, #tpu.memory_space<vmem>>, %arg8: memref<192x192xf32, #tpu.memory_space<vmem>>, %arg9: memref<1x192xf32, #tpu.memory_space<vmem>>, %arg10: memref<192x128xf32, #tpu.memory_space<vmem>>, %arg11: memref<1x128xf32, #tpu.memory_space<vmem>>, %arg12: memref<128x128xf32, #tpu.memory_space<vmem>>) attributes {dimension_semantics = [#tpu.dimension_semantics<parallel>], iteration_bounds = array<i64: 2>, scalar_prefetch = 0 : i64, scratch_operands = 0 : i64, tpu.core_type = #tpu.core_type<tc>, window_params = [{transform_indices = @transform_0, window_bounds = array<i64: 2048, 6>}, {pipeline_mode = #tpu.pipeline_mode<synchronous>, transform_indices = @transform_1, window_bounds = array<i64: 5, 6, 24>}, {pipeline_mode = #tpu.pipeline_mode<synchronous>, transform_indices = @transform_2, window_bounds = array<i64: 1, 24>}, {pipeline_mode = #tpu.pipeline_mode<synchronous>, transform_indices = @transform_3, window_bounds = array<i64: 5, 24, 48>}, {pipeline_mode = #tpu.pipeline_mode<synchronous>, transform_indices = @transform_4, window_bounds = array<i64: 1, 48>}, {pipeline_mode = #tpu.pipeline_mode<synchronous>, transform_indices = @transform_5, window_bounds = array<i64: 3, 48, 96>}, {pipeline_mode = #tpu.pipeline_mode<synchronous>, transform_indices = @transform_6, window_bounds = array<i64: 1, 96>}, {pipeline_mode = #tpu.pipeline_mode<synchronous>, transform_indices = @transform_7, window_bounds = array<i64: 192, 192>}, {pipeline_mode = #tpu.pipeline_mode<synchronous>, transform_indices = @transform_8, window_bounds = array<i64: 1, 192>}, {pipeline_mode = #tpu.pipeline_mode<synchronous>, transform_indices = @transform_9, window_bounds = array<i64: 192, 128>}, {pipeline_mode = #tpu.pipeline_mode<synchronous>, transform_indices = @transform_10, window_bounds = array<i64: 1, 128>}, {transform_indices = @transform_11, window_bounds = array<i64: 128, 128>}]} {
    %cst = arith.constant 0.000000e+00 : f32
    %0 = vector.broadcast %cst : f32 to vector<1536x24xf32>
    %c0 = arith.constant 0 : index
    %c0_0 = arith.constant 0 : index
    %1 = vector.load %arg1[%c0, %c0_0] : memref<2048x6xf32, #tpu.memory_space<vmem>>, vector<1536x6xf32>
    %c0_1 = arith.constant 0 : index
    %c0_2 = arith.constant 0 : index
    %c0_3 = arith.constant 0 : index
    %2 = vector.load %arg2[%c0_1, %c0_2, %c0_3] : memref<5x6x24xf32, #tpu.memory_space<vmem>>, vector<1x6x24xf32>
    %3 = vector.shape_cast %2 : vector<1x6x24xf32> to vector<6x24xf32>
    %cst_4 = arith.constant dense<0.000000e+00> : vector<1536x24xf32>
    %4 = tpu.matmul %1, %3, %cst_4 {dimension_numbers = #tpu.dot_dimension_numbers<[1], [0], [0], [1], [0, 0, 1, 1], [], []>} : vector<1536x6xf32>, vector<6x24xf32>, vector<1536x24xf32> -> vector<1536x24xf32>
    %5 = arith.addf %0, %4 : vector<1536x24xf32>
    %c128 = arith.constant 128 : index
    %c0_5 = arith.constant 0 : index
    %6 = vector.load %arg1[%c128, %c0_5] : memref<2048x6xf32, #tpu.memory_space<vmem>>, vector<1536x6xf32>
    %c1 = arith.constant 1 : index
    %c0_6 = arith.constant 0 : index
    %c0_7 = arith.constant 0 : index
    %7 = vector.load %arg2[%c1, %c0_6, %c0_7] : memref<5x6x24xf32, #tpu.memory_space<vmem>>, vector<1x6x24xf32>
    %8 = vector.shape_cast %7 : vector<1x6x24xf32> to vector<6x24xf32>
    %cst_8 = arith.constant dense<0.000000e+00> : vector<1536x24xf32>
    %9 = tpu.matmul %6, %8, %cst_8 {dimension_numbers = #tpu.dot_dimension_numbers<[1], [0], [0], [1], [0, 0, 1, 1], [], []>} : vector<1536x6xf32>, vector<6x24xf32>, vector<1536x24xf32> -> vector<1536x24xf32>
    %10 = arith.addf %5, %9 : vector<1536x24xf32>
    %c256 = arith.constant 256 : index
    %c0_9 = arith.constant 0 : index
    %11 = vector.load %arg1[%c256, %c0_9] : memref<2048x6xf32, #tpu.memory_space<vmem>>, vector<1536x6xf32>
    %c2 = arith.constant 2 : index
    %c0_10 = arith.constant 0 : index
    %c0_11 = arith.constant 0 : index
    %12 = vector.load %arg2[%c2, %c0_10, %c0_11] : memref<5x6x24xf32, #tpu.memory_space<vmem>>, vector<1x6x24xf32>
    %13 = vector.shape_cast %12 : vector<1x6x24xf32> to vector<6x24xf32>
    %cst_12 = arith.constant dense<0.000000e+00> : vector<1536x24xf32>
    %14 = tpu.matmul %11, %13, %cst_12 {dimension_numbers = #tpu.dot_dimension_numbers<[1], [0], [0], [1], [0, 0, 1, 1], [], []>} : vector<1536x6xf32>, vector<6x24xf32>, vector<1536x24xf32> -> vector<1536x24xf32>
    %15 = arith.addf %10, %14 : vector<1536x24xf32>
    %c384 = arith.constant 384 : index
    %c0_13 = arith.constant 0 : index
    %16 = vector.load %arg1[%c384, %c0_13] : memref<2048x6xf32, #tpu.memory_space<vmem>>, vector<1536x6xf32>
    %c3 = arith.constant 3 : index
    %c0_14 = arith.constant 0 : index
    %c0_15 = arith.constant 0 : index
    %17 = vector.load %arg2[%c3, %c0_14, %c0_15] : memref<5x6x24xf32, #tpu.memory_space<vmem>>, vector<1x6x24xf32>
    %18 = vector.shape_cast %17 : vector<1x6x24xf32> to vector<6x24xf32>
    %cst_16 = arith.constant dense<0.000000e+00> : vector<1536x24xf32>
    %19 = tpu.matmul %16, %18, %cst_16 {dimension_numbers = #tpu.dot_dimension_numbers<[1], [0], [0], [1], [0, 0, 1, 1], [], []>} : vector<1536x6xf32>, vector<6x24xf32>, vector<1536x24xf32> -> vector<1536x24xf32>
    %20 = arith.addf %15, %19 : vector<1536x24xf32>
    %c512 = arith.constant 512 : index
    %c0_17 = arith.constant 0 : index
    %21 = vector.load %arg1[%c512, %c0_17] : memref<2048x6xf32, #tpu.memory_space<vmem>>, vector<1536x6xf32>
    %c4 = arith.constant 4 : index
    %c0_18 = arith.constant 0 : index
    %c0_19 = arith.constant 0 : index
    %22 = vector.load %arg2[%c4, %c0_18, %c0_19] : memref<5x6x24xf32, #tpu.memory_space<vmem>>, vector<1x6x24xf32>
    %23 = vector.shape_cast %22 : vector<1x6x24xf32> to vector<6x24xf32>
    %cst_20 = arith.constant dense<0.000000e+00> : vector<1536x24xf32>
    %24 = tpu.matmul %21, %23, %cst_20 {dimension_numbers = #tpu.dot_dimension_numbers<[1], [0], [0], [1], [0, 0, 1, 1], [], []>} : vector<1536x6xf32>, vector<6x24xf32>, vector<1536x24xf32> -> vector<1536x24xf32>
    %25 = arith.addf %20, %24 : vector<1536x24xf32>
    %c0_21 = arith.constant 0 : index
    %c0_22 = arith.constant 0 : index
    %26 = vector.load %arg3[%c0_21, %c0_22] : memref<1x24xf32, #tpu.memory_space<vmem>>, vector<1x24xf32>
    %27 = vector.broadcast %26 : vector<1x24xf32> to vector<1536x24xf32>
    %28 = arith.addf %25, %27 : vector<1536x24xf32>
    %cst_23 = arith.constant 0.000000e+00 : f32
    %29 = vector.broadcast %cst_23 : f32 to vector<1536x24xf32>
    %30 = arith.maximumf %28, %29 : vector<1536x24xf32>
    %31 = vector.extract_strided_slice %30 {offsets = [0, 0], sizes = [128, 24], strides = [1, 1]} : vector<1536x24xf32> to vector<128x24xf32>
    %32 = vector.extract_strided_slice %30 {offsets = [128, 0], sizes = [128, 24], strides = [1, 1]} : vector<1536x24xf32> to vector<128x24xf32>
    %33 = vector.extract_strided_slice %30 {offsets = [384, 0], sizes = [128, 24], strides = [1, 1]} : vector<1536x24xf32> to vector<128x24xf32>
    %34 = vector.extract_strided_slice %30 {offsets = [512, 0], sizes = [128, 24], strides = [1, 1]} : vector<1536x24xf32> to vector<128x24xf32>
    %35 = vector.extract_strided_slice %30 {offsets = [768, 0], sizes = [128, 24], strides = [1, 1]} : vector<1536x24xf32> to vector<128x24xf32>
    %36 = vector.extract_strided_slice %30 {offsets = [896, 0], sizes = [128, 24], strides = [1, 1]} : vector<1536x24xf32> to vector<128x24xf32>
    %37 = vector.extract_strided_slice %30 {offsets = [1152, 0], sizes = [128, 24], strides = [1, 1]} : vector<1536x24xf32> to vector<128x24xf32>
    %38 = vector.extract_strided_slice %30 {offsets = [1280, 0], sizes = [128, 24], strides = [1, 1]} : vector<1536x24xf32> to vector<128x24xf32>
    %39 = tpu.concatenate %31, %32, %33, %34, %35, %36, %37, %38 in 0 : vector<128x24xf32>, vector<128x24xf32>, vector<128x24xf32>, vector<128x24xf32>, vector<128x24xf32>, vector<128x24xf32>, vector<128x24xf32>, vector<128x24xf32> -> vector<1024x24xf32>
    %cst_24 = arith.constant 0.000000e+00 : f32
    %40 = vector.broadcast %cst_24 : f32 to vector<512x48xf32>
    %41 = vector.extract_strided_slice %39 {offsets = [0, 0], sizes = [512, 24], strides = [1, 1]} : vector<1024x24xf32> to vector<512x24xf32>
    %c0_25 = arith.constant 0 : index
    %c0_26 = arith.constant 0 : index
    %c0_27 = arith.constant 0 : index
    %42 = vector.load %arg4[%c0_25, %c0_26, %c0_27] : memref<5x24x48xf32, #tpu.memory_space<vmem>>, vector<1x24x48xf32>
    %43 = vector.shape_cast %42 : vector<1x24x48xf32> to vector<24x48xf32>
    %cst_28 = arith.constant dense<0.000000e+00> : vector<512x48xf32>
    %44 = tpu.matmul %41, %43, %cst_28 {dimension_numbers = #tpu.dot_dimension_numbers<[1], [0], [0], [1], [0, 0, 1, 1], [], []>} : vector<512x24xf32>, vector<24x48xf32>, vector<512x48xf32> -> vector<512x48xf32>
    %45 = arith.addf %40, %44 : vector<512x48xf32>
    %46 = vector.extract_strided_slice %39 {offsets = [128, 0], sizes = [512, 24], strides = [1, 1]} : vector<1024x24xf32> to vector<512x24xf32>
    %c1_29 = arith.constant 1 : index
    %c0_30 = arith.constant 0 : index
    %c0_31 = arith.constant 0 : index
    %47 = vector.load %arg4[%c1_29, %c0_30, %c0_31] : memref<5x24x48xf32, #tpu.memory_space<vmem>>, vector<1x24x48xf32>
    %48 = vector.shape_cast %47 : vector<1x24x48xf32> to vector<24x48xf32>
    %cst_32 = arith.constant dense<0.000000e+00> : vector<512x48xf32>
    %49 = tpu.matmul %46, %48, %cst_32 {dimension_numbers = #tpu.dot_dimension_numbers<[1], [0], [0], [1], [0, 0, 1, 1], [], []>} : vector<512x24xf32>, vector<24x48xf32>, vector<512x48xf32> -> vector<512x48xf32>
    %50 = arith.addf %45, %49 : vector<512x48xf32>
    %51 = vector.extract_strided_slice %39 {offsets = [256, 0], sizes = [512, 24], strides = [1, 1]} : vector<1024x24xf32> to vector<512x24xf32>
    %c2_33 = arith.constant 2 : index
    %c0_34 = arith.constant 0 : index
    %c0_35 = arith.constant 0 : index
    %52 = vector.load %arg4[%c2_33, %c0_34, %c0_35] : memref<5x24x48xf32, #tpu.memory_space<vmem>>, vector<1x24x48xf32>
    %53 = vector.shape_cast %52 : vector<1x24x48xf32> to vector<24x48xf32>
    %cst_36 = arith.constant dense<0.000000e+00> : vector<512x48xf32>
    %54 = tpu.matmul %51, %53, %cst_36 {dimension_numbers = #tpu.dot_dimension_numbers<[1], [0], [0], [1], [0, 0, 1, 1], [], []>} : vector<512x24xf32>, vector<24x48xf32>, vector<512x48xf32> -> vector<512x48xf32>
    %55 = arith.addf %50, %54 : vector<512x48xf32>
    %56 = vector.extract_strided_slice %39 {offsets = [384, 0], sizes = [512, 24], strides = [1, 1]} : vector<1024x24xf32> to vector<512x24xf32>
    %c3_37 = arith.constant 3 : index
    %c0_38 = arith.constant 0 : index
    %c0_39 = arith.constant 0 : index
    %57 = vector.load %arg4[%c3_37, %c0_38, %c0_39] : memref<5x24x48xf32, #tpu.memory_space<vmem>>, vector<1x24x48xf32>
    %58 = vector.shape_cast %57 : vector<1x24x48xf32> to vector<24x48xf32>
    %cst_40 = arith.constant dense<0.000000e+00> : vector<512x48xf32>
    %59 = tpu.matmul %56, %58, %cst_40 {dimension_numbers = #tpu.dot_dimension_numbers<[1], [0], [0], [1], [0, 0, 1, 1], [], []>} : vector<512x24xf32>, vector<24x48xf32>, vector<512x48xf32> -> vector<512x48xf32>
    %60 = arith.addf %55, %59 : vector<512x48xf32>
    %61 = vector.extract_strided_slice %39 {offsets = [512, 0], sizes = [512, 24], strides = [1, 1]} : vector<1024x24xf32> to vector<512x24xf32>
    %c4_41 = arith.constant 4 : index
    %c0_42 = arith.constant 0 : index
    %c0_43 = arith.constant 0 : index
    %62 = vector.load %arg4[%c4_41, %c0_42, %c0_43] : memref<5x24x48xf32, #tpu.memory_space<vmem>>, vector<1x24x48xf32>
    %63 = vector.shape_cast %62 : vector<1x24x48xf32> to vector<24x48xf32>
    %cst_44 = arith.constant dense<0.000000e+00> : vector<512x48xf32>
    %64 = tpu.matmul %61, %63, %cst_44 {dimension_numbers = #tpu.dot_dimension_numbers<[1], [0], [0], [1], [0, 0, 1, 1], [], []>} : vector<512x24xf32>, vector<24x48xf32>, vector<512x48xf32> -> vector<512x48xf32>
    %65 = arith.addf %60, %64 : vector<512x48xf32>
    %c0_45 = arith.constant 0 : index
    %c0_46 = arith.constant 0 : index
    %66 = vector.load %arg5[%c0_45, %c0_46] : memref<1x48xf32, #tpu.memory_space<vmem>>, vector<1x48xf32>
    %67 = vector.broadcast %66 : vector<1x48xf32> to vector<512x48xf32>
    %68 = arith.addf %65, %67 : vector<512x48xf32>
    %cst_47 = arith.constant 0.000000e+00 : f32
    %69 = vector.broadcast %cst_47 : f32 to vector<512x48xf32>
    %70 = arith.maximumf %68, %69 : vector<512x48xf32>
    %cst_48 = arith.constant 0.000000e+00 : f32
    %71 = vector.broadcast %cst_48 : f32 to vector<256x96xf32>
    %72 = vector.extract_strided_slice %70 {offsets = [0, 0], sizes = [256, 48], strides = [1, 1]} : vector<512x48xf32> to vector<256x48xf32>
    %c0_49 = arith.constant 0 : index
    %c0_50 = arith.constant 0 : index
    %c0_51 = arith.constant 0 : index
    %73 = vector.load %arg6[%c0_49, %c0_50, %c0_51] : memref<3x48x96xf32, #tpu.memory_space<vmem>>, vector<1x48x96xf32>
    %74 = vector.shape_cast %73 : vector<1x48x96xf32> to vector<48x96xf32>
    %cst_52 = arith.constant dense<0.000000e+00> : vector<256x96xf32>
    %75 = tpu.matmul %72, %74, %cst_52 {dimension_numbers = #tpu.dot_dimension_numbers<[1], [0], [0], [1], [0, 0, 1, 1], [], []>} : vector<256x48xf32>, vector<48x96xf32>, vector<256x96xf32> -> vector<256x96xf32>
    %76 = arith.addf %71, %75 : vector<256x96xf32>
    %77 = vector.extract_strided_slice %70 {offsets = [128, 0], sizes = [256, 48], strides = [1, 1]} : vector<512x48xf32> to vector<256x48xf32>
    %c1_53 = arith.constant 1 : index
    %c0_54 = arith.constant 0 : index
    %c0_55 = arith.constant 0 : index
    %78 = vector.load %arg6[%c1_53, %c0_54, %c0_55] : memref<3x48x96xf32, #tpu.memory_space<vmem>>, vector<1x48x96xf32>
    %79 = vector.shape_cast %78 : vector<1x48x96xf32> to vector<48x96xf32>
    %cst_56 = arith.constant dense<0.000000e+00> : vector<256x96xf32>
    %80 = tpu.matmul %77, %79, %cst_56 {dimension_numbers = #tpu.dot_dimension_numbers<[1], [0], [0], [1], [0, 0, 1, 1], [], []>} : vector<256x48xf32>, vector<48x96xf32>, vector<256x96xf32> -> vector<256x96xf32>
    %81 = arith.addf %76, %80 : vector<256x96xf32>
    %82 = vector.extract_strided_slice %70 {offsets = [256, 0], sizes = [256, 48], strides = [1, 1]} : vector<512x48xf32> to vector<256x48xf32>
    %c2_57 = arith.constant 2 : index
    %c0_58 = arith.constant 0 : index
    %c0_59 = arith.constant 0 : index
    %83 = vector.load %arg6[%c2_57, %c0_58, %c0_59] : memref<3x48x96xf32, #tpu.memory_space<vmem>>, vector<1x48x96xf32>
    %84 = vector.shape_cast %83 : vector<1x48x96xf32> to vector<48x96xf32>
    %cst_60 = arith.constant dense<0.000000e+00> : vector<256x96xf32>
    %85 = tpu.matmul %82, %84, %cst_60 {dimension_numbers = #tpu.dot_dimension_numbers<[1], [0], [0], [1], [0, 0, 1, 1], [], []>} : vector<256x48xf32>, vector<48x96xf32>, vector<256x96xf32> -> vector<256x96xf32>
    %86 = arith.addf %81, %85 : vector<256x96xf32>
    %c0_61 = arith.constant 0 : index
    %c0_62 = arith.constant 0 : index
    %87 = vector.load %arg7[%c0_61, %c0_62] : memref<1x96xf32, #tpu.memory_space<vmem>>, vector<1x96xf32>
    %88 = vector.broadcast %87 : vector<1x96xf32> to vector<256x96xf32>
    %89 = arith.addf %86, %88 : vector<256x96xf32>
    %cst_63 = arith.constant 0.000000e+00 : f32
    %90 = vector.broadcast %cst_63 : f32 to vector<256x96xf32>
    %91 = arith.maximumf %89, %90 : vector<256x96xf32>
    %c0_64 = arith.constant 0 : index
    %c0_65 = arith.constant 0 : index
    %92 = vector.load %arg8[%c0_64, %c0_65] : memref<192x192xf32, #tpu.memory_space<vmem>>, vector<192x192xf32>
    %cst_66 = arith.constant 0.000000e+00 : f32
    %93 = vector.broadcast %cst_66 : f32 to vector<128x192xf32>
    %94 = vector.extract_strided_slice %91 {offsets = [0, 0], sizes = [128, 96], strides = [1, 1]} : vector<256x96xf32> to vector<128x96xf32>
    %95 = vector.extract_strided_slice %92 {offsets = [0, 0], sizes = [96, 192], strides = [1, 1]} : vector<192x192xf32> to vector<96x192xf32>
    %cst_67 = arith.constant dense<0.000000e+00> : vector<128x192xf32>
    %96 = tpu.matmul %94, %95, %cst_67 {dimension_numbers = #tpu.dot_dimension_numbers<[1], [0], [0], [1], [0, 0, 1, 1], [], []>} : vector<128x96xf32>, vector<96x192xf32>, vector<128x192xf32> -> vector<128x192xf32>
    %97 = arith.addf %93, %96 : vector<128x192xf32>
    %98 = vector.extract_strided_slice %91 {offsets = [128, 0], sizes = [128, 96], strides = [1, 1]} : vector<256x96xf32> to vector<128x96xf32>
    %99 = vector.extract_strided_slice %92 {offsets = [96, 0], sizes = [96, 192], strides = [1, 1]} : vector<192x192xf32> to vector<96x192xf32>
    %cst_68 = arith.constant dense<0.000000e+00> : vector<128x192xf32>
    %100 = tpu.matmul %98, %99, %cst_68 {dimension_numbers = #tpu.dot_dimension_numbers<[1], [0], [0], [1], [0, 0, 1, 1], [], []>} : vector<128x96xf32>, vector<96x192xf32>, vector<128x192xf32> -> vector<128x192xf32>
    %101 = arith.addf %97, %100 : vector<128x192xf32>
    %c0_69 = arith.constant 0 : index
    %c0_70 = arith.constant 0 : index
    %102 = vector.load %arg9[%c0_69, %c0_70] : memref<1x192xf32, #tpu.memory_space<vmem>>, vector<1x192xf32>
    %103 = vector.broadcast %102 : vector<1x192xf32> to vector<128x192xf32>
    %104 = arith.addf %101, %103 : vector<128x192xf32>
    %cst_71 = arith.constant 0.000000e+00 : f32
    %105 = vector.broadcast %cst_71 : f32 to vector<128x192xf32>
    %106 = arith.maximumf %104, %105 : vector<128x192xf32>
    %c0_72 = arith.constant 0 : index
    %c0_73 = arith.constant 0 : index
    %107 = vector.load %arg10[%c0_72, %c0_73] : memref<192x128xf32, #tpu.memory_space<vmem>>, vector<192x128xf32>
    %cst_74 = arith.constant dense<0.000000e+00> : vector<128x128xf32>
    %108 = tpu.matmul %106, %107, %cst_74 {dimension_numbers = #tpu.dot_dimension_numbers<[1], [0], [0], [1], [0, 0, 1, 1], [], []>} : vector<128x192xf32>, vector<192x128xf32>, vector<128x128xf32> -> vector<128x128xf32>
    %c0_75 = arith.constant 0 : index
    %c0_76 = arith.constant 0 : index
    %109 = vector.load %arg11[%c0_75, %c0_76] : memref<1x128xf32, #tpu.memory_space<vmem>>, vector<1x128xf32>
    %110 = vector.broadcast %109 : vector<1x128xf32> to vector<128x128xf32>
    %111 = arith.addf %108, %110 : vector<128x128xf32>
    %c0_77 = arith.constant 0 : index
    %c0_78 = arith.constant 0 : index
    %112 = vector.load %arg12[%c0_77, %c0_78] : memref<128x128xf32, #tpu.memory_space<vmem>>, vector<128x128xf32>
    tpu.vector_store %arg12[%c0_77, %c0_78], %111 {strides = array<i32>} : memref<128x128xf32, #tpu.memory_space<vmem>>, vector<128x128xf32>,
    return
  }
  func.func @transform_0(%arg0: i32) -> (i32, i32) {
    %c0_i32 = arith.constant 0 : i32
    %c0_i32_0 = arith.constant 0 : i32
    return %arg0, %c0_i32 : i32, i32
  }
  func.func @transform_1(%arg0: i32) -> (i32, i32, i32) {
    %c0_i32 = arith.constant 0 : i32
    %c0_i32_0 = arith.constant 0 : i32
    %c0_i32_1 = arith.constant 0 : i32
    %c0_i32_2 = arith.constant 0 : i32
    return %c0_i32, %c0_i32_0, %c0_i32_1 : i32, i32, i32
  }
  func.func @transform_2(%arg0: i32) -> (i32, i32) {
    %c0_i32 = arith.constant 0 : i32
    %c0_i32_0 = arith.constant 0 : i32
    %c0_i32_1 = arith.constant 0 : i32
    return %c0_i32, %c0_i32_0 : i32, i32
  }
  func.func @transform_3(%arg0: i32) -> (i32, i32, i32) {
    %c0_i32 = arith.constant 0 : i32
    %c0_i32_0 = arith.constant 0 : i32
    %c0_i32_1 = arith.constant 0 : i32
    %c0_i32_2 = arith.constant 0 : i32
    return %c0_i32, %c0_i32_0, %c0_i32_1 : i32, i32, i32
  }
  func.func @transform_4(%arg0: i32) -> (i32, i32) {
    %c0_i32 = arith.constant 0 : i32
    %c0_i32_0 = arith.constant 0 : i32
    %c0_i32_1 = arith.constant 0 : i32
    return %c0_i32, %c0_i32_0 : i32, i32
  }
  func.func @transform_5(%arg0: i32) -> (i32, i32, i32) {
    %c0_i32 = arith.constant 0 : i32
    %c0_i32_0 = arith.constant 0 : i32
    %c0_i32_1 = arith.constant 0 : i32
    %c0_i32_2 = arith.constant 0 : i32
    return %c0_i32, %c0_i32_0, %c0_i32_1 : i32, i32, i32
  }
  func.func @transform_6(%arg0: i32) -> (i32, i32) {
    %c0_i32 = arith.constant 0 : i32
    %c0_i32_0 = arith.constant 0 : i32
    %c0_i32_1 = arith.constant 0 : i32
    return %c0_i32, %c0_i32_0 : i32, i32
  }
  func.func @transform_7(%arg0: i32) -> (i32, i32) {
    %c0_i32 = arith.constant 0 : i32
    %c0_i32_0 = arith.constant 0 : i32
    %c0_i32_1 = arith.constant 0 : i32
    return %c0_i32, %c0_i32_0 : i32, i32
  }
  func.func @transform_8(%arg0: i32) -> (i32, i32) {
    %c0_i32 = arith.constant 0 : i32
    %c0_i32_0 = arith.constant 0 : i32
    %c0_i32_1 = arith.constant 0 : i32
    return %c0_i32, %c0_i32_0 : i32, i32
  }
  func.func @transform_9(%arg0: i32) -> (i32, i32) {
    %c0_i32 = arith.constant 0 : i32
    %c0_i32_0 = arith.constant 0 : i32
    %c0_i32_1 = arith.constant 0 : i32
    return %c0_i32, %c0_i32_0 : i32, i32
  }
  func.func @transform_10(%arg0: i32) -> (i32, i32) {
    %c0_i32 = arith.constant 0 : i32
    %c0_i32_0 = arith.constant 0 : i32
    %c0_i32_1 = arith.constant 0 : i32
    return %c0_i32, %c0_i32_0 : i32, i32
  }
  func.func @transform_11(%arg0: i32) -> (i32, i32) {
    %c0_i32 = arith.constant 0 : i32
    %c0_i32_0 = arith.constant 0 : i32
    return %arg0, %c0_i32 : i32, i32
  }
}

</mosaic_0001>

<llo_original>
// kernel: tpu_custom_call.1
$region0: #{tpu_custom_call.1}
  #allocation0 [shape = 'u32[]', space=smem, size = 0x4, offset = 0x4, fixed_abs, tag = 'smem constant byte address 0x4 - core index']
  #allocation1 [shape = 'u32[72,128]{1,0:T(1,128)}', space=vmem, size = 0x9000, scoped, tag = 'internal scratch']
  %s0 = inlined_call_operand.vmem [shape: f32[4096,6], index: 0, kind: input, shape index: {}]
  %s1 = inlined_call_operand.vmem [shape: f32[5,6,24], index: 1, kind: input, shape index: {}]
  %s2 = inlined_call_operand.vmem [shape: f32[1,24], index: 2, kind: input, shape index: {}]
  %s3 = inlined_call_operand.vmem [shape: f32[5,24,48], index: 3, kind: input, shape index: {}]
  %s4 = inlined_call_operand.vmem [shape: f32[1,48], index: 4, kind: input, shape index: {}]
  %s5 = inlined_call_operand.vmem [shape: f32[3,48,96], index: 5, kind: input, shape index: {}]
  %s6 = inlined_call_operand.vmem [shape: f32[1,96], index: 6, kind: input, shape index: {}]
  %s7 = inlined_call_operand.vmem [shape: f32[192,192], index: 7, kind: input, shape index: {}]
  %s8 = inlined_call_operand.vmem [shape: f32[1,192], index: 8, kind: input, shape index: {}]
  %s9 = inlined_call_operand.vmem [shape: f32[192,128], index: 9, kind: input, shape index: {}]
  %s10 = inlined_call_operand.vmem [shape: f32[1,128], index: 10, kind: input, shape index: {}]
  %s11 = inlined_call_operand.hbm [shape: f32[256,128], index: 11, kind: output, shape index: {}]
  %s12 = sld [smem:[#allocation0]]
  $region77: #{tpu_custom_call.1} parent=0
    _
  %s14 = ssub.s32 1, %s12
  %s15 = scalar_select 0, %s14, %s12
  $region1: #{tpu_custom_call.1} parent=0
    #allocation2 [shape = 'u8[131072]{0}', space=vmem, size = 0x20000, scoped, tag = 'output window, operand 0']
    #allocation3 [shape = 's32[2]{0}', space=sflag, size = 0x8, scoped, tag = 'scoped memory for tpu_custom_call.1']
    %16 = vsyncpa [#allocation3], 0
    %s17 = scalar_lea.sflag [#allocation3], 1
    %18 = vsyncpa %s17, 0
    loop: start=0, step=1, limit=4
    $region2: #{tpu_custom_call.1} parent=1 // loop_pre_header
      _
    $region3: #{tpu_custom_call.1} parent=1 // loop_header
      %s20 = sphi 0, %s24
      %p21 = scmp.ge.s32.totalorder %s20, 4
      %s30 = sphi 0, %s32
      %s33 = sphi 0, %s30
      %s34 = sphi 0, %s33
      %s50 = sphi 0, %s34
      %s54 = sphi 0, %s54
      %s56 = sphi 0, %s54
      %s57 = sphi 0, %s56
      %s71 = sphi 0, %s57
      %s75 = sphi 0, %s75
      %s77 = sphi 0, %s75
      %s78 = sphi 0, %s77
      %s92 = sphi 0, %s78
      %s96 = sphi 0, %s96
      %s98 = sphi 0, %s96
      %s99 = sphi 0, %s98
      %s113 = sphi 0, %s99
      %s117 = sphi 0, %s117
      %s119 = sphi 0, %s117
      %s120 = sphi 0, %s119
      %s134 = sphi 0, %s120
      %s138 = sphi 0, %s138
      %s140 = sphi 0, %s138
      %s141 = sphi 0, %s140
      %s155 = sphi 0, %s141
      %s159 = sphi 0, %s159
      %s161 = sphi 0, %s159
      %s162 = sphi 0, %s161
      %s176 = sphi 0, %s162
      %s180 = sphi 0, %s180
      %s182 = sphi 0, %s180
      %s183 = sphi 0, %s182
      %s197 = sphi 0, %s183
      %s201 = sphi 0, %s201
      %s203 = sphi 0, %s201
      %s204 = sphi 0, %s203
      %s218 = sphi 0, %s204
      %s222 = sphi 0, %s222
      %s224 = sphi 0, %s222
      %s225 = sphi 0, %s224
      %s239 = sphi 0, %s225
      %s243 = sphi 0, %s243
      %s245 = sphi 0, %s243
      %s246 = sphi 0, %s245
      %s260 = sphi 0, %s246
      %s266 = sphi 0, %s268
      %s269 = sphi 0, %s266
      %s270 = sphi 0, %s269
      %s286 = sphi 0, %s270
    $region4: #{tpu_custom_call.1} parent=1 // loop_header_branch
      %23 = sbr.rel (%p21) target = $region8
    $region5: #{tpu_custom_call.1} parent=1 // loop_body
      %s25 = ssub.s32 %s20, 1
      %s26 = ssub.s32 %s20, 2
      %s27 = sadd.s32 %s20, 1
      %s28 = ssub.s32 %s20, %s27
      %p29 = scmp.eq.s32.totalorder %s28, 0
      %s31 = sadd.s32 %s30, 1
      %s32 = scalar_select %p29, %s30, %s31
      %p35 = pneg %p29
      %p36 = scmp.eq.s32.totalorder %s20, 1
      %p37 = por %p35, %p36
      %p38 = scmp.ne.s32.totalorder %s30, %s33
      %p39 = scmp.eq.s32.totalorder %s20, 0
      %p40 = por %p38, %p39
      %p41 = scmp.ne.s32.totalorder %s30, %s33
      %p42 = scmp.eq.s32.totalorder %s25, 1
      %p43 = por %p41, %p42
      %p44 = scmp.ne.s32.totalorder %s33, %s34
      %p45 = scmp.eq.s32.totalorder %s25, 0
      %p46 = por %p44, %p45
      %p47 = scmp.ne.s32.totalorder %s33, %s34
      %p48 = scmp.eq.s32.totalorder %s26, 1
      %p49 = por %p47, %p48
      %p51 = scmp.ne.s32.totalorder %s34, %s50
      %p52 = scmp.eq.s32.totalorder %s26, 0
      %p53 = por %p51, %p52
      %s55 = sadd.s32 %s54, 1
      %p58 = scmp.eq.s32.totalorder %s20, 1
      %p59 = scmp.ne.s32.totalorder %s54, %s56
      %p60 = scmp.eq.s32.totalorder %s20, 0
      %p61 = por %p59, %p60
      %p62 = scmp.ne.s32.totalorder %s54, %s56
      %p63 = scmp.eq.s32.totalorder %s25, 1
      %p64 = por %p62, %p63
      %p65 = scmp.ne.s32.totalorder %s56, %s57
      %p66 = scmp.eq.s32.totalorder %s25, 0
      %p67 = por %p65, %p66
      %p68 = scmp.ne.s32.totalorder %s56, %s57
      %p69 = scmp.eq.s32.totalorder %s26, 1
      %p70 = por %p68, %p69
      %p72 = scmp.ne.s32.totalorder %s57, %s71
      %p73 = scmp.eq.s32.totalorder %s26, 0
      %p74 = por %p72, %p73
      %s76 = sadd.s32 %s75, 1
      %p79 = scmp.eq.s32.totalorder %s20, 1
      %p80 = scmp.ne.s32.totalorder %s75, %s77
      %p81 = scmp.eq.s32.totalorder %s20, 0
      %p82 = por %p80, %p81
      %p83 = scmp.ne.s32.totalorder %s75, %s77
      %p84 = scmp.eq.s32.totalorder %s25, 1
      %p85 = por %p83, %p84
      %p86 = scmp.ne.s32.totalorder %s77, %s78
      %p87 = scmp.eq.s32.totalorder %s25, 0
      %p88 = por %p86, %p87
      %p89 = scmp.ne.s32.totalorder %s77, %s78
      %p90 = scmp.eq.s32.totalorder %s26, 1
      %p91 = por %p89, %p90
      %p93 = scmp.ne.s32.totalorder %s78, %s92
      %p94 = scmp.eq.s32.totalorder %s26, 0
      %p95 = por %p93, %p94
      %s97 = sadd.s32 %s96, 1
      %p100 = scmp.eq.s32.totalorder %s20, 1
      %p101 = scmp.ne.s32.totalorder %s96, %s98
      %p102 = scmp.eq.s32.totalorder %s20, 0
      %p103 = por %p101, %p102
      %p104 = scmp.ne.s32.totalorder %s96, %s98
      %p105 = scmp.eq.s32.totalorder %s25, 1
      %p106 = por %p104, %p105
      %p107 = scmp.ne.s32.totalorder %s98, %s99
      %p108 = scmp.eq.s32.totalorder %s25, 0
      %p109 = por %p107, %p108
      %p110 = scmp.ne.s32.totalorder %s98, %s99
      %p111 = scmp.eq.s32.totalorder %s26, 1
      %p112 = por %p110, %p111
      %p114 = scmp.ne.s32.totalorder %s99, %s113
      %p115 = scmp.eq.s32.totalorder %s26, 0
      %p116 = por %p114, %p115
      %s118 = sadd.s32 %s117, 1
      %p121 = scmp.eq.s32.totalorder %s20, 1
      %p122 = scmp.ne.s32.totalorder %s117, %s119
      %p123 = scmp.eq.s32.totalorder %s20, 0
      %p124 = por %p122, %p123
      %p125 = scmp.ne.s32.totalorder %s117, %s119
      %p126 = scmp.eq.s32.totalorder %s25, 1
      %p127 = por %p125, %p126
      %p128 = scmp.ne.s32.totalorder %s119, %s120
      %p129 = scmp.eq.s32.totalorder %s25, 0
      %p130 = por %p128, %p129
      %p131 = scmp.ne.s32.totalorder %s119, %s120
      %p132 = scmp.eq.s32.totalorder %s26, 1
      %p133 = por %p131, %p132
      %p135 = scmp.ne.s32.totalorder %s120, %s134
      %p136 = scmp.eq.s32.totalorder %s26, 0
      %p137 = por %p135, %p136
      %s139 = sadd.s32 %s138, 1
      %p142 = scmp.eq.s32.totalorder %s20, 1
      %p143 = scmp.ne.s32.totalorder %s138, %s140
      %p144 = scmp.eq.s32.totalorder %s20, 0
      %p145 = por %p143, %p144
      %p146 = scmp.ne.s32.totalorder %s138, %s140
      %p147 = scmp.eq.s32.totalorder %s25, 1
      %p148 = por %p146, %p147
      %p149 = scmp.ne.s32.totalorder %s140, %s141
      %p150 = scmp.eq.s32.totalorder %s25, 0
      %p151 = por %p149, %p150
      %p152 = scmp.ne.s32.totalorder %s140, %s141
      %p153 = scmp.eq.s32.totalorder %s26, 1
      %p154 = por %p152, %p153
      %p156 = scmp.ne.s32.totalorder %s141, %s155
      %p157 = scmp.eq.s32.totalorder %s26, 0
      %p158 = por %p156, %p157
      %s160 = sadd.s32 %s159, 1
      %p163 = scmp.eq.s32.totalorder %s20, 1
      %p164 = scmp.ne.s32.totalorder %s159, %s161
      %p165 = scmp.eq.s32.totalorder %s20, 0
      %p166 = por %p164, %p165
      %p167 = scmp.ne.s32.totalorder %s159, %s161
      %p168 = scmp.eq.s32.totalorder %s25, 1
      %p169 = por %p167, %p168
      %p170 = scmp.ne.s32.totalorder %s161, %s162
      %p171 = scmp.eq.s32.totalorder %s25, 0
      %p172 = por %p170, %p171
      %p173 = scmp.ne.s32.totalorder %s161, %s162
      %p174 = scmp.eq.s32.totalorder %s26, 1
      %p175 = por %p173, %p174
      %p177 = scmp.ne.s32.totalorder %s162, %s176
      %p178 = scmp.eq.s32.totalorder %s26, 0
      %p179 = por %p177, %p178
      %s181 = sadd.s32 %s180, 1
      %p184 = scmp.eq.s32.totalorder %s20, 1
      %p185 = scmp.ne.s32.totalorder %s180, %s182
      %p186 = scmp.eq.s32.totalorder %s20, 0
      %p187 = por %p185, %p186
      %p188 = scmp.ne.s32.totalorder %s180, %s182
      %p189 = scmp.eq.s32.totalorder %s25, 1
      %p190 = por %p188, %p189
      %p191 = scmp.ne.s32.totalorder %s182, %s183
      %p192 = scmp.eq.s32.totalorder %s25, 0
      %p193 = por %p191, %p192
      %p194 = scmp.ne.s32.totalorder %s182, %s183
      %p195 = scmp.eq.s32.totalorder %s26, 1
      %p196 = por %p194, %p195
      %p198 = scmp.ne.s32.totalorder %s183, %s197
      %p199 = scmp.eq.s32.totalorder %s26, 0
      %p200 = por %p198, %p199
      %s202 = sadd.s32 %s201, 1
      %p205 = scmp.eq.s32.totalorder %s20, 1
      %p206 = scmp.ne.s32.totalorder %s201, %s203
      %p207 = scmp.eq.s32.totalorder %s20, 0
      %p208 = por %p206, %p207
      %p209 = scmp.ne.s32.totalorder %s201, %s203
      %p210 = scmp.eq.s32.totalorder %s25, 1
      %p211 = por %p209, %p210
      %p212 = scmp.ne.s32.totalorder %s203, %s204
      %p213 = scmp.eq.s32.totalorder %s25, 0
      %p214 = por %p212, %p213
      %p215 = scmp.ne.s32.totalorder %s203, %s204
      %p216 = scmp.eq.s32.totalorder %s26, 1
      %p217 = por %p215, %p216
      %p219 = scmp.ne.s32.totalorder %s204, %s218
      %p220 = scmp.eq.s32.totalorder %s26, 0
      %p221 = por %p219, %p220
      %s223 = sadd.s32 %s222, 1
      %p226 = scmp.eq.s32.totalorder %s20, 1
      %p227 = scmp.ne.s32.totalorder %s222, %s224
      %p228 = scmp.eq.s32.totalorder %s20, 0
      %p229 = por %p227, %p228
      %p230 = scmp.ne.s32.totalorder %s222, %s224
      %p231 = scmp.eq.s32.totalorder %s25, 1
      %p232 = por %p230, %p231
      %p233 = scmp.ne.s32.totalorder %s224, %s225
      %p234 = scmp.eq.s32.totalorder %s25, 0
      %p235 = por %p233, %p234
      %p236 = scmp.ne.s32.totalorder %s224, %s225
      %p237 = scmp.eq.s32.totalorder %s26, 1
      %p238 = por %p236, %p237
      %p240 = scmp.ne.s32.totalorder %s225, %s239
      %p241 = scmp.eq.s32.totalorder %s26, 0
      %p242 = por %p240, %p241
      %s244 = sadd.s32 %s243, 1
      %p247 = scmp.eq.s32.totalorder %s20, 1
      %p248 = scmp.ne.s32.totalorder %s243, %s245
      %p249 = scmp.eq.s32.totalorder %s20, 0
      %p250 = por %p248, %p249
      %p251 = scmp.ne.s32.totalorder %s243, %s245
      %p252 = scmp.eq.s32.totalorder %s25, 1
      %p253 = por %p251, %p252
      %p254 = scmp.ne.s32.totalorder %s245, %s246
      %p255 = scmp.eq.s32.totalorder %s25, 0
      %p256 = por %p254, %p255
      %p257 = scmp.ne.s32.totalorder %s245, %s246
      %p258 = scmp.eq.s32.totalorder %s26, 1
      %p259 = por %p257, %p258
      %p261 = scmp.ne.s32.totalorder %s246, %s260
      %p262 = scmp.eq.s32.totalorder %s26, 0
      %p263 = por %p261, %p262
      %s264 = ssub.s32 %s20, %s27
      %p265 = scmp.eq.s32.totalorder %s264, 0
      %s267 = sadd.s32 %s266, 1
      %s268 = scalar_select %p265, %s266, %s267
      %p271 = pneg %p265
      %p272 = scmp.eq.s32.totalorder %s20, 1
      %p273 = por %p271, %p272
      %p274 = scmp.ne.s32.totalorder %s266, %s269
      %p275 = scmp.eq.s32.totalorder %s20, 0
      %p276 = por %p274, %p275
      %p277 = scmp.ne.s32.totalorder %s266, %s269
      %p278 = scmp.eq.s32.totalorder %s25, 1
      %p279 = por %p277, %p278
      %p280 = scmp.ne.s32.totalorder %s269, %s270
      %p281 = scmp.eq.s32.totalorder %s25, 0
      %p282 = por %p280, %p281
      %p283 = scmp.ne.s32.totalorder %s269, %s270
      %p284 = scmp.eq.s32.totalorder %s26, 1
      %p285 = por %p283, %p284
      %p287 = scmp.ne.s32.totalorder %s270, %s286
      %p288 = scmp.eq.s32.totalorder %s26, 0
      %p289 = por %p287, %p288
      %p290 = scmp.le.s32.totalorder 1, %s20
      %p291 = scmp.lt.s32.totalorder %s20, 3
      %p292 = pnand %p290, %p291
      %p293 = pneg %p292
      // Predicated region
      $region9: #{tpu_custom_call.1} parent=5 // pred_check
        _
      $region10: #{tpu_custom_call.1} parent=5 // pred_check_branch
        %295 = sbr.rel (%p292) target = $region12
      $region11: #{tpu_custom_call.1} parent=5 // pred_region
        %s296 = ssub.s32 %s20, 1
        // Predicated region
        $region13: #{tpu_custom_call.1} parent=11 // pred_check
          %p297 = pneg %p67
        $region14: #{tpu_custom_call.1} parent=11 // pred_check_branch
          %299 = sbr.rel (%p297) target = $region16
        $region15: #{tpu_custom_call.1} parent=11 // pred_region
          _
        $region16: #{tpu_custom_call.1} parent=11 // pred_fallthru
          _
        // Predicated region
        $region17: #{tpu_custom_call.1} parent=11 // pred_check
          %p300 = pneg %p88
        $region18: #{tpu_custom_call.1} parent=11 // pred_check_branch
          %302 = sbr.rel (%p300) target = $region20
        $region19: #{tpu_custom_call.1} parent=11 // pred_region
          _
        $region20: #{tpu_custom_call.1} parent=11 // pred_fallthru
          _
        // Predicated region
        $region21: #{tpu_custom_call.1} parent=11 // pred_check
          %p303 = pneg %p109
        $region22: #{tpu_custom_call.1} parent=11 // pred_check_branch
          %305 = sbr.rel (%p303) target = $region24
        $region23: #{tpu_custom_call.1} parent=11 // pred_region
          _
        $region24: #{tpu_custom_call.1} parent=11 // pred_fallthru
          _
        // Predicated region
        $region25: #{tpu_custom_call.1} parent=11 // pred_check
          %p306 = pneg %p130
        $region26: #{tpu_custom_call.1} parent=11 // pred_check_branch
          %308 = sbr.rel (%p306) target = $region28
        $region27: #{tpu_custom_call.1} parent=11 // pred_region
          _
        $region28: #{tpu_custom_call.1} parent=11 // pred_fallthru
          _
        // Predicated region
        $region29: #{tpu_custom_call.1} parent=11 // pred_check
          %p309 = pneg %p151
        $region30: #{tpu_custom_call.1} parent=11 // pred_check_branch
          %311 = sbr.rel (%p309) target = $region32
        $region31: #{tpu_custom_call.1} parent=11 // pred_region
          _
        $region32: #{tpu_custom_call.1} parent=11 // pred_fallthru
          _
        // Predicated region
        $region33: #{tpu_custom_call.1} parent=11 // pred_check
          %p312 = pneg %p172
        $region34: #{tpu_custom_call.1} parent=11 // pred_check_branch
          %314 = sbr.rel (%p312) target = $region36
        $region35: #{tpu_custom_call.1} parent=11 // pred_region
          _
        $region36: #{tpu_custom_call.1} parent=11 // pred_fallthru
          _
        // Predicated region
        $region37: #{tpu_custom_call.1} parent=11 // pred_check
          %p315 = pneg %p193
        $region38: #{tpu_custom_call.1} parent=11 // pred_check_branch
          %317 = sbr.rel (%p315) target = $region40
        $region39: #{tpu_custom_call.1} parent=11 // pred_region
          _
        $region40: #{tpu_custom_call.1} parent=11 // pred_fallthru
          _
        // Predicated region
        $region41: #{tpu_custom_call.1} parent=11 // pred_check
          %p318 = pneg %p214
        $region42: #{tpu_custom_call.1} parent=11 // pred_check_branch
          %320 = sbr.rel (%p318) target = $region44
        $region43: #{tpu_custom_call.1} parent=11 // pred_region
          _
        $region44: #{tpu_custom_call.1} parent=11 // pred_fallthru
          _
        // Predicated region
        $region45: #{tpu_custom_call.1} parent=11 // pred_check
          %p321 = pneg %p235
        $region46: #{tpu_custom_call.1} parent=11 // pred_check_branch
          %323 = sbr.rel (%p321) target = $region48
        $region47: #{tpu_custom_call.1} parent=11 // pred_region
          _
        $region48: #{tpu_custom_call.1} parent=11 // pred_fallthru
          _
        // Predicated region
        $region49: #{tpu_custom_call.1} parent=11 // pred_check
          %p324 = pneg %p256
        $region50: #{tpu_custom_call.1} parent=11 // pred_check_branch
          %326 = sbr.rel (%p324) target = $region52
        $region51: #{tpu_custom_call.1} parent=11 // pred_region
          _
        $region52: #{tpu_custom_call.1} parent=11 // pred_fallthru
          _
      $region12: #{tpu_custom_call.1} parent=5 // pred_fallthru
        _
      %p327 = scmp.lt.s32.totalorder %s20, 2
      // Predicated region
      $region53: #{tpu_custom_call.1} parent=5 // pred_check
        %p328 = pneg %p327
      $region54: #{tpu_custom_call.1} parent=5 // pred_check_branch
        %330 = sbr.rel (%p328) target = $region56
      $region55: #{tpu_custom_call.1} parent=5 // pred_region
        // Predicated region
        $region57: #{tpu_custom_call.1} parent=55 // pred_check
          %p331 = pneg %p40
        $region58: #{tpu_custom_call.1} parent=55 // pred_check_branch
          %333 = sbr.rel (%p331) target = $region60
        $region59: #{tpu_custom_call.1} parent=55 // pred_region
          %s334 = smul.u32 256, %s20
          %p335 = scmp.lt.s32.totalorder %s334, 511
          %s336 = scalar_select %p335, %s334, 511
          %s337 = smul.addr %s336, 8
          %s338 = scalar_lea.vmem %s0, %s337
          %s339 = smul.u32 256, %s20
        $region60: #{tpu_custom_call.1} parent=55 // pred_fallthru
          _
      $region56: #{tpu_custom_call.1} parent=5 // pred_fallthru
        _
      %p340 = scmp.le.s32.totalorder 1, %s20
      %p341 = scmp.lt.s32.totalorder %s20, 3
      %p342 = pnand %p340, %p341
      %p343 = pneg %p342
      // Predicated region
      $region61: #{tpu_custom_call.1} parent=5 // pred_check
        _
      $region62: #{tpu_custom_call.1} parent=5 // pred_check_branch
        %345 = sbr.rel (%p342) target = $region64
      $region63: #{tpu_custom_call.1} parent=5 // pred_region
        %s346 = ssub.s32 %s20, 1
        %s347 = smul.u32 256, %s25
        %p348 = scmp.lt.s32.totalorder %s347, 511
        %s349 = scalar_select %p348, %s347, 511
        %s350 = smul.addr %s349, 8
        %s351 = scalar_lea.vmem %s0, %s350
        %p352 = pneg %p46
        %p353 = pneg %p43
        %p354 = pneg %p67
        %p355 = pneg %p64
        %p356 = pneg %p88
        %p357 = pneg %p85
        %p358 = pneg %p109
        %p359 = pneg %p106
        %p360 = pneg %p130
        %p361 = pneg %p127
        %p362 = pneg %p151
        %p363 = pneg %p148
        %p364 = pneg %p172
        %p365 = pneg %p169
        %p366 = pneg %p193
        %p367 = pneg %p190
        %p368 = pneg %p214
        %p369 = pneg %p211
        %p370 = pneg %p235
        %p371 = pneg %p232
        %p372 = pneg %p256
        %p373 = pneg %p253
        %p374 = pneg %p282
        %p375 = pneg %p279
        %s376 = sand.u32 %s269, 1
        %s377 = scalar_lea.sflag [#allocation3], %s376
        %s378 = sand.u32 %s269, 1
        %s379 = smul.addr %s378, 128
        %s380 = scalar_lea.vmem [#allocation2], %s379
        %s381 = smul.u32 256, %s25
        %p382 = scmp.lt.s32.totalorder %s381, 511
        %s383 = scalar_select %p382, %s381, 511
        %s384 = smul.addr %s383, 8
        %s385 = scalar_lea.vmem %s0, %s384
        %s386 = smul.u32 256, %s25
        %s387 = smul.u32 16, %s25
        %v388 = vld [vmem:[%s385] sm:$0xff]
        %v389 = vld [vmem:[%s385 + $0x8] sm:$0xff]
        %v390 = vld [vmem:[%s385 + $0x10] sm:$0xff]
        %v391 = vld [vmem:[%s385 + $0x18] sm:$0xff]
        %v392 = vld [vmem:[%s385 + $0x20] sm:$0xff]
        %v393 = vld [vmem:[%s385 + $0x28] sm:$0xff]
        %v394 = vld [vmem:[%s385 + $0x30] sm:$0xff]
        %v395 = vld [vmem:[%s385 + $0x38] sm:$0xff]
        %v396 = vld [vmem:[%s385 + $0x40] sm:$0xff]
        %v397 = vld [vmem:[%s385 + $0x48] sm:$0xff]
        %v398 = vld [vmem:[%s385 + $0x50] sm:$0xff]
        %v399 = vld [vmem:[%s385 + $0x58] sm:$0xff]
        %v400 = vld [vmem:[%s385 + $0x60] sm:$0xff]
        %v401 = vld [vmem:[%s385 + $0x68] sm:$0xff]
        %v402 = vld [vmem:[%s385 + $0x70] sm:$0xff]
        %v403 = vld [vmem:[%s385 + $0x78] sm:$0xff]
        %v404 = vld [vmem:[%s385 + $0x80] sm:$0xff]
        %v405 = vld [vmem:[%s385 + $0x88] sm:$0xff]
        %v406 = vld [vmem:[%s385 + $0x90] sm:$0xff]
        %v407 = vld [vmem:[%s385 + $0x98] sm:$0xff]
        %v408 = vld [vmem:[%s385 + $0xa0] sm:$0xff]
        %v409 = vld [vmem:[%s385 + $0xa8] sm:$0xff]
        %v410 = vld [vmem:[%s385 + $0xb0] sm:$0xff]
        %v411 = vld [vmem:[%s385 + $0xb8] sm:$0xff]
        %v412 = vld [vmem:[%s385 + $0xc0] sm:$0xff]
        %v413 = vld [vmem:[%s385 + $0xc8] sm:$0xff]
        %v414 = vld [vmem:[%s385 + $0xd0] sm:$0xff]
        %v415 = vld [vmem:[%s385 + $0xd8] sm:$0xff]
        %v416 = vld [vmem:[%s385 + $0xe0] sm:$0xff]
        %v417 = vld [vmem:[%s385 + $0xe8] sm:$0xff]
        %v418 = vld [vmem:[%s385 + $0xf0] sm:$0xff]
        %v419 = vld [vmem:[%s385 + $0xf8] sm:$0xff]
        %v420 = vld [vmem:[%s385 + $0x100] sm:$0xff]
        %v421 = vld [vmem:[%s385 + $0x108] sm:$0xff]
        %v422 = vld [vmem:[%s385 + $0x110] sm:$0xff]
        %v423 = vld [vmem:[%s385 + $0x118] sm:$0xff]
        %v424 = vld [vmem:[%s385 + $0x120] sm:$0xff]
        %v425 = vld [vmem:[%s385 + $0x128] sm:$0xff]
        %v426 = vld [vmem:[%s385 + $0x130] sm:$0xff]
        %v427 = vld [vmem:[%s385 + $0x138] sm:$0xff]
        %v428 = vld [vmem:[%s385 + $0x140] sm:$0xff]
        %v429 = vld [vmem:[%s385 + $0x148] sm:$0xff]
        %v430 = vld [vmem:[%s385 + $0x150] sm:$0xff]
        %v431 = vld [vmem:[%s385 + $0x158] sm:$0xff]
        %v432 = vld [vmem:[%s385 + $0x160] sm:$0xff]
        %v433 = vld [vmem:[%s385 + $0x168] sm:$0xff]
        %v434 = vld [vmem:[%s385 + $0x170] sm:$0xff]
        %v435 = vld [vmem:[%s385 + $0x178] sm:$0xff]
        %v436 = vld [vmem:[%s385 + $0x180] sm:$0xff]
        %v437 = vld [vmem:[%s385 + $0x188] sm:$0xff]
        %v438 = vld [vmem:[%s385 + $0x190] sm:$0xff]
        %v439 = vld [vmem:[%s385 + $0x198] sm:$0xff]
        %v440 = vld [vmem:[%s385 + $0x1a0] sm:$0xff]
        %v441 = vld [vmem:[%s385 + $0x1a8] sm:$0xff]
        %v442 = vld [vmem:[%s385 + $0x1b0] sm:$0xff]
        %v443 = vld [vmem:[%s385 + $0x1b8] sm:$0xff]
        %v444 = vld [vmem:[%s385 + $0x1c0] sm:$0xff]
        %v445 = vld [vmem:[%s385 + $0x1c8] sm:$0xff]
        %v446 = vld [vmem:[%s385 + $0x1d0] sm:$0xff]
        %v447 = vld [vmem:[%s385 + $0x1d8] sm:$0xff]
        %v448 = vld [vmem:[%s385 + $0x1e0] sm:$0xff]
        %v449 = vld [vmem:[%s385 + $0x1e8] sm:$0xff]
        %v450 = vld [vmem:[%s385 + $0x1f0] sm:$0xff]
        %v451 = vld [vmem:[%s385 + $0x1f8] sm:$0xff]
        %v452 = vld [vmem:[%s385 + $0x200] sm:$0xff]
        %v453 = vld [vmem:[%s385 + $0x208] sm:$0xff]
        %v454 = vld [vmem:[%s385 + $0x210] sm:$0xff]
        %v455 = vld [vmem:[%s385 + $0x218] sm:$0xff]
        %v456 = vld [vmem:[%s385 + $0x220] sm:$0xff]
        %v457 = vld [vmem:[%s385 + $0x228] sm:$0xff]
        %v458 = vld [vmem:[%s385 + $0x230] sm:$0xff]
        %v459 = vld [vmem:[%s385 + $0x238] sm:$0xff]
        %v460 = vld [vmem:[%s385 + $0x240] sm:$0xff]
        %v461 = vld [vmem:[%s385 + $0x248] sm:$0xff]
        %v462 = vld [vmem:[%s385 + $0x250] sm:$0xff]
        %v463 = vld [vmem:[%s385 + $0x258] sm:$0xff]
        %v464 = vld [vmem:[%s385 + $0x260] sm:$0xff]
        %v465 = vld [vmem:[%s385 + $0x268] sm:$0xff]
        %v466 = vld [vmem:[%s385 + $0x270] sm:$0xff]
        %v467 = vld [vmem:[%s385 + $0x278] sm:$0xff]
        %v468 = vld [vmem:[%s385 + $0x280] sm:$0xff]
        %v469 = vld [vmem:[%s385 + $0x288] sm:$0xff]
        %v470 = vld [vmem:[%s385 + $0x290] sm:$0xff]
        %v471 = vld [vmem:[%s385 + $0x298] sm:$0xff]
        %v472 = vld [vmem:[%s385 + $0x2a0] sm:$0xff]
        %v473 = vld [vmem:[%s385 + $0x2a8] sm:$0xff]
        %v474 = vld [vmem:[%s385 + $0x2b0] sm:$0xff]
        %v475 = vld [vmem:[%s385 + $0x2b8] sm:$0xff]
        %v476 = vld [vmem:[%s385 + $0x2c0] sm:$0xff]
        %v477 = vld [vmem:[%s385 + $0x2c8] sm:$0xff]
        %v478 = vld [vmem:[%s385 + $0x2d0] sm:$0xff]
        %v479 = vld [vmem:[%s385 + $0x2d8] sm:$0xff]
        %v480 = vld [vmem:[%s385 + $0x2e0] sm:$0xff]
        %v481 = vld [vmem:[%s385 + $0x2e8] sm:$0xff]
        %v482 = vld [vmem:[%s385 + $0x2f0] sm:$0xff]
        %v483 = vld [vmem:[%s385 + $0x2f8] sm:$0xff]
        %v484 = vld [vmem:[%s385 + $0x300] sm:$0xff]
        %v485 = vld [vmem:[%s385 + $0x308] sm:$0xff]
        %v486 = vld [vmem:[%s385 + $0x310] sm:$0xff]
        %v487 = vld [vmem:[%s385 + $0x318] sm:$0xff]
        %v488 = vld [vmem:[%s385 + $0x320] sm:$0xff]
        %v489 = vld [vmem:[%s385 + $0x328] sm:$0xff]
        %v490 = vld [vmem:[%s385 + $0x330] sm:$0xff]
        %v491 = vld [vmem:[%s385 + $0x338] sm:$0xff]
        %v492 = vld [vmem:[%s385 + $0x340] sm:$0xff]
        %v493 = vld [vmem:[%s385 + $0x348] sm:$0xff]
        %v494 = vld [vmem:[%s385 + $0x350] sm:$0xff]
        %v495 = vld [vmem:[%s385 + $0x358] sm:$0xff]
        %v496 = vld [vmem:[%s385 + $0x360] sm:$0xff]
        %v497 = vld [vmem:[%s385 + $0x368] sm:$0xff]
        %v498 = vld [vmem:[%s385 + $0x370] sm:$0xff]
        %v499 = vld [vmem:[%s385 + $0x378] sm:$0xff]
        %v500 = vld [vmem:[%s385 + $0x380] sm:$0xff]
        %v501 = vld [vmem:[%s385 + $0x388] sm:$0xff]
        %v502 = vld [vmem:[%s385 + $0x390] sm:$0xff]
        %v503 = vld [vmem:[%s385 + $0x398] sm:$0xff]
        %v504 = vld [vmem:[%s385 + $0x3a0] sm:$0xff]
        %v505 = vld [vmem:[%s385 + $0x3a8] sm:$0xff]
        %v506 = vld [vmem:[%s385 + $0x3b0] sm:$0xff]
        %v507 = vld [vmem:[%s385 + $0x3b8] sm:$0xff]
        %v508 = vld [vmem:[%s385 + $0x3c0] sm:$0xff]
        %v509 = vld [vmem:[%s385 + $0x3c8] sm:$0xff]
        %v510 = vld [vmem:[%s385 + $0x3d0] sm:$0xff]
        %v511 = vld [vmem:[%s385 + $0x3d8] sm:$0xff]
        %v512 = vld [vmem:[%s385 + $0x3e0] sm:$0xff]
        %v513 = vld [vmem:[%s385 + $0x3e8] sm:$0xff]
        %v514 = vld [vmem:[%s385 + $0x3f0] sm:$0xff]
        %v515 = vld [vmem:[%s385 + $0x3f8] sm:$0xff]
        %v516 = vld [vmem:[%s385 + $0x400] sm:$0xff]
        %v517 = vld [vmem:[%s385 + $0x408] sm:$0xff]
        %v518 = vld [vmem:[%s385 + $0x410] sm:$0xff]
        %v519 = vld [vmem:[%s385 + $0x418] sm:$0xff]
        %v520 = vld [vmem:[%s385 + $0x420] sm:$0xff]
        %v521 = vld [vmem:[%s385 + $0x428] sm:$0xff]
        %v522 = vld [vmem:[%s385 + $0x430] sm:$0xff]
        %v523 = vld [vmem:[%s385 + $0x438] sm:$0xff]
        %v524 = vld [vmem:[%s385 + $0x440] sm:$0xff]
        %v525 = vld [vmem:[%s385 + $0x448] sm:$0xff]
        %v526 = vld [vmem:[%s385 + $0x450] sm:$0xff]
        %v527 = vld [vmem:[%s385 + $0x458] sm:$0xff]
        %v528 = vld [vmem:[%s385 + $0x460] sm:$0xff]
        %v529 = vld [vmem:[%s385 + $0x468] sm:$0xff]
        %v530 = vld [vmem:[%s385 + $0x470] sm:$0xff]
        %v531 = vld [vmem:[%s385 + $0x478] sm:$0xff]
        %v532 = vld [vmem:[%s385 + $0x480] sm:$0xff]
        %v533 = vld [vmem:[%s385 + $0x488] sm:$0xff]
        %v534 = vld [vmem:[%s385 + $0x490] sm:$0xff]
        %v535 = vld [vmem:[%s385 + $0x498] sm:$0xff]
        %v536 = vld [vmem:[%s385 + $0x4a0] sm:$0xff]
        %v537 = vld [vmem:[%s385 + $0x4a8] sm:$0xff]
        %v538 = vld [vmem:[%s385 + $0x4b0] sm:$0xff]
        %v539 = vld [vmem:[%s385 + $0x4b8] sm:$0xff]
        %v540 = vld [vmem:[%s385 + $0x4c0] sm:$0xff]
        %v541 = vld [vmem:[%s385 + $0x4c8] sm:$0xff]
        %v542 = vld [vmem:[%s385 + $0x4d0] sm:$0xff]
        %v543 = vld [vmem:[%s385 + $0x4d8] sm:$0xff]
        %v544 = vld [vmem:[%s385 + $0x4e0] sm:$0xff]
        %v545 = vld [vmem:[%s385 + $0x4e8] sm:$0xff]
        %v546 = vld [vmem:[%s385 + $0x4f0] sm:$0xff]
        %v547 = vld [vmem:[%s385 + $0x4f8] sm:$0xff]
        %v548 = vld [vmem:[%s385 + $0x500] sm:$0xff]
        %v549 = vld [vmem:[%s385 + $0x508] sm:$0xff]
        %v550 = vld [vmem:[%s385 + $0x510] sm:$0xff]
        %v551 = vld [vmem:[%s385 + $0x518] sm:$0xff]
        %v552 = vld [vmem:[%s385 + $0x520] sm:$0xff]
        %v553 = vld [vmem:[%s385 + $0x528] sm:$0xff]
        %v554 = vld [vmem:[%s385 + $0x530] sm:$0xff]
        %v555 = vld [vmem:[%s385 + $0x538] sm:$0xff]
        %v556 = vld [vmem:[%s385 + $0x540] sm:$0xff]
        %v557 = vld [vmem:[%s385 + $0x548] sm:$0xff]
        %v558 = vld [vmem:[%s385 + $0x550] sm:$0xff]
        %v559 = vld [vmem:[%s385 + $0x558] sm:$0xff]
        %v560 = vld [vmem:[%s385 + $0x560] sm:$0xff]
        %v561 = vld [vmem:[%s385 + $0x568] sm:$0xff]
        %v562 = vld [vmem:[%s385 + $0x570] sm:$0xff]
        %v563 = vld [vmem:[%s385 + $0x578] sm:$0xff]
        %v564 = vld [vmem:[%s385 + $0x580] sm:$0xff]
        %v565 = vld [vmem:[%s385 + $0x588] sm:$0xff]
        %v566 = vld [vmem:[%s385 + $0x590] sm:$0xff]
        %v567 = vld [vmem:[%s385 + $0x598] sm:$0xff]
        %v568 = vld [vmem:[%s385 + $0x5a0] sm:$0xff]
        %v569 = vld [vmem:[%s385 + $0x5a8] sm:$0xff]
        %v570 = vld [vmem:[%s385 + $0x5b0] sm:$0xff]
        %v571 = vld [vmem:[%s385 + $0x5b8] sm:$0xff]
        %v572 = vld [vmem:[%s385 + $0x5c0] sm:$0xff]
        %v573 = vld [vmem:[%s385 + $0x5c8] sm:$0xff]
        %v574 = vld [vmem:[%s385 + $0x5d0] sm:$0xff]
        %v575 = vld [vmem:[%s385 + $0x5d8] sm:$0xff]
        %v576 = vld [vmem:[%s385 + $0x5e0] sm:$0xff]
        %v577 = vld [vmem:[%s385 + $0x5e8] sm:$0xff]
        %v578 = vld [vmem:[%s385 + $0x5f0] sm:$0xff]
        %v579 = vld [vmem:[%s385 + $0x5f8] sm:$0xff]
        %v580 = vld [vmem:[%s1] sm:$0x3f]
        %v581 = vld [vmem:[%s385 + $0x600] sm:$0xff]
        %v582 = vld [vmem:[%s385 + $0x608] sm:$0xff]
        %v583 = vld [vmem:[%s385 + $0x610] sm:$0xff]
        %v584 = vld [vmem:[%s385 + $0x618] sm:$0xff]
        %v585 = vld [vmem:[%s385 + $0x620] sm:$0xff]
        %v586 = vld [vmem:[%s385 + $0x628] sm:$0xff]
        %v587 = vld [vmem:[%s385 + $0x630] sm:$0xff]
        %v588 = vld [vmem:[%s385 + $0x638] sm:$0xff]
        %v589 = vld [vmem:[%s385 + $0x640] sm:$0xff]
        %v590 = vld [vmem:[%s385 + $0x648] sm:$0xff]
        %v591 = vld [vmem:[%s385 + $0x650] sm:$0xff]
        %v592 = vld [vmem:[%s385 + $0x658] sm:$0xff]
        %v593 = vld [vmem:[%s385 + $0x660] sm:$0xff]
        %v594 = vld [vmem:[%s385 + $0x668] sm:$0xff]
        %v595 = vld [vmem:[%s385 + $0x670] sm:$0xff]
        %v596 = vld [vmem:[%s385 + $0x678] sm:$0xff]
        %s597 = scalar_lea.vmem %s1, 8
        %v598 = vld [vmem:[%s597] sm:$0x3f]
        %vm599 = vcmask 48128
        %v601 = vsel %vm599, %v404, 0
        %v604 = vsel %vm599, %v405, 0
        %v607 = vsel %vm599, %v406, 0
        %v610 = vsel %vm599, %v407, 0
        %v613 = vsel %vm599, %v408, 0
        %v616 = vsel %vm599, %v409, 0
        %v619 = vsel %vm599, %v410, 0
        %v622 = vsel %vm599, %v411, 0
        %v625 = vsel %vm599, %v412, 0
        %v628 = vsel %vm599, %v413, 0
        %v631 = vsel %vm599, %v414, 0
        %v634 = vsel %vm599, %v415, 0
        %v637 = vsel %vm599, %v416, 0
        %v640 = vsel %vm599, %v417, 0
        %v643 = vsel %vm599, %v418, 0
        %v646 = vsel %vm599, %v419, 0
        %v649 = vsel %vm599, %v420, 0
        %v652 = vsel %vm599, %v421, 0
        %v655 = vsel %vm599, %v422, 0
        %v658 = vsel %vm599, %v423, 0
        %v661 = vsel %vm599, %v424, 0
        %v664 = vsel %vm599, %v425, 0
        %v667 = vsel %vm599, %v426, 0
        %v670 = vsel %vm599, %v427, 0
        %v673 = vsel %vm599, %v428, 0
        %v676 = vsel %vm599, %v429, 0
        %v679 = vsel %vm599, %v430, 0
        %v682 = vsel %vm599, %v431, 0
        %v685 = vsel %vm599, %v432, 0
        %v688 = vsel %vm599, %v433, 0
        %v691 = vsel %vm599, %v434, 0
        %v694 = vsel %vm599, %v435, 0
        %v697 = vsel %vm599, %v436, 0
        %v700 = vsel %vm599, %v437, 0
        %v703 = vsel %vm599, %v438, 0
        %v706 = vsel %vm599, %v439, 0
        %v709 = vsel %vm599, %v440, 0
        %v712 = vsel %vm599, %v441, 0
        %v715 = vsel %vm599, %v442, 0
        %v718 = vsel %vm599, %v443, 0
        %v721 = vsel %vm599, %v444, 0
        %v724 = vsel %vm599, %v445, 0
        %v727 = vsel %vm599, %v446, 0
        %v730 = vsel %vm599, %v447, 0
        %v733 = vsel %vm599, %v448, 0
        %v736 = vsel %vm599, %v449, 0
        %v739 = vsel %vm599, %v450, 0
        %v742 = vsel %vm599, %v451, 0
        %v745 = vsel %vm599, %v452, 0
        %v748 = vsel %vm599, %v453, 0
        %v751 = vsel %vm599, %v454, 0
        %v754 = vsel %vm599, %v455, 0
        %v757 = vsel %vm599, %v456, 0
        %v760 = vsel %vm599, %v457, 0
        %v763 = vsel %vm599, %v458, 0
        %v766 = vsel %vm599, %v459, 0
        %v769 = vsel %vm599, %v460, 0
        %v772 = vsel %vm599, %v461, 0
        %v775 = vsel %vm599, %v462, 0
        %v778 = vsel %vm599, %v463, 0
        %v781 = vsel %vm599, %v464, 0
        %v784 = vsel %vm599, %v465, 0
        %v787 = vsel %vm599, %v466, 0
        %v790 = vsel %vm599, %v467, 0
        %v793 = vsel %vm599, %v468, 0
        %v796 = vsel %vm599, %v469, 0
        %v799 = vsel %vm599, %v470, 0
        %v802 = vsel %vm599, %v471, 0
        %v805 = vsel %vm599, %v472, 0
        %v808 = vsel %vm599, %v473, 0
        %v811 = vsel %vm599, %v474, 0
        %v814 = vsel %vm599, %v475, 0
        %v817 = vsel %vm599, %v476, 0
        %v820 = vsel %vm599, %v477, 0
        %v823 = vsel %vm599, %v478, 0
        %v826 = vsel %vm599, %v479, 0
        %v829 = vsel %vm599, %v480, 0
        %v832 = vsel %vm599, %v481, 0
        %v835 = vsel %vm599, %v482, 0
        %v838 = vsel %vm599, %v483, 0
        %v841 = vsel %vm599, %v484, 0
        %v844 = vsel %vm599, %v485, 0
        %v847 = vsel %vm599, %v486, 0
        %v850 = vsel %vm599, %v487, 0
        %v853 = vsel %vm599, %v488, 0
        %v856 = vsel %vm599, %v489, 0
        %v859 = vsel %vm599, %v490, 0
        %v862 = vsel %vm599, %v491, 0
        %v865 = vsel %vm599, %v492, 0
        %v868 = vsel %vm599, %v493, 0
        %v871 = vsel %vm599, %v494, 0
        %v874 = vsel %vm599, %v495, 0
        %v877 = vsel %vm599, %v496, 0
        %v880 = vsel %vm599, %v497, 0
        %v883 = vsel %vm599, %v498, 0
        %v886 = vsel %vm599, %v499, 0
        %v889 = vsel %vm599, %v500, 0
        %v892 = vsel %vm599, %v501, 0
        %v895 = vsel %vm599, %v502, 0
        %v898 = vsel %vm599, %v503, 0
        %v901 = vsel %vm599, %v504, 0
        %v904 = vsel %vm599, %v505, 0
        %v907 = vsel %vm599, %v506, 0
        %v910 = vsel %vm599, %v507, 0
        %v913 = vsel %vm599, %v508, 0
        %v916 = vsel %vm599, %v509, 0
        %v919 = vsel %vm599, %v510, 0
        %v922 = vsel %vm599, %v511, 0
        %v925 = vsel %vm599, %v512, 0
        %v928 = vsel %vm599, %v513, 0
        %v931 = vsel %vm599, %v514, 0
        %v934 = vsel %vm599, %v515, 0
        %v937 = vsel %vm599, %v516, 0
        %v940 = vsel %vm599, %v517, 0
        %v943 = vsel %vm599, %v518, 0
        %v946 = vsel %vm599, %v519, 0
        %v949 = vsel %vm599, %v520, 0
        %v952 = vsel %vm599, %v521, 0
        %v955 = vsel %vm599, %v522, 0
        %v958 = vsel %vm599, %v523, 0
        %v961 = vsel %vm599, %v524, 0
        %v964 = vsel %vm599, %v525, 0
        %v967 = vsel %vm599, %v526, 0
        %v970 = vsel %vm599, %v527, 0
        %v973 = vsel %vm599, %v528, 0
        %v976 = vsel %vm599, %v529, 0
        %v979 = vsel %vm599, %v530, 0
        %v982 = vsel %vm599, %v531, 0
        %v985 = vsel %vm599, %v532, 0
        %v988 = vsel %vm599, %v533, 0
        %v991 = vsel %vm599, %v534, 0
        %v994 = vsel %vm599, %v535, 0
        %v997 = vsel %vm599, %v536, 0
        %v1000 = vsel %vm599, %v537, 0
        %v1003 = vsel %vm599, %v538, 0
        %v1006 = vsel %vm599, %v539, 0
        %v1009 = vsel %vm599, %v540, 0
        %v1012 = vsel %vm599, %v541, 0
        %v1015 = vsel %vm599, %v542, 0
        %v1018 = vsel %vm599, %v543, 0
        %v1021 = vsel %vm599, %v544, 0
        %v1024 = vsel %vm599, %v545, 0
        %v1027 = vsel %vm599, %v546, 0
        %v1030 = vsel %vm599, %v547, 0
        %v1033 = vsel %vm599, %v548, 0
        %v1036 = vsel %vm599, %v549, 0
        %v1039 = vsel %vm599, %v550, 0
        %v1042 = vsel %vm599, %v551, 0
        %v1045 = vsel %vm599, %v552, 0
        %v1048 = vsel %vm599, %v553, 0
        %v1051 = vsel %vm599, %v554, 0
        %v1054 = vsel %vm599, %v555, 0
        %v1057 = vsel %vm599, %v556, 0
        %v1060 = vsel %vm599, %v557, 0
        %v1063 = vsel %vm599, %v558, 0
        %v1066 = vsel %vm599, %v559, 0
        %v1069 = vsel %vm599, %v560, 0
        %v1072 = vsel %vm599, %v561, 0
        %v1075 = vsel %vm599, %v562, 0
        %v1078 = vsel %vm599, %v563, 0
        %v1081 = vsel %vm599, %v564, 0
        %v1084 = vsel %vm599, %v565, 0
        %v1087 = vsel %vm599, %v566, 0
        %v1090 = vsel %vm599, %v567, 0
        %v1093 = vsel %vm599, %v568, 0
        %v1096 = vsel %vm599, %v569, 0
        %v1099 = vsel %vm599, %v570, 0
        %v1102 = vsel %vm599, %v571, 0
        %v1105 = vsel %vm599, %v572, 0
        %v1108 = vsel %vm599, %v573, 0
        %v1111 = vsel %vm599, %v574, 0
        %v1114 = vsel %vm599, %v575, 0
        %v1117 = vsel %vm599, %v576, 0
        %v1120 = vsel %vm599, %v577, 0
        %v1123 = vsel %vm599, %v578, 0
        %v1126 = vsel %vm599, %v579, 0
        %v1129 = vsel %vm599, %v581, 0
        %v1132 = vsel %vm599, %v582, 0
        %v1135 = vsel %vm599, %v583, 0
        %v1138 = vsel %vm599, %v584, 0
        %v1141 = vsel %vm599, %v585, 0
        %v1144 = vsel %vm599, %v586, 0
        %v1147 = vsel %vm599, %v587, 0
        %v1150 = vsel %vm599, %v588, 0
        %v1153 = vsel %vm599, %v589, 0
        %v1156 = vsel %vm599, %v590, 0
        %v1159 = vsel %vm599, %v591, 0
        %v1162 = vsel %vm599, %v592, 0
        %v1165 = vsel %vm599, %v593, 0
        %v1168 = vsel %vm599, %v594, 0
        %v1171 = vsel %vm599, %v595, 0
        %v1174 = vsel %vm599, %v596, 0
        %vm1176 = vcmask 1045504
        %v1178 = vsel %vm1176, %v598, 0
        %1180 = vmatpush.msra.mxu0 0.0
        %1181 = vmatpush.msra.mxu0 0.0
        %1182 = vmatpush.msra.mxu0 0.0
        %1183 = vmatpush.msra.mxu0 0.0
        %1184 = vmatpush.msra.mxu0 0.0
        %1185 = vmatpush.msra.mxu0 0.0
        %1186 = vmatpush.msra.mxu0 0.0
        %1187 = vmatpush.msra.mxu0 0.0
        %1188 = vmatpush.msra.mxu0 0.0
        %1189 = vmatpush.msra.mxu0 0.0
        %1190 = vmatpush.msra.mxu0 0.0
        %1191 = vmatpush.msra.mxu0 0.0
        %1192 = vmatpush.msra.mxu0 0.0
        %1193 = vmatpush.msra.mxu0 0.0
        %1194 = vmatpush.msra.mxu0 0.0
        %1195 = vmatpush.msra.mxu0 %v1178
        %1196 = vmatmul.f32.gmra.mxu0 %v601
        %v1197 = vpop.f32.mrf.mxu0
        %v1198 = vadd.f32 0.0, %v1197
        %1199 = vmatmul.f32.gmra.mxu0 %v604
        %v1200 = vpop.f32.mrf.mxu0
        %v1201 = vadd.f32 0.0, %v1200
        %1202 = vmatmul.f32.gmra.mxu0 %v607
        %v1203 = vpop.f32.mrf.mxu0
        %v1204 = vadd.f32 0.0, %v1203
        %1205 = vmatmul.f32.gmra.mxu0 %v610
        %v1206 = vpop.f32.mrf.mxu0
        %v1207 = vadd.f32 0.0, %v1206
        %1208 = vmatmul.f32.gmra.mxu0 %v613
        %v1209 = vpop.f32.mrf.mxu0
        %v1210 = vadd.f32 0.0, %v1209
        %1211 = vmatmul.f32.gmra.mxu0 %v616
        %v1212 = vpop.f32.mrf.mxu0
        %v1213 = vadd.f32 0.0, %v1212
        %1214 = vmatmul.f32.gmra.mxu0 %v619
        %v1215 = vpop.f32.mrf.mxu0
        %v1216 = vadd.f32 0.0, %v1215
        %1217 = vmatmul.f32.gmra.mxu0 %v622
        %v1218 = vpop.f32.mrf.mxu0
        %v1219 = vadd.f32 0.0, %v1218
        %1220 = vmatmul.f32.gmra.mxu0 %v625
        %v1221 = vpop.f32.mrf.mxu0
        %v1222 = vadd.f32 0.0, %v1221
        %1223 = vmatmul.f32.gmra.mxu0 %v628
        %v1224 = vpop.f32.mrf.mxu0
        %v1225 = vadd.f32 0.0, %v1224
        %1226 = vmatmul.f32.gmra.mxu0 %v631
        %v1227 = vpop.f32.mrf.mxu0
        %v1228 = vadd.f32 0.0, %v1227
        %1229 = vmatmul.f32.gmra.mxu0 %v634
        %v1230 = vpop.f32.mrf.mxu0
        %v1231 = vadd.f32 0.0, %v1230
        %1232 = vmatmul.f32.gmra.mxu0 %v637
        %v1233 = vpop.f32.mrf.mxu0
        %v1234 = vadd.f32 0.0, %v1233
        %1235 = vmatmul.f32.gmra.mxu0 %v640
        %v1236 = vpop.f32.mrf.mxu0
        %v1237 = vadd.f32 0.0, %v1236
        %1238 = vmatmul.f32.gmra.mxu0 %v643
        %v1239 = vpop.f32.mrf.mxu0
        %v1240 = vadd.f32 0.0, %v1239
        %1241 = vmatmul.f32.gmra.mxu0 %v646
        %v1242 = vpop.f32.mrf.mxu0
        %v1243 = vadd.f32 0.0, %v1242
        %1244 = vmatmul.f32.gmra.mxu0 %v649
        %v1245 = vpop.f32.mrf.mxu0
        %v1246 = vadd.f32 0.0, %v1245
        %1247 = vmatmul.f32.gmra.mxu0 %v652
        %v1248 = vpop.f32.mrf.mxu0
        %v1249 = vadd.f32 0.0, %v1248
        %1250 = vmatmul.f32.gmra.mxu0 %v655
        %v1251 = vpop.f32.mrf.mxu0
        %v1252 = vadd.f32 0.0, %v1251
        %1253 = vmatmul.f32.gmra.mxu0 %v658
        %v1254 = vpop.f32.mrf.mxu0
        %v1255 = vadd.f32 0.0, %v1254
        %1256 = vmatmul.f32.gmra.mxu0 %v661
        %v1257 = vpop.f32.mrf.mxu0
        %v1258 = vadd.f32 0.0, %v1257
        %1259 = vmatmul.f32.gmra.mxu0 %v664
        %v1260 = vpop.f32.mrf.mxu0
        %v1261 = vadd.f32 0.0, %v1260
        %1262 = vmatmul.f32.gmra.mxu0 %v667
        %v1263 = vpop.f32.mrf.mxu0
        %v1264 = vadd.f32 0.0, %v1263
        %1265 = vmatmul.f32.gmra.mxu0 %v670
        %v1266 = vpop.f32.mrf.mxu0
        %v1267 = vadd.f32 0.0, %v1266
        %1268 = vmatmul.f32.gmra.mxu0 %v673
        %v1269 = vpop.f32.mrf.mxu0
        %v1270 = vadd.f32 0.0, %v1269
        %1271 = vmatmul.f32.gmra.mxu0 %v676
        %v1272 = vpop.f32.mrf.mxu0
        %v1273 = vadd.f32 0.0, %v1272
        %1274 = vmatmul.f32.gmra.mxu0 %v679
        %v1275 = vpop.f32.mrf.mxu0
        %v1276 = vadd.f32 0.0, %v1275
        %1277 = vmatmul.f32.gmra.mxu0 %v682
        %v1278 = vpop.f32.mrf.mxu0
        %v1279 = vadd.f32 0.0, %v1278
        %1280 = vmatmul.f32.gmra.mxu0 %v685
        %v1281 = vpop.f32.mrf.mxu0
        %v1282 = vadd.f32 0.0, %v1281
        %1283 = vmatmul.f32.gmra.mxu0 %v688
        %v1284 = vpop.f32.mrf.mxu0
        %v1285 = vadd.f32 0.0, %v1284
        %1286 = vmatmul.f32.gmra.mxu0 %v691
        %v1287 = vpop.f32.mrf.mxu0
        %v1288 = vadd.f32 0.0, %v1287
        %1289 = vmatmul.f32.gmra.mxu0 %v694
        %v1290 = vpop.f32.mrf.mxu0
        %v1291 = vadd.f32 0.0, %v1290
        %1292 = vmatmul.f32.gmra.mxu0 %v697
        %v1293 = vpop.f32.mrf.mxu0
        %1294 = vmatmul.f32.gmra.mxu0 %v700
        %v1295 = vpop.f32.mrf.mxu0
        %1296 = vmatmul.f32.gmra.mxu0 %v703
        %v1297 = vpop.f32.mrf.mxu0
        %1298 = vmatmul.f32.gmra.mxu0 %v706
        %v1299 = vpop.f32.mrf.mxu0
        %1300 = vmatmul.f32.gmra.mxu0 %v709
        %v1301 = vpop.f32.mrf.mxu0
        %1302 = vmatmul.f32.gmra.mxu0 %v712
        %v1303 = vpop.f32.mrf.mxu0
        %1304 = vmatmul.f32.gmra.mxu0 %v715
        %v1305 = vpop.f32.mrf.mxu0
        %1306 = vmatmul.f32.gmra.mxu0 %v718
        %v1307 = vpop.f32.mrf.mxu0
        %1308 = vmatmul.f32.gmra.mxu0 %v721
        %v1309 = vpop.f32.mrf.mxu0
        %1310 = vmatmul.f32.gmra.mxu0 %v724
        %v1311 = vpop.f32.mrf.mxu0
        %1312 = vmatmul.f32.gmra.mxu0 %v727
        %v1313 = vpop.f32.mrf.mxu0
        %1314 = vmatmul.f32.gmra.mxu0 %v730
        %v1315 = vpop.f32.mrf.mxu0
        %1316 = vmatmul.f32.gmra.mxu0 %v733
        %v1317 = vpop.f32.mrf.mxu0
        %1318 = vmatmul.f32.gmra.mxu0 %v736
        %v1319 = vpop.f32.mrf.mxu0
        %1320 = vmatmul.f32.gmra.mxu0 %v739
        %v1321 = vpop.f32.mrf.mxu0
        %1322 = vmatmul.f32.gmra.mxu0 %v742
        %v1323 = vpop.f32.mrf.mxu0
        %1324 = vmatmul.f32.gmra.mxu0 %v745
        %v1325 = vpop.f32.mrf.mxu0
        %v1326 = vadd.f32 0.0, %v1325
        %1327 = vmatmul.f32.gmra.mxu0 %v748
        %v1328 = vpop.f32.mrf.mxu0
        %v1329 = vadd.f32 0.0, %v1328
        %1330 = vmatmul.f32.gmra.mxu0 %v751
        %v1331 = vpop.f32.mrf.mxu0
        %v1332 = vadd.f32 0.0, %v1331
        %1333 = vmatmul.f32.gmra.mxu0 %v754
        %v1334 = vpop.f32.mrf.mxu0
        %v1335 = vadd.f32 0.0, %v1334
        %1336 = vmatmul.f32.gmra.mxu0 %v757
        %v1337 = vpop.f32.mrf.mxu0
        %v1338 = vadd.f32 0.0, %v1337
        %1339 = vmatmul.f32.gmra.mxu0 %v760
        %v1340 = vpop.f32.mrf.mxu0
        %v1341 = vadd.f32 0.0, %v1340
        %1342 = vmatmul.f32.gmra.mxu0 %v763
        %v1343 = vpop.f32.mrf.mxu0
        %v1344 = vadd.f32 0.0, %v1343
        %1345 = vmatmul.f32.gmra.mxu0 %v766
        %v1346 = vpop.f32.mrf.mxu0
        %v1347 = vadd.f32 0.0, %v1346
        %1348 = vmatmul.f32.gmra.mxu0 %v769
        %v1349 = vpop.f32.mrf.mxu0
        %v1350 = vadd.f32 0.0, %v1349
        %1351 = vmatmul.f32.gmra.mxu0 %v772
        %v1352 = vpop.f32.mrf.mxu0
        %v1353 = vadd.f32 0.0, %v1352
        %1354 = vmatmul.f32.gmra.mxu0 %v775
        %v1355 = vpop.f32.mrf.mxu0
        %v1356 = vadd.f32 0.0, %v1355
        %1357 = vmatmul.f32.gmra.mxu0 %v778
        %v1358 = vpop.f32.mrf.mxu0
        %v1359 = vadd.f32 0.0, %v1358
        %1360 = vmatmul.f32.gmra.mxu0 %v781
        %v1361 = vpop.f32.mrf.mxu0
        %v1362 = vadd.f32 0.0, %v1361
        %1363 = vmatmul.f32.gmra.mxu0 %v784
        %v1364 = vpop.f32.mrf.mxu0
        %v1365 = vadd.f32 0.0, %v1364
        %1366 = vmatmul.f32.gmra.mxu0 %v787
        %v1367 = vpop.f32.mrf.mxu0
        %v1368 = vadd.f32 0.0, %v1367
        %1369 = vmatmul.f32.gmra.mxu0 %v790
        %v1370 = vpop.f32.mrf.mxu0
        %v1371 = vadd.f32 0.0, %v1370
        %1372 = vmatmul.f32.gmra.mxu0 %v793
        %v1373 = vpop.f32.mrf.mxu0
        %v1374 = vadd.f32 0.0, %v1373
        %1375 = vmatmul.f32.gmra.mxu0 %v796
        %v1376 = vpop.f32.mrf.mxu0
        %v1377 = vadd.f32 0.0, %v1376
        %1378 = vmatmul.f32.gmra.mxu0 %v799
        %v1379 = vpop.f32.mrf.mxu0
        %v1380 = vadd.f32 0.0, %v1379
        %1381 = vmatmul.f32.gmra.mxu0 %v802
        %v1382 = vpop.f32.mrf.mxu0
        %v1383 = vadd.f32 0.0, %v1382
        %1384 = vmatmul.f32.gmra.mxu0 %v805
        %v1385 = vpop.f32.mrf.mxu0
        %v1386 = vadd.f32 0.0, %v1385
        %1387 = vmatmul.f32.gmra.mxu0 %v808
        %v1388 = vpop.f32.mrf.mxu0
        %v1389 = vadd.f32 0.0, %v1388
        %1390 = vmatmul.f32.gmra.mxu0 %v811
        %v1391 = vpop.f32.mrf.mxu0
        %v1392 = vadd.f32 0.0, %v1391
        %1393 = vmatmul.f32.gmra.mxu0 %v814
        %v1394 = vpop.f32.mrf.mxu0
        %v1395 = vadd.f32 0.0, %v1394
        %1396 = vmatmul.f32.gmra.mxu0 %v817
        %v1397 = vpop.f32.mrf.mxu0
        %v1398 = vadd.f32 0.0, %v1397
        %1399 = vmatmul.f32.gmra.mxu0 %v820
        %v1400 = vpop.f32.mrf.mxu0
        %v1401 = vadd.f32 0.0, %v1400
        %1402 = vmatmul.f32.gmra.mxu0 %v823
        %v1403 = vpop.f32.mrf.mxu0
        %v1404 = vadd.f32 0.0, %v1403
        %1405 = vmatmul.f32.gmra.mxu0 %v826
        %v1406 = vpop.f32.mrf.mxu0
        %v1407 = vadd.f32 0.0, %v1406
        %1408 = vmatmul.f32.gmra.mxu0 %v829
        %v1409 = vpop.f32.mrf.mxu0
        %v1410 = vadd.f32 0.0, %v1409
        %1411 = vmatmul.f32.gmra.mxu0 %v832
        %v1412 = vpop.f32.mrf.mxu0
        %v1413 = vadd.f32 0.0, %v1412
        %1414 = vmatmul.f32.gmra.mxu0 %v835
        %v1415 = vpop.f32.mrf.mxu0
        %v1416 = vadd.f32 0.0, %v1415
        %1417 = vmatmul.f32.gmra.mxu0 %v838
        %v1418 = vpop.f32.mrf.mxu0
        %v1419 = vadd.f32 0.0, %v1418
        %1420 = vmatmul.f32.gmra.mxu0 %v841
        %v1421 = vpop.f32.mrf.mxu0
        %1422 = vmatmul.f32.gmra.mxu0 %v844
        %v1423 = vpop.f32.mrf.mxu0
        %1424 = vmatmul.f32.gmra.mxu0 %v847
        %v1425 = vpop.f32.mrf.mxu0
        %1426 = vmatmul.f32.gmra.mxu0 %v850
        %v1427 = vpop.f32.mrf.mxu0
        %1428 = vmatmul.f32.gmra.mxu0 %v853
        %v1429 = vpop.f32.mrf.mxu0
        %1430 = vmatmul.f32.gmra.mxu0 %v856
        %v1431 = vpop.f32.mrf.mxu0
        %1432 = vmatmul.f32.gmra.mxu0 %v859
        %v1433 = vpop.f32.mrf.mxu0
        %1434 = vmatmul.f32.gmra.mxu0 %v862
        %v1435 = vpop.f32.mrf.mxu0
        %1436 = vmatmul.f32.gmra.mxu0 %v865
        %v1437 = vpop.f32.mrf.mxu0
        %1438 = vmatmul.f32.gmra.mxu0 %v868
        %v1439 = vpop.f32.mrf.mxu0
        %1440 = vmatmul.f32.gmra.mxu0 %v871
        %v1441 = vpop.f32.mrf.mxu0
        %1442 = vmatmul.f32.gmra.mxu0 %v874
        %v1443 = vpop.f32.mrf.mxu0
        %1444 = vmatmul.f32.gmra.mxu0 %v877
        %v1445 = vpop.f32.mrf.mxu0
        %1446 = vmatmul.f32.gmra.mxu0 %v880
        %v1447 = vpop.f32.mrf.mxu0
        %1448 = vmatmul.f32.gmra.mxu0 %v883
        %v1449 = vpop.f32.mrf.mxu0
        %1450 = vmatmul.f32.gmra.mxu0 %v886
        %v1451 = vpop.f32.mrf.mxu0
        %1452 = vmatmul.f32.gmra.mxu0 %v889
        %v1453 = vpop.f32.mrf.mxu0
        %v1454 = vadd.f32 0.0, %v1453
        %1455 = vmatmul.f32.gmra.mxu0 %v892
        %v1456 = vpop.f32.mrf.mxu0
        %v1457 = vadd.f32 0.0, %v1456
        %1458 = vmatmul.f32.gmra.mxu0 %v895
        %v1459 = vpop.f32.mrf.mxu0
        %v1460 = vadd.f32 0.0, %v1459
        %1461 = vmatmul.f32.gmra.mxu0 %v898
        %v1462 = vpop.f32.mrf.mxu0
        %v1463 = vadd.f32 0.0, %v1462
        %1464 = vmatmul.f32.gmra.mxu0 %v901
        %v1465 = vpop.f32.mrf.mxu0
        %v1466 = vadd.f32 0.0, %v1465
        %1467 = vmatmul.f32.gmra.mxu0 %v904
        %v1468 = vpop.f32.mrf.mxu0
        %v1469 = vadd.f32 0.0, %v1468
        %1470 = vmatmul.f32.gmra.mxu0 %v907
        %v1471 = vpop.f32.mrf.mxu0
        %v1472 = vadd.f32 0.0, %v1471
        %1473 = vmatmul.f32.gmra.mxu0 %v910
        %v1474 = vpop.f32.mrf.mxu0
        %v1475 = vadd.f32 0.0, %v1474
        %1476 = vmatmul.f32.gmra.mxu0 %v913
        %v1477 = vpop.f32.mrf.mxu0
        %v1478 = vadd.f32 0.0, %v1477
        %1479 = vmatmul.f32.gmra.mxu0 %v916
        %v1480 = vpop.f32.mrf.mxu0
        %v1481 = vadd.f32 0.0, %v1480
        %1482 = vmatmul.f32.gmra.mxu0 %v919
        %v1483 = vpop.f32.mrf.mxu0
        %v1484 = vadd.f32 0.0, %v1483
        %1485 = vmatmul.f32.gmra.mxu0 %v922
        %v1486 = vpop.f32.mrf.mxu0
        %v1487 = vadd.f32 0.0, %v1486
        %1488 = vmatmul.f32.gmra.mxu0 %v925
        %v1489 = vpop.f32.mrf.mxu0
        %v1490 = vadd.f32 0.0, %v1489
        %1491 = vmatmul.f32.gmra.mxu0 %v928
        %v1492 = vpop.f32.mrf.mxu0
        %v1493 = vadd.f32 0.0, %v1492
        %1494 = vmatmul.f32.gmra.mxu0 %v931
        %v1495 = vpop.f32.mrf.mxu0
        %v1496 = vadd.f32 0.0, %v1495
        %1497 = vmatmul.f32.gmra.mxu0 %v934
        %v1498 = vpop.f32.mrf.mxu0
        %v1499 = vadd.f32 0.0, %v1498
        %1500 = vmatmul.f32.gmra.mxu0 %v937
        %v1501 = vpop.f32.mrf.mxu0
        %v1502 = vadd.f32 0.0, %v1501
        %1503 = vmatmul.f32.gmra.mxu0 %v940
        %v1504 = vpop.f32.mrf.mxu0
        %v1505 = vadd.f32 0.0, %v1504
        %1506 = vmatmul.f32.gmra.mxu0 %v943
        %v1507 = vpop.f32.mrf.mxu0
        %v1508 = vadd.f32 0.0, %v1507
        %1509 = vmatmul.f32.gmra.mxu0 %v946
        %v1510 = vpop.f32.mrf.mxu0
        %v1511 = vadd.f32 0.0, %v1510
        %1512 = vmatmul.f32.gmra.mxu0 %v949
        %v1513 = vpop.f32.mrf.mxu0
        %v1514 = vadd.f32 0.0, %v1513
        %1515 = vmatmul.f32.gmra.mxu0 %v952
        %v1516 = vpop.f32.mrf.mxu0
        %v1517 = vadd.f32 0.0, %v1516
        %1518 = vmatmul.f32.gmra.mxu0 %v955
        %v1519 = vpop.f32.mrf.mxu0
        %v1520 = vadd.f32 0.0, %v1519
        %1521 = vmatmul.f32.gmra.mxu0 %v958
        %v1522 = vpop.f32.mrf.mxu0
        %v1523 = vadd.f32 0.0, %v1522
        %1524 = vmatmul.f32.gmra.mxu0 %v961
        %v1525 = vpop.f32.mrf.mxu0
        %v1526 = vadd.f32 0.0, %v1525
        %1527 = vmatmul.f32.gmra.mxu0 %v964
        %v1528 = vpop.f32.mrf.mxu0
        %v1529 = vadd.f32 0.0, %v1528
        %1530 = vmatmul.f32.gmra.mxu0 %v967
        %v1531 = vpop.f32.mrf.mxu0
        %v1532 = vadd.f32 0.0, %v1531
        %1533 = vmatmul.f32.gmra.mxu0 %v970
        %v1534 = vpop.f32.mrf.mxu0
        %v1535 = vadd.f32 0.0, %v1534
        %1536 = vmatmul.f32.gmra.mxu0 %v973
        %v1537 = vpop.f32.mrf.mxu0
        %v1538 = vadd.f32 0.0, %v1537
        %1539 = vmatmul.f32.gmra.mxu0 %v976
        %v1540 = vpop.f32.mrf.mxu0
        %v1541 = vadd.f32 0.0, %v1540
        %1542 = vmatmul.f32.gmra.mxu0 %v979
        %v1543 = vpop.f32.mrf.mxu0
        %v1544 = vadd.f32 0.0, %v1543
        %1545 = vmatmul.f32.gmra.mxu0 %v982
        %v1546 = vpop.f32.mrf.mxu0
        %v1547 = vadd.f32 0.0, %v1546
        %1548 = vmatmul.f32.gmra.mxu0 %v985
        %v1549 = vpop.f32.mrf.mxu0
        %1550 = vmatmul.f32.gmra.mxu0 %v988
        %v1551 = vpop.f32.mrf.mxu0
        %1552 = vmatmul.f32.gmra.mxu0 %v991
        %v1553 = vpop.f32.mrf.mxu0
        %1554 = vmatmul.f32.gmra.mxu0 %v994
        %v1555 = vpop.f32.mrf.mxu0
        %1556 = vmatmul.f32.gmra.mxu0 %v997
        %v1557 = vpop.f32.mrf.mxu0
        %1558 = vmatmul.f32.gmra.mxu0 %v1000
        %v1559 = vpop.f32.mrf.mxu0
        %1560 = vmatmul.f32.gmra.mxu0 %v1003
        %v1561 = vpop.f32.mrf.mxu0
        %1562 = vmatmul.f32.gmra.mxu0 %v1006
        %v1563 = vpop.f32.mrf.mxu0
        %1564 = vmatmul.f32.gmra.mxu0 %v1009
        %v1565 = vpop.f32.mrf.mxu0
        %1566 = vmatmul.f32.gmra.mxu0 %v1012
        %v1567 = vpop.f32.mrf.mxu0
        %1568 = vmatmul.f32.gmra.mxu0 %v1015
        %v1569 = vpop.f32.mrf.mxu0
        %1570 = vmatmul.f32.gmra.mxu0 %v1018
        %v1571 = vpop.f32.mrf.mxu0
        %1572 = vmatmul.f32.gmra.mxu0 %v1021
        %v1573 = vpop.f32.mrf.mxu0
        %1574 = vmatmul.f32.gmra.mxu0 %v1024
        %v1575 = vpop.f32.mrf.mxu0
        %1576 = vmatmul.f32.gmra.mxu0 %v1027
        %v1577 = vpop.f32.mrf.mxu0
        %1578 = vmatmul.f32.gmra.mxu0 %v1030
        %v1579 = vpop.f32.mrf.mxu0
        %1580 = vmatmul.f32.gmra.mxu0 %v1033
        %v1581 = vpop.f32.mrf.mxu0
        %v1582 = vadd.f32 0.0, %v1581
        %1583 = vmatmul.f32.gmra.mxu0 %v1036
        %v1584 = vpop.f32.mrf.mxu0
        %v1585 = vadd.f32 0.0, %v1584
        %1586 = vmatmul.f32.gmra.mxu0 %v1039
        %v1587 = vpop.f32.mrf.mxu0
        %v1588 = vadd.f32 0.0, %v1587
        %1589 = vmatmul.f32.gmra.mxu0 %v1042
        %v1590 = vpop.f32.mrf.mxu0
        %v1591 = vadd.f32 0.0, %v1590
        %1592 = vmatmul.f32.gmra.mxu0 %v1045
        %v1593 = vpop.f32.mrf.mxu0
        %v1594 = vadd.f32 0.0, %v1593
        %1595 = vmatmul.f32.gmra.mxu0 %v1048
        %v1596 = vpop.f32.mrf.mxu0
        %v1597 = vadd.f32 0.0, %v1596
        %1598 = vmatmul.f32.gmra.mxu0 %v1051
        %v1599 = vpop.f32.mrf.mxu0
        %v1600 = vadd.f32 0.0, %v1599
        %1601 = vmatmul.f32.gmra.mxu0 %v1054
        %v1602 = vpop.f32.mrf.mxu0
        %v1603 = vadd.f32 0.0, %v1602
        %1604 = vmatmul.f32.gmra.mxu0 %v1057
        %v1605 = vpop.f32.mrf.mxu0
        %v1606 = vadd.f32 0.0, %v1605
        %1607 = vmatmul.f32.gmra.mxu0 %v1060
        %v1608 = vpop.f32.mrf.mxu0
        %v1609 = vadd.f32 0.0, %v1608
        %1610 = vmatmul.f32.gmra.mxu0 %v1063
        %v1611 = vpop.f32.mrf.mxu0
        %v1612 = vadd.f32 0.0, %v1611
        %1613 = vmatmul.f32.gmra.mxu0 %v1066
        %v1614 = vpop.f32.mrf.mxu0
        %v1615 = vadd.f32 0.0, %v1614
        %1616 = vmatmul.f32.gmra.mxu0 %v1069
        %v1617 = vpop.f32.mrf.mxu0
        %v1618 = vadd.f32 0.0, %v1617
        %1619 = vmatmul.f32.gmra.mxu0 %v1072
        %v1620 = vpop.f32.mrf.mxu0
        %v1621 = vadd.f32 0.0, %v1620
        %1622 = vmatmul.f32.gmra.mxu0 %v1075
        %v1623 = vpop.f32.mrf.mxu0
        %v1624 = vadd.f32 0.0, %v1623
        %1625 = vmatmul.f32.gmra.mxu0 %v1078
        %v1626 = vpop.f32.mrf.mxu0
        %v1627 = vadd.f32 0.0, %v1626
        %1628 = vmatmul.f32.gmra.mxu0 %v1081
        %v1629 = vpop.f32.mrf.mxu0
        %v1630 = vadd.f32 0.0, %v1629
        %1631 = vmatmul.f32.gmra.mxu0 %v1084
        %v1632 = vpop.f32.mrf.mxu0
        %v1633 = vadd.f32 0.0, %v1632
        %1634 = vmatmul.f32.gmra.mxu0 %v1087
        %v1635 = vpop.f32.mrf.mxu0
        %v1636 = vadd.f32 0.0, %v1635
        %1637 = vmatmul.f32.gmra.mxu0 %v1090
        %v1638 = vpop.f32.mrf.mxu0
        %v1639 = vadd.f32 0.0, %v1638
        %1640 = vmatmul.f32.gmra.mxu0 %v1093
        %v1641 = vpop.f32.mrf.mxu0
        %v1642 = vadd.f32 0.0, %v1641
        %1643 = vmatmul.f32.gmra.mxu0 %v1096
        %v1644 = vpop.f32.mrf.mxu0
        %v1645 = vadd.f32 0.0, %v1644
        %1646 = vmatmul.f32.gmra.mxu0 %v1099
        %v1647 = vpop.f32.mrf.mxu0
        %v1648 = vadd.f32 0.0, %v1647
        %1649 = vmatmul.f32.gmra.mxu0 %v1102
        %v1650 = vpop.f32.mrf.mxu0
        %v1651 = vadd.f32 0.0, %v1650
        %1652 = vmatmul.f32.gmra.mxu0 %v1105
        %v1653 = vpop.f32.mrf.mxu0
        %v1654 = vadd.f32 0.0, %v1653
        %1655 = vmatmul.f32.gmra.mxu0 %v1108
        %v1656 = vpop.f32.mrf.mxu0
        %v1657 = vadd.f32 0.0, %v1656
        %1658 = vmatmul.f32.gmra.mxu0 %v1111
        %v1659 = vpop.f32.mrf.mxu0
        %v1660 = vadd.f32 0.0, %v1659
        %1661 = vmatmul.f32.gmra.mxu0 %v1114
        %v1662 = vpop.f32.mrf.mxu0
        %v1663 = vadd.f32 0.0, %v1662
        %1664 = vmatmul.f32.gmra.mxu0 %v1117
        %v1665 = vpop.f32.mrf.mxu0
        %v1666 = vadd.f32 0.0, %v1665
        %1667 = vmatmul.f32.gmra.mxu0 %v1120
        %v1668 = vpop.f32.mrf.mxu0
        %v1669 = vadd.f32 0.0, %v1668
        %1670 = vmatmul.f32.gmra.mxu0 %v1123
        %v1671 = vpop.f32.mrf.mxu0
        %v1672 = vadd.f32 0.0, %v1671
        %1673 = vmatmul.f32.gmra.mxu0 %v1126
        %v1674 = vpop.f32.mrf.mxu0
        %v1675 = vadd.f32 0.0, %v1674
        %1676 = vmatmul.f32.gmra.mxu0 %v1129
        %v1677 = vpop.f32.mrf.mxu0
        %1678 = vmatmul.f32.gmra.mxu0 %v1132
        %v1679 = vpop.f32.mrf.mxu0
        %1680 = vmatmul.f32.gmra.mxu0 %v1135
        %v1681 = vpop.f32.mrf.mxu0
        %1682 = vmatmul.f32.gmra.mxu0 %v1138
        %v1683 = vpop.f32.mrf.mxu0
        %1684 = vmatmul.f32.gmra.mxu0 %v1141
        %v1685 = vpop.f32.mrf.mxu0
        %1686 = vmatmul.f32.gmra.mxu0 %v1144
        %v1687 = vpop.f32.mrf.mxu0
        %1688 = vmatmul.f32.gmra.mxu0 %v1147
        %v1689 = vpop.f32.mrf.mxu0
        %1690 = vmatmul.f32.gmra.mxu0 %v1150
        %v1691 = vpop.f32.mrf.mxu0
        %1692 = vmatmul.f32.gmra.mxu0 %v1153
        %v1693 = vpop.f32.mrf.mxu0
        %1694 = vmatmul.f32.gmra.mxu0 %v1156
        %v1695 = vpop.f32.mrf.mxu0
        %1696 = vmatmul.f32.gmra.mxu0 %v1159
        %v1697 = vpop.f32.mrf.mxu0
        %1698 = vmatmul.f32.gmra.mxu0 %v1162
        %v1699 = vpop.f32.mrf.mxu0
        %1700 = vmatmul.f32.gmra.mxu0 %v1165
        %v1701 = vpop.f32.mrf.mxu0
        %1702 = vmatmul.f32.gmra.mxu0 %v1168
        %v1703 = vpop.f32.mrf.mxu0
        %1704 = vmatmul.f32.gmra.mxu0 %v1171
        %v1705 = vpop.f32.mrf.mxu0
        %1706 = vmatmul.f32.gmra.mxu0 %v1174
        %v1707 = vpop.f32.mrf.mxu0
        %1708 = vdwg.mxu0
        %v1710 = vsel %vm599, %v388, 0
        %v1713 = vsel %vm599, %v389, 0
        %v1716 = vsel %vm599, %v390, 0
        %v1719 = vsel %vm599, %v391, 0
        %v1722 = vsel %vm599, %v392, 0
        %v1725 = vsel %vm599, %v393, 0
        %v1728 = vsel %vm599, %v394, 0
        %v1731 = vsel %vm599, %v395, 0
        %v1734 = vsel %vm599, %v396, 0
        %v1737 = vsel %vm599, %v397, 0
        %v1740 = vsel %vm599, %v398, 0
        %v1743 = vsel %vm599, %v399, 0
        %v1746 = vsel %vm599, %v400, 0
        %v1749 = vsel %vm599, %v401, 0
        %v1752 = vsel %vm599, %v402, 0
        %v1755 = vsel %vm599, %v403, 0
        %v1758 = vsel %vm1176, %v580, 0
        %1760 = vmatpush.msra.mxu0 0.0
        %1761 = vmatpush.msra.mxu0 0.0
        %1762 = vmatpush.msra.mxu0 0.0
        %1763 = vmatpush.msra.mxu0 0.0
        %1764 = vmatpush.msra.mxu0 0.0
        %1765 = vmatpush.msra.mxu0 0.0
        %1766 = vmatpush.msra.mxu0 0.0
        %1767 = vmatpush.msra.mxu0 0.0
        %1768 = vmatpush.msra.mxu0 0.0
        %1769 = vmatpush.msra.mxu0 0.0
        %1770 = vmatpush.msra.mxu0 0.0
        %1771 = vmatpush.msra.mxu0 0.0
        %1772 = vmatpush.msra.mxu0 0.0
        %1773 = vmatpush.msra.mxu0 0.0
        %1774 = vmatpush.msra.mxu0 0.0
        %1775 = vmatpush.msra.mxu0 %v1758
        %1776 = vmatmul.f32.gmra.mxu0 %v1710
        %v1777 = vpop.f32.mrf.mxu0
        %v1778 = vadd.f32 %v1198, %v1777
        %1779 = vmatmul.f32.gmra.mxu0 %v1713
        %v1780 = vpop.f32.mrf.mxu0
        %v1781 = vadd.f32 %v1201, %v1780
        %1782 = vmatmul.f32.gmra.mxu0 %v1716
        %v1783 = vpop.f32.mrf.mxu0
        %v1784 = vadd.f32 %v1204, %v1783
        %1785 = vmatmul.f32.gmra.mxu0 %v1719
        %v1786 = vpop.f32.mrf.mxu0
        %v1787 = vadd.f32 %v1207, %v1786
        %1788 = vmatmul.f32.gmra.mxu0 %v1722
        %v1789 = vpop.f32.mrf.mxu0
        %v1790 = vadd.f32 %v1210, %v1789
        %1791 = vmatmul.f32.gmra.mxu0 %v1725
        %v1792 = vpop.f32.mrf.mxu0
        %v1793 = vadd.f32 %v1213, %v1792
        %1794 = vmatmul.f32.gmra.mxu0 %v1728
        %v1795 = vpop.f32.mrf.mxu0
        %v1796 = vadd.f32 %v1216, %v1795
        %1797 = vmatmul.f32.gmra.mxu0 %v1731
        %v1798 = vpop.f32.mrf.mxu0
        %v1799 = vadd.f32 %v1219, %v1798
        %1800 = vmatmul.f32.gmra.mxu0 %v1734
        %v1801 = vpop.f32.mrf.mxu0
        %v1802 = vadd.f32 %v1222, %v1801
        %1803 = vmatmul.f32.gmra.mxu0 %v1737
        %v1804 = vpop.f32.mrf.mxu0
        %v1805 = vadd.f32 %v1225, %v1804
        %1806 = vmatmul.f32.gmra.mxu0 %v1740
        %v1807 = vpop.f32.mrf.mxu0
        %v1808 = vadd.f32 %v1228, %v1807
        %1809 = vmatmul.f32.gmra.mxu0 %v1743
        %v1810 = vpop.f32.mrf.mxu0
        %v1811 = vadd.f32 %v1231, %v1810
        %1812 = vmatmul.f32.gmra.mxu0 %v1746
        %v1813 = vpop.f32.mrf.mxu0
        %v1814 = vadd.f32 %v1234, %v1813
        %1815 = vmatmul.f32.gmra.mxu0 %v1749
        %v1816 = vpop.f32.mrf.mxu0
        %v1817 = vadd.f32 %v1237, %v1816
        %1818 = vmatmul.f32.gmra.mxu0 %v1752
        %v1819 = vpop.f32.mrf.mxu0
        %v1820 = vadd.f32 %v1240, %v1819
        %1821 = vmatmul.f32.gmra.mxu0 %v1755
        %v1822 = vpop.f32.mrf.mxu0
        %v1823 = vadd.f32 %v1243, %v1822
        %1824 = vmatmul.f32.gmra.mxu0 %v601
        %v1825 = vpop.f32.mrf.mxu0
        %v1826 = vadd.f32 %v1246, %v1825
        %1827 = vmatmul.f32.gmra.mxu0 %v604
        %v1828 = vpop.f32.mrf.mxu0
        %v1829 = vadd.f32 %v1249, %v1828
        %1830 = vmatmul.f32.gmra.mxu0 %v607
        %v1831 = vpop.f32.mrf.mxu0
        %v1832 = vadd.f32 %v1252, %v1831
        %1833 = vmatmul.f32.gmra.mxu0 %v610
        %v1834 = vpop.f32.mrf.mxu0
        %v1835 = vadd.f32 %v1255, %v1834
        %1836 = vmatmul.f32.gmra.mxu0 %v613
        %v1837 = vpop.f32.mrf.mxu0
        %v1838 = vadd.f32 %v1258, %v1837
        %1839 = vmatmul.f32.gmra.mxu0 %v616
        %v1840 = vpop.f32.mrf.mxu0
        %v1841 = vadd.f32 %v1261, %v1840
        %1842 = vmatmul.f32.gmra.mxu0 %v619
        %v1843 = vpop.f32.mrf.mxu0
        %v1844 = vadd.f32 %v1264, %v1843
        %1845 = vmatmul.f32.gmra.mxu0 %v622
        %v1846 = vpop.f32.mrf.mxu0
        %v1847 = vadd.f32 %v1267, %v1846
        %1848 = vmatmul.f32.gmra.mxu0 %v625
        %v1849 = vpop.f32.mrf.mxu0
        %v1850 = vadd.f32 %v1270, %v1849
        %1851 = vmatmul.f32.gmra.mxu0 %v628
        %v1852 = vpop.f32.mrf.mxu0
        %v1853 = vadd.f32 %v1273, %v1852
        %1854 = vmatmul.f32.gmra.mxu0 %v631
        %v1855 = vpop.f32.mrf.mxu0
        %v1856 = vadd.f32 %v1276, %v1855
        %1857 = vmatmul.f32.gmra.mxu0 %v634
        %v1858 = vpop.f32.mrf.mxu0
        %v1859 = vadd.f32 %v1279, %v1858
        %1860 = vmatmul.f32.gmra.mxu0 %v637
        %v1861 = vpop.f32.mrf.mxu0
        %v1862 = vadd.f32 %v1282, %v1861
        %1863 = vmatmul.f32.gmra.mxu0 %v640
        %v1864 = vpop.f32.mrf.mxu0
        %v1865 = vadd.f32 %v1285, %v1864
        %1866 = vmatmul.f32.gmra.mxu0 %v643
        %v1867 = vpop.f32.mrf.mxu0
        %v1868 = vadd.f32 %v1288, %v1867
        %1869 = vmatmul.f32.gmra.mxu0 %v646
        %v1870 = vpop.f32.mrf.mxu0
        %v1871 = vadd.f32 %v1291, %v1870
        %1872 = vmatmul.f32.gmra.mxu0 %v649
        %v1873 = vpop.f32.mrf.mxu0
        %1874 = vmatmul.f32.gmra.mxu0 %v652
        %v1875 = vpop.f32.mrf.mxu0
        %1876 = vmatmul.f32.gmra.mxu0 %v655
        %v1877 = vpop.f32.mrf.mxu0
        %1878 = vmatmul.f32.gmra.mxu0 %v658
        %v1879 = vpop.f32.mrf.mxu0
        %1880 = vmatmul.f32.gmra.mxu0 %v661
        %v1881 = vpop.f32.mrf.mxu0
        %1882 = vmatmul.f32.gmra.mxu0 %v664
        %v1883 = vpop.f32.mrf.mxu0
        %1884 = vmatmul.f32.gmra.mxu0 %v667
        %v1885 = vpop.f32.mrf.mxu0
        %1886 = vmatmul.f32.gmra.mxu0 %v670
        %v1887 = vpop.f32.mrf.mxu0
        %1888 = vmatmul.f32.gmra.mxu0 %v673
        %v1889 = vpop.f32.mrf.mxu0
        %1890 = vmatmul.f32.gmra.mxu0 %v676
        %v1891 = vpop.f32.mrf.mxu0
        %1892 = vmatmul.f32.gmra.mxu0 %v679
        %v1893 = vpop.f32.mrf.mxu0
        %1894 = vmatmul.f32.gmra.mxu0 %v682
        %v1895 = vpop.f32.mrf.mxu0
        %1896 = vmatmul.f32.gmra.mxu0 %v685
        %v1897 = vpop.f32.mrf.mxu0
        %1898 = vmatmul.f32.gmra.mxu0 %v688
        %v1899 = vpop.f32.mrf.mxu0
        %1900 = vmatmul.f32.gmra.mxu0 %v691
        %v1901 = vpop.f32.mrf.mxu0
        %1902 = vmatmul.f32.gmra.mxu0 %v694
        %v1903 = vpop.f32.mrf.mxu0
        %1904 = vmatmul.f32.gmra.mxu0 %v697
        %v1905 = vpop.f32.mrf.mxu0
        %v1906 = vadd.f32 %v1326, %v1905
        %1907 = vmatmul.f32.gmra.mxu0 %v700
        %v1908 = vpop.f32.mrf.mxu0
        %v1909 = vadd.f32 %v1329, %v1908
        %1910 = vmatmul.f32.gmra.mxu0 %v703
        %v1911 = vpop.f32.mrf.mxu0
        %v1912 = vadd.f32 %v1332, %v1911
        %1913 = vmatmul.f32.gmra.mxu0 %v706
        %v1914 = vpop.f32.mrf.mxu0
        %v1915 = vadd.f32 %v1335, %v1914
        %1916 = vmatmul.f32.gmra.mxu0 %v709
        %v1917 = vpop.f32.mrf.mxu0
        %v1918 = vadd.f32 %v1338, %v1917
        %1919 = vmatmul.f32.gmra.mxu0 %v712
        %v1920 = vpop.f32.mrf.mxu0
        %v1921 = vadd.f32 %v1341, %v1920
        %1922 = vmatmul.f32.gmra.mxu0 %v715
        %v1923 = vpop.f32.mrf.mxu0
        %v1924 = vadd.f32 %v1344, %v1923
        %1925 = vmatmul.f32.gmra.mxu0 %v718
        %v1926 = vpop.f32.mrf.mxu0
        %v1927 = vadd.f32 %v1347, %v1926
        %1928 = vmatmul.f32.gmra.mxu0 %v721
        %v1929 = vpop.f32.mrf.mxu0
        %v1930 = vadd.f32 %v1350, %v1929
        %1931 = vmatmul.f32.gmra.mxu0 %v724
        %v1932 = vpop.f32.mrf.mxu0
        %v1933 = vadd.f32 %v1353, %v1932
        %1934 = vmatmul.f32.gmra.mxu0 %v727
        %v1935 = vpop.f32.mrf.mxu0
        %v1936 = vadd.f32 %v1356, %v1935
        %1937 = vmatmul.f32.gmra.mxu0 %v730
        %v1938 = vpop.f32.mrf.mxu0
        %v1939 = vadd.f32 %v1359, %v1938
        %1940 = vmatmul.f32.gmra.mxu0 %v733
        %v1941 = vpop.f32.mrf.mxu0
        %v1942 = vadd.f32 %v1362, %v1941
        %1943 = vmatmul.f32.gmra.mxu0 %v736
        %v1944 = vpop.f32.mrf.mxu0
        %v1945 = vadd.f32 %v1365, %v1944
        %1946 = vmatmul.f32.gmra.mxu0 %v739
        %v1947 = vpop.f32.mrf.mxu0
        %v1948 = vadd.f32 %v1368, %v1947
        %1949 = vmatmul.f32.gmra.mxu0 %v742
        %v1950 = vpop.f32.mrf.mxu0
        %v1951 = vadd.f32 %v1371, %v1950
        %1952 = vmatmul.f32.gmra.mxu0 %v745
        %v1953 = vpop.f32.mrf.mxu0
        %v1954 = vadd.f32 %v1374, %v1953
        %1955 = vmatmul.f32.gmra.mxu0 %v748
        %v1956 = vpop.f32.mrf.mxu0
        %v1957 = vadd.f32 %v1377, %v1956
        %1958 = vmatmul.f32.gmra.mxu0 %v751
        %v1959 = vpop.f32.mrf.mxu0
        %v1960 = vadd.f32 %v1380, %v1959
        %1961 = vmatmul.f32.gmra.mxu0 %v754
        %v1962 = vpop.f32.mrf.mxu0
        %v1963 = vadd.f32 %v1383, %v1962
        %1964 = vmatmul.f32.gmra.mxu0 %v757
        %v1965 = vpop.f32.mrf.mxu0
        %v1966 = vadd.f32 %v1386, %v1965
        %1967 = vmatmul.f32.gmra.mxu0 %v760
        %v1968 = vpop.f32.mrf.mxu0
        %v1969 = vadd.f32 %v1389, %v1968
        %1970 = vmatmul.f32.gmra.mxu0 %v763
        %v1971 = vpop.f32.mrf.mxu0
        %v1972 = vadd.f32 %v1392, %v1971
        %1973 = vmatmul.f32.gmra.mxu0 %v766
        %v1974 = vpop.f32.mrf.mxu0
        %v1975 = vadd.f32 %v1395, %v1974
        %1976 = vmatmul.f32.gmra.mxu0 %v769
        %v1977 = vpop.f32.mrf.mxu0
        %v1978 = vadd.f32 %v1398, %v1977
        %1979 = vmatmul.f32.gmra.mxu0 %v772
        %v1980 = vpop.f32.mrf.mxu0
        %v1981 = vadd.f32 %v1401, %v1980
        %1982 = vmatmul.f32.gmra.mxu0 %v775
        %v1983 = vpop.f32.mrf.mxu0
        %v1984 = vadd.f32 %v1404, %v1983
        %1985 = vmatmul.f32.gmra.mxu0 %v778
        %v1986 = vpop.f32.mrf.mxu0
        %v1987 = vadd.f32 %v1407, %v1986
        %1988 = vmatmul.f32.gmra.mxu0 %v781
        %v1989 = vpop.f32.mrf.mxu0
        %v1990 = vadd.f32 %v1410, %v1989
        %1991 = vmatmul.f32.gmra.mxu0 %v784
        %v1992 = vpop.f32.mrf.mxu0
        %v1993 = vadd.f32 %v1413, %v1992
        %1994 = vmatmul.f32.gmra.mxu0 %v787
        %v1995 = vpop.f32.mrf.mxu0
        %v1996 = vadd.f32 %v1416, %v1995
        %1997 = vmatmul.f32.gmra.mxu0 %v790
        %v1998 = vpop.f32.mrf.mxu0
        %v1999 = vadd.f32 %v1419, %v1998
        %2000 = vmatmul.f32.gmra.mxu0 %v793
        %v2001 = vpop.f32.mrf.mxu0
        %2002 = vmatmul.f32.gmra.mxu0 %v796
        %v2003 = vpop.f32.mrf.mxu0
        %2004 = vmatmul.f32.gmra.mxu0 %v799
        %v2005 = vpop.f32.mrf.mxu0
        %2006 = vmatmul.f32.gmra.mxu0 %v802
        %v2007 = vpop.f32.mrf.mxu0
        %2008 = vmatmul.f32.gmra.mxu0 %v805
        %v2009 = vpop.f32.mrf.mxu0
        %2010 = vmatmul.f32.gmra.mxu0 %v808
        %v2011 = vpop.f32.mrf.mxu0
        %2012 = vmatmul.f32.gmra.mxu0 %v811
        %v2013 = vpop.f32.mrf.mxu0
        %2014 = vmatmul.f32.gmra.mxu0 %v814
        %v2015 = vpop.f32.mrf.mxu0
        %2016 = vmatmul.f32.gmra.mxu0 %v817
        %v2017 = vpop.f32.mrf.mxu0
        %2018 = vmatmul.f32.gmra.mxu0 %v820
        %v2019 = vpop.f32.mrf.mxu0
        %2020 = vmatmul.f32.gmra.mxu0 %v823
        %v2021 = vpop.f32.mrf.mxu0
        %2022 = vmatmul.f32.gmra.mxu0 %v826
        %v2023 = vpop.f32.mrf.mxu0
        %2024 = vmatmul.f32.gmra.mxu0 %v829
        %v2025 = vpop.f32.mrf.mxu0
        %2026 = vmatmul.f32.gmra.mxu0 %v832
        %v2027 = vpop.f32.mrf.mxu0
        %2028 = vmatmul.f32.gmra.mxu0 %v835
        %v2029 = vpop.f32.mrf.mxu0
        %2030 = vmatmul.f32.gmra.mxu0 %v838
        %v2031 = vpop.f32.mrf.mxu0
        %2032 = vmatmul.f32.gmra.mxu0 %v841
        %v2033 = vpop.f32.mrf.mxu0
        %v2034 = vadd.f32 %v1454, %v2033
        %2035 = vmatmul.f32.gmra.mxu0 %v844
        %v2036 = vpop.f32.mrf.mxu0
        %v2037 = vadd.f32 %v1457, %v2036
        %2038 = vmatmul.f32.gmra.mxu0 %v847
        %v2039 = vpop.f32.mrf.mxu0
        %v2040 = vadd.f32 %v1460, %v2039
        %2041 = vmatmul.f32.gmra.mxu0 %v850
        %v2042 = vpop.f32.mrf.mxu0
        %v2043 = vadd.f32 %v1463, %v2042
        %2044 = vmatmul.f32.gmra.mxu0 %v853
        %v2045 = vpop.f32.mrf.mxu0
        %v2046 = vadd.f32 %v1466, %v2045
        %2047 = vmatmul.f32.gmra.mxu0 %v856
        %v2048 = vpop.f32.mrf.mxu0
        %v2049 = vadd.f32 %v1469, %v2048
        %2050 = vmatmul.f32.gmra.mxu0 %v859
        %v2051 = vpop.f32.mrf.mxu0
        %v2052 = vadd.f32 %v1472, %v2051
        %2053 = vmatmul.f32.gmra.mxu0 %v862
        %v2054 = vpop.f32.mrf.mxu0
        %v2055 = vadd.f32 %v1475, %v2054
        %2056 = vmatmul.f32.gmra.mxu0 %v865
        %v2057 = vpop.f32.mrf.mxu0
        %v2058 = vadd.f32 %v1478, %v2057
        %2059 = vmatmul.f32.gmra.mxu0 %v868
        %v2060 = vpop.f32.mrf.mxu0
        %v2061 = vadd.f32 %v1481, %v2060
        %2062 = vmatmul.f32.gmra.mxu0 %v871
        %v2063 = vpop.f32.mrf.mxu0
        %v2064 = vadd.f32 %v1484, %v2063
        %2065 = vmatmul.f32.gmra.mxu0 %v874
        %v2066 = vpop.f32.mrf.mxu0
        %v2067 = vadd.f32 %v1487, %v2066
        %2068 = vmatmul.f32.gmra.mxu0 %v877
        %v2069 = vpop.f32.mrf.mxu0
        %v2070 = vadd.f32 %v1490, %v2069
        %2071 = vmatmul.f32.gmra.mxu0 %v880
        %v2072 = vpop.f32.mrf.mxu0
        %v2073 = vadd.f32 %v1493, %v2072
        %2074 = vmatmul.f32.gmra.mxu0 %v883
        %v2075 = vpop.f32.mrf.mxu0
        %v2076 = vadd.f32 %v1496, %v2075
        %2077 = vmatmul.f32.gmra.mxu0 %v886
        %v2078 = vpop.f32.mrf.mxu0
        %v2079 = vadd.f32 %v1499, %v2078
        %2080 = vmatmul.f32.gmra.mxu0 %v889
        %v2081 = vpop.f32.mrf.mxu0
        %v2082 = vadd.f32 %v1502, %v2081
        %2083 = vmatmul.f32.gmra.mxu0 %v892
        %v2084 = vpop.f32.mrf.mxu0
        %v2085 = vadd.f32 %v1505, %v2084
        %2086 = vmatmul.f32.gmra.mxu0 %v895
        %v2087 = vpop.f32.mrf.mxu0
        %v2088 = vadd.f32 %v1508, %v2087
        %2089 = vmatmul.f32.gmra.mxu0 %v898
        %v2090 = vpop.f32.mrf.mxu0
        %v2091 = vadd.f32 %v1511, %v2090
        %2092 = vmatmul.f32.gmra.mxu0 %v901
        %v2093 = vpop.f32.mrf.mxu0
        %v2094 = vadd.f32 %v1514, %v2093
        %2095 = vmatmul.f32.gmra.mxu0 %v904
        %v2096 = vpop.f32.mrf.mxu0
        %v2097 = vadd.f32 %v1517, %v2096
        %2098 = vmatmul.f32.gmra.mxu0 %v907
        %v2099 = vpop.f32.mrf.mxu0
        %v2100 = vadd.f32 %v1520, %v2099
        %2101 = vmatmul.f32.gmra.mxu0 %v910
        %v2102 = vpop.f32.mrf.mxu0
        %v2103 = vadd.f32 %v1523, %v2102
        %2104 = vmatmul.f32.gmra.mxu0 %v913
        %v2105 = vpop.f32.mrf.mxu0
        %v2106 = vadd.f32 %v1526, %v2105
        %2107 = vmatmul.f32.gmra.mxu0 %v916
        %v2108 = vpop.f32.mrf.mxu0
        %v2109 = vadd.f32 %v1529, %v2108
        %2110 = vmatmul.f32.gmra.mxu0 %v919
        %v2111 = vpop.f32.mrf.mxu0
        %v2112 = vadd.f32 %v1532, %v2111
        %2113 = vmatmul.f32.gmra.mxu0 %v922
        %v2114 = vpop.f32.mrf.mxu0
        %v2115 = vadd.f32 %v1535, %v2114
        %2116 = vmatmul.f32.gmra.mxu0 %v925
        %v2117 = vpop.f32.mrf.mxu0
        %v2118 = vadd.f32 %v1538, %v2117
        %2119 = vmatmul.f32.gmra.mxu0 %v928
        %v2120 = vpop.f32.mrf.mxu0
        %v2121 = vadd.f32 %v1541, %v2120
        %2122 = vmatmul.f32.gmra.mxu0 %v931
        %v2123 = vpop.f32.mrf.mxu0
        %v2124 = vadd.f32 %v1544, %v2123
        %2125 = vmatmul.f32.gmra.mxu0 %v934
        %v2126 = vpop.f32.mrf.mxu0
        %v2127 = vadd.f32 %v1547, %v2126
        %2128 = vmatmul.f32.gmra.mxu0 %v937
        %v2129 = vpop.f32.mrf.mxu0
        %2130 = vmatmul.f32.gmra.mxu0 %v940
        %v2131 = vpop.f32.mrf.mxu0
        %2132 = vmatmul.f32.gmra.mxu0 %v943
        %v2133 = vpop.f32.mrf.mxu0
        %2134 = vmatmul.f32.gmra.mxu0 %v946
        %v2135 = vpop.f32.mrf.mxu0
        %2136 = vmatmul.f32.gmra.mxu0 %v949
        %v2137 = vpop.f32.mrf.mxu0
        %2138 = vmatmul.f32.gmra.mxu0 %v952
        %v2139 = vpop.f32.mrf.mxu0
        %2140 = vmatmul.f32.gmra.mxu0 %v955
        %v2141 = vpop.f32.mrf.mxu0
        %2142 = vmatmul.f32.gmra.mxu0 %v958
        %v2143 = vpop.f32.mrf.mxu0
        %2144 = vmatmul.f32.gmra.mxu0 %v961
        %v2145 = vpop.f32.mrf.mxu0
        %2146 = vmatmul.f32.gmra.mxu0 %v964
        %v2147 = vpop.f32.mrf.mxu0
        %2148 = vmatmul.f32.gmra.mxu0 %v967
        %v2149 = vpop.f32.mrf.mxu0
        %2150 = vmatmul.f32.gmra.mxu0 %v970
        %v2151 = vpop.f32.mrf.mxu0
        %2152 = vmatmul.f32.gmra.mxu0 %v973
        %v2153 = vpop.f32.mrf.mxu0
        %2154 = vmatmul.f32.gmra.mxu0 %v976
        %v2155 = vpop.f32.mrf.mxu0
        %2156 = vmatmul.f32.gmra.mxu0 %v979
        %v2157 = vpop.f32.mrf.mxu0
        %2158 = vmatmul.f32.gmra.mxu0 %v982
        %v2159 = vpop.f32.mrf.mxu0
        %2160 = vmatmul.f32.gmra.mxu0 %v985
        %v2161 = vpop.f32.mrf.mxu0
        %v2162 = vadd.f32 %v1582, %v2161
        %2163 = vmatmul.f32.gmra.mxu0 %v988
        %v2164 = vpop.f32.mrf.mxu0
        %v2165 = vadd.f32 %v1585, %v2164
        %2166 = vmatmul.f32.gmra.mxu0 %v991
        %v2167 = vpop.f32.mrf.mxu0
        %v2168 = vadd.f32 %v1588, %v2167
        %2169 = vmatmul.f32.gmra.mxu0 %v994
        %v2170 = vpop.f32.mrf.mxu0
        %v2171 = vadd.f32 %v1591, %v2170
        %2172 = vmatmul.f32.gmra.mxu0 %v997
        %v2173 = vpop.f32.mrf.mxu0
        %v2174 = vadd.f32 %v1594, %v2173
        %2175 = vmatmul.f32.gmra.mxu0 %v1000
        %v2176 = vpop.f32.mrf.mxu0
        %v2177 = vadd.f32 %v1597, %v2176
        %2178 = vmatmul.f32.gmra.mxu0 %v1003
        %v2179 = vpop.f32.mrf.mxu0
        %v2180 = vadd.f32 %v1600, %v2179
        %2181 = vmatmul.f32.gmra.mxu0 %v1006
        %v2182 = vpop.f32.mrf.mxu0
        %v2183 = vadd.f32 %v1603, %v2182
        %2184 = vmatmul.f32.gmra.mxu0 %v1009
        %v2185 = vpop.f32.mrf.mxu0
        %v2186 = vadd.f32 %v1606, %v2185
        %2187 = vmatmul.f32.gmra.mxu0 %v1012
        %v2188 = vpop.f32.mrf.mxu0
        %v2189 = vadd.f32 %v1609, %v2188
        %2190 = vmatmul.f32.gmra.mxu0 %v1015
        %v2191 = vpop.f32.mrf.mxu0
        %v2192 = vadd.f32 %v1612, %v2191
        %2193 = vmatmul.f32.gmra.mxu0 %v1018
        %v2194 = vpop.f32.mrf.mxu0
        %v2195 = vadd.f32 %v1615, %v2194
        %2196 = vmatmul.f32.gmra.mxu0 %v1021
        %v2197 = vpop.f32.mrf.mxu0
        %v2198 = vadd.f32 %v1618, %v2197
        %2199 = vmatmul.f32.gmra.mxu0 %v1024
        %v2200 = vpop.f32.mrf.mxu0
        %v2201 = vadd.f32 %v1621, %v2200
        %2202 = vmatmul.f32.gmra.mxu0 %v1027
        %v2203 = vpop.f32.mrf.mxu0
        %v2204 = vadd.f32 %v1624, %v2203
        %2205 = vmatmul.f32.gmra.mxu0 %v1030
        %v2206 = vpop.f32.mrf.mxu0
        %v2207 = vadd.f32 %v1627, %v2206
        %2208 = vmatmul.f32.gmra.mxu0 %v1033
        %v2209 = vpop.f32.mrf.mxu0
        %v2210 = vadd.f32 %v1630, %v2209
        %2211 = vmatmul.f32.gmra.mxu0 %v1036
        %v2212 = vpop.f32.mrf.mxu0
        %v2213 = vadd.f32 %v1633, %v2212
        %2214 = vmatmul.f32.gmra.mxu0 %v1039
        %v2215 = vpop.f32.mrf.mxu0
        %v2216 = vadd.f32 %v1636, %v2215
        %2217 = vmatmul.f32.gmra.mxu0 %v1042
        %v2218 = vpop.f32.mrf.mxu0
        %v2219 = vadd.f32 %v1639, %v2218
        %2220 = vmatmul.f32.gmra.mxu0 %v1045
        %v2221 = vpop.f32.mrf.mxu0
        %v2222 = vadd.f32 %v1642, %v2221
        %2223 = vmatmul.f32.gmra.mxu0 %v1048
        %v2224 = vpop.f32.mrf.mxu0
        %v2225 = vadd.f32 %v1645, %v2224
        %2226 = vmatmul.f32.gmra.mxu0 %v1051
        %v2227 = vpop.f32.mrf.mxu0
        %v2228 = vadd.f32 %v1648, %v2227
        %2229 = vmatmul.f32.gmra.mxu0 %v1054
        %v2230 = vpop.f32.mrf.mxu0
        %v2231 = vadd.f32 %v1651, %v2230
        %2232 = vmatmul.f32.gmra.mxu0 %v1057
        %v2233 = vpop.f32.mrf.mxu0
        %v2234 = vadd.f32 %v1654, %v2233
        %2235 = vmatmul.f32.gmra.mxu0 %v1060
        %v2236 = vpop.f32.mrf.mxu0
        %v2237 = vadd.f32 %v1657, %v2236
        %2238 = vmatmul.f32.gmra.mxu0 %v1063
        %v2239 = vpop.f32.mrf.mxu0
        %v2240 = vadd.f32 %v1660, %v2239
        %2241 = vmatmul.f32.gmra.mxu0 %v1066
        %v2242 = vpop.f32.mrf.mxu0
        %v2243 = vadd.f32 %v1663, %v2242
        %2244 = vmatmul.f32.gmra.mxu0 %v1069
        %v2245 = vpop.f32.mrf.mxu0
        %v2246 = vadd.f32 %v1666, %v2245
        %2247 = vmatmul.f32.gmra.mxu0 %v1072
        %v2248 = vpop.f32.mrf.mxu0
        %v2249 = vadd.f32 %v1669, %v2248
        %2250 = vmatmul.f32.gmra.mxu0 %v1075
        %v2251 = vpop.f32.mrf.mxu0
        %v2252 = vadd.f32 %v1672, %v2251
        %2253 = vmatmul.f32.gmra.mxu0 %v1078
        %v2254 = vpop.f32.mrf.mxu0
        %v2255 = vadd.f32 %v1675, %v2254
        %2256 = vmatmul.f32.gmra.mxu0 %v1081
        %v2257 = vpop.f32.mrf.mxu0
        %2258 = vmatmul.f32.gmra.mxu0 %v1084
        %v2259 = vpop.f32.mrf.mxu0
        %2260 = vmatmul.f32.gmra.mxu0 %v1087
        %v2261 = vpop.f32.mrf.mxu0
        %2262 = vmatmul.f32.gmra.mxu0 %v1090
        %v2263 = vpop.f32.mrf.mxu0
        %2264 = vmatmul.f32.gmra.mxu0 %v1093
        %v2265 = vpop.f32.mrf.mxu0
        %2266 = vmatmul.f32.gmra.mxu0 %v1096
        %v2267 = vpop.f32.mrf.mxu0
        %2268 = vmatmul.f32.gmra.mxu0 %v1099
        %v2269 = vpop.f32.mrf.mxu0
        %2270 = vmatmul.f32.gmra.mxu0 %v1102
        %v2271 = vpop.f32.mrf.mxu0
        %2272 = vmatmul.f32.gmra.mxu0 %v1105
        %v2273 = vpop.f32.mrf.mxu0
        %2274 = vmatmul.f32.gmra.mxu0 %v1108
        %v2275 = vpop.f32.mrf.mxu0
        %2276 = vmatmul.f32.gmra.mxu0 %v1111
        %v2277 = vpop.f32.mrf.mxu0
        %2278 = vmatmul.f32.gmra.mxu0 %v1114
        %v2279 = vpop.f32.mrf.mxu0
        %2280 = vmatmul.f32.gmra.mxu0 %v1117
        %v2281 = vpop.f32.mrf.mxu0
        %2282 = vmatmul.f32.gmra.mxu0 %v1120
        %v2283 = vpop.f32.mrf.mxu0
        %2284 = vmatmul.f32.gmra.mxu0 %v1123
        %v2285 = vpop.f32.mrf.mxu0
        %2286 = vmatmul.f32.gmra.mxu0 %v1126
        %v2287 = vpop.f32.mrf.mxu0
        %2288 = vdwg.mxu0
        %v2289 = vld [vmem:[%s385 + $0x100] sm:$0xff]
        %v2290 = vld [vmem:[%s385 + $0x108] sm:$0xff]
        %v2291 = vld [vmem:[%s385 + $0x110] sm:$0xff]
        %v2292 = vld [vmem:[%s385 + $0x118] sm:$0xff]
        %v2293 = vld [vmem:[%s385 + $0x120] sm:$0xff]
        %v2294 = vld [vmem:[%s385 + $0x128] sm:$0xff]
        %v2295 = vld [vmem:[%s385 + $0x130] sm:$0xff]
        %v2296 = vld [vmem:[%s385 + $0x138] sm:$0xff]
        %v2297 = vld [vmem:[%s385 + $0x140] sm:$0xff]
        %v2298 = vld [vmem:[%s385 + $0x148] sm:$0xff]
        %v2299 = vld [vmem:[%s385 + $0x150] sm:$0xff]
        %v2300 = vld [vmem:[%s385 + $0x158] sm:$0xff]
        %v2301 = vld [vmem:[%s385 + $0x160] sm:$0xff]
        %v2302 = vld [vmem:[%s385 + $0x168] sm:$0xff]
        %v2303 = vld [vmem:[%s385 + $0x170] sm:$0xff]
        %v2304 = vld [vmem:[%s385 + $0x178] sm:$0xff]
        %v2305 = vld [vmem:[%s385 + $0x180] sm:$0xff]
        %v2306 = vld [vmem:[%s385 + $0x188] sm:$0xff]
        %v2307 = vld [vmem:[%s385 + $0x190] sm:$0xff]
        %v2308 = vld [vmem:[%s385 + $0x198] sm:$0xff]
        %v2309 = vld [vmem:[%s385 + $0x1a0] sm:$0xff]
        %v2310 = vld [vmem:[%s385 + $0x1a8] sm:$0xff]
        %v2311 = vld [vmem:[%s385 + $0x1b0] sm:$0xff]
        %v2312 = vld [vmem:[%s385 + $0x1b8] sm:$0xff]
        %v2313 = vld [vmem:[%s385 + $0x1c0] sm:$0xff]
        %v2314 = vld [vmem:[%s385 + $0x1c8] sm:$0xff]
        %v2315 = vld [vmem:[%s385 + $0x1d0] sm:$0xff]
        %v2316 = vld [vmem:[%s385 + $0x1d8] sm:$0xff]
        %v2317 = vld [vmem:[%s385 + $0x1e0] sm:$0xff]
        %v2318 = vld [vmem:[%s385 + $0x1e8] sm:$0xff]
        %v2319 = vld [vmem:[%s385 + $0x1f0] sm:$0xff]
        %v2320 = vld [vmem:[%s385 + $0x1f8] sm:$0xff]
        %v2321 = vld [vmem:[%s385 + $0x200] sm:$0xff]
        %v2322 = vld [vmem:[%s385 + $0x208] sm:$0xff]
        %v2323 = vld [vmem:[%s385 + $0x210] sm:$0xff]
        %v2324 = vld [vmem:[%s385 + $0x218] sm:$0xff]
        %v2325 = vld [vmem:[%s385 + $0x220] sm:$0xff]
        %v2326 = vld [vmem:[%s385 + $0x228] sm:$0xff]
        %v2327 = vld [vmem:[%s385 + $0x230] sm:$0xff]
        %v2328 = vld [vmem:[%s385 + $0x238] sm:$0xff]
        %v2329 = vld [vmem:[%s385 + $0x240] sm:$0xff]
        %v2330 = vld [vmem:[%s385 + $0x248] sm:$0xff]
        %v2331 = vld [vmem:[%s385 + $0x250] sm:$0xff]
        %v2332 = vld [vmem:[%s385 + $0x258] sm:$0xff]
        %v2333 = vld [vmem:[%s385 + $0x260] sm:$0xff]
        %v2334 = vld [vmem:[%s385 + $0x268] sm:$0xff]
        %v2335 = vld [vmem:[%s385 + $0x270] sm:$0xff]
        %v2336 = vld [vmem:[%s385 + $0x278] sm:$0xff]
        %v2337 = vld [vmem:[%s385 + $0x280] sm:$0xff]
        %v2338 = vld [vmem:[%s385 + $0x288] sm:$0xff]
        %v2339 = vld [vmem:[%s385 + $0x290] sm:$0xff]
        %v2340 = vld [vmem:[%s385 + $0x298] sm:$0xff]
        %v2341 = vld [vmem:[%s385 + $0x2a0] sm:$0xff]
        %v2342 = vld [vmem:[%s385 + $0x2a8] sm:$0xff]
        %v2343 = vld [vmem:[%s385 + $0x2b0] sm:$0xff]
        %v2344 = vld [vmem:[%s385 + $0x2b8] sm:$0xff]
        %v2345 = vld [vmem:[%s385 + $0x2c0] sm:$0xff]
        %v2346 = vld [vmem:[%s385 + $0x2c8] sm:$0xff]
        %v2347 = vld [vmem:[%s385 + $0x2d0] sm:$0xff]
        %v2348 = vld [vmem:[%s385 + $0x2d8] sm:$0xff]
        %v2349 = vld [vmem:[%s385 + $0x2e0] sm:$0xff]
        %v2350 = vld [vmem:[%s385 + $0x2e8] sm:$0xff]
        %v2351 = vld [vmem:[%s385 + $0x2f0] sm:$0xff]
        %v2352 = vld [vmem:[%s385 + $0x2f8] sm:$0xff]
        %v2353 = vld [vmem:[%s385 + $0x300] sm:$0xff]
        %v2354 = vld [vmem:[%s385 + $0x308] sm:$0xff]
        %v2355 = vld [vmem:[%s385 + $0x310] sm:$0xff]
        %v2356 = vld [vmem:[%s385 + $0x318] sm:$0xff]
        %v2357 = vld [vmem:[%s385 + $0x320] sm:$0xff]
        %v2358 = vld [vmem:[%s385 + $0x328] sm:$0xff]
        %v2359 = vld [vmem:[%s385 + $0x330] sm:$0xff]
        %v2360 = vld [vmem:[%s385 + $0x338] sm:$0xff]
        %v2361 = vld [vmem:[%s385 + $0x340] sm:$0xff]
        %v2362 = vld [vmem:[%s385 + $0x348] sm:$0xff]
        %v2363 = vld [vmem:[%s385 + $0x350] sm:$0xff]
        %v2364 = vld [vmem:[%s385 + $0x358] sm:$0xff]
        %v2365 = vld [vmem:[%s385 + $0x360] sm:$0xff]
        %v2366 = vld [vmem:[%s385 + $0x368] sm:$0xff]
        %v2367 = vld [vmem:[%s385 + $0x370] sm:$0xff]
        %v2368 = vld [vmem:[%s385 + $0x378] sm:$0xff]
        %v2369 = vld [vmem:[%s385 + $0x380] sm:$0xff]
        %v2370 = vld [vmem:[%s385 + $0x388] sm:$0xff]
        %v2371 = vld [vmem:[%s385 + $0x390] sm:$0xff]
        %v2372 = vld [vmem:[%s385 + $0x398] sm:$0xff]
        %v2373 = vld [vmem:[%s385 + $0x3a0] sm:$0xff]
        %v2374 = vld [vmem:[%s385 + $0x3a8] sm:$0xff]
        %v2375 = vld [vmem:[%s385 + $0x3b0] sm:$0xff]
        %v2376 = vld [vmem:[%s385 + $0x3b8] sm:$0xff]
        %v2377 = vld [vmem:[%s385 + $0x3c0] sm:$0xff]
        %v2378 = vld [vmem:[%s385 + $0x3c8] sm:$0xff]
        %v2379 = vld [vmem:[%s385 + $0x3d0] sm:$0xff]
        %v2380 = vld [vmem:[%s385 + $0x3d8] sm:$0xff]
        %v2381 = vld [vmem:[%s385 + $0x3e0] sm:$0xff]
        %v2382 = vld [vmem:[%s385 + $0x3e8] sm:$0xff]
        %v2383 = vld [vmem:[%s385 + $0x3f0] sm:$0xff]
        %v2384 = vld [vmem:[%s385 + $0x3f8] sm:$0xff]
        %v2385 = vld [vmem:[%s385 + $0x400] sm:$0xff]
        %v2386 = vld [vmem:[%s385 + $0x408] sm:$0xff]
        %v2387 = vld [vmem:[%s385 + $0x410] sm:$0xff]
        %v2388 = vld [vmem:[%s385 + $0x418] sm:$0xff]
        %v2389 = vld [vmem:[%s385 + $0x420] sm:$0xff]
        %v2390 = vld [vmem:[%s385 + $0x428] sm:$0xff]
        %v2391 = vld [vmem:[%s385 + $0x430] sm:$0xff]
        %v2392 = vld [vmem:[%s385 + $0x438] sm:$0xff]
        %v2393 = vld [vmem:[%s385 + $0x440] sm:$0xff]
        %v2394 = vld [vmem:[%s385 + $0x448] sm:$0xff]
        %v2395 = vld [vmem:[%s385 + $0x450] sm:$0xff]
        %v2396 = vld [vmem:[%s385 + $0x458] sm:$0xff]
        %v2397 = vld [vmem:[%s385 + $0x460] sm:$0xff]
        %v2398 = vld [vmem:[%s385 + $0x468] sm:$0xff]
        %v2399 = vld [vmem:[%s385 + $0x470] sm:$0xff]
        %v2400 = vld [vmem:[%s385 + $0x478] sm:$0xff]
        %v2401 = vld [vmem:[%s385 + $0x480] sm:$0xff]
        %v2402 = vld [vmem:[%s385 + $0x488] sm:$0xff]
        %v2403 = vld [vmem:[%s385 + $0x490] sm:$0xff]
        %v2404 = vld [vmem:[%s385 + $0x498] sm:$0xff]
        %v2405 = vld [vmem:[%s385 + $0x4a0] sm:$0xff]
        %v2406 = vld [vmem:[%s385 + $0x4a8] sm:$0xff]
        %v2407 = vld [vmem:[%s385 + $0x4b0] sm:$0xff]
        %v2408 = vld [vmem:[%s385 + $0x4b8] sm:$0xff]
        %v2409 = vld [vmem:[%s385 + $0x4c0] sm:$0xff]
        %v2410 = vld [vmem:[%s385 + $0x4c8] sm:$0xff]
        %v2411 = vld [vmem:[%s385 + $0x4d0] sm:$0xff]
        %v2412 = vld [vmem:[%s385 + $0x4d8] sm:$0xff]
        %v2413 = vld [vmem:[%s385 + $0x4e0] sm:$0xff]
        %v2414 = vld [vmem:[%s385 + $0x4e8] sm:$0xff]
        %v2415 = vld [vmem:[%s385 + $0x4f0] sm:$0xff]
        %v2416 = vld [vmem:[%s385 + $0x4f8] sm:$0xff]
        %v2417 = vld [vmem:[%s385 + $0x500] sm:$0xff]
        %v2418 = vld [vmem:[%s385 + $0x508] sm:$0xff]
        %v2419 = vld [vmem:[%s385 + $0x510] sm:$0xff]
        %v2420 = vld [vmem:[%s385 + $0x518] sm:$0xff]
        %v2421 = vld [vmem:[%s385 + $0x520] sm:$0xff]
        %v2422 = vld [vmem:[%s385 + $0x528] sm:$0xff]
        %v2423 = vld [vmem:[%s385 + $0x530] sm:$0xff]
        %v2424 = vld [vmem:[%s385 + $0x538] sm:$0xff]
        %v2425 = vld [vmem:[%s385 + $0x540] sm:$0xff]
        %v2426 = vld [vmem:[%s385 + $0x548] sm:$0xff]
        %v2427 = vld [vmem:[%s385 + $0x550] sm:$0xff]
        %v2428 = vld [vmem:[%s385 + $0x558] sm:$0xff]
        %v2429 = vld [vmem:[%s385 + $0x560] sm:$0xff]
        %v2430 = vld [vmem:[%s385 + $0x568] sm:$0xff]
        %v2431 = vld [vmem:[%s385 + $0x570] sm:$0xff]
        %v2432 = vld [vmem:[%s385 + $0x578] sm:$0xff]
        %v2433 = vld [vmem:[%s385 + $0x580] sm:$0xff]
        %v2434 = vld [vmem:[%s385 + $0x588] sm:$0xff]
        %v2435 = vld [vmem:[%s385 + $0x590] sm:$0xff]
        %v2436 = vld [vmem:[%s385 + $0x598] sm:$0xff]
        %v2437 = vld [vmem:[%s385 + $0x5a0] sm:$0xff]
        %v2438 = vld [vmem:[%s385 + $0x5a8] sm:$0xff]
        %v2439 = vld [vmem:[%s385 + $0x5b0] sm:$0xff]
        %v2440 = vld [vmem:[%s385 + $0x5b8] sm:$0xff]
        %v2441 = vld [vmem:[%s385 + $0x5c0] sm:$0xff]
        %v2442 = vld [vmem:[%s385 + $0x5c8] sm:$0xff]
        %v2443 = vld [vmem:[%s385 + $0x5d0] sm:$0xff]
        %v2444 = vld [vmem:[%s385 + $0x5d8] sm:$0xff]
        %v2445 = vld [vmem:[%s385 + $0x5e0] sm:$0xff]
        %v2446 = vld [vmem:[%s385 + $0x5e8] sm:$0xff]
        %v2447 = vld [vmem:[%s385 + $0x5f0] sm:$0xff]
        %v2448 = vld [vmem:[%s385 + $0x5f8] sm:$0xff]
        %v2449 = vld [vmem:[%s385 + $0x600] sm:$0xff]
        %v2450 = vld [vmem:[%s385 + $0x608] sm:$0xff]
        %v2451 = vld [vmem:[%s385 + $0x610] sm:$0xff]
        %v2452 = vld [vmem:[%s385 + $0x618] sm:$0xff]
        %v2453 = vld [vmem:[%s385 + $0x620] sm:$0xff]
        %v2454 = vld [vmem:[%s385 + $0x628] sm:$0xff]
        %v2455 = vld [vmem:[%s385 + $0x630] sm:$0xff]
        %v2456 = vld [vmem:[%s385 + $0x638] sm:$0xff]
        %v2457 = vld [vmem:[%s385 + $0x640] sm:$0xff]
        %v2458 = vld [vmem:[%s385 + $0x648] sm:$0xff]
        %v2459 = vld [vmem:[%s385 + $0x650] sm:$0xff]
        %v2460 = vld [vmem:[%s385 + $0x658] sm:$0xff]
        %v2461 = vld [vmem:[%s385 + $0x660] sm:$0xff]
        %v2462 = vld [vmem:[%s385 + $0x668] sm:$0xff]
        %v2463 = vld [vmem:[%s385 + $0x670] sm:$0xff]
        %v2464 = vld [vmem:[%s385 + $0x678] sm:$0xff]
        %v2465 = vld [vmem:[%s385 + $0x680] sm:$0xff]
        %v2466 = vld [vmem:[%s385 + $0x688] sm:$0xff]
        %v2467 = vld [vmem:[%s385 + $0x690] sm:$0xff]
        %v2468 = vld [vmem:[%s385 + $0x698] sm:$0xff]
        %v2469 = vld [vmem:[%s385 + $0x6a0] sm:$0xff]
        %v2470 = vld [vmem:[%s385 + $0x6a8] sm:$0xff]
        %v2471 = vld [vmem:[%s385 + $0x6b0] sm:$0xff]
        %v2472 = vld [vmem:[%s385 + $0x6b8] sm:$0xff]
        %v2473 = vld [vmem:[%s385 + $0x6c0] sm:$0xff]
        %v2474 = vld [vmem:[%s385 + $0x6c8] sm:$0xff]
        %v2475 = vld [vmem:[%s385 + $0x6d0] sm:$0xff]
        %v2476 = vld [vmem:[%s385 + $0x6d8] sm:$0xff]
        %v2477 = vld [vmem:[%s385 + $0x6e0] sm:$0xff]
        %v2478 = vld [vmem:[%s385 + $0x6e8] sm:$0xff]
        %v2479 = vld [vmem:[%s385 + $0x6f0] sm:$0xff]
        %v2480 = vld [vmem:[%s385 + $0x6f8] sm:$0xff]
        %s2481 = scalar_lea.vmem %s1, 16
        %v2482 = vld [vmem:[%s2481] sm:$0x3f]
        %v2484 = vsel %vm599, %v2289, 0
        %v2487 = vsel %vm599, %v2290, 0
        %v2490 = vsel %vm599, %v2291, 0
        %v2493 = vsel %vm599, %v2292, 0
        %v2496 = vsel %vm599, %v2293, 0
        %v2499 = vsel %vm599, %v2294, 0
        %v2502 = vsel %vm599, %v2295, 0
        %v2505 = vsel %vm599, %v2296, 0
        %v2508 = vsel %vm599, %v2297, 0
        %v2511 = vsel %vm599, %v2298, 0
        %v2514 = vsel %vm599, %v2299, 0
        %v2517 = vsel %vm599, %v2300, 0
        %v2520 = vsel %vm599, %v2301, 0
        %v2523 = vsel %vm599, %v2302, 0
        %v2526 = vsel %vm599, %v2303, 0
        %v2529 = vsel %vm599, %v2304, 0
        %v2532 = vsel %vm599, %v2305, 0
        %v2535 = vsel %vm599, %v2306, 0
        %v2538 = vsel %vm599, %v2307, 0
        %v2541 = vsel %vm599, %v2308, 0
        %v2544 = vsel %vm599, %v2309, 0
        %v2547 = vsel %vm599, %v2310, 0
        %v2550 = vsel %vm599, %v2311, 0
        %v2553 = vsel %vm599, %v2312, 0
        %v2556 = vsel %vm599, %v2313, 0
        %v2559 = vsel %vm599, %v2314, 0
        %v2562 = vsel %vm599, %v2315, 0
        %v2565 = vsel %vm599, %v2316, 0
        %v2568 = vsel %vm599, %v2317, 0
        %v2571 = vsel %vm599, %v2318, 0
        %v2574 = vsel %vm599, %v2319, 0
        %v2577 = vsel %vm599, %v2320, 0
        %v2580 = vsel %vm599, %v2321, 0
        %v2583 = vsel %vm599, %v2322, 0
        %v2586 = vsel %vm599, %v2323, 0
        %v2589 = vsel %vm599, %v2324, 0
        %v2592 = vsel %vm599, %v2325, 0
        %v2595 = vsel %vm599, %v2326, 0
        %v2598 = vsel %vm599, %v2327, 0
        %v2601 = vsel %vm599, %v2328, 0
        %v2604 = vsel %vm599, %v2329, 0
        %v2607 = vsel %vm599, %v2330, 0
        %v2610 = vsel %vm599, %v2331, 0
        %v2613 = vsel %vm599, %v2332, 0
        %v2616 = vsel %vm599, %v2333, 0
        %v2619 = vsel %vm599, %v2334, 0
        %v2622 = vsel %vm599, %v2335, 0
        %v2625 = vsel %vm599, %v2336, 0
        %v2628 = vsel %vm599, %v2337, 0
        %v2631 = vsel %vm599, %v2338, 0
        %v2634 = vsel %vm599, %v2339, 0
        %v2637 = vsel %vm599, %v2340, 0
        %v2640 = vsel %vm599, %v2341, 0
        %v2643 = vsel %vm599, %v2342, 0
        %v2646 = vsel %vm599, %v2343, 0
        %v2649 = vsel %vm599, %v2344, 0
        %v2652 = vsel %vm599, %v2345, 0
        %v2655 = vsel %vm599, %v2346, 0
        %v2658 = vsel %vm599, %v2347, 0
        %v2661 = vsel %vm599, %v2348, 0
        %v2664 = vsel %vm599, %v2349, 0
        %v2667 = vsel %vm599, %v2350, 0
        %v2670 = vsel %vm599, %v2351, 0
        %v2673 = vsel %vm599, %v2352, 0
        %v2676 = vsel %vm599, %v2353, 0
        %v2679 = vsel %vm599, %v2354, 0
        %v2682 = vsel %vm599, %v2355, 0
        %v2685 = vsel %vm599, %v2356, 0
        %v2688 = vsel %vm599, %v2357, 0
        %v2691 = vsel %vm599, %v2358, 0
        %v2694 = vsel %vm599, %v2359, 0
        %v2697 = vsel %vm599, %v2360, 0
        %v2700 = vsel %vm599, %v2361, 0
        %v2703 = vsel %vm599, %v2362, 0
        %v2706 = vsel %vm599, %v2363, 0
        %v2709 = vsel %vm599, %v2364, 0
        %v2712 = vsel %vm599, %v2365, 0
        %v2715 = vsel %vm599, %v2366, 0
        %v2718 = vsel %vm599, %v2367, 0
        %v2721 = vsel %vm599, %v2368, 0
        %v2724 = vsel %vm599, %v2369, 0
        %v2727 = vsel %vm599, %v2370, 0
        %v2730 = vsel %vm599, %v2371, 0
        %v2733 = vsel %vm599, %v2372, 0
        %v2736 = vsel %vm599, %v2373, 0
        %v2739 = vsel %vm599, %v2374, 0
        %v2742 = vsel %vm599, %v2375, 0
        %v2745 = vsel %vm599, %v2376, 0
        %v2748 = vsel %vm599, %v2377, 0
        %v2751 = vsel %vm599, %v2378, 0
        %v2754 = vsel %vm599, %v2379, 0
        %v2757 = vsel %vm599, %v2380, 0
        %v2760 = vsel %vm599, %v2381, 0
        %v2763 = vsel %vm599, %v2382, 0
        %v2766 = vsel %vm599, %v2383, 0
        %v2769 = vsel %vm599, %v2384, 0
        %v2772 = vsel %vm599, %v2385, 0
        %v2775 = vsel %vm599, %v2386, 0
        %v2778 = vsel %vm599, %v2387, 0
        %v2781 = vsel %vm599, %v2388, 0
        %v2784 = vsel %vm599, %v2389, 0
        %v2787 = vsel %vm599, %v2390, 0
        %v2790 = vsel %vm599, %v2391, 0
        %v2793 = vsel %vm599, %v2392, 0
        %v2796 = vsel %vm599, %v2393, 0
        %v2799 = vsel %vm599, %v2394, 0
        %v2802 = vsel %vm599, %v2395, 0
        %v2805 = vsel %vm599, %v2396, 0
        %v2808 = vsel %vm599, %v2397, 0
        %v2811 = vsel %vm599, %v2398, 0
        %v2814 = vsel %vm599, %v2399, 0
        %v2817 = vsel %vm599, %v2400, 0
        %v2820 = vsel %vm599, %v2401, 0
        %v2823 = vsel %vm599, %v2402, 0
        %v2826 = vsel %vm599, %v2403, 0
        %v2829 = vsel %vm599, %v2404, 0
        %v2832 = vsel %vm599, %v2405, 0
        %v2835 = vsel %vm599, %v2406, 0
        %v2838 = vsel %vm599, %v2407, 0
        %v2841 = vsel %vm599, %v2408, 0
        %v2844 = vsel %vm599, %v2409, 0
        %v2847 = vsel %vm599, %v2410, 0
        %v2850 = vsel %vm599, %v2411, 0
        %v2853 = vsel %vm599, %v2412, 0
        %v2856 = vsel %vm599, %v2413, 0
        %v2859 = vsel %vm599, %v2414, 0
        %v2862 = vsel %vm599, %v2415, 0
        %v2865 = vsel %vm599, %v2416, 0
        %v2868 = vsel %vm599, %v2417, 0
        %v2871 = vsel %vm599, %v2418, 0
        %v2874 = vsel %vm599, %v2419, 0
        %v2877 = vsel %vm599, %v2420, 0
        %v2880 = vsel %vm599, %v2421, 0
        %v2883 = vsel %vm599, %v2422, 0
        %v2886 = vsel %vm599, %v2423, 0
        %v2889 = vsel %vm599, %v2424, 0
        %v2892 = vsel %vm599, %v2425, 0
        %v2895 = vsel %vm599, %v2426, 0
        %v2898 = vsel %vm599, %v2427, 0
        %v2901 = vsel %vm599, %v2428, 0
        %v2904 = vsel %vm599, %v2429, 0
        %v2907 = vsel %vm599, %v2430, 0
        %v2910 = vsel %vm599, %v2431, 0
        %v2913 = vsel %vm599, %v2432, 0
        %v2916 = vsel %vm599, %v2433, 0
        %v2919 = vsel %vm599, %v2434, 0
        %v2922 = vsel %vm599, %v2435, 0
        %v2925 = vsel %vm599, %v2436, 0
        %v2928 = vsel %vm599, %v2437, 0
        %v2931 = vsel %vm599, %v2438, 0
        %v2934 = vsel %vm599, %v2439, 0
        %v2937 = vsel %vm599, %v2440, 0
        %v2940 = vsel %vm599, %v2441, 0
        %v2943 = vsel %vm599, %v2442, 0
        %v2946 = vsel %vm599, %v2443, 0
        %v2949 = vsel %vm599, %v2444, 0
        %v2952 = vsel %vm599, %v2445, 0
        %v2955 = vsel %vm599, %v2446, 0
        %v2958 = vsel %vm599, %v2447, 0
        %v2961 = vsel %vm599, %v2448, 0
        %v2964 = vsel %vm599, %v2449, 0
        %v2967 = vsel %vm599, %v2450, 0
        %v2970 = vsel %vm599, %v2451, 0
        %v2973 = vsel %vm599, %v2452, 0
        %v2976 = vsel %vm599, %v2453, 0
        %v2979 = vsel %vm599, %v2454, 0
        %v2982 = vsel %vm599, %v2455, 0
        %v2985 = vsel %vm599, %v2456, 0
        %v2988 = vsel %vm599, %v2457, 0
        %v2991 = vsel %vm599, %v2458, 0
        %v2994 = vsel %vm599, %v2459, 0
        %v2997 = vsel %vm599, %v2460, 0
        %v3000 = vsel %vm599, %v2461, 0
        %v3003 = vsel %vm599, %v2462, 0
        %v3006 = vsel %vm599, %v2463, 0
        %v3009 = vsel %vm599, %v2464, 0
        %v3012 = vsel %vm599, %v2465, 0
        %v3015 = vsel %vm599, %v2466, 0
        %v3018 = vsel %vm599, %v2467, 0
        %v3021 = vsel %vm599, %v2468, 0
        %v3024 = vsel %vm599, %v2469, 0
        %v3027 = vsel %vm599, %v2470, 0
        %v3030 = vsel %vm599, %v2471, 0
        %v3033 = vsel %vm599, %v2472, 0
        %v3036 = vsel %vm599, %v2473, 0
        %v3039 = vsel %vm599, %v2474, 0
        %v3042 = vsel %vm599, %v2475, 0
        %v3045 = vsel %vm599, %v2476, 0
        %v3048 = vsel %vm599, %v2477, 0
        %v3051 = vsel %vm599, %v2478, 0
        %v3054 = vsel %vm599, %v2479, 0
        %v3057 = vsel %vm599, %v2480, 0
        %v3060 = vsel %vm1176, %v2482, 0
        %3062 = vmatpush.msra.mxu0 0.0
        %3063 = vmatpush.msra.mxu0 0.0
        %3064 = vmatpush.msra.mxu0 0.0
        %3065 = vmatpush.msra.mxu0 0.0
        %3066 = vmatpush.msra.mxu0 0.0
        %3067 = vmatpush.msra.mxu0 0.0
        %3068 = vmatpush.msra.mxu0 0.0
        %3069 = vmatpush.msra.mxu0 0.0
        %3070 = vmatpush.msra.mxu0 0.0
        %3071 = vmatpush.msra.mxu0 0.0
        %3072 = vmatpush.msra.mxu0 0.0
        %3073 = vmatpush.msra.mxu0 0.0
        %3074 = vmatpush.msra.mxu0 0.0
        %3075 = vmatpush.msra.mxu0 0.0
        %3076 = vmatpush.msra.mxu0 0.0
        %3077 = vmatpush.msra.mxu0 %v3060
        %3078 = vmatmul.f32.gmra.mxu0 %v2484
        %v3079 = vpop.f32.mrf.mxu0
        %v3080 = vadd.f32 0.0, %v3079
        %3081 = vmatmul.f32.gmra.mxu0 %v2487
        %v3082 = vpop.f32.mrf.mxu0
        %v3083 = vadd.f32 0.0, %v3082
        %3084 = vmatmul.f32.gmra.mxu0 %v2490
        %v3085 = vpop.f32.mrf.mxu0
        %v3086 = vadd.f32 0.0, %v3085
        %3087 = vmatmul.f32.gmra.mxu0 %v2493
        %v3088 = vpop.f32.mrf.mxu0
        %v3089 = vadd.f32 0.0, %v3088
        %3090 = vmatmul.f32.gmra.mxu0 %v2496
        %v3091 = vpop.f32.mrf.mxu0
        %v3092 = vadd.f32 0.0, %v3091
        %3093 = vmatmul.f32.gmra.mxu0 %v2499
        %v3094 = vpop.f32.mrf.mxu0
        %v3095 = vadd.f32 0.0, %v3094
        %3096 = vmatmul.f32.gmra.mxu0 %v2502
        %v3097 = vpop.f32.mrf.mxu0
        %v3098 = vadd.f32 0.0, %v3097
        %3099 = vmatmul.f32.gmra.mxu0 %v2505
        %v3100 = vpop.f32.mrf.mxu0
        %v3101 = vadd.f32 0.0, %v3100
        %3102 = vmatmul.f32.gmra.mxu0 %v2508
        %v3103 = vpop.f32.mrf.mxu0
        %v3104 = vadd.f32 0.0, %v3103
        %3105 = vmatmul.f32.gmra.mxu0 %v2511
        %v3106 = vpop.f32.mrf.mxu0
        %v3107 = vadd.f32 0.0, %v3106
        %3108 = vmatmul.f32.gmra.mxu0 %v2514
        %v3109 = vpop.f32.mrf.mxu0
        %v3110 = vadd.f32 0.0, %v3109
        %3111 = vmatmul.f32.gmra.mxu0 %v2517
        %v3112 = vpop.f32.mrf.mxu0
        %v3113 = vadd.f32 0.0, %v3112
        %3114 = vmatmul.f32.gmra.mxu0 %v2520
        %v3115 = vpop.f32.mrf.mxu0
        %v3116 = vadd.f32 0.0, %v3115
        %3117 = vmatmul.f32.gmra.mxu0 %v2523
        %v3118 = vpop.f32.mrf.mxu0
        %v3119 = vadd.f32 0.0, %v3118
        %3120 = vmatmul.f32.gmra.mxu0 %v2526
        %v3121 = vpop.f32.mrf.mxu0
        %v3122 = vadd.f32 0.0, %v3121
        %3123 = vmatmul.f32.gmra.mxu0 %v2529
        %v3124 = vpop.f32.mrf.mxu0
        %v3125 = vadd.f32 0.0, %v3124
        %3126 = vmatmul.f32.gmra.mxu0 %v2532
        %v3127 = vpop.f32.mrf.mxu0
        %v3128 = vadd.f32 0.0, %v3127
        %3129 = vmatmul.f32.gmra.mxu0 %v2535
        %v3130 = vpop.f32.mrf.mxu0
        %v3131 = vadd.f32 0.0, %v3130
        %3132 = vmatmul.f32.gmra.mxu0 %v2538
        %v3133 = vpop.f32.mrf.mxu0
        %v3134 = vadd.f32 0.0, %v3133
        %3135 = vmatmul.f32.gmra.mxu0 %v2541
        %v3136 = vpop.f32.mrf.mxu0
        %v3137 = vadd.f32 0.0, %v3136
        %3138 = vmatmul.f32.gmra.mxu0 %v2544
        %v3139 = vpop.f32.mrf.mxu0
        %v3140 = vadd.f32 0.0, %v3139
        %3141 = vmatmul.f32.gmra.mxu0 %v2547
        %v3142 = vpop.f32.mrf.mxu0
        %v3143 = vadd.f32 0.0, %v3142
        %3144 = vmatmul.f32.gmra.mxu0 %v2550
        %v3145 = vpop.f32.mrf.mxu0
        %v3146 = vadd.f32 0.0, %v3145
        %3147 = vmatmul.f32.gmra.mxu0 %v2553
        %v3148 = vpop.f32.mrf.mxu0
        %v3149 = vadd.f32 0.0, %v3148
        %3150 = vmatmul.f32.gmra.mxu0 %v2556
        %v3151 = vpop.f32.mrf.mxu0
        %v3152 = vadd.f32 0.0, %v3151
        %3153 = vmatmul.f32.gmra.mxu0 %v2559
        %v3154 = vpop.f32.mrf.mxu0
        %v3155 = vadd.f32 0.0, %v3154
        %3156 = vmatmul.f32.gmra.mxu0 %v2562
        %v3157 = vpop.f32.mrf.mxu0
        %v3158 = vadd.f32 0.0, %v3157
        %3159 = vmatmul.f32.gmra.mxu0 %v2565
        %v3160 = vpop.f32.mrf.mxu0
        %v3161 = vadd.f32 0.0, %v3160
        %3162 = vmatmul.f32.gmra.mxu0 %v2568
        %v3163 = vpop.f32.mrf.mxu0
        %v3164 = vadd.f32 0.0, %v3163
        %3165 = vmatmul.f32.gmra.mxu0 %v2571
        %v3166 = vpop.f32.mrf.mxu0
        %v3167 = vadd.f32 0.0, %v3166
        %3168 = vmatmul.f32.gmra.mxu0 %v2574
        %v3169 = vpop.f32.mrf.mxu0
        %v3170 = vadd.f32 0.0, %v3169
        %3171 = vmatmul.f32.gmra.mxu0 %v2577
        %v3172 = vpop.f32.mrf.mxu0
        %v3173 = vadd.f32 0.0, %v3172
        %3174 = vmatmul.f32.gmra.mxu0 %v2580
        %v3175 = vpop.f32.mrf.mxu0
        %3176 = vmatmul.f32.gmra.mxu0 %v2583
        %v3177 = vpop.f32.mrf.mxu0
        %3178 = vmatmul.f32.gmra.mxu0 %v2586
        %v3179 = vpop.f32.mrf.mxu0
        %3180 = vmatmul.f32.gmra.mxu0 %v2589
        %v3181 = vpop.f32.mrf.mxu0
        %3182 = vmatmul.f32.gmra.mxu0 %v2592
        %v3183 = vpop.f32.mrf.mxu0
        %3184 = vmatmul.f32.gmra.mxu0 %v2595
        %v3185 = vpop.f32.mrf.mxu0
        %3186 = vmatmul.f32.gmra.mxu0 %v2598
        %v3187 = vpop.f32.mrf.mxu0
        %3188 = vmatmul.f32.gmra.mxu0 %v2601
        %v3189 = vpop.f32.mrf.mxu0
        %3190 = vmatmul.f32.gmra.mxu0 %v2604
        %v3191 = vpop.f32.mrf.mxu0
        %3192 = vmatmul.f32.gmra.mxu0 %v2607
        %v3193 = vpop.f32.mrf.mxu0
        %3194 = vmatmul.f32.gmra.mxu0 %v2610
        %v3195 = vpop.f32.mrf.mxu0
        %3196 = vmatmul.f32.gmra.mxu0 %v2613
        %v3197 = vpop.f32.mrf.mxu0
        %3198 = vmatmul.f32.gmra.mxu0 %v2616
        %v3199 = vpop.f32.mrf.mxu0
        %3200 = vmatmul.f32.gmra.mxu0 %v2619
        %v3201 = vpop.f32.mrf.mxu0
        %3202 = vmatmul.f32.gmra.mxu0 %v2622
        %v3203 = vpop.f32.mrf.mxu0
        %3204 = vmatmul.f32.gmra.mxu0 %v2625
        %v3205 = vpop.f32.mrf.mxu0
        %3206 = vmatmul.f32.gmra.mxu0 %v2628
        %v3207 = vpop.f32.mrf.mxu0
        %v3208 = vadd.f32 0.0, %v3207
        %3209 = vmatmul.f32.gmra.mxu0 %v2631
        %v3210 = vpop.f32.mrf.mxu0
        %v3211 = vadd.f32 0.0, %v3210
        %3212 = vmatmul.f32.gmra.mxu0 %v2634
        %v3213 = vpop.f32.mrf.mxu0
        %v3214 = vadd.f32 0.0, %v3213
        %3215 = vmatmul.f32.gmra.mxu0 %v2637
        %v3216 = vpop.f32.mrf.mxu0
        %v3217 = vadd.f32 0.0, %v3216
        %3218 = vmatmul.f32.gmra.mxu0 %v2640
        %v3219 = vpop.f32.mrf.mxu0
        %v3220 = vadd.f32 0.0, %v3219
        %3221 = vmatmul.f32.gmra.mxu0 %v2643
        %v3222 = vpop.f32.mrf.mxu0
        %v3223 = vadd.f32 0.0, %v3222
        %3224 = vmatmul.f32.gmra.mxu0 %v2646
        %v3225 = vpop.f32.mrf.mxu0
        %v3226 = vadd.f32 0.0, %v3225
        %3227 = vmatmul.f32.gmra.mxu0 %v2649
        %v3228 = vpop.f32.mrf.mxu0
        %v3229 = vadd.f32 0.0, %v3228
        %3230 = vmatmul.f32.gmra.mxu0 %v2652
        %v3231 = vpop.f32.mrf.mxu0
        %v3232 = vadd.f32 0.0, %v3231
        %3233 = vmatmul.f32.gmra.mxu0 %v2655
        %v3234 = vpop.f32.mrf.mxu0
        %v3235 = vadd.f32 0.0, %v3234
        %3236 = vmatmul.f32.gmra.mxu0 %v2658
        %v3237 = vpop.f32.mrf.mxu0
        %v3238 = vadd.f32 0.0, %v3237
        %3239 = vmatmul.f32.gmra.mxu0 %v2661
        %v3240 = vpop.f32.mrf.mxu0
        %v3241 = vadd.f32 0.0, %v3240
        %3242 = vmatmul.f32.gmra.mxu0 %v2664
        %v3243 = vpop.f32.mrf.mxu0
        %v3244 = vadd.f32 0.0, %v3243
        %3245 = vmatmul.f32.gmra.mxu0 %v2667
        %v3246 = vpop.f32.mrf.mxu0
        %v3247 = vadd.f32 0.0, %v3246
        %3248 = vmatmul.f32.gmra.mxu0 %v2670
        %v3249 = vpop.f32.mrf.mxu0
        %v3250 = vadd.f32 0.0, %v3249
        %3251 = vmatmul.f32.gmra.mxu0 %v2673
        %v3252 = vpop.f32.mrf.mxu0
        %v3253 = vadd.f32 0.0, %v3252
        %3254 = vmatmul.f32.gmra.mxu0 %v2676
        %v3255 = vpop.f32.mrf.mxu0
        %v3256 = vadd.f32 0.0, %v3255
        %3257 = vmatmul.f32.gmra.mxu0 %v2679
        %v3258 = vpop.f32.mrf.mxu0
        %v3259 = vadd.f32 0.0, %v3258
        %3260 = vmatmul.f32.gmra.mxu0 %v2682
        %v3261 = vpop.f32.mrf.mxu0
        %v3262 = vadd.f32 0.0, %v3261
        %3263 = vmatmul.f32.gmra.mxu0 %v2685
        %v3264 = vpop.f32.mrf.mxu0
        %v3265 = vadd.f32 0.0, %v3264
        %3266 = vmatmul.f32.gmra.mxu0 %v2688
        %v3267 = vpop.f32.mrf.mxu0
        %v3268 = vadd.f32 0.0, %v3267
        %3269 = vmatmul.f32.gmra.mxu0 %v2691
        %v3270 = vpop.f32.mrf.mxu0
        %v3271 = vadd.f32 0.0, %v3270
        %3272 = vmatmul.f32.gmra.mxu0 %v2694
        %v3273 = vpop.f32.mrf.mxu0
        %v3274 = vadd.f32 0.0, %v3273
        %3275 = vmatmul.f32.gmra.mxu0 %v2697
        %v3276 = vpop.f32.mrf.mxu0
        %v3277 = vadd.f32 0.0, %v3276
        %3278 = vmatmul.f32.gmra.mxu0 %v2700
        %v3279 = vpop.f32.mrf.mxu0
        %v3280 = vadd.f32 0.0, %v3279
        %3281 = vmatmul.f32.gmra.mxu0 %v2703
        %v3282 = vpop.f32.mrf.mxu0
        %v3283 = vadd.f32 0.0, %v3282
        %3284 = vmatmul.f32.gmra.mxu0 %v2706
        %v3285 = vpop.f32.mrf.mxu0
        %v3286 = vadd.f32 0.0, %v3285
        %3287 = vmatmul.f32.gmra.mxu0 %v2709
        %v3288 = vpop.f32.mrf.mxu0
        %v3289 = vadd.f32 0.0, %v3288
        %3290 = vmatmul.f32.gmra.mxu0 %v2712
        %v3291 = vpop.f32.mrf.mxu0
        %v3292 = vadd.f32 0.0, %v3291
        %3293 = vmatmul.f32.gmra.mxu0 %v2715
        %v3294 = vpop.f32.mrf.mxu0
        %v3295 = vadd.f32 0.0, %v3294
        %3296 = vmatmul.f32.gmra.mxu0 %v2718
        %v3297 = vpop.f32.mrf.mxu0
        %v3298 = vadd.f32 0.0, %v3297
        %3299 = vmatmul.f32.gmra.mxu0 %v2721
        %v3300 = vpop.f32.mrf.mxu0
        %v3301 = vadd.f32 0.0, %v3300
        %3302 = vmatmul.f32.gmra.mxu0 %v2724
        %v3303 = vpop.f32.mrf.mxu0
        %3304 = vmatmul.f32.gmra.mxu0 %v2727
        %v3305 = vpop.f32.mrf.mxu0
        %3306 = vmatmul.f32.gmra.mxu0 %v2730
        %v3307 = vpop.f32.mrf.mxu0
        %3308 = vmatmul.f32.gmra.mxu0 %v2733
        %v3309 = vpop.f32.mrf.mxu0
        %3310 = vmatmul.f32.gmra.mxu0 %v2736
        %v3311 = vpop.f32.mrf.mxu0
        %3312 = vmatmul.f32.gmra.mxu0 %v2739
        %v3313 = vpop.f32.mrf.mxu0
        %3314 = vmatmul.f32.gmra.mxu0 %v2742
        %v3315 = vpop.f32.mrf.mxu0
        %3316 = vmatmul.f32.gmra.mxu0 %v2745
        %v3317 = vpop.f32.mrf.mxu0
        %3318 = vmatmul.f32.gmra.mxu0 %v2748
        %v3319 = vpop.f32.mrf.mxu0
        %3320 = vmatmul.f32.gmra.mxu0 %v2751
        %v3321 = vpop.f32.mrf.mxu0
        %3322 = vmatmul.f32.gmra.mxu0 %v2754
        %v3323 = vpop.f32.mrf.mxu0
        %3324 = vmatmul.f32.gmra.mxu0 %v2757
        %v3325 = vpop.f32.mrf.mxu0
        %3326 = vmatmul.f32.gmra.mxu0 %v2760
        %v3327 = vpop.f32.mrf.mxu0
        %3328 = vmatmul.f32.gmra.mxu0 %v2763
        %v3329 = vpop.f32.mrf.mxu0
        %3330 = vmatmul.f32.gmra.mxu0 %v2766
        %v3331 = vpop.f32.mrf.mxu0
        %3332 = vmatmul.f32.gmra.mxu0 %v2769
        %v3333 = vpop.f32.mrf.mxu0
        %3334 = vmatmul.f32.gmra.mxu0 %v2772
        %v3335 = vpop.f32.mrf.mxu0
        %v3336 = vadd.f32 0.0, %v3335
        %3337 = vmatmul.f32.gmra.mxu0 %v2775
        %v3338 = vpop.f32.mrf.mxu0
        %v3339 = vadd.f32 0.0, %v3338
        %3340 = vmatmul.f32.gmra.mxu0 %v2778
        %v3341 = vpop.f32.mrf.mxu0
        %v3342 = vadd.f32 0.0, %v3341
        %3343 = vmatmul.f32.gmra.mxu0 %v2781
        %v3344 = vpop.f32.mrf.mxu0
        %v3345 = vadd.f32 0.0, %v3344
        %3346 = vmatmul.f32.gmra.mxu0 %v2784
        %v3347 = vpop.f32.mrf.mxu0
        %v3348 = vadd.f32 0.0, %v3347
        %3349 = vmatmul.f32.gmra.mxu0 %v2787
        %v3350 = vpop.f32.mrf.mxu0
        %v3351 = vadd.f32 0.0, %v3350
        %3352 = vmatmul.f32.gmra.mxu0 %v2790
        %v3353 = vpop.f32.mrf.mxu0
        %v3354 = vadd.f32 0.0, %v3353
        %3355 = vmatmul.f32.gmra.mxu0 %v2793
        %v3356 = vpop.f32.mrf.mxu0
        %v3357 = vadd.f32 0.0, %v3356
        %3358 = vmatmul.f32.gmra.mxu0 %v2796
        %v3359 = vpop.f32.mrf.mxu0
        %v3360 = vadd.f32 0.0, %v3359
        %3361 = vmatmul.f32.gmra.mxu0 %v2799
        %v3362 = vpop.f32.mrf.mxu0
        %v3363 = vadd.f32 0.0, %v3362
        %3364 = vmatmul.f32.gmra.mxu0 %v2802
        %v3365 = vpop.f32.mrf.mxu0
        %v3366 = vadd.f32 0.0, %v3365
        %3367 = vmatmul.f32.gmra.mxu0 %v2805
        %v3368 = vpop.f32.mrf.mxu0
        %v3369 = vadd.f32 0.0, %v3368
        %3370 = vmatmul.f32.gmra.mxu0 %v2808
        %v3371 = vpop.f32.mrf.mxu0
        %v3372 = vadd.f32 0.0, %v3371
        %3373 = vmatmul.f32.gmra.mxu0 %v2811
        %v3374 = vpop.f32.mrf.mxu0
        %v3375 = vadd.f32 0.0, %v3374
        %3376 = vmatmul.f32.gmra.mxu0 %v2814
        %v3377 = vpop.f32.mrf.mxu0
        %v3378 = vadd.f32 0.0, %v3377
        %3379 = vmatmul.f32.gmra.mxu0 %v2817
        %v3380 = vpop.f32.mrf.mxu0
        %v3381 = vadd.f32 0.0, %v3380
        %3382 = vmatmul.f32.gmra.mxu0 %v2820
        %v3383 = vpop.f32.mrf.mxu0
        %v3384 = vadd.f32 0.0, %v3383
        %3385 = vmatmul.f32.gmra.mxu0 %v2823
        %v3386 = vpop.f32.mrf.mxu0
        %v3387 = vadd.f32 0.0, %v3386
        %3388 = vmatmul.f32.gmra.mxu0 %v2826
        %v3389 = vpop.f32.mrf.mxu0
        %v3390 = vadd.f32 0.0, %v3389
        %3391 = vmatmul.f32.gmra.mxu0 %v2829
        %v3392 = vpop.f32.mrf.mxu0
        %v3393 = vadd.f32 0.0, %v3392
        %3394 = vmatmul.f32.gmra.mxu0 %v2832
        %v3395 = vpop.f32.mrf.mxu0
        %v3396 = vadd.f32 0.0, %v3395
        %3397 = vmatmul.f32.gmra.mxu0 %v2835
        %v3398 = vpop.f32.mrf.mxu0
        %v3399 = vadd.f32 0.0, %v3398
        %3400 = vmatmul.f32.gmra.mxu0 %v2838
        %v3401 = vpop.f32.mrf.mxu0
        %v3402 = vadd.f32 0.0, %v3401
        %3403 = vmatmul.f32.gmra.mxu0 %v2841
        %v3404 = vpop.f32.mrf.mxu0
        %v3405 = vadd.f32 0.0, %v3404
        %3406 = vmatmul.f32.gmra.mxu0 %v2844
        %v3407 = vpop.f32.mrf.mxu0
        %v3408 = vadd.f32 0.0, %v3407
        %3409 = vmatmul.f32.gmra.mxu0 %v2847
        %v3410 = vpop.f32.mrf.mxu0
        %v3411 = vadd.f32 0.0, %v3410
        %3412 = vmatmul.f32.gmra.mxu0 %v2850
        %v3413 = vpop.f32.mrf.mxu0
        %v3414 = vadd.f32 0.0, %v3413
        %3415 = vmatmul.f32.gmra.mxu0 %v2853
        %v3416 = vpop.f32.mrf.mxu0
        %v3417 = vadd.f32 0.0, %v3416
        %3418 = vmatmul.f32.gmra.mxu0 %v2856
        %v3419 = vpop.f32.mrf.mxu0
        %v3420 = vadd.f32 0.0, %v3419
        %3421 = vmatmul.f32.gmra.mxu0 %v2859
        %v3422 = vpop.f32.mrf.mxu0
        %v3423 = vadd.f32 0.0, %v3422
        %3424 = vmatmul.f32.gmra.mxu0 %v2862
        %v3425 = vpop.f32.mrf.mxu0
        %v3426 = vadd.f32 0.0, %v3425
        %3427 = vmatmul.f32.gmra.mxu0 %v2865
        %v3428 = vpop.f32.mrf.mxu0
        %v3429 = vadd.f32 0.0, %v3428
        %3430 = vmatmul.f32.gmra.mxu0 %v2868
        %v3431 = vpop.f32.mrf.mxu0
        %3432 = vmatmul.f32.gmra.mxu0 %v2871
        %v3433 = vpop.f32.mrf.mxu0
        %3434 = vmatmul.f32.gmra.mxu0 %v2874
        %v3435 = vpop.f32.mrf.mxu0
        %3436 = vmatmul.f32.gmra.mxu0 %v2877
        %v3437 = vpop.f32.mrf.mxu0
        %3438 = vmatmul.f32.gmra.mxu0 %v2880
        %v3439 = vpop.f32.mrf.mxu0
        %3440 = vmatmul.f32.gmra.mxu0 %v2883
        %v3441 = vpop.f32.mrf.mxu0
        %3442 = vmatmul.f32.gmra.mxu0 %v2886
        %v3443 = vpop.f32.mrf.mxu0
        %3444 = vmatmul.f32.gmra.mxu0 %v2889
        %v3445 = vpop.f32.mrf.mxu0
        %3446 = vmatmul.f32.gmra.mxu0 %v2892
        %v3447 = vpop.f32.mrf.mxu0
        %3448 = vmatmul.f32.gmra.mxu0 %v2895
        %v3449 = vpop.f32.mrf.mxu0
        %3450 = vmatmul.f32.gmra.mxu0 %v2898
        %v3451 = vpop.f32.mrf.mxu0
        %3452 = vmatmul.f32.gmra.mxu0 %v2901
        %v3453 = vpop.f32.mrf.mxu0
        %3454 = vmatmul.f32.gmra.mxu0 %v2904
        %v3455 = vpop.f32.mrf.mxu0
        %3456 = vmatmul.f32.gmra.mxu0 %v2907
        %v3457 = vpop.f32.mrf.mxu0
        %3458 = vmatmul.f32.gmra.mxu0 %v2910
        %v3459 = vpop.f32.mrf.mxu0
        %3460 = vmatmul.f32.gmra.mxu0 %v2913
        %v3461 = vpop.f32.mrf.mxu0
        %3462 = vmatmul.f32.gmra.mxu0 %v2916
        %v3463 = vpop.f32.mrf.mxu0
        %v3464 = vadd.f32 0.0, %v3463
        %3465 = vmatmul.f32.gmra.mxu0 %v2919
        %v3466 = vpop.f32.mrf.mxu0
        %v3467 = vadd.f32 0.0, %v3466
        %3468 = vmatmul.f32.gmra.mxu0 %v2922
        %v3469 = vpop.f32.mrf.mxu0
        %v3470 = vadd.f32 0.0, %v3469
        %3471 = vmatmul.f32.gmra.mxu0 %v2925
        %v3472 = vpop.f32.mrf.mxu0
        %v3473 = vadd.f32 0.0, %v3472
        %3474 = vmatmul.f32.gmra.mxu0 %v2928
        %v3475 = vpop.f32.mrf.mxu0
        %v3476 = vadd.f32 0.0, %v3475
        %3477 = vmatmul.f32.gmra.mxu0 %v2931
        %v3478 = vpop.f32.mrf.mxu0
        %v3479 = vadd.f32 0.0, %v3478
        %3480 = vmatmul.f32.gmra.mxu0 %v2934
        %v3481 = vpop.f32.mrf.mxu0
        %v3482 = vadd.f32 0.0, %v3481
        %3483 = vmatmul.f32.gmra.mxu0 %v2937
        %v3484 = vpop.f32.mrf.mxu0
        %v3485 = vadd.f32 0.0, %v3484
        %3486 = vmatmul.f32.gmra.mxu0 %v2940
        %v3487 = vpop.f32.mrf.mxu0
        %v3488 = vadd.f32 0.0, %v3487
        %3489 = vmatmul.f32.gmra.mxu0 %v2943
        %v3490 = vpop.f32.mrf.mxu0
        %v3491 = vadd.f32 0.0, %v3490
        %3492 = vmatmul.f32.gmra.mxu0 %v2946
        %v3493 = vpop.f32.mrf.mxu0
        %v3494 = vadd.f32 0.0, %v3493
        %3495 = vmatmul.f32.gmra.mxu0 %v2949
        %v3496 = vpop.f32.mrf.mxu0
        %v3497 = vadd.f32 0.0, %v3496
        %3498 = vmatmul.f32.gmra.mxu0 %v2952
        %v3499 = vpop.f32.mrf.mxu0
        %v3500 = vadd.f32 0.0, %v3499
        %3501 = vmatmul.f32.gmra.mxu0 %v2955
        %v3502 = vpop.f32.mrf.mxu0
        %v3503 = vadd.f32 0.0, %v3502
        %3504 = vmatmul.f32.gmra.mxu0 %v2958
        %v3505 = vpop.f32.mrf.mxu0
        %v3506 = vadd.f32 0.0, %v3505
        %3507 = vmatmul.f32.gmra.mxu0 %v2961
        %v3508 = vpop.f32.mrf.mxu0
        %v3509 = vadd.f32 0.0, %v3508
        %3510 = vmatmul.f32.gmra.mxu0 %v2964
        %v3511 = vpop.f32.mrf.mxu0
        %v3512 = vadd.f32 0.0, %v3511
        %3513 = vmatmul.f32.gmra.mxu0 %v2967
        %v3514 = vpop.f32.mrf.mxu0
        %v3515 = vadd.f32 0.0, %v3514
        %3516 = vmatmul.f32.gmra.mxu0 %v2970
        %v3517 = vpop.f32.mrf.mxu0
        %v3518 = vadd.f32 0.0, %v3517
        %3519 = vmatmul.f32.gmra.mxu0 %v2973
        %v3520 = vpop.f32.mrf.mxu0
        %v3521 = vadd.f32 0.0, %v3520
        %3522 = vmatmul.f32.gmra.mxu0 %v2976
        %v3523 = vpop.f32.mrf.mxu0
        %v3524 = vadd.f32 0.0, %v3523
        %3525 = vmatmul.f32.gmra.mxu0 %v2979
        %v3526 = vpop.f32.mrf.mxu0
        %v3527 = vadd.f32 0.0, %v3526
        %3528 = vmatmul.f32.gmra.mxu0 %v2982
        %v3529 = vpop.f32.mrf.mxu0
        %v3530 = vadd.f32 0.0, %v3529
        %3531 = vmatmul.f32.gmra.mxu0 %v2985
        %v3532 = vpop.f32.mrf.mxu0
        %v3533 = vadd.f32 0.0, %v3532
        %3534 = vmatmul.f32.gmra.mxu0 %v2988
        %v3535 = vpop.f32.mrf.mxu0
        %v3536 = vadd.f32 0.0, %v3535
        %3537 = vmatmul.f32.gmra.mxu0 %v2991
        %v3538 = vpop.f32.mrf.mxu0
        %v3539 = vadd.f32 0.0, %v3538
        %3540 = vmatmul.f32.gmra.mxu0 %v2994
        %v3541 = vpop.f32.mrf.mxu0
        %v3542 = vadd.f32 0.0, %v3541
        %3543 = vmatmul.f32.gmra.mxu0 %v2997
        %v3544 = vpop.f32.mrf.mxu0
        %v3545 = vadd.f32 0.0, %v3544
        %3546 = vmatmul.f32.gmra.mxu0 %v3000
        %v3547 = vpop.f32.mrf.mxu0
        %v3548 = vadd.f32 0.0, %v3547
        %3549 = vmatmul.f32.gmra.mxu0 %v3003
        %v3550 = vpop.f32.mrf.mxu0
        %v3551 = vadd.f32 0.0, %v3550
        %3552 = vmatmul.f32.gmra.mxu0 %v3006
        %v3553 = vpop.f32.mrf.mxu0
        %v3554 = vadd.f32 0.0, %v3553
        %3555 = vmatmul.f32.gmra.mxu0 %v3009
        %v3556 = vpop.f32.mrf.mxu0
        %v3557 = vadd.f32 0.0, %v3556
        %3558 = vmatmul.f32.gmra.mxu0 %v3012
        %v3559 = vpop.f32.mrf.mxu0
        %3560 = vmatmul.f32.gmra.mxu0 %v3015
        %v3561 = vpop.f32.mrf.mxu0
        %3562 = vmatmul.f32.gmra.mxu0 %v3018
        %v3563 = vpop.f32.mrf.mxu0
        %3564 = vmatmul.f32.gmra.mxu0 %v3021
        %v3565 = vpop.f32.mrf.mxu0
        %3566 = vmatmul.f32.gmra.mxu0 %v3024
        %v3567 = vpop.f32.mrf.mxu0
        %3568 = vmatmul.f32.gmra.mxu0 %v3027
        %v3569 = vpop.f32.mrf.mxu0
        %3570 = vmatmul.f32.gmra.mxu0 %v3030
        %v3571 = vpop.f32.mrf.mxu0
        %3572 = vmatmul.f32.gmra.mxu0 %v3033
        %v3573 = vpop.f32.mrf.mxu0
        %3574 = vmatmul.f32.gmra.mxu0 %v3036
        %v3575 = vpop.f32.mrf.mxu0
        %3576 = vmatmul.f32.gmra.mxu0 %v3039
        %v3577 = vpop.f32.mrf.mxu0
        %3578 = vmatmul.f32.gmra.mxu0 %v3042
        %v3579 = vpop.f32.mrf.mxu0
        %3580 = vmatmul.f32.gmra.mxu0 %v3045
        %v3581 = vpop.f32.mrf.mxu0
        %3582 = vmatmul.f32.gmra.mxu0 %v3048
        %v3583 = vpop.f32.mrf.mxu0
        %3584 = vmatmul.f32.gmra.mxu0 %v3051
        %v3585 = vpop.f32.mrf.mxu0
        %3586 = vmatmul.f32.gmra.mxu0 %v3054
        %v3587 = vpop.f32.mrf.mxu0
        %3588 = vmatmul.f32.gmra.mxu0 %v3057
        %v3589 = vpop.f32.mrf.mxu0
        %3590 = vdwg.mxu0
        %v3591 = vadd.f32 %v1778, %v3080
        %v3592 = vadd.f32 %v1781, %v3083
        %v3593 = vadd.f32 %v1784, %v3086
        %v3594 = vadd.f32 %v1787, %v3089
        %v3595 = vadd.f32 %v1790, %v3092
        %v3596 = vadd.f32 %v1793, %v3095
        %v3597 = vadd.f32 %v1796, %v3098
        %v3598 = vadd.f32 %v1799, %v3101
        %v3599 = vadd.f32 %v1802, %v3104
        %v3600 = vadd.f32 %v1805, %v3107
        %v3601 = vadd.f32 %v1808, %v3110
        %v3602 = vadd.f32 %v1811, %v3113
        %v3603 = vadd.f32 %v1814, %v3116
        %v3604 = vadd.f32 %v1817, %v3119
        %v3605 = vadd.f32 %v1820, %v3122
        %v3606 = vadd.f32 %v1823, %v3125
        %v3607 = vadd.f32 %v1826, %v3128
        %v3608 = vadd.f32 %v1829, %v3131
        %v3609 = vadd.f32 %v1832, %v3134
        %v3610 = vadd.f32 %v1835, %v3137
        %v3611 = vadd.f32 %v1838, %v3140
        %v3612 = vadd.f32 %v1841, %v3143
        %v3613 = vadd.f32 %v1844, %v3146
        %v3614 = vadd.f32 %v1847, %v3149
        %v3615 = vadd.f32 %v1850, %v3152
        %v3616 = vadd.f32 %v1853, %v3155
        %v3617 = vadd.f32 %v1856, %v3158
        %v3618 = vadd.f32 %v1859, %v3161
        %v3619 = vadd.f32 %v1862, %v3164
        %v3620 = vadd.f32 %v1865, %v3167
        %v3621 = vadd.f32 %v1868, %v3170
        %v3622 = vadd.f32 %v1871, %v3173
        %v3623 = vadd.f32 %v1906, %v3208
        %v3624 = vadd.f32 %v1909, %v3211
        %v3625 = vadd.f32 %v1912, %v3214
        %v3626 = vadd.f32 %v1915, %v3217
        %v3627 = vadd.f32 %v1918, %v3220
        %v3628 = vadd.f32 %v1921, %v3223
        %v3629 = vadd.f32 %v1924, %v3226
        %v3630 = vadd.f32 %v1927, %v3229
        %v3631 = vadd.f32 %v1930, %v3232
        %v3632 = vadd.f32 %v1933, %v3235
        %v3633 = vadd.f32 %v1936, %v3238
        %v3634 = vadd.f32 %v1939, %v3241
        %v3635 = vadd.f32 %v1942, %v3244
        %v3636 = vadd.f32 %v1945, %v3247
        %v3637 = vadd.f32 %v1948, %v3250
        %v3638 = vadd.f32 %v1951, %v3253
        %v3639 = vadd.f32 %v1954, %v3256
        %v3640 = vadd.f32 %v1957, %v3259
        %v3641 = vadd.f32 %v1960, %v3262
        %v3642 = vadd.f32 %v1963, %v3265
        %v3643 = vadd.f32 %v1966, %v3268
        %v3644 = vadd.f32 %v1969, %v3271
        %v3645 = vadd.f32 %v1972, %v3274
        %v3646 = vadd.f32 %v1975, %v3277
        %v3647 = vadd.f32 %v1978, %v3280
        %v3648 = vadd.f32 %v1981, %v3283
        %v3649 = vadd.f32 %v1984, %v3286
        %v3650 = vadd.f32 %v1987, %v3289
        %v3651 = vadd.f32 %v1990, %v3292
        %v3652 = vadd.f32 %v1993, %v3295
        %v3653 = vadd.f32 %v1996, %v3298
        %v3654 = vadd.f32 %v1999, %v3301
        %v3655 = vadd.f32 %v2034, %v3336
        %v3656 = vadd.f32 %v2037, %v3339
        %v3657 = vadd.f32 %v2040, %v3342
        %v3658 = vadd.f32 %v2043, %v3345
        %v3659 = vadd.f32 %v2046, %v3348
        %v3660 = vadd.f32 %v2049, %v3351
        %v3661 = vadd.f32 %v2052, %v3354
        %v3662 = vadd.f32 %v2055, %v3357
        %v3663 = vadd.f32 %v2058, %v3360
        %v3664 = vadd.f32 %v2061, %v3363
        %v3665 = vadd.f32 %v2064, %v3366
        %v3666 = vadd.f32 %v2067, %v3369
        %v3667 = vadd.f32 %v2070, %v3372
        %v3668 = vadd.f32 %v2073, %v3375
        %v3669 = vadd.f32 %v2076, %v3378
        %v3670 = vadd.f32 %v2079, %v3381
        %v3671 = vadd.f32 %v2082, %v3384
        %v3672 = vadd.f32 %v2085, %v3387
        %v3673 = vadd.f32 %v2088, %v3390
        %v3674 = vadd.f32 %v2091, %v3393
        %v3675 = vadd.f32 %v2094, %v3396
        %v3676 = vadd.f32 %v2097, %v3399
        %v3677 = vadd.f32 %v2100, %v3402
        %v3678 = vadd.f32 %v2103, %v3405
        %v3679 = vadd.f32 %v2106, %v3408
        %v3680 = vadd.f32 %v2109, %v3411
        %v3681 = vadd.f32 %v2112, %v3414
        %v3682 = vadd.f32 %v2115, %v3417
        %v3683 = vadd.f32 %v2118, %v3420
        %v3684 = vadd.f32 %v2121, %v3423
        %v3685 = vadd.f32 %v2124, %v3426
        %v3686 = vadd.f32 %v2127, %v3429
        %v3687 = vadd.f32 %v2162, %v3464
        %v3688 = vadd.f32 %v2165, %v3467
        %v3689 = vadd.f32 %v2168, %v3470
        %v3690 = vadd.f32 %v2171, %v3473
        %v3691 = vadd.f32 %v2174, %v3476
        %v3692 = vadd.f32 %v2177, %v3479
        %v3693 = vadd.f32 %v2180, %v3482
        %v3694 = vadd.f32 %v2183, %v3485
        %v3695 = vadd.f32 %v2186, %v3488
        %v3696 = vadd.f32 %v2189, %v3491
        %v3697 = vadd.f32 %v2192, %v3494
        %v3698 = vadd.f32 %v2195, %v3497
        %v3699 = vadd.f32 %v2198, %v3500
        %v3700 = vadd.f32 %v2201, %v3503
        %v3701 = vadd.f32 %v2204, %v3506
        %v3702 = vadd.f32 %v2207, %v3509
        %v3703 = vadd.f32 %v2210, %v3512
        %v3704 = vadd.f32 %v2213, %v3515
        %v3705 = vadd.f32 %v2216, %v3518
        %v3706 = vadd.f32 %v2219, %v3521
        %v3707 = vadd.f32 %v2222, %v3524
        %v3708 = vadd.f32 %v2225, %v3527
        %v3709 = vadd.f32 %v2228, %v3530
        %v3710 = vadd.f32 %v2231, %v3533
        %v3711 = vadd.f32 %v2234, %v3536
        %v3712 = vadd.f32 %v2237, %v3539
        %v3713 = vadd.f32 %v2240, %v3542
        %v3714 = vadd.f32 %v2243, %v3545
        %v3715 = vadd.f32 %v2246, %v3548
        %v3716 = vadd.f32 %v2249, %v3551
        %v3717 = vadd.f32 %v2252, %v3554
        %v3718 = vadd.f32 %v2255, %v3557
        %v3719 = vld [vmem:[%s385 + $0x180] sm:$0xff]
        %v3720 = vld [vmem:[%s385 + $0x188] sm:$0xff]
        %v3721 = vld [vmem:[%s385 + $0x190] sm:$0xff]
        %v3722 = vld [vmem:[%s385 + $0x198] sm:$0xff]
        %v3723 = vld [vmem:[%s385 + $0x1a0] sm:$0xff]
        %v3724 = vld [vmem:[%s385 + $0x1a8] sm:$0xff]
        %v3725 = vld [vmem:[%s385 + $0x1b0] sm:$0xff]
        %v3726 = vld [vmem:[%s385 + $0x1b8] sm:$0xff]
        %v3727 = vld [vmem:[%s385 + $0x1c0] sm:$0xff]
        %v3728 = vld [vmem:[%s385 + $0x1c8] sm:$0xff]
        %v3729 = vld [vmem:[%s385 + $0x1d0] sm:$0xff]
        %v3730 = vld [vmem:[%s385 + $0x1d8] sm:$0xff]
        %v3731 = vld [vmem:[%s385 + $0x1e0] sm:$0xff]
        %v3732 = vld [vmem:[%s385 + $0x1e8] sm:$0xff]
        %v3733 = vld [vmem:[%s385 + $0x1f0] sm:$0xff]
        %v3734 = vld [vmem:[%s385 + $0x1f8] sm:$0xff]
        %v3735 = vld [vmem:[%s385 + $0x200] sm:$0xff]
        %v3736 = vld [vmem:[%s385 + $0x208] sm:$0xff]
        %v3737 = vld [vmem:[%s385 + $0x210] sm:$0xff]
        %v3738 = vld [vmem:[%s385 + $0x218] sm:$0xff]
        %v3739 = vld [vmem:[%s385 + $0x220] sm:$0xff]
        %v3740 = vld [vmem:[%s385 + $0x228] sm:$0xff]
        %v3741 = vld [vmem:[%s385 + $0x230] sm:$0xff]
        %v3742 = vld [vmem:[%s385 + $0x238] sm:$0xff]
        %v3743 = vld [vmem:[%s385 + $0x240] sm:$0xff]
        %v3744 = vld [vmem:[%s385 + $0x248] sm:$0xff]
        %v3745 = vld [vmem:[%s385 + $0x250] sm:$0xff]
        %v3746 = vld [vmem:[%s385 + $0x258] sm:$0xff]
        %v3747 = vld [vmem:[%s385 + $0x260] sm:$0xff]
        %v3748 = vld [vmem:[%s385 + $0x268] sm:$0xff]
        %v3749 = vld [vmem:[%s385 + $0x270] sm:$0xff]
        %v3750 = vld [vmem:[%s385 + $0x278] sm:$0xff]
        %v3751 = vld [vmem:[%s385 + $0x280] sm:$0xff]
        %v3752 = vld [vmem:[%s385 + $0x288] sm:$0xff]
        %v3753 = vld [vmem:[%s385 + $0x290] sm:$0xff]
        %v3754 = vld [vmem:[%s385 + $0x298] sm:$0xff]
        %v3755 = vld [vmem:[%s385 + $0x2a0] sm:$0xff]
        %v3756 = vld [vmem:[%s385 + $0x2a8] sm:$0xff]
        %v3757 = vld [vmem:[%s385 + $0x2b0] sm:$0xff]
        %v3758 = vld [vmem:[%s385 + $0x2b8] sm:$0xff]
        %v3759 = vld [vmem:[%s385 + $0x2c0] sm:$0xff]
        %v3760 = vld [vmem:[%s385 + $0x2c8] sm:$0xff]
        %v3761 = vld [vmem:[%s385 + $0x2d0] sm:$0xff]
        %v3762 = vld [vmem:[%s385 + $0x2d8] sm:$0xff]
        %v3763 = vld [vmem:[%s385 + $0x2e0] sm:$0xff]
        %v3764 = vld [vmem:[%s385 + $0x2e8] sm:$0xff]
        %v3765 = vld [vmem:[%s385 + $0x2f0] sm:$0xff]
        %v3766 = vld [vmem:[%s385 + $0x2f8] sm:$0xff]
        %v3767 = vld [vmem:[%s385 + $0x300] sm:$0xff]
        %v3768 = vld [vmem:[%s385 + $0x308] sm:$0xff]
        %v3769 = vld [vmem:[%s385 + $0x310] sm:$0xff]
        %v3770 = vld [vmem:[%s385 + $0x318] sm:$0xff]
        %v3771 = vld [vmem:[%s385 + $0x320] sm:$0xff]
        %v3772 = vld [vmem:[%s385 + $0x328] sm:$0xff]
        %v3773 = vld [vmem:[%s385 + $0x330] sm:$0xff]
        %v3774 = vld [vmem:[%s385 + $0x338] sm:$0xff]
        %v3775 = vld [vmem:[%s385 + $0x340] sm:$0xff]
        %v3776 = vld [vmem:[%s385 + $0x348] sm:$0xff]
        %v3777 = vld [vmem:[%s385 + $0x350] sm:$0xff]
        %v3778 = vld [vmem:[%s385 + $0x358] sm:$0xff]
        %v3779 = vld [vmem:[%s385 + $0x360] sm:$0xff]
        %v3780 = vld [vmem:[%s385 + $0x368] sm:$0xff]
        %v3781 = vld [vmem:[%s385 + $0x370] sm:$0xff]
        %v3782 = vld [vmem:[%s385 + $0x378] sm:$0xff]
        %v3783 = vld [vmem:[%s385 + $0x380] sm:$0xff]
        %v3784 = vld [vmem:[%s385 + $0x388] sm:$0xff]
        %v3785 = vld [vmem:[%s385 + $0x390] sm:$0xff]
        %v3786 = vld [vmem:[%s385 + $0x398] sm:$0xff]
        %v3787 = vld [vmem:[%s385 + $0x3a0] sm:$0xff]
        %v3788 = vld [vmem:[%s385 + $0x3a8] sm:$0xff]
        %v3789 = vld [vmem:[%s385 + $0x3b0] sm:$0xff]
        %v3790 = vld [vmem:[%s385 + $0x3b8] sm:$0xff]
        %v3791 = vld [vmem:[%s385 + $0x3c0] sm:$0xff]
        %v3792 = vld [vmem:[%s385 + $0x3c8] sm:$0xff]
        %v3793 = vld [vmem:[%s385 + $0x3d0] sm:$0xff]
        %v3794 = vld [vmem:[%s385 + $0x3d8] sm:$0xff]
        %v3795 = vld [vmem:[%s385 + $0x3e0] sm:$0xff]
        %v3796 = vld [vmem:[%s385 + $0x3e8] sm:$0xff]
        %v3797 = vld [vmem:[%s385 + $0x3f0] sm:$0xff]
        %v3798 = vld [vmem:[%s385 + $0x3f8] sm:$0xff]
        %v3799 = vld [vmem:[%s385 + $0x400] sm:$0xff]
        %v3800 = vld [vmem:[%s385 + $0x408] sm:$0xff]
        %v3801 = vld [vmem:[%s385 + $0x410] sm:$0xff]
        %v3802 = vld [vmem:[%s385 + $0x418] sm:$0xff]
        %v3803 = vld [vmem:[%s385 + $0x420] sm:$0xff]
        %v3804 = vld [vmem:[%s385 + $0x428] sm:$0xff]
        %v3805 = vld [vmem:[%s385 + $0x430] sm:$0xff]
        %v3806 = vld [vmem:[%s385 + $0x438] sm:$0xff]
        %v3807 = vld [vmem:[%s385 + $0x440] sm:$0xff]
        %v3808 = vld [vmem:[%s385 + $0x448] sm:$0xff]
        %v3809 = vld [vmem:[%s385 + $0x450] sm:$0xff]
        %v3810 = vld [vmem:[%s385 + $0x458] sm:$0xff]
        %v3811 = vld [vmem:[%s385 + $0x460] sm:$0xff]
        %v3812 = vld [vmem:[%s385 + $0x468] sm:$0xff]
        %v3813 = vld [vmem:[%s385 + $0x470] sm:$0xff]
        %v3814 = vld [vmem:[%s385 + $0x478] sm:$0xff]
        %v3815 = vld [vmem:[%s385 + $0x480] sm:$0xff]
        %v3816 = vld [vmem:[%s385 + $0x488] sm:$0xff]
        %v3817 = vld [vmem:[%s385 + $0x490] sm:$0xff]
        %v3818 = vld [vmem:[%s385 + $0x498] sm:$0xff]
        %v3819 = vld [vmem:[%s385 + $0x4a0] sm:$0xff]
        %v3820 = vld [vmem:[%s385 + $0x4a8] sm:$0xff]
        %v3821 = vld [vmem:[%s385 + $0x4b0] sm:$0xff]
        %v3822 = vld [vmem:[%s385 + $0x4b8] sm:$0xff]
        %v3823 = vld [vmem:[%s385 + $0x4c0] sm:$0xff]
        %v3824 = vld [vmem:[%s385 + $0x4c8] sm:$0xff]
        %v3825 = vld [vmem:[%s385 + $0x4d0] sm:$0xff]
        %v3826 = vld [vmem:[%s385 + $0x4d8] sm:$0xff]
        %v3827 = vld [vmem:[%s385 + $0x4e0] sm:$0xff]
        %v3828 = vld [vmem:[%s385 + $0x4e8] sm:$0xff]
        %v3829 = vld [vmem:[%s385 + $0x4f0] sm:$0xff]
        %v3830 = vld [vmem:[%s385 + $0x4f8] sm:$0xff]
        %v3831 = vld [vmem:[%s385 + $0x500] sm:$0xff]
        %v3832 = vld [vmem:[%s385 + $0x508] sm:$0xff]
        %v3833 = vld [vmem:[%s385 + $0x510] sm:$0xff]
        %v3834 = vld [vmem:[%s385 + $0x518] sm:$0xff]
        %v3835 = vld [vmem:[%s385 + $0x520] sm:$0xff]
        %v3836 = vld [vmem:[%s385 + $0x528] sm:$0xff]
        %v3837 = vld [vmem:[%s385 + $0x530] sm:$0xff]
        %v3838 = vld [vmem:[%s385 + $0x538] sm:$0xff]
        %v3839 = vld [vmem:[%s385 + $0x540] sm:$0xff]
        %v3840 = vld [vmem:[%s385 + $0x548] sm:$0xff]
        %v3841 = vld [vmem:[%s385 + $0x550] sm:$0xff]
        %v3842 = vld [vmem:[%s385 + $0x558] sm:$0xff]
        %v3843 = vld [vmem:[%s385 + $0x560] sm:$0xff]
        %v3844 = vld [vmem:[%s385 + $0x568] sm:$0xff]
        %v3845 = vld [vmem:[%s385 + $0x570] sm:$0xff]
        %v3846 = vld [vmem:[%s385 + $0x578] sm:$0xff]
        %v3847 = vld [vmem:[%s385 + $0x580] sm:$0xff]
        %v3848 = vld [vmem:[%s385 + $0x588] sm:$0xff]
        %v3849 = vld [vmem:[%s385 + $0x590] sm:$0xff]
        %v3850 = vld [vmem:[%s385 + $0x598] sm:$0xff]
        %v3851 = vld [vmem:[%s385 + $0x5a0] sm:$0xff]
        %v3852 = vld [vmem:[%s385 + $0x5a8] sm:$0xff]
        %v3853 = vld [vmem:[%s385 + $0x5b0] sm:$0xff]
        %v3854 = vld [vmem:[%s385 + $0x5b8] sm:$0xff]
        %v3855 = vld [vmem:[%s385 + $0x5c0] sm:$0xff]
        %v3856 = vld [vmem:[%s385 + $0x5c8] sm:$0xff]
        %v3857 = vld [vmem:[%s385 + $0x5d0] sm:$0xff]
        %v3858 = vld [vmem:[%s385 + $0x5d8] sm:$0xff]
        %v3859 = vld [vmem:[%s385 + $0x5e0] sm:$0xff]
        %v3860 = vld [vmem:[%s385 + $0x5e8] sm:$0xff]
        %v3861 = vld [vmem:[%s385 + $0x5f0] sm:$0xff]
        %v3862 = vld [vmem:[%s385 + $0x5f8] sm:$0xff]
        %v3863 = vld [vmem:[%s385 + $0x600] sm:$0xff]
        %v3864 = vld [vmem:[%s385 + $0x608] sm:$0xff]
        %v3865 = vld [vmem:[%s385 + $0x610] sm:$0xff]
        %v3866 = vld [vmem:[%s385 + $0x618] sm:$0xff]
        %v3867 = vld [vmem:[%s385 + $0x620] sm:$0xff]
        %v3868 = vld [vmem:[%s385 + $0x628] sm:$0xff]
        %v3869 = vld [vmem:[%s385 + $0x630] sm:$0xff]
        %v3870 = vld [vmem:[%s385 + $0x638] sm:$0xff]
        %v3871 = vld [vmem:[%s385 + $0x640] sm:$0xff]
        %v3872 = vld [vmem:[%s385 + $0x648] sm:$0xff]
        %v3873 = vld [vmem:[%s385 + $0x650] sm:$0xff]
        %v3874 = vld [vmem:[%s385 + $0x658] sm:$0xff]
        %v3875 = vld [vmem:[%s385 + $0x660] sm:$0xff]
        %v3876 = vld [vmem:[%s385 + $0x668] sm:$0xff]
        %v3877 = vld [vmem:[%s385 + $0x670] sm:$0xff]
        %v3878 = vld [vmem:[%s385 + $0x678] sm:$0xff]
        %v3879 = vld [vmem:[%s385 + $0x680] sm:$0xff]
        %v3880 = vld [vmem:[%s385 + $0x688] sm:$0xff]
        %v3881 = vld [vmem:[%s385 + $0x690] sm:$0xff]
        %v3882 = vld [vmem:[%s385 + $0x698] sm:$0xff]
        %v3883 = vld [vmem:[%s385 + $0x6a0] sm:$0xff]
        %v3884 = vld [vmem:[%s385 + $0x6a8] sm:$0xff]
        %v3885 = vld [vmem:[%s385 + $0x6b0] sm:$0xff]
        %v3886 = vld [vmem:[%s385 + $0x6b8] sm:$0xff]
        %v3887 = vld [vmem:[%s385 + $0x6c0] sm:$0xff]
        %v3888 = vld [vmem:[%s385 + $0x6c8] sm:$0xff]
        %v3889 = vld [vmem:[%s385 + $0x6d0] sm:$0xff]
        %v3890 = vld [vmem:[%s385 + $0x6d8] sm:$0xff]
        %v3891 = vld [vmem:[%s385 + $0x6e0] sm:$0xff]
        %v3892 = vld [vmem:[%s385 + $0x6e8] sm:$0xff]
        %v3893 = vld [vmem:[%s385 + $0x6f0] sm:$0xff]
        %v3894 = vld [vmem:[%s385 + $0x6f8] sm:$0xff]
        %v3895 = vld [vmem:[%s385 + $0x700] sm:$0xff]
        %v3896 = vld [vmem:[%s385 + $0x708] sm:$0xff]
        %v3897 = vld [vmem:[%s385 + $0x710] sm:$0xff]
        %v3898 = vld [vmem:[%s385 + $0x718] sm:$0xff]
        %v3899 = vld [vmem:[%s385 + $0x720] sm:$0xff]
        %v3900 = vld [vmem:[%s385 + $0x728] sm:$0xff]
        %v3901 = vld [vmem:[%s385 + $0x730] sm:$0xff]
        %v3902 = vld [vmem:[%s385 + $0x738] sm:$0xff]
        %v3903 = vld [vmem:[%s385 + $0x740] sm:$0xff]
        %v3904 = vld [vmem:[%s385 + $0x748] sm:$0xff]
        %v3905 = vld [vmem:[%s385 + $0x750] sm:$0xff]
        %v3906 = vld [vmem:[%s385 + $0x758] sm:$0xff]
        %v3907 = vld [vmem:[%s385 + $0x760] sm:$0xff]
        %v3908 = vld [vmem:[%s385 + $0x768] sm:$0xff]
        %v3909 = vld [vmem:[%s385 + $0x770] sm:$0xff]
        %v3910 = vld [vmem:[%s385 + $0x778] sm:$0xff]
        %s3911 = scalar_lea.vmem %s1, 24
        %v3912 = vld [vmem:[%s3911] sm:$0x3f]
        %v3914 = vsel %vm599, %v3719, 0
        %v3917 = vsel %vm599, %v3720, 0
        %v3920 = vsel %vm599, %v3721, 0
        %v3923 = vsel %vm599, %v3722, 0
        %v3926 = vsel %vm599, %v3723, 0
        %v3929 = vsel %vm599, %v3724, 0
        %v3932 = vsel %vm599, %v3725, 0
        %v3935 = vsel %vm599, %v3726, 0
        %v3938 = vsel %vm599, %v3727, 0
        %v3941 = vsel %vm599, %v3728, 0
        %v3944 = vsel %vm599, %v3729, 0
        %v3947 = vsel %vm599, %v3730, 0
        %v3950 = vsel %vm599, %v3731, 0
        %v3953 = vsel %vm599, %v3732, 0
        %v3956 = vsel %vm599, %v3733, 0
        %v3959 = vsel %vm599, %v3734, 0
        %v3962 = vsel %vm599, %v3735, 0
        %v3965 = vsel %vm599, %v3736, 0
        %v3968 = vsel %vm599, %v3737, 0
        %v3971 = vsel %vm599, %v3738, 0
        %v3974 = vsel %vm599, %v3739, 0
        %v3977 = vsel %vm599, %v3740, 0
        %v3980 = vsel %vm599, %v3741, 0
        %v3983 = vsel %vm599, %v3742, 0
        %v3986 = vsel %vm599, %v3743, 0
        %v3989 = vsel %vm599, %v3744, 0
        %v3992 = vsel %vm599, %v3745, 0
        %v3995 = vsel %vm599, %v3746, 0
        %v3998 = vsel %vm599, %v3747, 0
        %v4001 = vsel %vm599, %v3748, 0
        %v4004 = vsel %vm599, %v3749, 0
        %v4007 = vsel %vm599, %v3750, 0
        %v4010 = vsel %vm599, %v3751, 0
        %v4013 = vsel %vm599, %v3752, 0
        %v4016 = vsel %vm599, %v3753, 0
        %v4019 = vsel %vm599, %v3754, 0
        %v4022 = vsel %vm599, %v3755, 0
        %v4025 = vsel %vm599, %v3756, 0
        %v4028 = vsel %vm599, %v3757, 0
        %v4031 = vsel %vm599, %v3758, 0
        %v4034 = vsel %vm599, %v3759, 0
        %v4037 = vsel %vm599, %v3760, 0
        %v4040 = vsel %vm599, %v3761, 0
        %v4043 = vsel %vm599, %v3762, 0
        %v4046 = vsel %vm599, %v3763, 0
        %v4049 = vsel %vm599, %v3764, 0
        %v4052 = vsel %vm599, %v3765, 0
        %v4055 = vsel %vm599, %v3766, 0
        %v4058 = vsel %vm599, %v3767, 0
        %v4061 = vsel %vm599, %v3768, 0
        %v4064 = vsel %vm599, %v3769, 0
        %v4067 = vsel %vm599, %v3770, 0
        %v4070 = vsel %vm599, %v3771, 0
        %v4073 = vsel %vm599, %v3772, 0
        %v4076 = vsel %vm599, %v3773, 0
        %v4079 = vsel %vm599, %v3774, 0
        %v4082 = vsel %vm599, %v3775, 0
        %v4085 = vsel %vm599, %v3776, 0
        %v4088 = vsel %vm599, %v3777, 0
        %v4091 = vsel %vm599, %v3778, 0
        %v4094 = vsel %vm599, %v3779, 0
        %v4097 = vsel %vm599, %v3780, 0
        %v4100 = vsel %vm599, %v3781, 0
        %v4103 = vsel %vm599, %v3782, 0
        %v4106 = vsel %vm599, %v3783, 0
        %v4109 = vsel %vm599, %v3784, 0
        %v4112 = vsel %vm599, %v3785, 0
        %v4115 = vsel %vm599, %v3786, 0
        %v4118 = vsel %vm599, %v3787, 0
        %v4121 = vsel %vm599, %v3788, 0
        %v4124 = vsel %vm599, %v3789, 0
        %v4127 = vsel %vm599, %v3790, 0
        %v4130 = vsel %vm599, %v3791, 0
        %v4133 = vsel %vm599, %v3792, 0
        %v4136 = vsel %vm599, %v3793, 0
        %v4139 = vsel %vm599, %v3794, 0
        %v4142 = vsel %vm599, %v3795, 0
        %v4145 = vsel %vm599, %v3796, 0
        %v4148 = vsel %vm599, %v3797, 0
        %v4151 = vsel %vm599, %v3798, 0
        %v4154 = vsel %vm599, %v3799, 0
        %v4157 = vsel %vm599, %v3800, 0
        %v4160 = vsel %vm599, %v3801, 0
        %v4163 = vsel %vm599, %v3802, 0
        %v4166 = vsel %vm599, %v3803, 0
        %v4169 = vsel %vm599, %v3804, 0
        %v4172 = vsel %vm599, %v3805, 0
        %v4175 = vsel %vm599, %v3806, 0
        %v4178 = vsel %vm599, %v3807, 0
        %v4181 = vsel %vm599, %v3808, 0
        %v4184 = vsel %vm599, %v3809, 0
        %v4187 = vsel %vm599, %v3810, 0
        %v4190 = vsel %vm599, %v3811, 0
        %v4193 = vsel %vm599, %v3812, 0
        %v4196 = vsel %vm599, %v3813, 0
        %v4199 = vsel %vm599, %v3814, 0
        %v4202 = vsel %vm599, %v3815, 0
        %v4205 = vsel %vm599, %v3816, 0
        %v4208 = vsel %vm599, %v3817, 0
        %v4211 = vsel %vm599, %v3818, 0
        %v4214 = vsel %vm599, %v3819, 0
        %v4217 = vsel %vm599, %v3820, 0
        %v4220 = vsel %vm599, %v3821, 0
        %v4223 = vsel %vm599, %v3822, 0
        %v4226 = vsel %vm599, %v3823, 0
        %v4229 = vsel %vm599, %v3824, 0
        %v4232 = vsel %vm599, %v3825, 0
        %v4235 = vsel %vm599, %v3826, 0
        %v4238 = vsel %vm599, %v3827, 0
        %v4241 = vsel %vm599, %v3828, 0
        %v4244 = vsel %vm599, %v3829, 0
        %v4247 = vsel %vm599, %v3830, 0
        %v4250 = vsel %vm599, %v3831, 0
        %v4253 = vsel %vm599, %v3832, 0
        %v4256 = vsel %vm599, %v3833, 0
        %v4259 = vsel %vm599, %v3834, 0
        %v4262 = vsel %vm599, %v3835, 0
        %v4265 = vsel %vm599, %v3836, 0
        %v4268 = vsel %vm599, %v3837, 0
        %v4271 = vsel %vm599, %v3838, 0
        %v4274 = vsel %vm599, %v3839, 0
        %v4277 = vsel %vm599, %v3840, 0
        %v4280 = vsel %vm599, %v3841, 0
        %v4283 = vsel %vm599, %v3842, 0
        %v4286 = vsel %vm599, %v3843, 0
        %v4289 = vsel %vm599, %v3844, 0
        %v4292 = vsel %vm599, %v3845, 0
        %v4295 = vsel %vm599, %v3846, 0
        %v4298 = vsel %vm599, %v3847, 0
        %v4301 = vsel %vm599, %v3848, 0
        %v4304 = vsel %vm599, %v3849, 0
        %v4307 = vsel %vm599, %v3850, 0
        %v4310 = vsel %vm599, %v3851, 0
        %v4313 = vsel %vm599, %v3852, 0
        %v4316 = vsel %vm599, %v3853, 0
        %v4319 = vsel %vm599, %v3854, 0
        %v4322 = vsel %vm599, %v3855, 0
        %v4325 = vsel %vm599, %v3856, 0
        %v4328 = vsel %vm599, %v3857, 0
        %v4331 = vsel %vm599, %v3858, 0
        %v4334 = vsel %vm599, %v3859, 0
        %v4337 = vsel %vm599, %v3860, 0
        %v4340 = vsel %vm599, %v3861, 0
        %v4343 = vsel %vm599, %v3862, 0
        %v4346 = vsel %vm599, %v3863, 0
        %v4349 = vsel %vm599, %v3864, 0
        %v4352 = vsel %vm599, %v3865, 0
        %v4355 = vsel %vm599, %v3866, 0
        %v4358 = vsel %vm599, %v3867, 0
        %v4361 = vsel %vm599, %v3868, 0
        %v4364 = vsel %vm599, %v3869, 0
        %v4367 = vsel %vm599, %v3870, 0
        %v4370 = vsel %vm599, %v3871, 0
        %v4373 = vsel %vm599, %v3872, 0
        %v4376 = vsel %vm599, %v3873, 0
        %v4379 = vsel %vm599, %v3874, 0
        %v4382 = vsel %vm599, %v3875, 0
        %v4385 = vsel %vm599, %v3876, 0
        %v4388 = vsel %vm599, %v3877, 0
        %v4391 = vsel %vm599, %v3878, 0
        %v4394 = vsel %vm599, %v3879, 0
        %v4397 = vsel %vm599, %v3880, 0
        %v4400 = vsel %vm599, %v3881, 0
        %v4403 = vsel %vm599, %v3882, 0
        %v4406 = vsel %vm599, %v3883, 0
        %v4409 = vsel %vm599, %v3884, 0
        %v4412 = vsel %vm599, %v3885, 0
        %v4415 = vsel %vm599, %v3886, 0
        %v4418 = vsel %vm599, %v3887, 0
        %v4421 = vsel %vm599, %v3888, 0
        %v4424 = vsel %vm599, %v3889, 0
        %v4427 = vsel %vm599, %v3890, 0
        %v4430 = vsel %vm599, %v3891, 0
        %v4433 = vsel %vm599, %v3892, 0
        %v4436 = vsel %vm599, %v3893, 0
        %v4439 = vsel %vm599, %v3894, 0
        %v4442 = vsel %vm599, %v3895, 0
        %v4445 = vsel %vm599, %v3896, 0
        %v4448 = vsel %vm599, %v3897, 0
        %v4451 = vsel %vm599, %v3898, 0
        %v4454 = vsel %vm599, %v3899, 0
        %v4457 = vsel %vm599, %v3900, 0
        %v4460 = vsel %vm599, %v3901, 0
        %v4463 = vsel %vm599, %v3902, 0
        %v4466 = vsel %vm599, %v3903, 0
        %v4469 = vsel %vm599, %v3904, 0
        %v4472 = vsel %vm599, %v3905, 0
        %v4475 = vsel %vm599, %v3906, 0
        %v4478 = vsel %vm599, %v3907, 0
        %v4481 = vsel %vm599, %v3908, 0
        %v4484 = vsel %vm599, %v3909, 0
        %v4487 = vsel %vm599, %v3910, 0
        %v4490 = vsel %vm1176, %v3912, 0
        %4492 = vmatpush.msra.mxu0 0.0
        %4493 = vmatpush.msra.mxu0 0.0
        %4494 = vmatpush.msra.mxu0 0.0
        %4495 = vmatpush.msra.mxu0 0.0
        %4496 = vmatpush.msra.mxu0 0.0
        %4497 = vmatpush.msra.mxu0 0.0
        %4498 = vmatpush.msra.mxu0 0.0
        %4499 = vmatpush.msra.mxu0 0.0
        %4500 = vmatpush.msra.mxu0 0.0
        %4501 = vmatpush.msra.mxu0 0.0
        %4502 = vmatpush.msra.mxu0 0.0
        %4503 = vmatpush.msra.mxu0 0.0
        %4504 = vmatpush.msra.mxu0 0.0
        %4505 = vmatpush.msra.mxu0 0.0
        %4506 = vmatpush.msra.mxu0 0.0
        %4507 = vmatpush.msra.mxu0 %v4490
        %4508 = vmatmul.f32.gmra.mxu0 %v3914
        %v4509 = vpop.f32.mrf.mxu0
        %v4510 = vadd.f32 0.0, %v4509
        %4511 = vmatmul.f32.gmra.mxu0 %v3917
        %v4512 = vpop.f32.mrf.mxu0
        %v4513 = vadd.f32 0.0, %v4512
        %4514 = vmatmul.f32.gmra.mxu0 %v3920
        %v4515 = vpop.f32.mrf.mxu0
        %v4516 = vadd.f32 0.0, %v4515
        %4517 = vmatmul.f32.gmra.mxu0 %v3923
        %v4518 = vpop.f32.mrf.mxu0
        %v4519 = vadd.f32 0.0, %v4518
        %4520 = vmatmul.f32.gmra.mxu0 %v3926
        %v4521 = vpop.f32.mrf.mxu0
        %v4522 = vadd.f32 0.0, %v4521
        %4523 = vmatmul.f32.gmra.mxu0 %v3929
        %v4524 = vpop.f32.mrf.mxu0
        %v4525 = vadd.f32 0.0, %v4524
        %4526 = vmatmul.f32.gmra.mxu0 %v3932
        %v4527 = vpop.f32.mrf.mxu0
        %v4528 = vadd.f32 0.0, %v4527
        %4529 = vmatmul.f32.gmra.mxu0 %v3935
        %v4530 = vpop.f32.mrf.mxu0
        %v4531 = vadd.f32 0.0, %v4530
        %4532 = vmatmul.f32.gmra.mxu0 %v3938
        %v4533 = vpop.f32.mrf.mxu0
        %v4534 = vadd.f32 0.0, %v4533
        %4535 = vmatmul.f32.gmra.mxu0 %v3941
        %v4536 = vpop.f32.mrf.mxu0
        %v4537 = vadd.f32 0.0, %v4536
        %4538 = vmatmul.f32.gmra.mxu0 %v3944
        %v4539 = vpop.f32.mrf.mxu0
        %v4540 = vadd.f32 0.0, %v4539
        %4541 = vmatmul.f32.gmra.mxu0 %v3947
        %v4542 = vpop.f32.mrf.mxu0
        %v4543 = vadd.f32 0.0, %v4542
        %4544 = vmatmul.f32.gmra.mxu0 %v3950
        %v4545 = vpop.f32.mrf.mxu0
        %v4546 = vadd.f32 0.0, %v4545
        %4547 = vmatmul.f32.gmra.mxu0 %v3953
        %v4548 = vpop.f32.mrf.mxu0
        %v4549 = vadd.f32 0.0, %v4548
        %4550 = vmatmul.f32.gmra.mxu0 %v3956
        %v4551 = vpop.f32.mrf.mxu0
        %v4552 = vadd.f32 0.0, %v4551
        %4553 = vmatmul.f32.gmra.mxu0 %v3959
        %v4554 = vpop.f32.mrf.mxu0
        %v4555 = vadd.f32 0.0, %v4554
        %4556 = vmatmul.f32.gmra.mxu0 %v3962
        %v4557 = vpop.f32.mrf.mxu0
        %v4558 = vadd.f32 0.0, %v4557
        %4559 = vmatmul.f32.gmra.mxu0 %v3965
        %v4560 = vpop.f32.mrf.mxu0
        %v4561 = vadd.f32 0.0, %v4560
        %4562 = vmatmul.f32.gmra.mxu0 %v3968
        %v4563 = vpop.f32.mrf.mxu0
        %v4564 = vadd.f32 0.0, %v4563
        %4565 = vmatmul.f32.gmra.mxu0 %v3971
        %v4566 = vpop.f32.mrf.mxu0
        %v4567 = vadd.f32 0.0, %v4566
        %4568 = vmatmul.f32.gmra.mxu0 %v3974
        %v4569 = vpop.f32.mrf.mxu0
        %v4570 = vadd.f32 0.0, %v4569
        %4571 = vmatmul.f32.gmra.mxu0 %v3977
        %v4572 = vpop.f32.mrf.mxu0
        %v4573 = vadd.f32 0.0, %v4572
        %4574 = vmatmul.f32.gmra.mxu0 %v3980
        %v4575 = vpop.f32.mrf.mxu0
        %v4576 = vadd.f32 0.0, %v4575
        %4577 = vmatmul.f32.gmra.mxu0 %v3983
        %v4578 = vpop.f32.mrf.mxu0
        %v4579 = vadd.f32 0.0, %v4578
        %4580 = vmatmul.f32.gmra.mxu0 %v3986
        %v4581 = vpop.f32.mrf.mxu0
        %v4582 = vadd.f32 0.0, %v4581
        %4583 = vmatmul.f32.gmra.mxu0 %v3989
        %v4584 = vpop.f32.mrf.mxu0
        %v4585 = vadd.f32 0.0, %v4584
        %4586 = vmatmul.f32.gmra.mxu0 %v3992
        %v4587 = vpop.f32.mrf.mxu0
        %v4588 = vadd.f32 0.0, %v4587
        %4589 = vmatmul.f32.gmra.mxu0 %v3995
        %v4590 = vpop.f32.mrf.mxu0
        %v4591 = vadd.f32 0.0, %v4590
        %4592 = vmatmul.f32.gmra.mxu0 %v3998
        %v4593 = vpop.f32.mrf.mxu0
        %v4594 = vadd.f32 0.0, %v4593
        %4595 = vmatmul.f32.gmra.mxu0 %v4001
        %v4596 = vpop.f32.mrf.mxu0
        %v4597 = vadd.f32 0.0, %v4596
        %4598 = vmatmul.f32.gmra.mxu0 %v4004
        %v4599 = vpop.f32.mrf.mxu0
        %v4600 = vadd.f32 0.0, %v4599
        %4601 = vmatmul.f32.gmra.mxu0 %v4007
        %v4602 = vpop.f32.mrf.mxu0
        %v4603 = vadd.f32 0.0, %v4602
        %4604 = vmatmul.f32.gmra.mxu0 %v4010
        %v4605 = vpop.f32.mrf.mxu0
        %4606 = vmatmul.f32.gmra.mxu0 %v4013
        %v4607 = vpop.f32.mrf.mxu0
        %4608 = vmatmul.f32.gmra.mxu0 %v4016
        %v4609 = vpop.f32.mrf.mxu0
        %4610 = vmatmul.f32.gmra.mxu0 %v4019
        %v4611 = vpop.f32.mrf.mxu0
        %4612 = vmatmul.f32.gmra.mxu0 %v4022
        %v4613 = vpop.f32.mrf.mxu0
        %4614 = vmatmul.f32.gmra.mxu0 %v4025
        %v4615 = vpop.f32.mrf.mxu0
        %4616 = vmatmul.f32.gmra.mxu0 %v4028
        %v4617 = vpop.f32.mrf.mxu0
        %4618 = vmatmul.f32.gmra.mxu0 %v4031
        %v4619 = vpop.f32.mrf.mxu0
        %4620 = vmatmul.f32.gmra.mxu0 %v4034
        %v4621 = vpop.f32.mrf.mxu0
        %4622 = vmatmul.f32.gmra.mxu0 %v4037
        %v4623 = vpop.f32.mrf.mxu0
        %4624 = vmatmul.f32.gmra.mxu0 %v4040
        %v4625 = vpop.f32.mrf.mxu0
        %4626 = vmatmul.f32.gmra.mxu0 %v4043
        %v4627 = vpop.f32.mrf.mxu0
        %4628 = vmatmul.f32.gmra.mxu0 %v4046
        %v4629 = vpop.f32.mrf.mxu0
        %4630 = vmatmul.f32.gmra.mxu0 %v4049
        %v4631 = vpop.f32.mrf.mxu0
        %4632 = vmatmul.f32.gmra.mxu0 %v4052
        %v4633 = vpop.f32.mrf.mxu0
        %4634 = vmatmul.f32.gmra.mxu0 %v4055
        %v4635 = vpop.f32.mrf.mxu0
        %4636 = vmatmul.f32.gmra.mxu0 %v4058
        %v4637 = vpop.f32.mrf.mxu0
        %v4638 = vadd.f32 0.0, %v4637
        %4639 = vmatmul.f32.gmra.mxu0 %v4061
        %v4640 = vpop.f32.mrf.mxu0
        %v4641 = vadd.f32 0.0, %v4640
        %4642 = vmatmul.f32.gmra.mxu0 %v4064
        %v4643 = vpop.f32.mrf.mxu0
        %v4644 = vadd.f32 0.0, %v4643
        %4645 = vmatmul.f32.gmra.mxu0 %v4067
        %v4646 = vpop.f32.mrf.mxu0
        %v4647 = vadd.f32 0.0, %v4646
        %4648 = vmatmul.f32.gmra.mxu0 %v4070
        %v4649 = vpop.f32.mrf.mxu0
        %v4650 = vadd.f32 0.0, %v4649
        %4651 = vmatmul.f32.gmra.mxu0 %v4073
        %v4652 = vpop.f32.mrf.mxu0
        %v4653 = vadd.f32 0.0, %v4652
        %4654 = vmatmul.f32.gmra.mxu0 %v4076
        %v4655 = vpop.f32.mrf.mxu0
        %v4656 = vadd.f32 0.0, %v4655
        %4657 = vmatmul.f32.gmra.mxu0 %v4079
        %v4658 = vpop.f32.mrf.mxu0
        %v4659 = vadd.f32 0.0, %v4658
        %4660 = vmatmul.f32.gmra.mxu0 %v4082
        %v4661 = vpop.f32.mrf.mxu0
        %v4662 = vadd.f32 0.0, %v4661
        %4663 = vmatmul.f32.gmra.mxu0 %v4085
        %v4664 = vpop.f32.mrf.mxu0
        %v4665 = vadd.f32 0.0, %v4664
        %4666 = vmatmul.f32.gmra.mxu0 %v4088
        %v4667 = vpop.f32.mrf.mxu0
        %v4668 = vadd.f32 0.0, %v4667
        %4669 = vmatmul.f32.gmra.mxu0 %v4091
        %v4670 = vpop.f32.mrf.mxu0
        %v4671 = vadd.f32 0.0, %v4670
        %4672 = vmatmul.f32.gmra.mxu0 %v4094
        %v4673 = vpop.f32.mrf.mxu0
        %v4674 = vadd.f32 0.0, %v4673
        %4675 = vmatmul.f32.gmra.mxu0 %v4097
        %v4676 = vpop.f32.mrf.mxu0
        %v4677 = vadd.f32 0.0, %v4676
        %4678 = vmatmul.f32.gmra.mxu0 %v4100
        %v4679 = vpop.f32.mrf.mxu0
        %v4680 = vadd.f32 0.0, %v4679
        %4681 = vmatmul.f32.gmra.mxu0 %v4103
        %v4682 = vpop.f32.mrf.mxu0
        %v4683 = vadd.f32 0.0, %v4682
        %4684 = vmatmul.f32.gmra.mxu0 %v4106
        %v4685 = vpop.f32.mrf.mxu0
        %v4686 = vadd.f32 0.0, %v4685
        %4687 = vmatmul.f32.gmra.mxu0 %v4109
        %v4688 = vpop.f32.mrf.mxu0
        %v4689 = vadd.f32 0.0, %v4688
        %4690 = vmatmul.f32.gmra.mxu0 %v4112
        %v4691 = vpop.f32.mrf.mxu0
        %v4692 = vadd.f32 0.0, %v4691
        %4693 = vmatmul.f32.gmra.mxu0 %v4115
        %v4694 = vpop.f32.mrf.mxu0
        %v4695 = vadd.f32 0.0, %v4694
        %4696 = vmatmul.f32.gmra.mxu0 %v4118
        %v4697 = vpop.f32.mrf.mxu0
        %v4698 = vadd.f32 0.0, %v4697
        %4699 = vmatmul.f32.gmra.mxu0 %v4121
        %v4700 = vpop.f32.mrf.mxu0
        %v4701 = vadd.f32 0.0, %v4700
        %4702 = vmatmul.f32.gmra.mxu0 %v4124
        %v4703 = vpop.f32.mrf.mxu0
        %v4704 = vadd.f32 0.0, %v4703
        %4705 = vmatmul.f32.gmra.mxu0 %v4127
        %v4706 = vpop.f32.mrf.mxu0
        %v4707 = vadd.f32 0.0, %v4706
        %4708 = vmatmul.f32.gmra.mxu0 %v4130
        %v4709 = vpop.f32.mrf.mxu0
        %v4710 = vadd.f32 0.0, %v4709
        %4711 = vmatmul.f32.gmra.mxu0 %v4133
        %v4712 = vpop.f32.mrf.mxu0
        %v4713 = vadd.f32 0.0, %v4712
        %4714 = vmatmul.f32.gmra.mxu0 %v4136
        %v4715 = vpop.f32.mrf.mxu0
        %v4716 = vadd.f32 0.0, %v4715
        %4717 = vmatmul.f32.gmra.mxu0 %v4139
        %v4718 = vpop.f32.mrf.mxu0
        %v4719 = vadd.f32 0.0, %v4718
        %4720 = vmatmul.f32.gmra.mxu0 %v4142
        %v4721 = vpop.f32.mrf.mxu0
        %v4722 = vadd.f32 0.0, %v4721
        %4723 = vmatmul.f32.gmra.mxu0 %v4145
        %v4724 = vpop.f32.mrf.mxu0
        %v4725 = vadd.f32 0.0, %v4724
        %4726 = vmatmul.f32.gmra.mxu0 %v4148
        %v4727 = vpop.f32.mrf.mxu0
        %v4728 = vadd.f32 0.0, %v4727
        %4729 = vmatmul.f32.gmra.mxu0 %v4151
        %v4730 = vpop.f32.mrf.mxu0
        %v4731 = vadd.f32 0.0, %v4730
        %4732 = vmatmul.f32.gmra.mxu0 %v4154
        %v4733 = vpop.f32.mrf.mxu0
        %4734 = vmatmul.f32.gmra.mxu0 %v4157
        %v4735 = vpop.f32.mrf.mxu0
        %4736 = vmatmul.f32.gmra.mxu0 %v4160
        %v4737 = vpop.f32.mrf.mxu0
        %4738 = vmatmul.f32.gmra.mxu0 %v4163
        %v4739 = vpop.f32.mrf.mxu0
        %4740 = vmatmul.f32.gmra.mxu0 %v4166
        %v4741 = vpop.f32.mrf.mxu0
        %4742 = vmatmul.f32.gmra.mxu0 %v4169
        %v4743 = vpop.f32.mrf.mxu0
        %4744 = vmatmul.f32.gmra.mxu0 %v4172
        %v4745 = vpop.f32.mrf.mxu0
        %4746 = vmatmul.f32.gmra.mxu0 %v4175
        %v4747 = vpop.f32.mrf.mxu0
        %4748 = vmatmul.f32.gmra.mxu0 %v4178
        %v4749 = vpop.f32.mrf.mxu0
        %4750 = vmatmul.f32.gmra.mxu0 %v4181
        %v4751 = vpop.f32.mrf.mxu0
        %4752 = vmatmul.f32.gmra.mxu0 %v4184
        %v4753 = vpop.f32.mrf.mxu0
        %4754 = vmatmul.f32.gmra.mxu0 %v4187
        %v4755 = vpop.f32.mrf.mxu0
        %4756 = vmatmul.f32.gmra.mxu0 %v4190
        %v4757 = vpop.f32.mrf.mxu0
        %4758 = vmatmul.f32.gmra.mxu0 %v4193
        %v4759 = vpop.f32.mrf.mxu0
        %4760 = vmatmul.f32.gmra.mxu0 %v4196
        %v4761 = vpop.f32.mrf.mxu0
        %4762 = vmatmul.f32.gmra.mxu0 %v4199
        %v4763 = vpop.f32.mrf.mxu0
        %4764 = vmatmul.f32.gmra.mxu0 %v4202
        %v4765 = vpop.f32.mrf.mxu0
        %v4766 = vadd.f32 0.0, %v4765
        %4767 = vmatmul.f32.gmra.mxu0 %v4205
        %v4768 = vpop.f32.mrf.mxu0
        %v4769 = vadd.f32 0.0, %v4768
        %4770 = vmatmul.f32.gmra.mxu0 %v4208
        %v4771 = vpop.f32.mrf.mxu0
        %v4772 = vadd.f32 0.0, %v4771
        %4773 = vmatmul.f32.gmra.mxu0 %v4211
        %v4774 = vpop.f32.mrf.mxu0
        %v4775 = vadd.f32 0.0, %v4774
        %4776 = vmatmul.f32.gmra.mxu0 %v4214
        %v4777 = vpop.f32.mrf.mxu0
        %v4778 = vadd.f32 0.0, %v4777
        %4779 = vmatmul.f32.gmra.mxu0 %v4217
        %v4780 = vpop.f32.mrf.mxu0
        %v4781 = vadd.f32 0.0, %v4780
        %4782 = vmatmul.f32.gmra.mxu0 %v4220
        %v4783 = vpop.f32.mrf.mxu0
        %v4784 = vadd.f32 0.0, %v4783
        %4785 = vmatmul.f32.gmra.mxu0 %v4223
        %v4786 = vpop.f32.mrf.mxu0
        %v4787 = vadd.f32 0.0, %v4786
        %4788 = vmatmul.f32.gmra.mxu0 %v4226
        %v4789 = vpop.f32.mrf.mxu0
        %v4790 = vadd.f32 0.0, %v4789
        %4791 = vmatmul.f32.gmra.mxu0 %v4229
        %v4792 = vpop.f32.mrf.mxu0
        %v4793 = vadd.f32 0.0, %v4792
        %4794 = vmatmul.f32.gmra.mxu0 %v4232
        %v4795 = vpop.f32.mrf.mxu0
        %v4796 = vadd.f32 0.0, %v4795
        %4797 = vmatmul.f32.gmra.mxu0 %v4235
        %v4798 = vpop.f32.mrf.mxu0
        %v4799 = vadd.f32 0.0, %v4798
        %4800 = vmatmul.f32.gmra.mxu0 %v4238
        %v4801 = vpop.f32.mrf.mxu0
        %v4802 = vadd.f32 0.0, %v4801
        %4803 = vmatmul.f32.gmra.mxu0 %v4241
        %v4804 = vpop.f32.mrf.mxu0
        %v4805 = vadd.f32 0.0, %v4804
        %4806 = vmatmul.f32.gmra.mxu0 %v4244
        %v4807 = vpop.f32.mrf.mxu0
        %v4808 = vadd.f32 0.0, %v4807
        %4809 = vmatmul.f32.gmra.mxu0 %v4247
        %v4810 = vpop.f32.mrf.mxu0
        %v4811 = vadd.f32 0.0, %v4810
        %4812 = vmatmul.f32.gmra.mxu0 %v4250
        %v4813 = vpop.f32.mrf.mxu0
        %v4814 = vadd.f32 0.0, %v4813
        %4815 = vmatmul.f32.gmra.mxu0 %v4253
        %v4816 = vpop.f32.mrf.mxu0
        %v4817 = vadd.f32 0.0, %v4816
        %4818 = vmatmul.f32.gmra.mxu0 %v4256
        %v4819 = vpop.f32.mrf.mxu0
        %v4820 = vadd.f32 0.0, %v4819
        %4821 = vmatmul.f32.gmra.mxu0 %v4259
        %v4822 = vpop.f32.mrf.mxu0
        %v4823 = vadd.f32 0.0, %v4822
        %4824 = vmatmul.f32.gmra.mxu0 %v4262
        %v4825 = vpop.f32.mrf.mxu0
        %v4826 = vadd.f32 0.0, %v4825
        %4827 = vmatmul.f32.gmra.mxu0 %v4265
        %v4828 = vpop.f32.mrf.mxu0
        %v4829 = vadd.f32 0.0, %v4828
        %4830 = vmatmul.f32.gmra.mxu0 %v4268
        %v4831 = vpop.f32.mrf.mxu0
        %v4832 = vadd.f32 0.0, %v4831
        %4833 = vmatmul.f32.gmra.mxu0 %v4271
        %v4834 = vpop.f32.mrf.mxu0
        %v4835 = vadd.f32 0.0, %v4834
        %4836 = vmatmul.f32.gmra.mxu0 %v4274
        %v4837 = vpop.f32.mrf.mxu0
        %v4838 = vadd.f32 0.0, %v4837
        %4839 = vmatmul.f32.gmra.mxu0 %v4277
        %v4840 = vpop.f32.mrf.mxu0
        %v4841 = vadd.f32 0.0, %v4840
        %4842 = vmatmul.f32.gmra.mxu0 %v4280
        %v4843 = vpop.f32.mrf.mxu0
        %v4844 = vadd.f32 0.0, %v4843
        %4845 = vmatmul.f32.gmra.mxu0 %v4283
        %v4846 = vpop.f32.mrf.mxu0
        %v4847 = vadd.f32 0.0, %v4846
        %4848 = vmatmul.f32.gmra.mxu0 %v4286
        %v4849 = vpop.f32.mrf.mxu0
        %v4850 = vadd.f32 0.0, %v4849
        %4851 = vmatmul.f32.gmra.mxu0 %v4289
        %v4852 = vpop.f32.mrf.mxu0
        %v4853 = vadd.f32 0.0, %v4852
        %4854 = vmatmul.f32.gmra.mxu0 %v4292
        %v4855 = vpop.f32.mrf.mxu0
        %v4856 = vadd.f32 0.0, %v4855
        %4857 = vmatmul.f32.gmra.mxu0 %v4295
        %v4858 = vpop.f32.mrf.mxu0
        %v4859 = vadd.f32 0.0, %v4858
        %4860 = vmatmul.f32.gmra.mxu0 %v4298
        %v4861 = vpop.f32.mrf.mxu0
        %4862 = vmatmul.f32.gmra.mxu0 %v4301
        %v4863 = vpop.f32.mrf.mxu0
        %4864 = vmatmul.f32.gmra.mxu0 %v4304
        %v4865 = vpop.f32.mrf.mxu0
        %4866 = vmatmul.f32.gmra.mxu0 %v4307
        %v4867 = vpop.f32.mrf.mxu0
        %4868 = vmatmul.f32.gmra.mxu0 %v4310
        %v4869 = vpop.f32.mrf.mxu0
        %4870 = vmatmul.f32.gmra.mxu0 %v4313
        %v4871 = vpop.f32.mrf.mxu0
        %4872 = vmatmul.f32.gmra.mxu0 %v4316
        %v4873 = vpop.f32.mrf.mxu0
        %4874 = vmatmul.f32.gmra.mxu0 %v4319
        %v4875 = vpop.f32.mrf.mxu0
        %4876 = vmatmul.f32.gmra.mxu0 %v4322
        %v4877 = vpop.f32.mrf.mxu0
        %4878 = vmatmul.f32.gmra.mxu0 %v4325
        %v4879 = vpop.f32.mrf.mxu0
        %4880 = vmatmul.f32.gmra.mxu0 %v4328
        %v4881 = vpop.f32.mrf.mxu0
        %4882 = vmatmul.f32.gmra.mxu0 %v4331
        %v4883 = vpop.f32.mrf.mxu0
        %4884 = vmatmul.f32.gmra.mxu0 %v4334
        %v4885 = vpop.f32.mrf.mxu0
        %4886 = vmatmul.f32.gmra.mxu0 %v4337
        %v4887 = vpop.f32.mrf.mxu0
        %4888 = vmatmul.f32.gmra.mxu0 %v4340
        %v4889 = vpop.f32.mrf.mxu0
        %4890 = vmatmul.f32.gmra.mxu0 %v4343
        %v4891 = vpop.f32.mrf.mxu0
        %4892 = vmatmul.f32.gmra.mxu0 %v4346
        %v4893 = vpop.f32.mrf.mxu0
        %v4894 = vadd.f32 0.0, %v4893
        %4895 = vmatmul.f32.gmra.mxu0 %v4349
        %v4896 = vpop.f32.mrf.mxu0
        %v4897 = vadd.f32 0.0, %v4896
        %4898 = vmatmul.f32.gmra.mxu0 %v4352
        %v4899 = vpop.f32.mrf.mxu0
        %v4900 = vadd.f32 0.0, %v4899
        %4901 = vmatmul.f32.gmra.mxu0 %v4355
        %v4902 = vpop.f32.mrf.mxu0
        %v4903 = vadd.f32 0.0, %v4902
        %4904 = vmatmul.f32.gmra.mxu0 %v4358
        %v4905 = vpop.f32.mrf.mxu0
        %v4906 = vadd.f32 0.0, %v4905
        %4907 = vmatmul.f32.gmra.mxu0 %v4361
        %v4908 = vpop.f32.mrf.mxu0
        %v4909 = vadd.f32 0.0, %v4908
        %4910 = vmatmul.f32.gmra.mxu0 %v4364
        %v4911 = vpop.f32.mrf.mxu0
        %v4912 = vadd.f32 0.0, %v4911
        %4913 = vmatmul.f32.gmra.mxu0 %v4367
        %v4914 = vpop.f32.mrf.mxu0
        %v4915 = vadd.f32 0.0, %v4914
        %4916 = vmatmul.f32.gmra.mxu0 %v4370
        %v4917 = vpop.f32.mrf.mxu0
        %v4918 = vadd.f32 0.0, %v4917
        %4919 = vmatmul.f32.gmra.mxu0 %v4373
        %v4920 = vpop.f32.mrf.mxu0
        %v4921 = vadd.f32 0.0, %v4920
        %4922 = vmatmul.f32.gmra.mxu0 %v4376
        %v4923 = vpop.f32.mrf.mxu0
        %v4924 = vadd.f32 0.0, %v4923
        %4925 = vmatmul.f32.gmra.mxu0 %v4379
        %v4926 = vpop.f32.mrf.mxu0
        %v4927 = vadd.f32 0.0, %v4926
        %4928 = vmatmul.f32.gmra.mxu0 %v4382
        %v4929 = vpop.f32.mrf.mxu0
        %v4930 = vadd.f32 0.0, %v4929
        %4931 = vmatmul.f32.gmra.mxu0 %v4385
        %v4932 = vpop.f32.mrf.mxu0
        %v4933 = vadd.f32 0.0, %v4932
        %4934 = vmatmul.f32.gmra.mxu0 %v4388
        %v4935 = vpop.f32.mrf.mxu0
        %v4936 = vadd.f32 0.0, %v4935
        %4937 = vmatmul.f32.gmra.mxu0 %v4391
        %v4938 = vpop.f32.mrf.mxu0
        %v4939 = vadd.f32 0.0, %v4938
        %4940 = vmatmul.f32.gmra.mxu0 %v4394
        %v4941 = vpop.f32.mrf.mxu0
        %v4942 = vadd.f32 0.0, %v4941
        %4943 = vmatmul.f32.gmra.mxu0 %v4397
        %v4944 = vpop.f32.mrf.mxu0
        %v4945 = vadd.f32 0.0, %v4944
        %4946 = vmatmul.f32.gmra.mxu0 %v4400
        %v4947 = vpop.f32.mrf.mxu0
        %v4948 = vadd.f32 0.0, %v4947
        %4949 = vmatmul.f32.gmra.mxu0 %v4403
        %v4950 = vpop.f32.mrf.mxu0
        %v4951 = vadd.f32 0.0, %v4950
        %4952 = vmatmul.f32.gmra.mxu0 %v4406
        %v4953 = vpop.f32.mrf.mxu0
        %v4954 = vadd.f32 0.0, %v4953
        %4955 = vmatmul.f32.gmra.mxu0 %v4409
        %v4956 = vpop.f32.mrf.mxu0
        %v4957 = vadd.f32 0.0, %v4956
        %4958 = vmatmul.f32.gmra.mxu0 %v4412
        %v4959 = vpop.f32.mrf.mxu0
        %v4960 = vadd.f32 0.0, %v4959
        %4961 = vmatmul.f32.gmra.mxu0 %v4415
        %v4962 = vpop.f32.mrf.mxu0
        %v4963 = vadd.f32 0.0, %v4962
        %4964 = vmatmul.f32.gmra.mxu0 %v4418
        %v4965 = vpop.f32.mrf.mxu0
        %v4966 = vadd.f32 0.0, %v4965
        %4967 = vmatmul.f32.gmra.mxu0 %v4421
        %v4968 = vpop.f32.mrf.mxu0
        %v4969 = vadd.f32 0.0, %v4968
        %4970 = vmatmul.f32.gmra.mxu0 %v4424
        %v4971 = vpop.f32.mrf.mxu0
        %v4972 = vadd.f32 0.0, %v4971
        %4973 = vmatmul.f32.gmra.mxu0 %v4427
        %v4974 = vpop.f32.mrf.mxu0
        %v4975 = vadd.f32 0.0, %v4974
        %4976 = vmatmul.f32.gmra.mxu0 %v4430
        %v4977 = vpop.f32.mrf.mxu0
        %v4978 = vadd.f32 0.0, %v4977
        %4979 = vmatmul.f32.gmra.mxu0 %v4433
        %v4980 = vpop.f32.mrf.mxu0
        %v4981 = vadd.f32 0.0, %v4980
        %4982 = vmatmul.f32.gmra.mxu0 %v4436
        %v4983 = vpop.f32.mrf.mxu0
        %v4984 = vadd.f32 0.0, %v4983
        %4985 = vmatmul.f32.gmra.mxu0 %v4439
        %v4986 = vpop.f32.mrf.mxu0
        %v4987 = vadd.f32 0.0, %v4986
        %4988 = vmatmul.f32.gmra.mxu0 %v4442
        %v4989 = vpop.f32.mrf.mxu0
        %4990 = vmatmul.f32.gmra.mxu0 %v4445
        %v4991 = vpop.f32.mrf.mxu0
        %4992 = vmatmul.f32.gmra.mxu0 %v4448
        %v4993 = vpop.f32.mrf.mxu0
        %4994 = vmatmul.f32.gmra.mxu0 %v4451
        %v4995 = vpop.f32.mrf.mxu0
        %4996 = vmatmul.f32.gmra.mxu0 %v4454
        %v4997 = vpop.f32.mrf.mxu0
        %4998 = vmatmul.f32.gmra.mxu0 %v4457
        %v4999 = vpop.f32.mrf.mxu0
        %5000 = vmatmul.f32.gmra.mxu0 %v4460
        %v5001 = vpop.f32.mrf.mxu0
        %5002 = vmatmul.f32.gmra.mxu0 %v4463
        %v5003 = vpop.f32.mrf.mxu0
        %5004 = vmatmul.f32.gmra.mxu0 %v4466
        %v5005 = vpop.f32.mrf.mxu0
        %5006 = vmatmul.f32.gmra.mxu0 %v4469
        %v5007 = vpop.f32.mrf.mxu0
        %5008 = vmatmul.f32.gmra.mxu0 %v4472
        %v5009 = vpop.f32.mrf.mxu0
        %5010 = vmatmul.f32.gmra.mxu0 %v4475
        %v5011 = vpop.f32.mrf.mxu0
        %5012 = vmatmul.f32.gmra.mxu0 %v4478
        %v5013 = vpop.f32.mrf.mxu0
        %5014 = vmatmul.f32.gmra.mxu0 %v4481
        %v5015 = vpop.f32.mrf.mxu0
        %5016 = vmatmul.f32.gmra.mxu0 %v4484
        %v5017 = vpop.f32.mrf.mxu0
        %5018 = vmatmul.f32.gmra.mxu0 %v4487
        %v5019 = vpop.f32.mrf.mxu0
        %5020 = vdwg.mxu0
        %v5021 = vadd.f32 %v3591, %v4510
        %v5022 = vadd.f32 %v3592, %v4513
        %v5023 = vadd.f32 %v3593, %v4516
        %v5024 = vadd.f32 %v3594, %v4519
        %v5025 = vadd.f32 %v3595, %v4522
        %v5026 = vadd.f32 %v3596, %v4525
        %v5027 = vadd.f32 %v3597, %v4528
        %v5028 = vadd.f32 %v3598, %v4531
        %v5029 = vadd.f32 %v3599, %v4534
        %v5030 = vadd.f32 %v3600, %v4537
        %v5031 = vadd.f32 %v3601, %v4540
        %v5032 = vadd.f32 %v3602, %v4543
        %v5033 = vadd.f32 %v3603, %v4546
        %v5034 = vadd.f32 %v3604, %v4549
        %v5035 = vadd.f32 %v3605, %v4552
        %v5036 = vadd.f32 %v3606, %v4555
        %v5037 = vadd.f32 %v3607, %v4558
        %v5038 = vadd.f32 %v3608, %v4561
        %v5039 = vadd.f32 %v3609, %v4564
        %v5040 = vadd.f32 %v3610, %v4567
        %v5041 = vadd.f32 %v3611, %v4570
        %v5042 = vadd.f32 %v3612, %v4573
        %v5043 = vadd.f32 %v3613, %v4576
        %v5044 = vadd.f32 %v3614, %v4579
        %v5045 = vadd.f32 %v3615, %v4582
        %v5046 = vadd.f32 %v3616, %v4585
        %v5047 = vadd.f32 %v3617, %v4588
        %v5048 = vadd.f32 %v3618, %v4591
        %v5049 = vadd.f32 %v3619, %v4594
        %v5050 = vadd.f32 %v3620, %v4597
        %v5051 = vadd.f32 %v3621, %v4600
        %v5052 = vadd.f32 %v3622, %v4603
        %v5053 = vadd.f32 %v3623, %v4638
        %v5054 = vadd.f32 %v3624, %v4641
        %v5055 = vadd.f32 %v3625, %v4644
        %v5056 = vadd.f32 %v3626, %v4647
        %v5057 = vadd.f32 %v3627, %v4650
        %v5058 = vadd.f32 %v3628, %v4653
        %v5059 = vadd.f32 %v3629, %v4656
        %v5060 = vadd.f32 %v3630, %v4659
        %v5061 = vadd.f32 %v3631, %v4662
        %v5062 = vadd.f32 %v3632, %v4665
        %v5063 = vadd.f32 %v3633, %v4668
        %v5064 = vadd.f32 %v3634, %v4671
        %v5065 = vadd.f32 %v3635, %v4674
        %v5066 = vadd.f32 %v3636, %v4677
        %v5067 = vadd.f32 %v3637, %v4680
        %v5068 = vadd.f32 %v3638, %v4683
        %v5069 = vadd.f32 %v3639, %v4686
        %v5070 = vadd.f32 %v3640, %v4689
        %v5071 = vadd.f32 %v3641, %v4692
        %v5072 = vadd.f32 %v3642, %v4695
        %v5073 = vadd.f32 %v3643, %v4698
        %v5074 = vadd.f32 %v3644, %v4701
        %v5075 = vadd.f32 %v3645, %v4704
        %v5076 = vadd.f32 %v3646, %v4707
        %v5077 = vadd.f32 %v3647, %v4710
        %v5078 = vadd.f32 %v3648, %v4713
        %v5079 = vadd.f32 %v3649, %v4716
        %v5080 = vadd.f32 %v3650, %v4719
        %v5081 = vadd.f32 %v3651, %v4722
        %v5082 = vadd.f32 %v3652, %v4725
        %v5083 = vadd.f32 %v3653, %v4728
        %v5084 = vadd.f32 %v3654, %v4731
        %v5085 = vadd.f32 %v3655, %v4766
        %v5086 = vadd.f32 %v3656, %v4769
        %v5087 = vadd.f32 %v3657, %v4772
        %v5088 = vadd.f32 %v3658, %v4775
        %v5089 = vadd.f32 %v3659, %v4778
        %v5090 = vadd.f32 %v3660, %v4781
        %v5091 = vadd.f32 %v3661, %v4784
        %v5092 = vadd.f32 %v3662, %v4787
        %v5093 = vadd.f32 %v3663, %v4790
        %v5094 = vadd.f32 %v3664, %v4793
        %v5095 = vadd.f32 %v3665, %v4796
        %v5096 = vadd.f32 %v3666, %v4799
        %v5097 = vadd.f32 %v3667, %v4802
        %v5098 = vadd.f32 %v3668, %v4805
        %v5099 = vadd.f32 %v3669, %v4808
        %v5100 = vadd.f32 %v3670, %v4811
        %v5101 = vadd.f32 %v3671, %v4814
        %v5102 = vadd.f32 %v3672, %v4817
        %v5103 = vadd.f32 %v3673, %v4820
        %v5104 = vadd.f32 %v3674, %v4823
        %v5105 = vadd.f32 %v3675, %v4826
        %v5106 = vadd.f32 %v3676, %v4829
        %v5107 = vadd.f32 %v3677, %v4832
        %v5108 = vadd.f32 %v3678, %v4835
        %v5109 = vadd.f32 %v3679, %v4838
        %v5110 = vadd.f32 %v3680, %v4841
        %v5111 = vadd.f32 %v3681, %v4844
        %v5112 = vadd.f32 %v3682, %v4847
        %v5113 = vadd.f32 %v3683, %v4850
        %v5114 = vadd.f32 %v3684, %v4853
        %v5115 = vadd.f32 %v3685, %v4856
        %v5116 = vadd.f32 %v3686, %v4859
        %v5117 = vadd.f32 %v3687, %v4894
        %v5118 = vadd.f32 %v3688, %v4897
        %v5119 = vadd.f32 %v3689, %v4900
        %v5120 = vadd.f32 %v3690, %v4903
        %v5121 = vadd.f32 %v3691, %v4906
        %v5122 = vadd.f32 %v3692, %v4909
        %v5123 = vadd.f32 %v3693, %v4912
        %v5124 = vadd.f32 %v3694, %v4915
        %v5125 = vadd.f32 %v3695, %v4918
        %v5126 = vadd.f32 %v3696, %v4921
        %v5127 = vadd.f32 %v3697, %v4924
        %v5128 = vadd.f32 %v3698, %v4927
        %v5129 = vadd.f32 %v3699, %v4930
        %v5130 = vadd.f32 %v3700, %v4933
        %v5131 = vadd.f32 %v3701, %v4936
        %v5132 = vadd.f32 %v3702, %v4939
        %v5133 = vadd.f32 %v3703, %v4942
        %v5134 = vadd.f32 %v3704, %v4945
        %v5135 = vadd.f32 %v3705, %v4948
        %v5136 = vadd.f32 %v3706, %v4951
        %v5137 = vadd.f32 %v3707, %v4954
        %v5138 = vadd.f32 %v3708, %v4957
        %v5139 = vadd.f32 %v3709, %v4960
        %v5140 = vadd.f32 %v3710, %v4963
        %v5141 = vadd.f32 %v3711, %v4966
        %v5142 = vadd.f32 %v3712, %v4969
        %v5143 = vadd.f32 %v3713, %v4972
        %v5144 = vadd.f32 %v3714, %v4975
        %v5145 = vadd.f32 %v3715, %v4978
        %v5146 = vadd.f32 %v3716, %v4981
        %v5147 = vadd.f32 %v3717, %v4984
        %v5148 = vadd.f32 %v3718, %v4987
        %v5149 = vld [vmem:[%s385 + $0x200] sm:$0xff]
        %v5150 = vld [vmem:[%s385 + $0x208] sm:$0xff]
        %v5151 = vld [vmem:[%s385 + $0x210] sm:$0xff]
        %v5152 = vld [vmem:[%s385 + $0x218] sm:$0xff]
        %v5153 = vld [vmem:[%s385 + $0x220] sm:$0xff]
        %v5154 = vld [vmem:[%s385 + $0x228] sm:$0xff]
        %v5155 = vld [vmem:[%s385 + $0x230] sm:$0xff]
        %v5156 = vld [vmem:[%s385 + $0x238] sm:$0xff]
        %v5157 = vld [vmem:[%s385 + $0x240] sm:$0xff]
        %v5158 = vld [vmem:[%s385 + $0x248] sm:$0xff]
        %v5159 = vld [vmem:[%s385 + $0x250] sm:$0xff]
        %v5160 = vld [vmem:[%s385 + $0x258] sm:$0xff]
        %v5161 = vld [vmem:[%s385 + $0x260] sm:$0xff]
        %v5162 = vld [vmem:[%s385 + $0x268] sm:$0xff]
        %v5163 = vld [vmem:[%s385 + $0x270] sm:$0xff]
        %v5164 = vld [vmem:[%s385 + $0x278] sm:$0xff]
        %v5165 = vld [vmem:[%s385 + $0x280] sm:$0xff]
        %v5166 = vld [vmem:[%s385 + $0x288] sm:$0xff]
        %v5167 = vld [vmem:[%s385 + $0x290] sm:$0xff]
        %v5168 = vld [vmem:[%s385 + $0x298] sm:$0xff]
        %v5169 = vld [vmem:[%s385 + $0x2a0] sm:$0xff]
        %v5170 = vld [vmem:[%s385 + $0x2a8] sm:$0xff]
        %v5171 = vld [vmem:[%s385 + $0x2b0] sm:$0xff]
        %v5172 = vld [vmem:[%s385 + $0x2b8] sm:$0xff]
        %v5173 = vld [vmem:[%s385 + $0x2c0] sm:$0xff]
        %v5174 = vld [vmem:[%s385 + $0x2c8] sm:$0xff]
        %v5175 = vld [vmem:[%s385 + $0x2d0] sm:$0xff]
        %v5176 = vld [vmem:[%s385 + $0x2d8] sm:$0xff]
        %v5177 = vld [vmem:[%s385 + $0x2e0] sm:$0xff]
        %v5178 = vld [vmem:[%s385 + $0x2e8] sm:$0xff]
        %v5179 = vld [vmem:[%s385 + $0x2f0] sm:$0xff]
        %v5180 = vld [vmem:[%s385 + $0x2f8] sm:$0xff]
        %v5181 = vld [vmem:[%s385 + $0x300] sm:$0xff]
        %v5182 = vld [vmem:[%s385 + $0x308] sm:$0xff]
        %v5183 = vld [vmem:[%s385 + $0x310] sm:$0xff]
        %v5184 = vld [vmem:[%s385 + $0x318] sm:$0xff]
        %v5185 = vld [vmem:[%s385 + $0x320] sm:$0xff]
        %v5186 = vld [vmem:[%s385 + $0x328] sm:$0xff]
        %v5187 = vld [vmem:[%s385 + $0x330] sm:$0xff]
        %v5188 = vld [vmem:[%s385 + $0x338] sm:$0xff]
        %v5189 = vld [vmem:[%s385 + $0x340] sm:$0xff]
        %v5190 = vld [vmem:[%s385 + $0x348] sm:$0xff]
        %v5191 = vld [vmem:[%s385 + $0x350] sm:$0xff]
        %v5192 = vld [vmem:[%s385 + $0x358] sm:$0xff]
        %v5193 = vld [vmem:[%s385 + $0x360] sm:$0xff]
        %v5194 = vld [vmem:[%s385 + $0x368] sm:$0xff]
        %v5195 = vld [vmem:[%s385 + $0x370] sm:$0xff]
        %v5196 = vld [vmem:[%s385 + $0x378] sm:$0xff]
        %v5197 = vld [vmem:[%s385 + $0x380] sm:$0xff]
        %v5198 = vld [vmem:[%s385 + $0x388] sm:$0xff]
        %v5199 = vld [vmem:[%s385 + $0x390] sm:$0xff]
        %v5200 = vld [vmem:[%s385 + $0x398] sm:$0xff]
        %v5201 = vld [vmem:[%s385 + $0x3a0] sm:$0xff]
        %v5202 = vld [vmem:[%s385 + $0x3a8] sm:$0xff]
        %v5203 = vld [vmem:[%s385 + $0x3b0] sm:$0xff]
        %v5204 = vld [vmem:[%s385 + $0x3b8] sm:$0xff]
        %v5205 = vld [vmem:[%s385 + $0x3c0] sm:$0xff]
        %v5206 = vld [vmem:[%s385 + $0x3c8] sm:$0xff]
        %v5207 = vld [vmem:[%s385 + $0x3d0] sm:$0xff]
        %v5208 = vld [vmem:[%s385 + $0x3d8] sm:$0xff]
        %v5209 = vld [vmem:[%s385 + $0x3e0] sm:$0xff]
        %v5210 = vld [vmem:[%s385 + $0x3e8] sm:$0xff]
        %v5211 = vld [vmem:[%s385 + $0x3f0] sm:$0xff]
        %v5212 = vld [vmem:[%s385 + $0x3f8] sm:$0xff]
        %v5213 = vld [vmem:[%s385 + $0x400] sm:$0xff]
        %v5214 = vld [vmem:[%s385 + $0x408] sm:$0xff]
        %v5215 = vld [vmem:[%s385 + $0x410] sm:$0xff]
        %v5216 = vld [vmem:[%s385 + $0x418] sm:$0xff]
        %v5217 = vld [vmem:[%s385 + $0x420] sm:$0xff]
        %v5218 = vld [vmem:[%s385 + $0x428] sm:$0xff]
        %v5219 = vld [vmem:[%s385 + $0x430] sm:$0xff]
        %v5220 = vld [vmem:[%s385 + $0x438] sm:$0xff]
        %v5221 = vld [vmem:[%s385 + $0x440] sm:$0xff]
        %v5222 = vld [vmem:[%s385 + $0x448] sm:$0xff]
        %v5223 = vld [vmem:[%s385 + $0x450] sm:$0xff]
        %v5224 = vld [vmem:[%s385 + $0x458] sm:$0xff]
        %v5225 = vld [vmem:[%s385 + $0x460] sm:$0xff]
        %v5226 = vld [vmem:[%s385 + $0x468] sm:$0xff]
        %v5227 = vld [vmem:[%s385 + $0x470] sm:$0xff]
        %v5228 = vld [vmem:[%s385 + $0x478] sm:$0xff]
        %v5229 = vld [vmem:[%s385 + $0x480] sm:$0xff]
        %v5230 = vld [vmem:[%s385 + $0x488] sm:$0xff]
        %v5231 = vld [vmem:[%s385 + $0x490] sm:$0xff]
        %v5232 = vld [vmem:[%s385 + $0x498] sm:$0xff]
        %v5233 = vld [vmem:[%s385 + $0x4a0] sm:$0xff]
        %v5234 = vld [vmem:[%s385 + $0x4a8] sm:$0xff]
        %v5235 = vld [vmem:[%s385 + $0x4b0] sm:$0xff]
        %v5236 = vld [vmem:[%s385 + $0x4b8] sm:$0xff]
        %v5237 = vld [vmem:[%s385 + $0x4c0] sm:$0xff]
        %v5238 = vld [vmem:[%s385 + $0x4c8] sm:$0xff]
        %v5239 = vld [vmem:[%s385 + $0x4d0] sm:$0xff]
        %v5240 = vld [vmem:[%s385 + $0x4d8] sm:$0xff]
        %v5241 = vld [vmem:[%s385 + $0x4e0] sm:$0xff]
        %v5242 = vld [vmem:[%s385 + $0x4e8] sm:$0xff]
        %v5243 = vld [vmem:[%s385 + $0x4f0] sm:$0xff]
        %v5244 = vld [vmem:[%s385 + $0x4f8] sm:$0xff]
        %v5245 = vld [vmem:[%s385 + $0x500] sm:$0xff]
        %v5246 = vld [vmem:[%s385 + $0x508] sm:$0xff]
        %v5247 = vld [vmem:[%s385 + $0x510] sm:$0xff]
        %v5248 = vld [vmem:[%s385 + $0x518] sm:$0xff]
        %v5249 = vld [vmem:[%s385 + $0x520] sm:$0xff]
        %v5250 = vld [vmem:[%s385 + $0x528] sm:$0xff]
        %v5251 = vld [vmem:[%s385 + $0x530] sm:$0xff]
        %v5252 = vld [vmem:[%s385 + $0x538] sm:$0xff]
        %v5253 = vld [vmem:[%s385 + $0x540] sm:$0xff]
        %v5254 = vld [vmem:[%s385 + $0x548] sm:$0xff]
        %v5255 = vld [vmem:[%s385 + $0x550] sm:$0xff]
        %v5256 = vld [vmem:[%s385 + $0x558] sm:$0xff]
        %v5257 = vld [vmem:[%s385 + $0x560] sm:$0xff]
        %v5258 = vld [vmem:[%s385 + $0x568] sm:$0xff]
        %v5259 = vld [vmem:[%s385 + $0x570] sm:$0xff]
        %v5260 = vld [vmem:[%s385 + $0x578] sm:$0xff]
        %v5261 = vld [vmem:[%s385 + $0x580] sm:$0xff]
        %v5262 = vld [vmem:[%s385 + $0x588] sm:$0xff]
        %v5263 = vld [vmem:[%s385 + $0x590] sm:$0xff]
        %v5264 = vld [vmem:[%s385 + $0x598] sm:$0xff]
        %v5265 = vld [vmem:[%s385 + $0x5a0] sm:$0xff]
        %v5266 = vld [vmem:[%s385 + $0x5a8] sm:$0xff]
        %v5267 = vld [vmem:[%s385 + $0x5b0] sm:$0xff]
        %v5268 = vld [vmem:[%s385 + $0x5b8] sm:$0xff]
        %v5269 = vld [vmem:[%s385 + $0x5c0] sm:$0xff]
        %v5270 = vld [vmem:[%s385 + $0x5c8] sm:$0xff]
        %v5271 = vld [vmem:[%s385 + $0x5d0] sm:$0xff]
        %v5272 = vld [vmem:[%s385 + $0x5d8] sm:$0xff]
        %v5273 = vld [vmem:[%s385 + $0x5e0] sm:$0xff]
        %v5274 = vld [vmem:[%s385 + $0x5e8] sm:$0xff]
        %v5275 = vld [vmem:[%s385 + $0x5f0] sm:$0xff]
        %v5276 = vld [vmem:[%s385 + $0x5f8] sm:$0xff]
        %v5277 = vld [vmem:[%s385 + $0x600] sm:$0xff]
        %v5278 = vld [vmem:[%s385 + $0x608] sm:$0xff]
        %v5279 = vld [vmem:[%s385 + $0x610] sm:$0xff]
        %v5280 = vld [vmem:[%s385 + $0x618] sm:$0xff]
        %v5281 = vld [vmem:[%s385 + $0x620] sm:$0xff]
        %v5282 = vld [vmem:[%s385 + $0x628] sm:$0xff]
        %v5283 = vld [vmem:[%s385 + $0x630] sm:$0xff]
        %v5284 = vld [vmem:[%s385 + $0x638] sm:$0xff]
        %v5285 = vld [vmem:[%s385 + $0x640] sm:$0xff]
        %v5286 = vld [vmem:[%s385 + $0x648] sm:$0xff]
        %v5287 = vld [vmem:[%s385 + $0x650] sm:$0xff]
        %v5288 = vld [vmem:[%s385 + $0x658] sm:$0xff]
        %v5289 = vld [vmem:[%s385 + $0x660] sm:$0xff]
        %v5290 = vld [vmem:[%s385 + $0x668] sm:$0xff]
        %v5291 = vld [vmem:[%s385 + $0x670] sm:$0xff]
        %v5292 = vld [vmem:[%s385 + $0x678] sm:$0xff]
        %v5293 = vld [vmem:[%s385 + $0x680] sm:$0xff]
        %v5294 = vld [vmem:[%s385 + $0x688] sm:$0xff]
        %v5295 = vld [vmem:[%s385 + $0x690] sm:$0xff]
        %v5296 = vld [vmem:[%s385 + $0x698] sm:$0xff]
        %v5297 = vld [vmem:[%s385 + $0x6a0] sm:$0xff]
        %v5298 = vld [vmem:[%s385 + $0x6a8] sm:$0xff]
        %v5299 = vld [vmem:[%s385 + $0x6b0] sm:$0xff]
        %v5300 = vld [vmem:[%s385 + $0x6b8] sm:$0xff]
        %v5301 = vld [vmem:[%s385 + $0x6c0] sm:$0xff]
        %v5302 = vld [vmem:[%s385 + $0x6c8] sm:$0xff]
        %v5303 = vld [vmem:[%s385 + $0x6d0] sm:$0xff]
        %v5304 = vld [vmem:[%s385 + $0x6d8] sm:$0xff]
        %v5305 = vld [vmem:[%s385 + $0x6e0] sm:$0xff]
        %v5306 = vld [vmem:[%s385 + $0x6e8] sm:$0xff]
        %v5307 = vld [vmem:[%s385 + $0x6f0] sm:$0xff]
        %v5308 = vld [vmem:[%s385 + $0x6f8] sm:$0xff]
        %v5309 = vld [vmem:[%s385 + $0x700] sm:$0xff]
        %v5310 = vld [vmem:[%s385 + $0x708] sm:$0xff]
        %v5311 = vld [vmem:[%s385 + $0x710] sm:$0xff]
        %v5312 = vld [vmem:[%s385 + $0x718] sm:$0xff]
        %v5313 = vld [vmem:[%s385 + $0x720] sm:$0xff]
        %v5314 = vld [vmem:[%s385 + $0x728] sm:$0xff]
        %v5315 = vld [vmem:[%s385 + $0x730] sm:$0xff]
        %v5316 = vld [vmem:[%s385 + $0x738] sm:$0xff]
        %v5317 = vld [vmem:[%s385 + $0x740] sm:$0xff]
        %v5318 = vld [vmem:[%s385 + $0x748] sm:$0xff]
        %v5319 = vld [vmem:[%s385 + $0x750] sm:$0xff]
        %v5320 = vld [vmem:[%s385 + $0x758] sm:$0xff]
        %v5321 = vld [vmem:[%s385 + $0x760] sm:$0xff]
        %v5322 = vld [vmem:[%s385 + $0x768] sm:$0xff]
        %v5323 = vld [vmem:[%s385 + $0x770] sm:$0xff]
        %v5324 = vld [vmem:[%s385 + $0x778] sm:$0xff]
        %v5325 = vld [vmem:[%s385 + $0x780] sm:$0xff]
        %v5326 = vld [vmem:[%s385 + $0x788] sm:$0xff]
        %v5327 = vld [vmem:[%s385 + $0x790] sm:$0xff]
        %v5328 = vld [vmem:[%s385 + $0x798] sm:$0xff]
        %v5329 = vld [vmem:[%s385 + $0x7a0] sm:$0xff]
        %v5330 = vld [vmem:[%s385 + $0x7a8] sm:$0xff]
        %v5331 = vld [vmem:[%s385 + $0x7b0] sm:$0xff]
        %v5332 = vld [vmem:[%s385 + $0x7b8] sm:$0xff]
        %v5333 = vld [vmem:[%s385 + $0x7c0] sm:$0xff]
        %v5334 = vld [vmem:[%s385 + $0x7c8] sm:$0xff]
        %v5335 = vld [vmem:[%s385 + $0x7d0] sm:$0xff]
        %v5336 = vld [vmem:[%s385 + $0x7d8] sm:$0xff]
        %v5337 = vld [vmem:[%s385 + $0x7e0] sm:$0xff]
        %v5338 = vld [vmem:[%s385 + $0x7e8] sm:$0xff]
        %v5339 = vld [vmem:[%s385 + $0x7f0] sm:$0xff]
        %v5340 = vld [vmem:[%s385 + $0x7f8] sm:$0xff]
        %s5341 = scalar_lea.vmem %s1, 32
        %v5342 = vld [vmem:[%s5341] sm:$0x3f]
        %v5344 = vsel %vm599, %v5149, 0
        %v5347 = vsel %vm599, %v5150, 0
        %v5350 = vsel %vm599, %v5151, 0
        %v5353 = vsel %vm599, %v5152, 0
        %v5356 = vsel %vm599, %v5153, 0
        %v5359 = vsel %vm599, %v5154, 0
        %v5362 = vsel %vm599, %v5155, 0
        %v5365 = vsel %vm599, %v5156, 0
        %v5368 = vsel %vm599, %v5157, 0
        %v5371 = vsel %vm599, %v5158, 0
        %v5374 = vsel %vm599, %v5159, 0
        %v5377 = vsel %vm599, %v5160, 0
        %v5380 = vsel %vm599, %v5161, 0
        %v5383 = vsel %vm599, %v5162, 0
        %v5386 = vsel %vm599, %v5163, 0
        %v5389 = vsel %vm599, %v5164, 0
        %v5392 = vsel %vm599, %v5165, 0
        %v5395 = vsel %vm599, %v5166, 0
        %v5398 = vsel %vm599, %v5167, 0
        %v5401 = vsel %vm599, %v5168, 0
        %v5404 = vsel %vm599, %v5169, 0
        %v5407 = vsel %vm599, %v5170, 0
        %v5410 = vsel %vm599, %v5171, 0
        %v5413 = vsel %vm599, %v5172, 0
        %v5416 = vsel %vm599, %v5173, 0
        %v5419 = vsel %vm599, %v5174, 0
        %v5422 = vsel %vm599, %v5175, 0
        %v5425 = vsel %vm599, %v5176, 0
        %v5428 = vsel %vm599, %v5177, 0
        %v5431 = vsel %vm599, %v5178, 0
        %v5434 = vsel %vm599, %v5179, 0
        %v5437 = vsel %vm599, %v5180, 0
        %v5440 = vsel %vm599, %v5181, 0
        %v5443 = vsel %vm599, %v5182, 0
        %v5446 = vsel %vm599, %v5183, 0
        %v5449 = vsel %vm599, %v5184, 0
        %v5452 = vsel %vm599, %v5185, 0
        %v5455 = vsel %vm599, %v5186, 0
        %v5458 = vsel %vm599, %v5187, 0
        %v5461 = vsel %vm599, %v5188, 0
        %v5464 = vsel %vm599, %v5189, 0
        %v5467 = vsel %vm599, %v5190, 0
        %v5470 = vsel %vm599, %v5191, 0
        %v5473 = vsel %vm599, %v5192, 0
        %v5476 = vsel %vm599, %v5193, 0
        %v5479 = vsel %vm599, %v5194, 0
        %v5482 = vsel %vm599, %v5195, 0
        %v5485 = vsel %vm599, %v5196, 0
        %v5488 = vsel %vm599, %v5197, 0
        %v5491 = vsel %vm599, %v5198, 0
        %v5494 = vsel %vm599, %v5199, 0
        %v5497 = vsel %vm599, %v5200, 0
        %v5500 = vsel %vm599, %v5201, 0
        %v5503 = vsel %vm599, %v5202, 0
        %v5506 = vsel %vm599, %v5203, 0
        %v5509 = vsel %vm599, %v5204, 0
        %v5512 = vsel %vm599, %v5205, 0
        %v5515 = vsel %vm599, %v5206, 0
        %v5518 = vsel %vm599, %v5207, 0
        %v5521 = vsel %vm599, %v5208, 0
        %v5524 = vsel %vm599, %v5209, 0
        %v5527 = vsel %vm599, %v5210, 0
        %v5530 = vsel %vm599, %v5211, 0
        %v5533 = vsel %vm599, %v5212, 0
        %v5536 = vsel %vm599, %v5213, 0
        %v5539 = vsel %vm599, %v5214, 0
        %v5542 = vsel %vm599, %v5215, 0
        %v5545 = vsel %vm599, %v5216, 0
        %v5548 = vsel %vm599, %v5217, 0
        %v5551 = vsel %vm599, %v5218, 0
        %v5554 = vsel %vm599, %v5219, 0
        %v5557 = vsel %vm599, %v5220, 0
        %v5560 = vsel %vm599, %v5221, 0
        %v5563 = vsel %vm599, %v5222, 0
        %v5566 = vsel %vm599, %v5223, 0
        %v5569 = vsel %vm599, %v5224, 0
        %v5572 = vsel %vm599, %v5225, 0
        %v5575 = vsel %vm599, %v5226, 0
        %v5578 = vsel %vm599, %v5227, 0
        %v5581 = vsel %vm599, %v5228, 0
        %v5584 = vsel %vm599, %v5229, 0
        %v5587 = vsel %vm599, %v5230, 0
        %v5590 = vsel %vm599, %v5231, 0
        %v5593 = vsel %vm599, %v5232, 0
        %v5596 = vsel %vm599, %v5233, 0
        %v5599 = vsel %vm599, %v5234, 0
        %v5602 = vsel %vm599, %v5235, 0
        %v5605 = vsel %vm599, %v5236, 0
        %v5608 = vsel %vm599, %v5237, 0
        %v5611 = vsel %vm599, %v5238, 0
        %v5614 = vsel %vm599, %v5239, 0
        %v5617 = vsel %vm599, %v5240, 0
        %v5620 = vsel %vm599, %v5241, 0
        %v5623 = vsel %vm599, %v5242, 0
        %v5626 = vsel %vm599, %v5243, 0
        %v5629 = vsel %vm599, %v5244, 0
        %v5632 = vsel %vm599, %v5245, 0
        %v5635 = vsel %vm599, %v5246, 0
        %v5638 = vsel %vm599, %v5247, 0
        %v5641 = vsel %vm599, %v5248, 0
        %v5644 = vsel %vm599, %v5249, 0
        %v5647 = vsel %vm599, %v5250, 0
        %v5650 = vsel %vm599, %v5251, 0
        %v5653 = vsel %vm599, %v5252, 0
        %v5656 = vsel %vm599, %v5253, 0
        %v5659 = vsel %vm599, %v5254, 0
        %v5662 = vsel %vm599, %v5255, 0
        %v5665 = vsel %vm599, %v5256, 0
        %v5668 = vsel %vm599, %v5257, 0
        %v5671 = vsel %vm599, %v5258, 0
        %v5674 = vsel %vm599, %v5259, 0
        %v5677 = vsel %vm599, %v5260, 0
        %v5680 = vsel %vm599, %v5261, 0
        %v5683 = vsel %vm599, %v5262, 0
        %v5686 = vsel %vm599, %v5263, 0
        %v5689 = vsel %vm599, %v5264, 0
        %v5692 = vsel %vm599, %v5265, 0
        %v5695 = vsel %vm599, %v5266, 0
        %v5698 = vsel %vm599, %v5267, 0
        %v5701 = vsel %vm599, %v5268, 0
        %v5704 = vsel %vm599, %v5269, 0
        %v5707 = vsel %vm599, %v5270, 0
        %v5710 = vsel %vm599, %v5271, 0
        %v5713 = vsel %vm599, %v5272, 0
        %v5716 = vsel %vm599, %v5273, 0
        %v5719 = vsel %vm599, %v5274, 0
        %v5722 = vsel %vm599, %v5275, 0
        %v5725 = vsel %vm599, %v5276, 0
        %v5728 = vsel %vm599, %v5277, 0
        %v5731 = vsel %vm599, %v5278, 0
        %v5734 = vsel %vm599, %v5279, 0
        %v5737 = vsel %vm599, %v5280, 0
        %v5740 = vsel %vm599, %v5281, 0
        %v5743 = vsel %vm599, %v5282, 0
        %v5746 = vsel %vm599, %v5283, 0
        %v5749 = vsel %vm599, %v5284, 0
        %v5752 = vsel %vm599, %v5285, 0
        %v5755 = vsel %vm599, %v5286, 0
        %v5758 = vsel %vm599, %v5287, 0
        %v5761 = vsel %vm599, %v5288, 0
        %v5764 = vsel %vm599, %v5289, 0
        %v5767 = vsel %vm599, %v5290, 0
        %v5770 = vsel %vm599, %v5291, 0
        %v5773 = vsel %vm599, %v5292, 0
        %v5776 = vsel %vm599, %v5293, 0
        %v5779 = vsel %vm599, %v5294, 0
        %v5782 = vsel %vm599, %v5295, 0
        %v5785 = vsel %vm599, %v5296, 0
        %v5788 = vsel %vm599, %v5297, 0
        %v5791 = vsel %vm599, %v5298, 0
        %v5794 = vsel %vm599, %v5299, 0
        %v5797 = vsel %vm599, %v5300, 0
        %v5800 = vsel %vm599, %v5301, 0
        %v5803 = vsel %vm599, %v5302, 0
        %v5806 = vsel %vm599, %v5303, 0
        %v5809 = vsel %vm599, %v5304, 0
        %v5812 = vsel %vm599, %v5305, 0
        %v5815 = vsel %vm599, %v5306, 0
        %v5818 = vsel %vm599, %v5307, 0
        %v5821 = vsel %vm599, %v5308, 0
        %v5824 = vsel %vm599, %v5309, 0
        %v5827 = vsel %vm599, %v5310, 0
        %v5830 = vsel %vm599, %v5311, 0
        %v5833 = vsel %vm599, %v5312, 0
        %v5836 = vsel %vm599, %v5313, 0
        %v5839 = vsel %vm599, %v5314, 0
        %v5842 = vsel %vm599, %v5315, 0
        %v5845 = vsel %vm599, %v5316, 0
        %v5848 = vsel %vm599, %v5317, 0
        %v5851 = vsel %vm599, %v5318, 0
        %v5854 = vsel %vm599, %v5319, 0
        %v5857 = vsel %vm599, %v5320, 0
        %v5860 = vsel %vm599, %v5321, 0
        %v5863 = vsel %vm599, %v5322, 0
        %v5866 = vsel %vm599, %v5323, 0
        %v5869 = vsel %vm599, %v5324, 0
        %v5872 = vsel %vm599, %v5325, 0
        %v5875 = vsel %vm599, %v5326, 0
        %v5878 = vsel %vm599, %v5327, 0
        %v5881 = vsel %vm599, %v5328, 0
        %v5884 = vsel %vm599, %v5329, 0
        %v5887 = vsel %vm599, %v5330, 0
        %v5890 = vsel %vm599, %v5331, 0
        %v5893 = vsel %vm599, %v5332, 0
        %v5896 = vsel %vm599, %v5333, 0
        %v5899 = vsel %vm599, %v5334, 0
        %v5902 = vsel %vm599, %v5335, 0
        %v5905 = vsel %vm599, %v5336, 0
        %v5908 = vsel %vm599, %v5337, 0
        %v5911 = vsel %vm599, %v5338, 0
        %v5914 = vsel %vm599, %v5339, 0
        %v5917 = vsel %vm599, %v5340, 0
        %v5920 = vsel %vm1176, %v5342, 0
        %5922 = vmatpush.msra.mxu0 0.0
        %5923 = vmatpush.msra.mxu0 0.0
        %5924 = vmatpush.msra.mxu0 0.0
        %5925 = vmatpush.msra.mxu0 0.0
        %5926 = vmatpush.msra.mxu0 0.0
        %5927 = vmatpush.msra.mxu0 0.0
        %5928 = vmatpush.msra.mxu0 0.0
        %5929 = vmatpush.msra.mxu0 0.0
        %5930 = vmatpush.msra.mxu0 0.0
        %5931 = vmatpush.msra.mxu0 0.0
        %5932 = vmatpush.msra.mxu0 0.0
        %5933 = vmatpush.msra.mxu0 0.0
        %5934 = vmatpush.msra.mxu0 0.0
        %5935 = vmatpush.msra.mxu0 0.0
        %5936 = vmatpush.msra.mxu0 0.0
        %5937 = vmatpush.msra.mxu0 %v5920
        %5938 = vmatmul.f32.gmra.mxu0 %v5344
        %v5939 = vpop.f32.mrf.mxu0
        %v5940 = vadd.f32 0.0, %v5939
        %5941 = vmatmul.f32.gmra.mxu0 %v5347
        %v5942 = vpop.f32.mrf.mxu0
        %v5943 = vadd.f32 0.0, %v5942
        %5944 = vmatmul.f32.gmra.mxu0 %v5350
        %v5945 = vpop.f32.mrf.mxu0
        %v5946 = vadd.f32 0.0, %v5945
        %5947 = vmatmul.f32.gmra.mxu0 %v5353
        %v5948 = vpop.f32.mrf.mxu0
        %v5949 = vadd.f32 0.0, %v5948
        %5950 = vmatmul.f32.gmra.mxu0 %v5356
        %v5951 = vpop.f32.mrf.mxu0
        %v5952 = vadd.f32 0.0, %v5951
        %5953 = vmatmul.f32.gmra.mxu0 %v5359
        %v5954 = vpop.f32.mrf.mxu0
        %v5955 = vadd.f32 0.0, %v5954
        %5956 = vmatmul.f32.gmra.mxu0 %v5362
        %v5957 = vpop.f32.mrf.mxu0
        %v5958 = vadd.f32 0.0, %v5957
        %5959 = vmatmul.f32.gmra.mxu0 %v5365
        %v5960 = vpop.f32.mrf.mxu0
        %v5961 = vadd.f32 0.0, %v5960
        %5962 = vmatmul.f32.gmra.mxu0 %v5368
        %v5963 = vpop.f32.mrf.mxu0
        %v5964 = vadd.f32 0.0, %v5963
        %5965 = vmatmul.f32.gmra.mxu0 %v5371
        %v5966 = vpop.f32.mrf.mxu0
        %v5967 = vadd.f32 0.0, %v5966
        %5968 = vmatmul.f32.gmra.mxu0 %v5374
        %v5969 = vpop.f32.mrf.mxu0
        %v5970 = vadd.f32 0.0, %v5969
        %5971 = vmatmul.f32.gmra.mxu0 %v5377
        %v5972 = vpop.f32.mrf.mxu0
        %v5973 = vadd.f32 0.0, %v5972
        %5974 = vmatmul.f32.gmra.mxu0 %v5380
        %v5975 = vpop.f32.mrf.mxu0
        %v5976 = vadd.f32 0.0, %v5975
        %5977 = vmatmul.f32.gmra.mxu0 %v5383
        %v5978 = vpop.f32.mrf.mxu0
        %v5979 = vadd.f32 0.0, %v5978
        %5980 = vmatmul.f32.gmra.mxu0 %v5386
        %v5981 = vpop.f32.mrf.mxu0
        %v5982 = vadd.f32 0.0, %v5981
        %5983 = vmatmul.f32.gmra.mxu0 %v5389
        %v5984 = vpop.f32.mrf.mxu0
        %v5985 = vadd.f32 0.0, %v5984
        %5986 = vmatmul.f32.gmra.mxu0 %v5392
        %v5987 = vpop.f32.mrf.mxu0
        %v5988 = vadd.f32 0.0, %v5987
        %5989 = vmatmul.f32.gmra.mxu0 %v5395
        %v5990 = vpop.f32.mrf.mxu0
        %v5991 = vadd.f32 0.0, %v5990
        %5992 = vmatmul.f32.gmra.mxu0 %v5398
        %v5993 = vpop.f32.mrf.mxu0
        %v5994 = vadd.f32 0.0, %v5993
        %5995 = vmatmul.f32.gmra.mxu0 %v5401
        %v5996 = vpop.f32.mrf.mxu0
        %v5997 = vadd.f32 0.0, %v5996
        %5998 = vmatmul.f32.gmra.mxu0 %v5404
        %v5999 = vpop.f32.mrf.mxu0
        %v6000 = vadd.f32 0.0, %v5999
        %6001 = vmatmul.f32.gmra.mxu0 %v5407
        %v6002 = vpop.f32.mrf.mxu0
        %v6003 = vadd.f32 0.0, %v6002
        %6004 = vmatmul.f32.gmra.mxu0 %v5410
        %v6005 = vpop.f32.mrf.mxu0
        %v6006 = vadd.f32 0.0, %v6005
        %6007 = vmatmul.f32.gmra.mxu0 %v5413
        %v6008 = vpop.f32.mrf.mxu0
        %v6009 = vadd.f32 0.0, %v6008
        %6010 = vmatmul.f32.gmra.mxu0 %v5416
        %v6011 = vpop.f32.mrf.mxu0
        %v6012 = vadd.f32 0.0, %v6011
        %6013 = vmatmul.f32.gmra.mxu0 %v5419
        %v6014 = vpop.f32.mrf.mxu0
        %v6015 = vadd.f32 0.0, %v6014
        %6016 = vmatmul.f32.gmra.mxu0 %v5422
        %v6017 = vpop.f32.mrf.mxu0
        %v6018 = vadd.f32 0.0, %v6017
        %6019 = vmatmul.f32.gmra.mxu0 %v5425
        %v6020 = vpop.f32.mrf.mxu0
        %v6021 = vadd.f32 0.0, %v6020
        %6022 = vmatmul.f32.gmra.mxu0 %v5428
        %v6023 = vpop.f32.mrf.mxu0
        %v6024 = vadd.f32 0.0, %v6023
        %6025 = vmatmul.f32.gmra.mxu0 %v5431
        %v6026 = vpop.f32.mrf.mxu0
        %v6027 = vadd.f32 0.0, %v6026
        %6028 = vmatmul.f32.gmra.mxu0 %v5434
        %v6029 = vpop.f32.mrf.mxu0
        %v6030 = vadd.f32 0.0, %v6029
        %6031 = vmatmul.f32.gmra.mxu0 %v5437
        %v6032 = vpop.f32.mrf.mxu0
        %v6033 = vadd.f32 0.0, %v6032
        %6034 = vmatmul.f32.gmra.mxu0 %v5440
        %v6035 = vpop.f32.mrf.mxu0
        %6036 = vmatmul.f32.gmra.mxu0 %v5443
        %v6037 = vpop.f32.mrf.mxu0
        %6038 = vmatmul.f32.gmra.mxu0 %v5446
        %v6039 = vpop.f32.mrf.mxu0
        %6040 = vmatmul.f32.gmra.mxu0 %v5449
        %v6041 = vpop.f32.mrf.mxu0
        %6042 = vmatmul.f32.gmra.mxu0 %v5452
        %v6043 = vpop.f32.mrf.mxu0
        %6044 = vmatmul.f32.gmra.mxu0 %v5455
        %v6045 = vpop.f32.mrf.mxu0
        %6046 = vmatmul.f32.gmra.mxu0 %v5458
        %v6047 = vpop.f32.mrf.mxu0
        %6048 = vmatmul.f32.gmra.mxu0 %v5461
        %v6049 = vpop.f32.mrf.mxu0
        %6050 = vmatmul.f32.gmra.mxu0 %v5464
        %v6051 = vpop.f32.mrf.mxu0
        %6052 = vmatmul.f32.gmra.mxu0 %v5467
        %v6053 = vpop.f32.mrf.mxu0
        %6054 = vmatmul.f32.gmra.mxu0 %v5470
        %v6055 = vpop.f32.mrf.mxu0
        %6056 = vmatmul.f32.gmra.mxu0 %v5473
        %v6057 = vpop.f32.mrf.mxu0
        %6058 = vmatmul.f32.gmra.mxu0 %v5476
        %v6059 = vpop.f32.mrf.mxu0
        %6060 = vmatmul.f32.gmra.mxu0 %v5479
        %v6061 = vpop.f32.mrf.mxu0
        %6062 = vmatmul.f32.gmra.mxu0 %v5482
        %v6063 = vpop.f32.mrf.mxu0
        %6064 = vmatmul.f32.gmra.mxu0 %v5485
        %v6065 = vpop.f32.mrf.mxu0
        %6066 = vmatmul.f32.gmra.mxu0 %v5488
        %v6067 = vpop.f32.mrf.mxu0
        %v6068 = vadd.f32 0.0, %v6067
        %6069 = vmatmul.f32.gmra.mxu0 %v5491
        %v6070 = vpop.f32.mrf.mxu0
        %v6071 = vadd.f32 0.0, %v6070
        %6072 = vmatmul.f32.gmra.mxu0 %v5494
        %v6073 = vpop.f32.mrf.mxu0
        %v6074 = vadd.f32 0.0, %v6073
        %6075 = vmatmul.f32.gmra.mxu0 %v5497
        %v6076 = vpop.f32.mrf.mxu0
        %v6077 = vadd.f32 0.0, %v6076
        %6078 = vmatmul.f32.gmra.mxu0 %v5500
        %v6079 = vpop.f32.mrf.mxu0
        %v6080 = vadd.f32 0.0, %v6079
        %6081 = vmatmul.f32.gmra.mxu0 %v5503
        %v6082 = vpop.f32.mrf.mxu0
        %v6083 = vadd.f32 0.0, %v6082
        %6084 = vmatmul.f32.gmra.mxu0 %v5506
        %v6085 = vpop.f32.mrf.mxu0
        %v6086 = vadd.f32 0.0, %v6085
        %6087 = vmatmul.f32.gmra.mxu0 %v5509
        %v6088 = vpop.f32.mrf.mxu0
        %v6089 = vadd.f32 0.0, %v6088
        %6090 = vmatmul.f32.gmra.mxu0 %v5512
        %v6091 = vpop.f32.mrf.mxu0
        %v6092 = vadd.f32 0.0, %v6091
        %6093 = vmatmul.f32.gmra.mxu0 %v5515
        %v6094 = vpop.f32.mrf.mxu0
        %v6095 = vadd.f32 0.0, %v6094
        %6096 = vmatmul.f32.gmra.mxu0 %v5518
        %v6097 = vpop.f32.mrf.mxu0
        %v6098 = vadd.f32 0.0, %v6097
        %6099 = vmatmul.f32.gmra.mxu0 %v5521
        %v6100 = vpop.f32.mrf.mxu0
        %v6101 = vadd.f32 0.0, %v6100
        %6102 = vmatmul.f32.gmra.mxu0 %v5524
        %v6103 = vpop.f32.mrf.mxu0
        %v6104 = vadd.f32 0.0, %v6103
        %6105 = vmatmul.f32.gmra.mxu0 %v5527
        %v6106 = vpop.f32.mrf.mxu0
        %v6107 = vadd.f32 0.0, %v6106
        %6108 = vmatmul.f32.gmra.mxu0 %v5530
        %v6109 = vpop.f32.mrf.mxu0
        %v6110 = vadd.f32 0.0, %v6109
        %6111 = vmatmul.f32.gmra.mxu0 %v5533
        %v6112 = vpop.f32.mrf.mxu0
        %v6113 = vadd.f32 0.0, %v6112
        %6114 = vmatmul.f32.gmra.mxu0 %v5536
        %v6115 = vpop.f32.mrf.mxu0
        %v6116 = vadd.f32 0.0, %v6115
        %6117 = vmatmul.f32.gmra.mxu0 %v5539
        %v6118 = vpop.f32.mrf.mxu0
        %v6119 = vadd.f32 0.0, %v6118
        %6120 = vmatmul.f32.gmra.mxu0 %v5542
        %v6121 = vpop.f32.mrf.mxu0
        %v6122 = vadd.f32 0.0, %v6121
        %6123 = vmatmul.f32.gmra.mxu0 %v5545
        %v6124 = vpop.f32.mrf.mxu0
        %v6125 = vadd.f32 0.0, %v6124
        %6126 = vmatmul.f32.gmra.mxu0 %v5548
        %v6127 = vpop.f32.mrf.mxu0
        %v6128 = vadd.f32 0.0, %v6127
        %6129 = vmatmul.f32.gmra.mxu0 %v5551
        %v6130 = vpop.f32.mrf.mxu0
        %v6131 = vadd.f32 0.0, %v6130
        %6132 = vmatmul.f32.gmra.mxu0 %v5554
        %v6133 = vpop.f32.mrf.mxu0
        %v6134 = vadd.f32 0.0, %v6133
        %6135 = vmatmul.f32.gmra.mxu0 %v5557
        %v6136 = vpop.f32.mrf.mxu0
        %v6137 = vadd.f32 0.0, %v6136
        %6138 = vmatmul.f32.gmra.mxu0 %v5560
        %v6139 = vpop.f32.mrf.mxu0
        %v6140 = vadd.f32 0.0, %v6139
        %6141 = vmatmul.f32.gmra.mxu0 %v5563
        %v6142 = vpop.f32.mrf.mxu0
        %v6143 = vadd.f32 0.0, %v6142
        %6144 = vmatmul.f32.gmra.mxu0 %v5566
        %v6145 = vpop.f32.mrf.mxu0
        %v6146 = vadd.f32 0.0, %v6145
        %6147 = vmatmul.f32.gmra.mxu0 %v5569
        %v6148 = vpop.f32.mrf.mxu0
        %v6149 = vadd.f32 0.0, %v6148
        %6150 = vmatmul.f32.gmra.mxu0 %v5572
        %v6151 = vpop.f32.mrf.mxu0
        %v6152 = vadd.f32 0.0, %v6151
        %6153 = vmatmul.f32.gmra.mxu0 %v5575
        %v6154 = vpop.f32.mrf.mxu0
        %v6155 = vadd.f32 0.0, %v6154
        %6156 = vmatmul.f32.gmra.mxu0 %v5578
        %v6157 = vpop.f32.mrf.mxu0
        %v6158 = vadd.f32 0.0, %v6157
        %6159 = vmatmul.f32.gmra.mxu0 %v5581
        %v6160 = vpop.f32.mrf.mxu0
        %v6161 = vadd.f32 0.0, %v6160
        %6162 = vmatmul.f32.gmra.mxu0 %v5584
        %v6163 = vpop.f32.mrf.mxu0
        %6164 = vmatmul.f32.gmra.mxu0 %v5587
        %v6165 = vpop.f32.mrf.mxu0
        %6166 = vmatmul.f32.gmra.mxu0 %v5590
        %v6167 = vpop.f32.mrf.mxu0
        %6168 = vmatmul.f32.gmra.mxu0 %v5593
        %v6169 = vpop.f32.mrf.mxu0
        %6170 = vmatmul.f32.gmra.mxu0 %v5596
        %v6171 = vpop.f32.mrf.mxu0
        %6172 = vmatmul.f32.gmra.mxu0 %v5599
        %v6173 = vpop.f32.mrf.mxu0
        %6174 = vmatmul.f32.gmra.mxu0 %v5602
        %v6175 = vpop.f32.mrf.mxu0
        %6176 = vmatmul.f32.gmra.mxu0 %v5605
        %v6177 = vpop.f32.mrf.mxu0
        %6178 = vmatmul.f32.gmra.mxu0 %v5608
        %v6179 = vpop.f32.mrf.mxu0
        %6180 = vmatmul.f32.gmra.mxu0 %v5611
        %v6181 = vpop.f32.mrf.mxu0
        %6182 = vmatmul.f32.gmra.mxu0 %v5614
        %v6183 = vpop.f32.mrf.mxu0
        %6184 = vmatmul.f32.gmra.mxu0 %v5617
        %v6185 = vpop.f32.mrf.mxu0
        %6186 = vmatmul.f32.gmra.mxu0 %v5620
        %v6187 = vpop.f32.mrf.mxu0
        %6188 = vmatmul.f32.gmra.mxu0 %v5623
        %v6189 = vpop.f32.mrf.mxu0
        %6190 = vmatmul.f32.gmra.mxu0 %v5626
        %v6191 = vpop.f32.mrf.mxu0
        %6192 = vmatmul.f32.gmra.mxu0 %v5629
        %v6193 = vpop.f32.mrf.mxu0
        %6194 = vmatmul.f32.gmra.mxu0 %v5632
        %v6195 = vpop.f32.mrf.mxu0
        %v6196 = vadd.f32 0.0, %v6195
        %6197 = vmatmul.f32.gmra.mxu0 %v5635
        %v6198 = vpop.f32.mrf.mxu0
        %v6199 = vadd.f32 0.0, %v6198
        %6200 = vmatmul.f32.gmra.mxu0 %v5638
        %v6201 = vpop.f32.mrf.mxu0
        %v6202 = vadd.f32 0.0, %v6201
        %6203 = vmatmul.f32.gmra.mxu0 %v5641
        %v6204 = vpop.f32.mrf.mxu0
        %v6205 = vadd.f32 0.0, %v6204
        %6206 = vmatmul.f32.gmra.mxu0 %v5644
        %v6207 = vpop.f32.mrf.mxu0
        %v6208 = vadd.f32 0.0, %v6207
        %6209 = vmatmul.f32.gmra.mxu0 %v5647
        %v6210 = vpop.f32.mrf.mxu0
        %v6211 = vadd.f32 0.0, %v6210
        %6212 = vmatmul.f32.gmra.mxu0 %v5650
        %v6213 = vpop.f32.mrf.mxu0
        %v6214 = vadd.f32 0.0, %v6213
        %6215 = vmatmul.f32.gmra.mxu0 %v5653
        %v6216 = vpop.f32.mrf.mxu0
        %v6217 = vadd.f32 0.0, %v6216
        %6218 = vmatmul.f32.gmra.mxu0 %v5656
        %v6219 = vpop.f32.mrf.mxu0
        %v6220 = vadd.f32 0.0, %v6219
        %6221 = vmatmul.f32.gmra.mxu0 %v5659
        %v6222 = vpop.f32.mrf.mxu0
        %v6223 = vadd.f32 0.0, %v6222
        %6224 = vmatmul.f32.gmra.mxu0 %v5662
        %v6225 = vpop.f32.mrf.mxu0
        %v6226 = vadd.f32 0.0, %v6225
        %6227 = vmatmul.f32.gmra.mxu0 %v5665
        %v6228 = vpop.f32.mrf.mxu0
        %v6229 = vadd.f32 0.0, %v6228
        %6230 = vmatmul.f32.gmra.mxu0 %v5668
        %v6231 = vpop.f32.mrf.mxu0
        %v6232 = vadd.f32 0.0, %v6231
        %6233 = vmatmul.f32.gmra.mxu0 %v5671
        %v6234 = vpop.f32.mrf.mxu0
        %v6235 = vadd.f32 0.0, %v6234
        %6236 = vmatmul.f32.gmra.mxu0 %v5674
        %v6237 = vpop.f32.mrf.mxu0
        %v6238 = vadd.f32 0.0, %v6237
        %6239 = vmatmul.f32.gmra.mxu0 %v5677
        %v6240 = vpop.f32.mrf.mxu0
        %v6241 = vadd.f32 0.0, %v6240
        %6242 = vmatmul.f32.gmra.mxu0 %v5680
        %v6243 = vpop.f32.mrf.mxu0
        %v6244 = vadd.f32 0.0, %v6243
        %6245 = vmatmul.f32.gmra.mxu0 %v5683
        %v6246 = vpop.f32.mrf.mxu0
        %v6247 = vadd.f32 0.0, %v6246
        %6248 = vmatmul.f32.gmra.mxu0 %v5686
        %v6249 = vpop.f32.mrf.mxu0
        %v6250 = vadd.f32 0.0, %v6249
        %6251 = vmatmul.f32.gmra.mxu0 %v5689
        %v6252 = vpop.f32.mrf.mxu0
        %v6253 = vadd.f32 0.0, %v6252
        %6254 = vmatmul.f32.gmra.mxu0 %v5692
        %v6255 = vpop.f32.mrf.mxu0
        %v6256 = vadd.f32 0.0, %v6255
        %6257 = vmatmul.f32.gmra.mxu0 %v5695
        %v6258 = vpop.f32.mrf.mxu0
        %v6259 = vadd.f32 0.0, %v6258
        %6260 = vmatmul.f32.gmra.mxu0 %v5698
        %v6261 = vpop.f32.mrf.mxu0
        %v6262 = vadd.f32 0.0, %v6261
        %6263 = vmatmul.f32.gmra.mxu0 %v5701
        %v6264 = vpop.f32.mrf.mxu0
        %v6265 = vadd.f32 0.0, %v6264
        %6266 = vmatmul.f32.gmra.mxu0 %v5704
        %v6267 = vpop.f32.mrf.mxu0
        %v6268 = vadd.f32 0.0, %v6267
        %6269 = vmatmul.f32.gmra.mxu0 %v5707
        %v6270 = vpop.f32.mrf.mxu0
        %v6271 = vadd.f32 0.0, %v6270
        %6272 = vmatmul.f32.gmra.mxu0 %v5710
        %v6273 = vpop.f32.mrf.mxu0
        %v6274 = vadd.f32 0.0, %v6273
        %6275 = vmatmul.f32.gmra.mxu0 %v5713
        %v6276 = vpop.f32.mrf.mxu0
        %v6277 = vadd.f32 0.0, %v6276
        %6278 = vmatmul.f32.gmra.mxu0 %v5716
        %v6279 = vpop.f32.mrf.mxu0
        %v6280 = vadd.f32 0.0, %v6279
        %6281 = vmatmul.f32.gmra.mxu0 %v5719
        %v6282 = vpop.f32.mrf.mxu0
        %v6283 = vadd.f32 0.0, %v6282
        %6284 = vmatmul.f32.gmra.mxu0 %v5722
        %v6285 = vpop.f32.mrf.mxu0
        %v6286 = vadd.f32 0.0, %v6285
        %6287 = vmatmul.f32.gmra.mxu0 %v5725
        %v6288 = vpop.f32.mrf.mxu0
        %v6289 = vadd.f32 0.0, %v6288
        %6290 = vmatmul.f32.gmra.mxu0 %v5728
        %v6291 = vpop.f32.mrf.mxu0
        %6292 = vmatmul.f32.gmra.mxu0 %v5731
        %v6293 = vpop.f32.mrf.mxu0
        %6294 = vmatmul.f32.gmra.mxu0 %v5734
        %v6295 = vpop.f32.mrf.mxu0
        %6296 = vmatmul.f32.gmra.mxu0 %v5737
        %v6297 = vpop.f32.mrf.mxu0
        %6298 = vmatmul.f32.gmra.mxu0 %v5740
        %v6299 = vpop.f32.mrf.mxu0
        %6300 = vmatmul.f32.gmra.mxu0 %v5743
        %v6301 = vpop.f32.mrf.mxu0
        %6302 = vmatmul.f32.gmra.mxu0 %v5746
        %v6303 = vpop.f32.mrf.mxu0
        %6304 = vmatmul.f32.gmra.mxu0 %v5749
        %v6305 = vpop.f32.mrf.mxu0
        %6306 = vmatmul.f32.gmra.mxu0 %v5752
        %v6307 = vpop.f32.mrf.mxu0
        %6308 = vmatmul.f32.gmra.mxu0 %v5755
        %v6309 = vpop.f32.mrf.mxu0
        %6310 = vmatmul.f32.gmra.mxu0 %v5758
        %v6311 = vpop.f32.mrf.mxu0
        %6312 = vmatmul.f32.gmra.mxu0 %v5761
        %v6313 = vpop.f32.mrf.mxu0
        %6314 = vmatmul.f32.gmra.mxu0 %v5764
        %v6315 = vpop.f32.mrf.mxu0
        %6316 = vmatmul.f32.gmra.mxu0 %v5767
        %v6317 = vpop.f32.mrf.mxu0
        %6318 = vmatmul.f32.gmra.mxu0 %v5770
        %v6319 = vpop.f32.mrf.mxu0
        %6320 = vmatmul.f32.gmra.mxu0 %v5773
        %v6321 = vpop.f32.mrf.mxu0
        %6322 = vmatmul.f32.gmra.mxu0 %v5776
        %v6323 = vpop.f32.mrf.mxu0
        %v6324 = vadd.f32 0.0, %v6323
        %6325 = vmatmul.f32.gmra.mxu0 %v5779
        %v6326 = vpop.f32.mrf.mxu0
        %v6327 = vadd.f32 0.0, %v6326
        %6328 = vmatmul.f32.gmra.mxu0 %v5782
        %v6329 = vpop.f32.mrf.mxu0
        %v6330 = vadd.f32 0.0, %v6329
        %6331 = vmatmul.f32.gmra.mxu0 %v5785
        %v6332 = vpop.f32.mrf.mxu0
        %v6333 = vadd.f32 0.0, %v6332
        %6334 = vmatmul.f32.gmra.mxu0 %v5788
        %v6335 = vpop.f32.mrf.mxu0
        %v6336 = vadd.f32 0.0, %v6335
        %6337 = vmatmul.f32.gmra.mxu0 %v5791
        %v6338 = vpop.f32.mrf.mxu0
        %v6339 = vadd.f32 0.0, %v6338
        %6340 = vmatmul.f32.gmra.mxu0 %v5794
        %v6341 = vpop.f32.mrf.mxu0
        %v6342 = vadd.f32 0.0, %v6341
        %6343 = vmatmul.f32.gmra.mxu0 %v5797
        %v6344 = vpop.f32.mrf.mxu0
        %v6345 = vadd.f32 0.0, %v6344
        %6346 = vmatmul.f32.gmra.mxu0 %v5800
        %v6347 = vpop.f32.mrf.mxu0
        %v6348 = vadd.f32 0.0, %v6347
        %6349 = vmatmul.f32.gmra.mxu0 %v5803
        %v6350 = vpop.f32.mrf.mxu0
        %v6351 = vadd.f32 0.0, %v6350
        %6352 = vmatmul.f32.gmra.mxu0 %v5806
        %v6353 = vpop.f32.mrf.mxu0
        %v6354 = vadd.f32 0.0, %v6353
        %6355 = vmatmul.f32.gmra.mxu0 %v5809
        %v6356 = vpop.f32.mrf.mxu0
        %v6357 = vadd.f32 0.0, %v6356
        %6358 = vmatmul.f32.gmra.mxu0 %v5812
        %v6359 = vpop.f32.mrf.mxu0
        %v6360 = vadd.f32 0.0, %v6359
        %6361 = vmatmul.f32.gmra.mxu0 %v5815
        %v6362 = vpop.f32.mrf.mxu0
        %v6363 = vadd.f32 0.0, %v6362
        %6364 = vmatmul.f32.gmra.mxu0 %v5818
        %v6365 = vpop.f32.mrf.mxu0
        %v6366 = vadd.f32 0.0, %v6365
        %6367 = vmatmul.f32.gmra.mxu0 %v5821
        %v6368 = vpop.f32.mrf.mxu0
        %v6369 = vadd.f32 0.0, %v6368
        %6370 = vmatmul.f32.gmra.mxu0 %v5824
        %v6371 = vpop.f32.mrf.mxu0
        %v6372 = vadd.f32 0.0, %v6371
        %6373 = vmatmul.f32.gmra.mxu0 %v5827
        %v6374 = vpop.f32.mrf.mxu0
        %v6375 = vadd.f32 0.0, %v6374
        %6376 = vmatmul.f32.gmra.mxu0 %v5830
        %v6377 = vpop.f32.mrf.mxu0
        %v6378 = vadd.f32 0.0, %v6377
        %6379 = vmatmul.f32.gmra.mxu0 %v5833
        %v6380 = vpop.f32.mrf.mxu0
        %v6381 = vadd.f32 0.0, %v6380
        %6382 = vmatmul.f32.gmra.mxu0 %v5836
        %v6383 = vpop.f32.mrf.mxu0
        %v6384 = vadd.f32 0.0, %v6383
        %6385 = vmatmul.f32.gmra.mxu0 %v5839
        %v6386 = vpop.f32.mrf.mxu0
        %v6387 = vadd.f32 0.0, %v6386
        %6388 = vmatmul.f32.gmra.mxu0 %v5842
        %v6389 = vpop.f32.mrf.mxu0
        %v6390 = vadd.f32 0.0, %v6389
        %6391 = vmatmul.f32.gmra.mxu0 %v5845
        %v6392 = vpop.f32.mrf.mxu0
        %v6393 = vadd.f32 0.0, %v6392
        %6394 = vmatmul.f32.gmra.mxu0 %v5848
        %v6395 = vpop.f32.mrf.mxu0
        %v6396 = vadd.f32 0.0, %v6395
        %6397 = vmatmul.f32.gmra.mxu0 %v5851
        %v6398 = vpop.f32.mrf.mxu0
        %v6399 = vadd.f32 0.0, %v6398
        %6400 = vmatmul.f32.gmra.mxu0 %v5854
        %v6401 = vpop.f32.mrf.mxu0
        %v6402 = vadd.f32 0.0, %v6401
        %6403 = vmatmul.f32.gmra.mxu0 %v5857
        %v6404 = vpop.f32.mrf.mxu0
        %v6405 = vadd.f32 0.0, %v6404
        %6406 = vmatmul.f32.gmra.mxu0 %v5860
        %v6407 = vpop.f32.mrf.mxu0
        %v6408 = vadd.f32 0.0, %v6407
        %6409 = vmatmul.f32.gmra.mxu0 %v5863
        %v6410 = vpop.f32.mrf.mxu0
        %v6411 = vadd.f32 0.0, %v6410
        %6412 = vmatmul.f32.gmra.mxu0 %v5866
        %v6413 = vpop.f32.mrf.mxu0
        %v6414 = vadd.f32 0.0, %v6413
        %6415 = vmatmul.f32.gmra.mxu0 %v5869
        %v6416 = vpop.f32.mrf.mxu0
        %v6417 = vadd.f32 0.0, %v6416
        %6418 = vmatmul.f32.gmra.mxu0 %v5872
        %v6419 = vpop.f32.mrf.mxu0
        %6420 = vmatmul.f32.gmra.mxu0 %v5875
        %v6421 = vpop.f32.mrf.mxu0
        %6422 = vmatmul.f32.gmra.mxu0 %v5878
        %v6423 = vpop.f32.mrf.mxu0
        %6424 = vmatmul.f32.gmra.mxu0 %v5881
        %v6425 = vpop.f32.mrf.mxu0
        %6426 = vmatmul.f32.gmra.mxu0 %v5884
        %v6427 = vpop.f32.mrf.mxu0
        %6428 = vmatmul.f32.gmra.mxu0 %v5887
        %v6429 = vpop.f32.mrf.mxu0
        %6430 = vmatmul.f32.gmra.mxu0 %v5890
        %v6431 = vpop.f32.mrf.mxu0
        %6432 = vmatmul.f32.gmra.mxu0 %v5893
        %v6433 = vpop.f32.mrf.mxu0
        %6434 = vmatmul.f32.gmra.mxu0 %v5896
        %v6435 = vpop.f32.mrf.mxu0
        %6436 = vmatmul.f32.gmra.mxu0 %v5899
        %v6437 = vpop.f32.mrf.mxu0
        %6438 = vmatmul.f32.gmra.mxu0 %v5902
        %v6439 = vpop.f32.mrf.mxu0
        %6440 = vmatmul.f32.gmra.mxu0 %v5905
        %v6441 = vpop.f32.mrf.mxu0
        %6442 = vmatmul.f32.gmra.mxu0 %v5908
        %v6443 = vpop.f32.mrf.mxu0
        %6444 = vmatmul.f32.gmra.mxu0 %v5911
        %v6445 = vpop.f32.mrf.mxu0
        %6446 = vmatmul.f32.gmra.mxu0 %v5914
        %v6447 = vpop.f32.mrf.mxu0
        %6448 = vmatmul.f32.gmra.mxu0 %v5917
        %v6449 = vpop.f32.mrf.mxu0
        %6450 = vdwg.mxu0
        %v6451 = vadd.f32 %v5021, %v5940
        %v6452 = vadd.f32 %v5022, %v5943
        %v6453 = vadd.f32 %v5023, %v5946
        %v6454 = vadd.f32 %v5024, %v5949
        %v6455 = vadd.f32 %v5025, %v5952
        %v6456 = vadd.f32 %v5026, %v5955
        %v6457 = vadd.f32 %v5027, %v5958
        %v6458 = vadd.f32 %v5028, %v5961
        %v6459 = vadd.f32 %v5029, %v5964
        %v6460 = vadd.f32 %v5030, %v5967
        %v6461 = vadd.f32 %v5031, %v5970
        %v6462 = vadd.f32 %v5032, %v5973
        %v6463 = vadd.f32 %v5033, %v5976
        %v6464 = vadd.f32 %v5034, %v5979
        %v6465 = vadd.f32 %v5035, %v5982
        %v6466 = vadd.f32 %v5036, %v5985
        %v6467 = vadd.f32 %v5037, %v5988
        %v6468 = vadd.f32 %v5038, %v5991
        %v6469 = vadd.f32 %v5039, %v5994
        %v6470 = vadd.f32 %v5040, %v5997
        %v6471 = vadd.f32 %v5041, %v6000
        %v6472 = vadd.f32 %v5042, %v6003
        %v6473 = vadd.f32 %v5043, %v6006
        %v6474 = vadd.f32 %v5044, %v6009
        %v6475 = vadd.f32 %v5045, %v6012
        %v6476 = vadd.f32 %v5046, %v6015
        %v6477 = vadd.f32 %v5047, %v6018
        %v6478 = vadd.f32 %v5048, %v6021
        %v6479 = vadd.f32 %v5049, %v6024
        %v6480 = vadd.f32 %v5050, %v6027
        %v6481 = vadd.f32 %v5051, %v6030
        %v6482 = vadd.f32 %v5052, %v6033
        %v6483 = vadd.f32 %v5053, %v6068
        %v6484 = vadd.f32 %v5054, %v6071
        %v6485 = vadd.f32 %v5055, %v6074
        %v6486 = vadd.f32 %v5056, %v6077
        %v6487 = vadd.f32 %v5057, %v6080
        %v6488 = vadd.f32 %v5058, %v6083
        %v6489 = vadd.f32 %v5059, %v6086
        %v6490 = vadd.f32 %v5060, %v6089
        %v6491 = vadd.f32 %v5061, %v6092
        %v6492 = vadd.f32 %v5062, %v6095
        %v6493 = vadd.f32 %v5063, %v6098
        %v6494 = vadd.f32 %v5064, %v6101
        %v6495 = vadd.f32 %v5065, %v6104
        %v6496 = vadd.f32 %v5066, %v6107
        %v6497 = vadd.f32 %v5067, %v6110
        %v6498 = vadd.f32 %v5068, %v6113
        %v6499 = vadd.f32 %v5069, %v6116
        %v6500 = vadd.f32 %v5070, %v6119
        %v6501 = vadd.f32 %v5071, %v6122
        %v6502 = vadd.f32 %v5072, %v6125
        %v6503 = vadd.f32 %v5073, %v6128
        %v6504 = vadd.f32 %v5074, %v6131
        %v6505 = vadd.f32 %v5075, %v6134
        %v6506 = vadd.f32 %v5076, %v6137
        %v6507 = vadd.f32 %v5077, %v6140
        %v6508 = vadd.f32 %v5078, %v6143
        %v6509 = vadd.f32 %v5079, %v6146
        %v6510 = vadd.f32 %v5080, %v6149
        %v6511 = vadd.f32 %v5081, %v6152
        %v6512 = vadd.f32 %v5082, %v6155
        %v6513 = vadd.f32 %v5083, %v6158
        %v6514 = vadd.f32 %v5084, %v6161
        %v6515 = vadd.f32 %v5085, %v6196
        %v6516 = vadd.f32 %v5086, %v6199
        %v6517 = vadd.f32 %v5087, %v6202
        %v6518 = vadd.f32 %v5088, %v6205
        %v6519 = vadd.f32 %v5089, %v6208
        %v6520 = vadd.f32 %v5090, %v6211
        %v6521 = vadd.f32 %v5091, %v6214
        %v6522 = vadd.f32 %v5092, %v6217
        %v6523 = vadd.f32 %v5093, %v6220
        %v6524 = vadd.f32 %v5094, %v6223
        %v6525 = vadd.f32 %v5095, %v6226
        %v6526 = vadd.f32 %v5096, %v6229
        %v6527 = vadd.f32 %v5097, %v6232
        %v6528 = vadd.f32 %v5098, %v6235
        %v6529 = vadd.f32 %v5099, %v6238
        %v6530 = vadd.f32 %v5100, %v6241
        %v6531 = vadd.f32 %v5101, %v6244
        %v6532 = vadd.f32 %v5102, %v6247
        %v6533 = vadd.f32 %v5103, %v6250
        %v6534 = vadd.f32 %v5104, %v6253
        %v6535 = vadd.f32 %v5105, %v6256
        %v6536 = vadd.f32 %v5106, %v6259
        %v6537 = vadd.f32 %v5107, %v6262
        %v6538 = vadd.f32 %v5108, %v6265
        %v6539 = vadd.f32 %v5109, %v6268
        %v6540 = vadd.f32 %v5110, %v6271
        %v6541 = vadd.f32 %v5111, %v6274
        %v6542 = vadd.f32 %v5112, %v6277
        %v6543 = vadd.f32 %v5113, %v6280
        %v6544 = vadd.f32 %v5114, %v6283
        %v6545 = vadd.f32 %v5115, %v6286
        %v6546 = vadd.f32 %v5116, %v6289
        %v6547 = vadd.f32 %v5117, %v6324
        %v6548 = vadd.f32 %v5118, %v6327
        %v6549 = vadd.f32 %v5119, %v6330
        %v6550 = vadd.f32 %v5120, %v6333
        %v6551 = vadd.f32 %v5121, %v6336
        %v6552 = vadd.f32 %v5122, %v6339
        %v6553 = vadd.f32 %v5123, %v6342
        %v6554 = vadd.f32 %v5124, %v6345
        %v6555 = vadd.f32 %v5125, %v6348
        %v6556 = vadd.f32 %v5126, %v6351
        %v6557 = vadd.f32 %v5127, %v6354
        %v6558 = vadd.f32 %v5128, %v6357
        %v6559 = vadd.f32 %v5129, %v6360
        %v6560 = vadd.f32 %v5130, %v6363
        %v6561 = vadd.f32 %v5131, %v6366
        %v6562 = vadd.f32 %v5132, %v6369
        %v6563 = vadd.f32 %v5133, %v6372
        %v6564 = vadd.f32 %v5134, %v6375
        %v6565 = vadd.f32 %v5135, %v6378
        %v6566 = vadd.f32 %v5136, %v6381
        %v6567 = vadd.f32 %v5137, %v6384
        %v6568 = vadd.f32 %v5138, %v6387
        %v6569 = vadd.f32 %v5139, %v6390
        %v6570 = vadd.f32 %v5140, %v6393
        %v6571 = vadd.f32 %v5141, %v6396
        %v6572 = vadd.f32 %v5142, %v6399
        %v6573 = vadd.f32 %v5143, %v6402
        %v6574 = vadd.f32 %v5144, %v6405
        %v6575 = vadd.f32 %v5145, %v6408
        %v6576 = vadd.f32 %v5146, %v6411
        %v6577 = vadd.f32 %v5147, %v6414
        %v6578 = vadd.f32 %v5148, %v6417
        %v6579 = vld [vmem:[%s2] sm:$0x1]
        %v6581 = vperm.slane %v6579, 0
        %v6583 = vadd.f32 %v6451, %v6581
        %v6584 = vadd.f32 %v6452, %v6581
        %v6585 = vadd.f32 %v6453, %v6581
        %v6586 = vadd.f32 %v6454, %v6581
        %v6587 = vadd.f32 %v6455, %v6581
        %v6588 = vadd.f32 %v6456, %v6581
        %v6589 = vadd.f32 %v6457, %v6581
        %v6590 = vadd.f32 %v6458, %v6581
        %v6591 = vadd.f32 %v6459, %v6581
        %v6592 = vadd.f32 %v6460, %v6581
        %v6593 = vadd.f32 %v6461, %v6581
        %v6594 = vadd.f32 %v6462, %v6581
        %v6595 = vadd.f32 %v6463, %v6581
        %v6596 = vadd.f32 %v6464, %v6581
        %v6597 = vadd.f32 %v6465, %v6581
        %v6598 = vadd.f32 %v6466, %v6581
        %v6599 = vadd.f32 %v6467, %v6581
        %v6600 = vadd.f32 %v6468, %v6581
        %v6601 = vadd.f32 %v6469, %v6581
        %v6602 = vadd.f32 %v6470, %v6581
        %v6603 = vadd.f32 %v6471, %v6581
        %v6604 = vadd.f32 %v6472, %v6581
        %v6605 = vadd.f32 %v6473, %v6581
        %v6606 = vadd.f32 %v6474, %v6581
        %v6607 = vadd.f32 %v6475, %v6581
        %v6608 = vadd.f32 %v6476, %v6581
        %v6609 = vadd.f32 %v6477, %v6581
        %v6610 = vadd.f32 %v6478, %v6581
        %v6611 = vadd.f32 %v6479, %v6581
        %v6612 = vadd.f32 %v6480, %v6581
        %v6613 = vadd.f32 %v6481, %v6581
        %v6614 = vadd.f32 %v6482, %v6581
        %v6615 = vadd.f32 %v6483, %v6581
        %v6616 = vadd.f32 %v6484, %v6581
        %v6617 = vadd.f32 %v6485, %v6581
        %v6618 = vadd.f32 %v6486, %v6581
        %v6619 = vadd.f32 %v6487, %v6581
        %v6620 = vadd.f32 %v6488, %v6581
        %v6621 = vadd.f32 %v6489, %v6581
        %v6622 = vadd.f32 %v6490, %v6581
        %v6623 = vadd.f32 %v6491, %v6581
        %v6624 = vadd.f32 %v6492, %v6581
        %v6625 = vadd.f32 %v6493, %v6581
        %v6626 = vadd.f32 %v6494, %v6581
        %v6627 = vadd.f32 %v6495, %v6581
        %v6628 = vadd.f32 %v6496, %v6581
        %v6629 = vadd.f32 %v6497, %v6581
        %v6630 = vadd.f32 %v6498, %v6581
        %v6631 = vadd.f32 %v6499, %v6581
        %v6632 = vadd.f32 %v6500, %v6581
        %v6633 = vadd.f32 %v6501, %v6581
        %v6634 = vadd.f32 %v6502, %v6581
        %v6635 = vadd.f32 %v6503, %v6581
        %v6636 = vadd.f32 %v6504, %v6581
        %v6637 = vadd.f32 %v6505, %v6581
        %v6638 = vadd.f32 %v6506, %v6581
        %v6639 = vadd.f32 %v6507, %v6581
        %v6640 = vadd.f32 %v6508, %v6581
        %v6641 = vadd.f32 %v6509, %v6581
        %v6642 = vadd.f32 %v6510, %v6581
        %v6643 = vadd.f32 %v6511, %v6581
        %v6644 = vadd.f32 %v6512, %v6581
        %v6645 = vadd.f32 %v6513, %v6581
        %v6646 = vadd.f32 %v6514, %v6581
        %v6647 = vadd.f32 %v6515, %v6581
        %v6648 = vadd.f32 %v6516, %v6581
        %v6649 = vadd.f32 %v6517, %v6581
        %v6650 = vadd.f32 %v6518, %v6581
        %v6651 = vadd.f32 %v6519, %v6581
        %v6652 = vadd.f32 %v6520, %v6581
        %v6653 = vadd.f32 %v6521, %v6581
        %v6654 = vadd.f32 %v6522, %v6581
        %v6655 = vadd.f32 %v6523, %v6581
        %v6656 = vadd.f32 %v6524, %v6581
        %v6657 = vadd.f32 %v6525, %v6581
        %v6658 = vadd.f32 %v6526, %v6581
        %v6659 = vadd.f32 %v6527, %v6581
        %v6660 = vadd.f32 %v6528, %v6581
        %v6661 = vadd.f32 %v6529, %v6581
        %v6662 = vadd.f32 %v6530, %v6581
        %v6663 = vadd.f32 %v6531, %v6581
        %v6664 = vadd.f32 %v6532, %v6581
        %v6665 = vadd.f32 %v6533, %v6581
        %v6666 = vadd.f32 %v6534, %v6581
        %v6667 = vadd.f32 %v6535, %v6581
        %v6668 = vadd.f32 %v6536, %v6581
        %v6669 = vadd.f32 %v6537, %v6581
        %v6670 = vadd.f32 %v6538, %v6581
        %v6671 = vadd.f32 %v6539, %v6581
        %v6672 = vadd.f32 %v6540, %v6581
        %v6673 = vadd.f32 %v6541, %v6581
        %v6674 = vadd.f32 %v6542, %v6581
        %v6675 = vadd.f32 %v6543, %v6581
        %v6676 = vadd.f32 %v6544, %v6581
        %v6677 = vadd.f32 %v6545, %v6581
        %v6678 = vadd.f32 %v6546, %v6581
        %v6679 = vadd.f32 %v6547, %v6581
        %v6680 = vadd.f32 %v6548, %v6581
        %v6681 = vadd.f32 %v6549, %v6581
        %v6682 = vadd.f32 %v6550, %v6581
        %v6683 = vadd.f32 %v6551, %v6581
        %v6684 = vadd.f32 %v6552, %v6581
        %v6685 = vadd.f32 %v6553, %v6581
        %v6686 = vadd.f32 %v6554, %v6581
        %v6687 = vadd.f32 %v6555, %v6581
        %v6688 = vadd.f32 %v6556, %v6581
        %v6689 = vadd.f32 %v6557, %v6581
        %v6690 = vadd.f32 %v6558, %v6581
        %v6691 = vadd.f32 %v6559, %v6581
        %v6692 = vadd.f32 %v6560, %v6581
        %v6693 = vadd.f32 %v6561, %v6581
        %v6694 = vadd.f32 %v6562, %v6581
        %v6695 = vadd.f32 %v6563, %v6581
        %v6696 = vadd.f32 %v6564, %v6581
        %v6697 = vadd.f32 %v6565, %v6581
        %v6698 = vadd.f32 %v6566, %v6581
        %v6699 = vadd.f32 %v6567, %v6581
        %v6700 = vadd.f32 %v6568, %v6581
        %v6701 = vadd.f32 %v6569, %v6581
        %v6702 = vadd.f32 %v6570, %v6581
        %v6703 = vadd.f32 %v6571, %v6581
        %v6704 = vadd.f32 %v6572, %v6581
        %v6705 = vadd.f32 %v6573, %v6581
        %v6706 = vadd.f32 %v6574, %v6581
        %v6707 = vadd.f32 %v6575, %v6581
        %v6708 = vadd.f32 %v6576, %v6581
        %v6709 = vadd.f32 %v6577, %v6581
        %v6710 = vadd.f32 %v6578, %v6581
        %v6711 = vmax.f32 %v6583, 0.0
        %v6712 = vmax.f32 %v6584, 0.0
        %v6713 = vmax.f32 %v6585, 0.0
        %v6714 = vmax.f32 %v6586, 0.0
        %v6715 = vmax.f32 %v6587, 0.0
        %v6716 = vmax.f32 %v6588, 0.0
        %v6717 = vmax.f32 %v6589, 0.0
        %v6718 = vmax.f32 %v6590, 0.0
        %v6719 = vmax.f32 %v6591, 0.0
        %v6720 = vmax.f32 %v6592, 0.0
        %v6721 = vmax.f32 %v6593, 0.0
        %v6722 = vmax.f32 %v6594, 0.0
        %v6723 = vmax.f32 %v6595, 0.0
        %v6724 = vmax.f32 %v6596, 0.0
        %v6725 = vmax.f32 %v6597, 0.0
        %v6726 = vmax.f32 %v6598, 0.0
        %v6727 = vmax.f32 %v6599, 0.0
        %v6728 = vmax.f32 %v6600, 0.0
        %v6729 = vmax.f32 %v6601, 0.0
        %v6730 = vmax.f32 %v6602, 0.0
        %v6731 = vmax.f32 %v6603, 0.0
        %v6732 = vmax.f32 %v6604, 0.0
        %v6733 = vmax.f32 %v6605, 0.0
        %v6734 = vmax.f32 %v6606, 0.0
        %v6735 = vmax.f32 %v6607, 0.0
        %v6736 = vmax.f32 %v6608, 0.0
        %v6737 = vmax.f32 %v6609, 0.0
        %v6738 = vmax.f32 %v6610, 0.0
        %v6739 = vmax.f32 %v6611, 0.0
        %v6740 = vmax.f32 %v6612, 0.0
        %v6741 = vmax.f32 %v6613, 0.0
        %v6742 = vmax.f32 %v6614, 0.0
        %v6743 = vmax.f32 %v6615, 0.0
        %v6744 = vmax.f32 %v6616, 0.0
        %v6745 = vmax.f32 %v6617, 0.0
        %v6746 = vmax.f32 %v6618, 0.0
        %v6747 = vmax.f32 %v6619, 0.0
        %v6748 = vmax.f32 %v6620, 0.0
        %v6749 = vmax.f32 %v6621, 0.0
        %v6750 = vmax.f32 %v6622, 0.0
        %v6751 = vmax.f32 %v6623, 0.0
        %v6752 = vmax.f32 %v6624, 0.0
        %v6753 = vmax.f32 %v6625, 0.0
        %v6754 = vmax.f32 %v6626, 0.0
        %v6755 = vmax.f32 %v6627, 0.0
        %v6756 = vmax.f32 %v6628, 0.0
        %v6757 = vmax.f32 %v6629, 0.0
        %v6758 = vmax.f32 %v6630, 0.0
        %v6759 = vmax.f32 %v6631, 0.0
        %v6760 = vmax.f32 %v6632, 0.0
        %v6761 = vmax.f32 %v6633, 0.0
        %v6762 = vmax.f32 %v6634, 0.0
        %v6763 = vmax.f32 %v6635, 0.0
        %v6764 = vmax.f32 %v6636, 0.0
        %v6765 = vmax.f32 %v6637, 0.0
        %v6766 = vmax.f32 %v6638, 0.0
        %v6767 = vmax.f32 %v6639, 0.0
        %v6768 = vmax.f32 %v6640, 0.0
        %v6769 = vmax.f32 %v6641, 0.0
        %v6770 = vmax.f32 %v6642, 0.0
        %v6771 = vmax.f32 %v6643, 0.0
        %v6772 = vmax.f32 %v6644, 0.0
        %v6773 = vmax.f32 %v6645, 0.0
        %v6774 = vmax.f32 %v6646, 0.0
        %v6775 = vmax.f32 %v6647, 0.0
        %v6776 = vmax.f32 %v6648, 0.0
        %v6777 = vmax.f32 %v6649, 0.0
        %v6778 = vmax.f32 %v6650, 0.0
        %v6779 = vmax.f32 %v6651, 0.0
        %v6780 = vmax.f32 %v6652, 0.0
        %v6781 = vmax.f32 %v6653, 0.0
        %v6782 = vmax.f32 %v6654, 0.0
        %v6783 = vmax.f32 %v6655, 0.0
        %v6784 = vmax.f32 %v6656, 0.0
        %v6785 = vmax.f32 %v6657, 0.0
        %v6786 = vmax.f32 %v6658, 0.0
        %v6787 = vmax.f32 %v6659, 0.0
        %v6788 = vmax.f32 %v6660, 0.0
        %v6789 = vmax.f32 %v6661, 0.0
        %v6790 = vmax.f32 %v6662, 0.0
        %v6791 = vmax.f32 %v6663, 0.0
        %v6792 = vmax.f32 %v6664, 0.0
        %v6793 = vmax.f32 %v6665, 0.0
        %v6794 = vmax.f32 %v6666, 0.0
        %v6795 = vmax.f32 %v6667, 0.0
        %v6796 = vmax.f32 %v6668, 0.0
        %v6797 = vmax.f32 %v6669, 0.0
        %v6798 = vmax.f32 %v6670, 0.0
        %v6799 = vmax.f32 %v6671, 0.0
        %v6800 = vmax.f32 %v6672, 0.0
        %v6801 = vmax.f32 %v6673, 0.0
        %v6802 = vmax.f32 %v6674, 0.0
        %v6803 = vmax.f32 %v6675, 0.0
        %v6804 = vmax.f32 %v6676, 0.0
        %v6805 = vmax.f32 %v6677, 0.0
        %v6806 = vmax.f32 %v6678, 0.0
        %v6807 = vmax.f32 %v6679, 0.0
        %v6808 = vmax.f32 %v6680, 0.0
        %v6809 = vmax.f32 %v6681, 0.0
        %v6810 = vmax.f32 %v6682, 0.0
        %v6811 = vmax.f32 %v6683, 0.0
        %v6812 = vmax.f32 %v6684, 0.0
        %v6813 = vmax.f32 %v6685, 0.0
        %v6814 = vmax.f32 %v6686, 0.0
        %v6815 = vmax.f32 %v6687, 0.0
        %v6816 = vmax.f32 %v6688, 0.0
        %v6817 = vmax.f32 %v6689, 0.0
        %v6818 = vmax.f32 %v6690, 0.0
        %v6819 = vmax.f32 %v6691, 0.0
        %v6820 = vmax.f32 %v6692, 0.0
        %v6821 = vmax.f32 %v6693, 0.0
        %v6822 = vmax.f32 %v6694, 0.0
        %v6823 = vmax.f32 %v6695, 0.0
        %v6824 = vmax.f32 %v6696, 0.0
        %v6825 = vmax.f32 %v6697, 0.0
        %v6826 = vmax.f32 %v6698, 0.0
        %v6827 = vmax.f32 %v6699, 0.0
        %v6828 = vmax.f32 %v6700, 0.0
        %v6829 = vmax.f32 %v6701, 0.0
        %v6830 = vmax.f32 %v6702, 0.0
        %v6831 = vmax.f32 %v6703, 0.0
        %v6832 = vmax.f32 %v6704, 0.0
        %v6833 = vmax.f32 %v6705, 0.0
        %v6834 = vmax.f32 %v6706, 0.0
        %v6835 = vmax.f32 %v6707, 0.0
        %v6836 = vmax.f32 %v6708, 0.0
        %v6837 = vmax.f32 %v6709, 0.0
        %v6838 = vmax.f32 %v6710, 0.0
        %v6839 = vld [vmem:[%s3] sm:$0xff]
        %v6840 = vld [vmem:[%s3 + $0x8] sm:$0xff]
        %v6841 = vld [vmem:[%s3 + $0x10] sm:$0xff]
        %s6842 = scalar_lea.vmem %s3, 24
        %v6843 = vld [vmem:[%s6842] sm:$0xff]
        %v6844 = vld [vmem:[%s6842 + $0x8] sm:$0xff]
        %v6845 = vld [vmem:[%s6842 + $0x10] sm:$0xff]
        %vm6846 = vcmask 195584
        %v6848 = vsel %vm6846, %v6727, 0
        %v6851 = vsel %vm6846, %v6728, 0
        %v6854 = vsel %vm6846, %v6729, 0
        %v6857 = vsel %vm6846, %v6730, 0
        %v6860 = vsel %vm6846, %v6731, 0
        %v6863 = vsel %vm6846, %v6732, 0
        %v6866 = vsel %vm6846, %v6733, 0
        %v6869 = vsel %vm6846, %v6734, 0
        %v6872 = vsel %vm6846, %v6735, 0
        %v6875 = vsel %vm6846, %v6736, 0
        %v6878 = vsel %vm6846, %v6737, 0
        %v6881 = vsel %vm6846, %v6738, 0
        %v6884 = vsel %vm6846, %v6739, 0
        %v6887 = vsel %vm6846, %v6740, 0
        %v6890 = vsel %vm6846, %v6741, 0
        %v6893 = vsel %vm6846, %v6742, 0
        %v6896 = vsel %vm6846, %v6743, 0
        %v6899 = vsel %vm6846, %v6744, 0
        %v6902 = vsel %vm6846, %v6745, 0
        %v6905 = vsel %vm6846, %v6746, 0
        %v6908 = vsel %vm6846, %v6747, 0
        %v6911 = vsel %vm6846, %v6748, 0
        %v6914 = vsel %vm6846, %v6749, 0
        %v6917 = vsel %vm6846, %v6750, 0
        %v6920 = vsel %vm6846, %v6751, 0
        %v6923 = vsel %vm6846, %v6752, 0
        %v6926 = vsel %vm6846, %v6753, 0
        %v6929 = vsel %vm6846, %v6754, 0
        %v6932 = vsel %vm6846, %v6755, 0
        %v6935 = vsel %vm6846, %v6756, 0
        %v6938 = vsel %vm6846, %v6757, 0
        %v6941 = vsel %vm6846, %v6758, 0
        %v6944 = vsel %vm6846, %v6759, 0
        %v6947 = vsel %vm6846, %v6760, 0
        %v6950 = vsel %vm6846, %v6761, 0
        %v6953 = vsel %vm6846, %v6762, 0
        %v6956 = vsel %vm6846, %v6763, 0
        %v6959 = vsel %vm6846, %v6764, 0
        %v6962 = vsel %vm6846, %v6765, 0
        %v6965 = vsel %vm6846, %v6766, 0
        %v6968 = vsel %vm6846, %v6767, 0
        %v6971 = vsel %vm6846, %v6768, 0
        %v6974 = vsel %vm6846, %v6769, 0
        %v6977 = vsel %vm6846, %v6770, 0
        %v6980 = vsel %vm6846, %v6771, 0
        %v6983 = vsel %vm6846, %v6772, 0
        %v6986 = vsel %vm6846, %v6773, 0
        %v6989 = vsel %vm6846, %v6774, 0
        %v6992 = vsel %vm6846, %v6775, 0
        %v6995 = vsel %vm6846, %v6776, 0
        %v6998 = vsel %vm6846, %v6777, 0
        %v7001 = vsel %vm6846, %v6778, 0
        %v7004 = vsel %vm6846, %v6779, 0
        %v7007 = vsel %vm6846, %v6780, 0
        %v7010 = vsel %vm6846, %v6781, 0
        %v7013 = vsel %vm6846, %v6782, 0
        %v7016 = vsel %vm6846, %v6783, 0
        %v7019 = vsel %vm6846, %v6784, 0
        %v7022 = vsel %vm6846, %v6785, 0
        %v7025 = vsel %vm6846, %v6786, 0
        %v7028 = vsel %vm6846, %v6787, 0
        %v7031 = vsel %vm6846, %v6788, 0
        %v7034 = vsel %vm6846, %v6789, 0
        %v7037 = vsel %vm6846, %v6790, 0
        %7039 = vmatpush.msra.mxu0 0.0
        %7040 = vmatpush.msra.mxu0 0.0
        %7041 = vmatpush.msra.mxu0 0.0
        %7042 = vmatpush.msra.mxu0 0.0
        %7043 = vmatpush.msra.mxu0 0.0
        %7044 = vmatpush.msra.mxu0 0.0
        %7045 = vmatpush.msra.mxu0 0.0
        %7046 = vmatpush.msra.mxu0 0.0
        %7047 = vmatpush.msra.mxu0 0.0
        %7048 = vmatpush.msra.mxu0 0.0
        %7049 = vmatpush.msra.mxu0 0.0
        %7050 = vmatpush.msra.mxu0 0.0
        %7051 = vmatpush.msra.mxu0 0.0
        %7052 = vmatpush.msra.mxu0 %v6845
        %7053 = vmatpush.msra.mxu0 %v6844
        %7054 = vmatpush.msra.mxu0 %v6843
        %7055 = vmatmul.f32.gmra.mxu0 %v6848
        %v7056 = vpop.f32.mrf.mxu0
        %v7057 = vadd.f32 0.0, %v7056
        %7058 = vmatmul.f32.gmra.mxu0 %v6851
        %v7059 = vpop.f32.mrf.mxu0
        %v7060 = vadd.f32 0.0, %v7059
        %7061 = vmatmul.f32.gmra.mxu0 %v6854
        %v7062 = vpop.f32.mrf.mxu0
        %v7063 = vadd.f32 0.0, %v7062
        %7064 = vmatmul.f32.gmra.mxu0 %v6857
        %v7065 = vpop.f32.mrf.mxu0
        %v7066 = vadd.f32 0.0, %v7065
        %7067 = vmatmul.f32.gmra.mxu0 %v6860
        %v7068 = vpop.f32.mrf.mxu0
        %v7069 = vadd.f32 0.0, %v7068
        %7070 = vmatmul.f32.gmra.mxu0 %v6863
        %v7071 = vpop.f32.mrf.mxu0
        %v7072 = vadd.f32 0.0, %v7071
        %7073 = vmatmul.f32.gmra.mxu0 %v6866
        %v7074 = vpop.f32.mrf.mxu0
        %v7075 = vadd.f32 0.0, %v7074
        %7076 = vmatmul.f32.gmra.mxu0 %v6869
        %v7077 = vpop.f32.mrf.mxu0
        %v7078 = vadd.f32 0.0, %v7077
        %7079 = vmatmul.f32.gmra.mxu0 %v6872
        %v7080 = vpop.f32.mrf.mxu0
        %v7081 = vadd.f32 0.0, %v7080
        %7082 = vmatmul.f32.gmra.mxu0 %v6875
        %v7083 = vpop.f32.mrf.mxu0
        %v7084 = vadd.f32 0.0, %v7083
        %7085 = vmatmul.f32.gmra.mxu0 %v6878
        %v7086 = vpop.f32.mrf.mxu0
        %v7087 = vadd.f32 0.0, %v7086
        %7088 = vmatmul.f32.gmra.mxu0 %v6881
        %v7089 = vpop.f32.mrf.mxu0
        %v7090 = vadd.f32 0.0, %v7089
        %7091 = vmatmul.f32.gmra.mxu0 %v6884
        %v7092 = vpop.f32.mrf.mxu0
        %v7093 = vadd.f32 0.0, %v7092
        %7094 = vmatmul.f32.gmra.mxu0 %v6887
        %v7095 = vpop.f32.mrf.mxu0
        %v7096 = vadd.f32 0.0, %v7095
        %7097 = vmatmul.f32.gmra.mxu0 %v6890
        %v7098 = vpop.f32.mrf.mxu0
        %v7099 = vadd.f32 0.0, %v7098
        %7100 = vmatmul.f32.gmra.mxu0 %v6893
        %v7101 = vpop.f32.mrf.mxu0
        %v7102 = vadd.f32 0.0, %v7101
        %7103 = vmatmul.f32.gmra.mxu0 %v6896
        %v7104 = vpop.f32.mrf.mxu0
        %v7105 = vadd.f32 0.0, %v7104
        %7106 = vmatmul.f32.gmra.mxu0 %v6899
        %v7107 = vpop.f32.mrf.mxu0
        %v7108 = vadd.f32 0.0, %v7107
        %7109 = vmatmul.f32.gmra.mxu0 %v6902
        %v7110 = vpop.f32.mrf.mxu0
        %v7111 = vadd.f32 0.0, %v7110
        %7112 = vmatmul.f32.gmra.mxu0 %v6905
        %v7113 = vpop.f32.mrf.mxu0
        %v7114 = vadd.f32 0.0, %v7113
        %7115 = vmatmul.f32.gmra.mxu0 %v6908
        %v7116 = vpop.f32.mrf.mxu0
        %v7117 = vadd.f32 0.0, %v7116
        %7118 = vmatmul.f32.gmra.mxu0 %v6911
        %v7119 = vpop.f32.mrf.mxu0
        %v7120 = vadd.f32 0.0, %v7119
        %7121 = vmatmul.f32.gmra.mxu0 %v6914
        %v7122 = vpop.f32.mrf.mxu0
        %v7123 = vadd.f32 0.0, %v7122
        %7124 = vmatmul.f32.gmra.mxu0 %v6917
        %v7125 = vpop.f32.mrf.mxu0
        %v7126 = vadd.f32 0.0, %v7125
        %7127 = vmatmul.f32.gmra.mxu0 %v6920
        %v7128 = vpop.f32.mrf.mxu0
        %v7129 = vadd.f32 0.0, %v7128
        %7130 = vmatmul.f32.gmra.mxu0 %v6923
        %v7131 = vpop.f32.mrf.mxu0
        %v7132 = vadd.f32 0.0, %v7131
        %7133 = vmatmul.f32.gmra.mxu0 %v6926
        %v7134 = vpop.f32.mrf.mxu0
        %v7135 = vadd.f32 0.0, %v7134
        %7136 = vmatmul.f32.gmra.mxu0 %v6929
        %v7137 = vpop.f32.mrf.mxu0
        %v7138 = vadd.f32 0.0, %v7137
        %7139 = vmatmul.f32.gmra.mxu0 %v6932
        %v7140 = vpop.f32.mrf.mxu0
        %v7141 = vadd.f32 0.0, %v7140
        %7142 = vmatmul.f32.gmra.mxu0 %v6935
        %v7143 = vpop.f32.mrf.mxu0
        %v7144 = vadd.f32 0.0, %v7143
        %7145 = vmatmul.f32.gmra.mxu0 %v6938
        %v7146 = vpop.f32.mrf.mxu0
        %v7147 = vadd.f32 0.0, %v7146
        %7148 = vmatmul.f32.gmra.mxu0 %v6941
        %v7149 = vpop.f32.mrf.mxu0
        %v7150 = vadd.f32 0.0, %v7149
        %7151 = vmatmul.f32.gmra.mxu0 %v6944
        %v7152 = vpop.f32.mrf.mxu0
        %v7153 = vadd.f32 0.0, %v7152
        %7154 = vmatmul.f32.gmra.mxu0 %v6947
        %v7155 = vpop.f32.mrf.mxu0
        %v7156 = vadd.f32 0.0, %v7155
        %7157 = vmatmul.f32.gmra.mxu0 %v6950
        %v7158 = vpop.f32.mrf.mxu0
        %v7159 = vadd.f32 0.0, %v7158
        %7160 = vmatmul.f32.gmra.mxu0 %v6953
        %v7161 = vpop.f32.mrf.mxu0
        %v7162 = vadd.f32 0.0, %v7161
        %7163 = vmatmul.f32.gmra.mxu0 %v6956
        %v7164 = vpop.f32.mrf.mxu0
        %v7165 = vadd.f32 0.0, %v7164
        %7166 = vmatmul.f32.gmra.mxu0 %v6959
        %v7167 = vpop.f32.mrf.mxu0
        %v7168 = vadd.f32 0.0, %v7167
        %7169 = vmatmul.f32.gmra.mxu0 %v6962
        %v7170 = vpop.f32.mrf.mxu0
        %v7171 = vadd.f32 0.0, %v7170
        %7172 = vmatmul.f32.gmra.mxu0 %v6965
        %v7173 = vpop.f32.mrf.mxu0
        %v7174 = vadd.f32 0.0, %v7173
        %7175 = vmatmul.f32.gmra.mxu0 %v6968
        %v7176 = vpop.f32.mrf.mxu0
        %v7177 = vadd.f32 0.0, %v7176
        %7178 = vmatmul.f32.gmra.mxu0 %v6971
        %v7179 = vpop.f32.mrf.mxu0
        %v7180 = vadd.f32 0.0, %v7179
        %7181 = vmatmul.f32.gmra.mxu0 %v6974
        %v7182 = vpop.f32.mrf.mxu0
        %v7183 = vadd.f32 0.0, %v7182
        %7184 = vmatmul.f32.gmra.mxu0 %v6977
        %v7185 = vpop.f32.mrf.mxu0
        %v7186 = vadd.f32 0.0, %v7185
        %7187 = vmatmul.f32.gmra.mxu0 %v6980
        %v7188 = vpop.f32.mrf.mxu0
        %v7189 = vadd.f32 0.0, %v7188
        %7190 = vmatmul.f32.gmra.mxu0 %v6983
        %v7191 = vpop.f32.mrf.mxu0
        %v7192 = vadd.f32 0.0, %v7191
        %7193 = vmatmul.f32.gmra.mxu0 %v6986
        %v7194 = vpop.f32.mrf.mxu0
        %v7195 = vadd.f32 0.0, %v7194
        %7196 = vmatmul.f32.gmra.mxu0 %v6989
        %v7197 = vpop.f32.mrf.mxu0
        %v7198 = vadd.f32 0.0, %v7197
        %7199 = vmatmul.f32.gmra.mxu0 %v6992
        %v7200 = vpop.f32.mrf.mxu0
        %v7201 = vadd.f32 0.0, %v7200
        %7202 = vmatmul.f32.gmra.mxu0 %v6995
        %v7203 = vpop.f32.mrf.mxu0
        %v7204 = vadd.f32 0.0, %v7203
        %7205 = vmatmul.f32.gmra.mxu0 %v6998
        %v7206 = vpop.f32.mrf.mxu0
        %v7207 = vadd.f32 0.0, %v7206
        %7208 = vmatmul.f32.gmra.mxu0 %v7001
        %v7209 = vpop.f32.mrf.mxu0
        %v7210 = vadd.f32 0.0, %v7209
        %7211 = vmatmul.f32.gmra.mxu0 %v7004
        %v7212 = vpop.f32.mrf.mxu0
        %v7213 = vadd.f32 0.0, %v7212
        %7214 = vmatmul.f32.gmra.mxu0 %v7007
        %v7215 = vpop.f32.mrf.mxu0
        %v7216 = vadd.f32 0.0, %v7215
        %7217 = vmatmul.f32.gmra.mxu0 %v7010
        %v7218 = vpop.f32.mrf.mxu0
        %v7219 = vadd.f32 0.0, %v7218
        %7220 = vmatmul.f32.gmra.mxu0 %v7013
        %v7221 = vpop.f32.mrf.mxu0
        %v7222 = vadd.f32 0.0, %v7221
        %7223 = vmatmul.f32.gmra.mxu0 %v7016
        %v7224 = vpop.f32.mrf.mxu0
        %v7225 = vadd.f32 0.0, %v7224
        %7226 = vmatmul.f32.gmra.mxu0 %v7019
        %v7227 = vpop.f32.mrf.mxu0
        %v7228 = vadd.f32 0.0, %v7227
        %7229 = vmatmul.f32.gmra.mxu0 %v7022
        %v7230 = vpop.f32.mrf.mxu0
        %v7231 = vadd.f32 0.0, %v7230
        %7232 = vmatmul.f32.gmra.mxu0 %v7025
        %v7233 = vpop.f32.mrf.mxu0
        %v7234 = vadd.f32 0.0, %v7233
        %7235 = vmatmul.f32.gmra.mxu0 %v7028
        %v7236 = vpop.f32.mrf.mxu0
        %v7237 = vadd.f32 0.0, %v7236
        %7238 = vmatmul.f32.gmra.mxu0 %v7031
        %v7239 = vpop.f32.mrf.mxu0
        %v7240 = vadd.f32 0.0, %v7239
        %7241 = vmatmul.f32.gmra.mxu0 %v7034
        %v7242 = vpop.f32.mrf.mxu0
        %v7243 = vadd.f32 0.0, %v7242
        %7244 = vmatmul.f32.gmra.mxu0 %v7037
        %v7245 = vpop.f32.mrf.mxu0
        %v7246 = vadd.f32 0.0, %v7245
        %7247 = vdwg.mxu0
        %v7249 = vsel %vm6846, %v6711, 0
        %v7252 = vsel %vm6846, %v6712, 0
        %v7255 = vsel %vm6846, %v6713, 0
        %v7258 = vsel %vm6846, %v6714, 0
        %v7261 = vsel %vm6846, %v6715, 0
        %v7264 = vsel %vm6846, %v6716, 0
        %v7267 = vsel %vm6846, %v6717, 0
        %v7270 = vsel %vm6846, %v6718, 0
        %v7273 = vsel %vm6846, %v6719, 0
        %v7276 = vsel %vm6846, %v6720, 0
        %v7279 = vsel %vm6846, %v6721, 0
        %v7282 = vsel %vm6846, %v6722, 0
        %v7285 = vsel %vm6846, %v6723, 0
        %v7288 = vsel %vm6846, %v6724, 0
        %v7291 = vsel %vm6846, %v6725, 0
        %v7294 = vsel %vm6846, %v6726, 0
        %7296 = vmatpush.msra.mxu0 0.0
        %7297 = vmatpush.msra.mxu0 0.0
        %7298 = vmatpush.msra.mxu0 0.0
        %7299 = vmatpush.msra.mxu0 0.0
        %7300 = vmatpush.msra.mxu0 0.0
        %7301 = vmatpush.msra.mxu0 0.0
        %7302 = vmatpush.msra.mxu0 0.0
        %7303 = vmatpush.msra.mxu0 0.0
        %7304 = vmatpush.msra.mxu0 0.0
        %7305 = vmatpush.msra.mxu0 0.0
        %7306 = vmatpush.msra.mxu0 0.0
        %7307 = vmatpush.msra.mxu0 0.0
        %7308 = vmatpush.msra.mxu0 0.0
        %7309 = vmatpush.msra.mxu0 %v6841
        %7310 = vmatpush.msra.mxu0 %v6840
        %7311 = vmatpush.msra.mxu0 %v6839
        %7312 = vmatmul.f32.gmra.mxu0 %v7249
        %v7313 = vpop.f32.mrf.mxu0
        %v7314 = vadd.f32 %v7057, %v7313
        %7315 = vmatmul.f32.gmra.mxu0 %v7252
        %v7316 = vpop.f32.mrf.mxu0
        %v7317 = vadd.f32 %v7060, %v7316
        %7318 = vmatmul.f32.gmra.mxu0 %v7255
        %v7319 = vpop.f32.mrf.mxu0
        %v7320 = vadd.f32 %v7063, %v7319
        %7321 = vmatmul.f32.gmra.mxu0 %v7258
        %v7322 = vpop.f32.mrf.mxu0
        %v7323 = vadd.f32 %v7066, %v7322
        %7324 = vmatmul.f32.gmra.mxu0 %v7261
        %v7325 = vpop.f32.mrf.mxu0
        %v7326 = vadd.f32 %v7069, %v7325
        %7327 = vmatmul.f32.gmra.mxu0 %v7264
        %v7328 = vpop.f32.mrf.mxu0
        %v7329 = vadd.f32 %v7072, %v7328
        %7330 = vmatmul.f32.gmra.mxu0 %v7267
        %v7331 = vpop.f32.mrf.mxu0
        %v7332 = vadd.f32 %v7075, %v7331
        %7333 = vmatmul.f32.gmra.mxu0 %v7270
        %v7334 = vpop.f32.mrf.mxu0
        %v7335 = vadd.f32 %v7078, %v7334
        %7336 = vmatmul.f32.gmra.mxu0 %v7273
        %v7337 = vpop.f32.mrf.mxu0
        %v7338 = vadd.f32 %v7081, %v7337
        %7339 = vmatmul.f32.gmra.mxu0 %v7276
        %v7340 = vpop.f32.mrf.mxu0
        %v7341 = vadd.f32 %v7084, %v7340
        %7342 = vmatmul.f32.gmra.mxu0 %v7279
        %v7343 = vpop.f32.mrf.mxu0
        %v7344 = vadd.f32 %v7087, %v7343
        %7345 = vmatmul.f32.gmra.mxu0 %v7282
        %v7346 = vpop.f32.mrf.mxu0
        %v7347 = vadd.f32 %v7090, %v7346
        %7348 = vmatmul.f32.gmra.mxu0 %v7285
        %v7349 = vpop.f32.mrf.mxu0
        %v7350 = vadd.f32 %v7093, %v7349
        %7351 = vmatmul.f32.gmra.mxu0 %v7288
        %v7352 = vpop.f32.mrf.mxu0
        %v7353 = vadd.f32 %v7096, %v7352
        %7354 = vmatmul.f32.gmra.mxu0 %v7291
        %v7355 = vpop.f32.mrf.mxu0
        %v7356 = vadd.f32 %v7099, %v7355
        %7357 = vmatmul.f32.gmra.mxu0 %v7294
        %v7358 = vpop.f32.mrf.mxu0
        %v7359 = vadd.f32 %v7102, %v7358
        %7360 = vmatmul.f32.gmra.mxu0 %v6848
        %v7361 = vpop.f32.mrf.mxu0
        %v7362 = vadd.f32 %v7105, %v7361
        %7363 = vmatmul.f32.gmra.mxu0 %v6851
        %v7364 = vpop.f32.mrf.mxu0
        %v7365 = vadd.f32 %v7108, %v7364
        %7366 = vmatmul.f32.gmra.mxu0 %v6854
        %v7367 = vpop.f32.mrf.mxu0
        %v7368 = vadd.f32 %v7111, %v7367
        %7369 = vmatmul.f32.gmra.mxu0 %v6857
        %v7370 = vpop.f32.mrf.mxu0
        %v7371 = vadd.f32 %v7114, %v7370
        %7372 = vmatmul.f32.gmra.mxu0 %v6860
        %v7373 = vpop.f32.mrf.mxu0
        %v7374 = vadd.f32 %v7117, %v7373
        %7375 = vmatmul.f32.gmra.mxu0 %v6863
        %v7376 = vpop.f32.mrf.mxu0
        %v7377 = vadd.f32 %v7120, %v7376
        %7378 = vmatmul.f32.gmra.mxu0 %v6866
        %v7379 = vpop.f32.mrf.mxu0
        %v7380 = vadd.f32 %v7123, %v7379
        %7381 = vmatmul.f32.gmra.mxu0 %v6869
        %v7382 = vpop.f32.mrf.mxu0
        %v7383 = vadd.f32 %v7126, %v7382
        %7384 = vmatmul.f32.gmra.mxu0 %v6872
        %v7385 = vpop.f32.mrf.mxu0
        %v7386 = vadd.f32 %v7129, %v7385
        %7387 = vmatmul.f32.gmra.mxu0 %v6875
        %v7388 = vpop.f32.mrf.mxu0
        %v7389 = vadd.f32 %v7132, %v7388
        %7390 = vmatmul.f32.gmra.mxu0 %v6878
        %v7391 = vpop.f32.mrf.mxu0
        %v7392 = vadd.f32 %v7135, %v7391
        %7393 = vmatmul.f32.gmra.mxu0 %v6881
        %v7394 = vpop.f32.mrf.mxu0
        %v7395 = vadd.f32 %v7138, %v7394
        %7396 = vmatmul.f32.gmra.mxu0 %v6884
        %v7397 = vpop.f32.mrf.mxu0
        %v7398 = vadd.f32 %v7141, %v7397
        %7399 = vmatmul.f32.gmra.mxu0 %v6887
        %v7400 = vpop.f32.mrf.mxu0
        %v7401 = vadd.f32 %v7144, %v7400
        %7402 = vmatmul.f32.gmra.mxu0 %v6890
        %v7403 = vpop.f32.mrf.mxu0
        %v7404 = vadd.f32 %v7147, %v7403
        %7405 = vmatmul.f32.gmra.mxu0 %v6893
        %v7406 = vpop.f32.mrf.mxu0
        %v7407 = vadd.f32 %v7150, %v7406
        %7408 = vmatmul.f32.gmra.mxu0 %v6896
        %v7409 = vpop.f32.mrf.mxu0
        %v7410 = vadd.f32 %v7153, %v7409
        %7411 = vmatmul.f32.gmra.mxu0 %v6899
        %v7412 = vpop.f32.mrf.mxu0
        %v7413 = vadd.f32 %v7156, %v7412
        %7414 = vmatmul.f32.gmra.mxu0 %v6902
        %v7415 = vpop.f32.mrf.mxu0
        %v7416 = vadd.f32 %v7159, %v7415
        %7417 = vmatmul.f32.gmra.mxu0 %v6905
        %v7418 = vpop.f32.mrf.mxu0
        %v7419 = vadd.f32 %v7162, %v7418
        %7420 = vmatmul.f32.gmra.mxu0 %v6908
        %v7421 = vpop.f32.mrf.mxu0
        %v7422 = vadd.f32 %v7165, %v7421
        %7423 = vmatmul.f32.gmra.mxu0 %v6911
        %v7424 = vpop.f32.mrf.mxu0
        %v7425 = vadd.f32 %v7168, %v7424
        %7426 = vmatmul.f32.gmra.mxu0 %v6914
        %v7427 = vpop.f32.mrf.mxu0
        %v7428 = vadd.f32 %v7171, %v7427
        %7429 = vmatmul.f32.gmra.mxu0 %v6917
        %v7430 = vpop.f32.mrf.mxu0
        %v7431 = vadd.f32 %v7174, %v7430
        %7432 = vmatmul.f32.gmra.mxu0 %v6920
        %v7433 = vpop.f32.mrf.mxu0
        %v7434 = vadd.f32 %v7177, %v7433
        %7435 = vmatmul.f32.gmra.mxu0 %v6923
        %v7436 = vpop.f32.mrf.mxu0
        %v7437 = vadd.f32 %v7180, %v7436
        %7438 = vmatmul.f32.gmra.mxu0 %v6926
        %v7439 = vpop.f32.mrf.mxu0
        %v7440 = vadd.f32 %v7183, %v7439
        %7441 = vmatmul.f32.gmra.mxu0 %v6929
        %v7442 = vpop.f32.mrf.mxu0
        %v7443 = vadd.f32 %v7186, %v7442
        %7444 = vmatmul.f32.gmra.mxu0 %v6932
        %v7445 = vpop.f32.mrf.mxu0
        %v7446 = vadd.f32 %v7189, %v7445
        %7447 = vmatmul.f32.gmra.mxu0 %v6935
        %v7448 = vpop.f32.mrf.mxu0
        %v7449 = vadd.f32 %v7192, %v7448
        %7450 = vmatmul.f32.gmra.mxu0 %v6938
        %v7451 = vpop.f32.mrf.mxu0
        %v7452 = vadd.f32 %v7195, %v7451
        %7453 = vmatmul.f32.gmra.mxu0 %v6941
        %v7454 = vpop.f32.mrf.mxu0
        %v7455 = vadd.f32 %v7198, %v7454
        %7456 = vmatmul.f32.gmra.mxu0 %v6944
        %v7457 = vpop.f32.mrf.mxu0
        %v7458 = vadd.f32 %v7201, %v7457
        %7459 = vmatmul.f32.gmra.mxu0 %v6947
        %v7460 = vpop.f32.mrf.mxu0
        %v7461 = vadd.f32 %v7204, %v7460
        %7462 = vmatmul.f32.gmra.mxu0 %v6950
        %v7463 = vpop.f32.mrf.mxu0
        %v7464 = vadd.f32 %v7207, %v7463
        %7465 = vmatmul.f32.gmra.mxu0 %v6953
        %v7466 = vpop.f32.mrf.mxu0
        %v7467 = vadd.f32 %v7210, %v7466
        %7468 = vmatmul.f32.gmra.mxu0 %v6956
        %v7469 = vpop.f32.mrf.mxu0
        %v7470 = vadd.f32 %v7213, %v7469
        %7471 = vmatmul.f32.gmra.mxu0 %v6959
        %v7472 = vpop.f32.mrf.mxu0
        %v7473 = vadd.f32 %v7216, %v7472
        %7474 = vmatmul.f32.gmra.mxu0 %v6962
        %v7475 = vpop.f32.mrf.mxu0
        %v7476 = vadd.f32 %v7219, %v7475
        %7477 = vmatmul.f32.gmra.mxu0 %v6965
        %v7478 = vpop.f32.mrf.mxu0
        %v7479 = vadd.f32 %v7222, %v7478
        %7480 = vmatmul.f32.gmra.mxu0 %v6968
        %v7481 = vpop.f32.mrf.mxu0
        %v7482 = vadd.f32 %v7225, %v7481
        %7483 = vmatmul.f32.gmra.mxu0 %v6971
        %v7484 = vpop.f32.mrf.mxu0
        %v7485 = vadd.f32 %v7228, %v7484
        %7486 = vmatmul.f32.gmra.mxu0 %v6974
        %v7487 = vpop.f32.mrf.mxu0
        %v7488 = vadd.f32 %v7231, %v7487
        %7489 = vmatmul.f32.gmra.mxu0 %v6977
        %v7490 = vpop.f32.mrf.mxu0
        %v7491 = vadd.f32 %v7234, %v7490
        %7492 = vmatmul.f32.gmra.mxu0 %v6980
        %v7493 = vpop.f32.mrf.mxu0
        %v7494 = vadd.f32 %v7237, %v7493
        %7495 = vmatmul.f32.gmra.mxu0 %v6983
        %v7496 = vpop.f32.mrf.mxu0
        %v7497 = vadd.f32 %v7240, %v7496
        %7498 = vmatmul.f32.gmra.mxu0 %v6986
        %v7499 = vpop.f32.mrf.mxu0
        %v7500 = vadd.f32 %v7243, %v7499
        %7501 = vmatmul.f32.gmra.mxu0 %v6989
        %v7502 = vpop.f32.mrf.mxu0
        %v7503 = vadd.f32 %v7246, %v7502
        %7504 = vdwg.mxu0
        %s7505 = scalar_lea.vmem %s3, 48
        %v7506 = vld [vmem:[%s7505] sm:$0xff]
        %v7507 = vld [vmem:[%s7505 + $0x8] sm:$0xff]
        %v7508 = vld [vmem:[%s7505 + $0x10] sm:$0xff]
        %v7510 = vsel %vm6846, %v6791, 0
        %v7513 = vsel %vm6846, %v6792, 0
        %v7516 = vsel %vm6846, %v6793, 0
        %v7519 = vsel %vm6846, %v6794, 0
        %v7522 = vsel %vm6846, %v6795, 0
        %v7525 = vsel %vm6846, %v6796, 0
        %v7528 = vsel %vm6846, %v6797, 0
        %v7531 = vsel %vm6846, %v6798, 0
        %v7534 = vsel %vm6846, %v6799, 0
        %v7537 = vsel %vm6846, %v6800, 0
        %v7540 = vsel %vm6846, %v6801, 0
        %v7543 = vsel %vm6846, %v6802, 0
        %v7546 = vsel %vm6846, %v6803, 0
        %v7549 = vsel %vm6846, %v6804, 0
        %v7552 = vsel %vm6846, %v6805, 0
        %v7555 = vsel %vm6846, %v6806, 0
        %7557 = vmatpush.msra.mxu0 0.0
        %7558 = vmatpush.msra.mxu0 0.0
        %7559 = vmatpush.msra.mxu0 0.0
        %7560 = vmatpush.msra.mxu0 0.0
        %7561 = vmatpush.msra.mxu0 0.0
        %7562 = vmatpush.msra.mxu0 0.0
        %7563 = vmatpush.msra.mxu0 0.0
        %7564 = vmatpush.msra.mxu0 0.0
        %7565 = vmatpush.msra.mxu0 0.0
        %7566 = vmatpush.msra.mxu0 0.0
        %7567 = vmatpush.msra.mxu0 0.0
        %7568 = vmatpush.msra.mxu0 0.0
        %7569 = vmatpush.msra.mxu0 0.0
        %7570 = vmatpush.msra.mxu0 %v7508
        %7571 = vmatpush.msra.mxu0 %v7507
        %7572 = vmatpush.msra.mxu0 %v7506
        %7573 = vmatmul.f32.gmra.mxu0 %v6896
        %v7574 = vpop.f32.mrf.mxu0
        %v7575 = vadd.f32 0.0, %v7574
        %7576 = vmatmul.f32.gmra.mxu0 %v6899
        %v7577 = vpop.f32.mrf.mxu0
        %v7578 = vadd.f32 0.0, %v7577
        %7579 = vmatmul.f32.gmra.mxu0 %v6902
        %v7580 = vpop.f32.mrf.mxu0
        %v7581 = vadd.f32 0.0, %v7580
        %7582 = vmatmul.f32.gmra.mxu0 %v6905
        %v7583 = vpop.f32.mrf.mxu0
        %v7584 = vadd.f32 0.0, %v7583
        %7585 = vmatmul.f32.gmra.mxu0 %v6908
        %v7586 = vpop.f32.mrf.mxu0
        %v7587 = vadd.f32 0.0, %v7586
        %7588 = vmatmul.f32.gmra.mxu0 %v6911
        %v7589 = vpop.f32.mrf.mxu0
        %v7590 = vadd.f32 0.0, %v7589
        %7591 = vmatmul.f32.gmra.mxu0 %v6914
        %v7592 = vpop.f32.mrf.mxu0
        %v7593 = vadd.f32 0.0, %v7592
        %7594 = vmatmul.f32.gmra.mxu0 %v6917
        %v7595 = vpop.f32.mrf.mxu0
        %v7596 = vadd.f32 0.0, %v7595
        %7597 = vmatmul.f32.gmra.mxu0 %v6920
        %v7598 = vpop.f32.mrf.mxu0
        %v7599 = vadd.f32 0.0, %v7598
        %7600 = vmatmul.f32.gmra.mxu0 %v6923
        %v7601 = vpop.f32.mrf.mxu0
        %v7602 = vadd.f32 0.0, %v7601
        %7603 = vmatmul.f32.gmra.mxu0 %v6926
        %v7604 = vpop.f32.mrf.mxu0
        %v7605 = vadd.f32 0.0, %v7604
        %7606 = vmatmul.f32.gmra.mxu0 %v6929
        %v7607 = vpop.f32.mrf.mxu0
        %v7608 = vadd.f32 0.0, %v7607
        %7609 = vmatmul.f32.gmra.mxu0 %v6932
        %v7610 = vpop.f32.mrf.mxu0
        %v7611 = vadd.f32 0.0, %v7610
        %7612 = vmatmul.f32.gmra.mxu0 %v6935
        %v7613 = vpop.f32.mrf.mxu0
        %v7614 = vadd.f32 0.0, %v7613
        %7615 = vmatmul.f32.gmra.mxu0 %v6938
        %v7616 = vpop.f32.mrf.mxu0
        %v7617 = vadd.f32 0.0, %v7616
        %7618 = vmatmul.f32.gmra.mxu0 %v6941
        %v7619 = vpop.f32.mrf.mxu0
        %v7620 = vadd.f32 0.0, %v7619
        %7621 = vmatmul.f32.gmra.mxu0 %v6944
        %v7622 = vpop.f32.mrf.mxu0
        %v7623 = vadd.f32 0.0, %v7622
        %7624 = vmatmul.f32.gmra.mxu0 %v6947
        %v7625 = vpop.f32.mrf.mxu0
        %v7626 = vadd.f32 0.0, %v7625
        %7627 = vmatmul.f32.gmra.mxu0 %v6950
        %v7628 = vpop.f32.mrf.mxu0
        %v7629 = vadd.f32 0.0, %v7628
        %7630 = vmatmul.f32.gmra.mxu0 %v6953
        %v7631 = vpop.f32.mrf.mxu0
        %v7632 = vadd.f32 0.0, %v7631
        %7633 = vmatmul.f32.gmra.mxu0 %v6956
        %v7634 = vpop.f32.mrf.mxu0
        %v7635 = vadd.f32 0.0, %v7634
        %7636 = vmatmul.f32.gmra.mxu0 %v6959
        %v7637 = vpop.f32.mrf.mxu0
        %v7638 = vadd.f32 0.0, %v7637
        %7639 = vmatmul.f32.gmra.mxu0 %v6962
        %v7640 = vpop.f32.mrf.mxu0
        %v7641 = vadd.f32 0.0, %v7640
        %7642 = vmatmul.f32.gmra.mxu0 %v6965
        %v7643 = vpop.f32.mrf.mxu0
        %v7644 = vadd.f32 0.0, %v7643
        %7645 = vmatmul.f32.gmra.mxu0 %v6968
        %v7646 = vpop.f32.mrf.mxu0
        %v7647 = vadd.f32 0.0, %v7646
        %7648 = vmatmul.f32.gmra.mxu0 %v6971
        %v7649 = vpop.f32.mrf.mxu0
        %v7650 = vadd.f32 0.0, %v7649
        %7651 = vmatmul.f32.gmra.mxu0 %v6974
        %v7652 = vpop.f32.mrf.mxu0
        %v7653 = vadd.f32 0.0, %v7652
        %7654 = vmatmul.f32.gmra.mxu0 %v6977
        %v7655 = vpop.f32.mrf.mxu0
        %v7656 = vadd.f32 0.0, %v7655
        %7657 = vmatmul.f32.gmra.mxu0 %v6980
        %v7658 = vpop.f32.mrf.mxu0
        %v7659 = vadd.f32 0.0, %v7658
        %7660 = vmatmul.f32.gmra.mxu0 %v6983
        %v7661 = vpop.f32.mrf.mxu0
        %v7662 = vadd.f32 0.0, %v7661
        %7663 = vmatmul.f32.gmra.mxu0 %v6986
        %v7664 = vpop.f32.mrf.mxu0
        %v7665 = vadd.f32 0.0, %v7664
        %7666 = vmatmul.f32.gmra.mxu0 %v6989
        %v7667 = vpop.f32.mrf.mxu0
        %v7668 = vadd.f32 0.0, %v7667
        %7669 = vmatmul.f32.gmra.mxu0 %v6992
        %v7670 = vpop.f32.mrf.mxu0
        %v7671 = vadd.f32 0.0, %v7670
        %7672 = vmatmul.f32.gmra.mxu0 %v6995
        %v7673 = vpop.f32.mrf.mxu0
        %v7674 = vadd.f32 0.0, %v7673
        %7675 = vmatmul.f32.gmra.mxu0 %v6998
        %v7676 = vpop.f32.mrf.mxu0
        %v7677 = vadd.f32 0.0, %v7676
        %7678 = vmatmul.f32.gmra.mxu0 %v7001
        %v7679 = vpop.f32.mrf.mxu0
        %v7680 = vadd.f32 0.0, %v7679
        %7681 = vmatmul.f32.gmra.mxu0 %v7004
        %v7682 = vpop.f32.mrf.mxu0
        %v7683 = vadd.f32 0.0, %v7682
        %7684 = vmatmul.f32.gmra.mxu0 %v7007
        %v7685 = vpop.f32.mrf.mxu0
        %v7686 = vadd.f32 0.0, %v7685
        %7687 = vmatmul.f32.gmra.mxu0 %v7010
        %v7688 = vpop.f32.mrf.mxu0
        %v7689 = vadd.f32 0.0, %v7688
        %7690 = vmatmul.f32.gmra.mxu0 %v7013
        %v7691 = vpop.f32.mrf.mxu0
        %v7692 = vadd.f32 0.0, %v7691
        %7693 = vmatmul.f32.gmra.mxu0 %v7016
        %v7694 = vpop.f32.mrf.mxu0
        %v7695 = vadd.f32 0.0, %v7694
        %7696 = vmatmul.f32.gmra.mxu0 %v7019
        %v7697 = vpop.f32.mrf.mxu0
        %v7698 = vadd.f32 0.0, %v7697
        %7699 = vmatmul.f32.gmra.mxu0 %v7022
        %v7700 = vpop.f32.mrf.mxu0
        %v7701 = vadd.f32 0.0, %v7700
        %7702 = vmatmul.f32.gmra.mxu0 %v7025
        %v7703 = vpop.f32.mrf.mxu0
        %v7704 = vadd.f32 0.0, %v7703
        %7705 = vmatmul.f32.gmra.mxu0 %v7028
        %v7706 = vpop.f32.mrf.mxu0
        %v7707 = vadd.f32 0.0, %v7706
        %7708 = vmatmul.f32.gmra.mxu0 %v7031
        %v7709 = vpop.f32.mrf.mxu0
        %v7710 = vadd.f32 0.0, %v7709
        %7711 = vmatmul.f32.gmra.mxu0 %v7034
        %v7712 = vpop.f32.mrf.mxu0
        %v7713 = vadd.f32 0.0, %v7712
        %7714 = vmatmul.f32.gmra.mxu0 %v7037
        %v7715 = vpop.f32.mrf.mxu0
        %v7716 = vadd.f32 0.0, %v7715
        %7717 = vmatmul.f32.gmra.mxu0 %v7510
        %v7718 = vpop.f32.mrf.mxu0
        %v7719 = vadd.f32 0.0, %v7718
        %7720 = vmatmul.f32.gmra.mxu0 %v7513
        %v7721 = vpop.f32.mrf.mxu0
        %v7722 = vadd.f32 0.0, %v7721
        %7723 = vmatmul.f32.gmra.mxu0 %v7516
        %v7724 = vpop.f32.mrf.mxu0
        %v7725 = vadd.f32 0.0, %v7724
        %7726 = vmatmul.f32.gmra.mxu0 %v7519
        %v7727 = vpop.f32.mrf.mxu0
        %v7728 = vadd.f32 0.0, %v7727
        %7729 = vmatmul.f32.gmra.mxu0 %v7522
        %v7730 = vpop.f32.mrf.mxu0
        %v7731 = vadd.f32 0.0, %v7730
        %7732 = vmatmul.f32.gmra.mxu0 %v7525
        %v7733 = vpop.f32.mrf.mxu0
        %v7734 = vadd.f32 0.0, %v7733
        %7735 = vmatmul.f32.gmra.mxu0 %v7528
        %v7736 = vpop.f32.mrf.mxu0
        %v7737 = vadd.f32 0.0, %v7736
        %7738 = vmatmul.f32.gmra.mxu0 %v7531
        %v7739 = vpop.f32.mrf.mxu0
        %v7740 = vadd.f32 0.0, %v7739
        %7741 = vmatmul.f32.gmra.mxu0 %v7534
        %v7742 = vpop.f32.mrf.mxu0
        %v7743 = vadd.f32 0.0, %v7742
        %7744 = vmatmul.f32.gmra.mxu0 %v7537
        %v7745 = vpop.f32.mrf.mxu0
        %v7746 = vadd.f32 0.0, %v7745
        %7747 = vmatmul.f32.gmra.mxu0 %v7540
        %v7748 = vpop.f32.mrf.mxu0
        %v7749 = vadd.f32 0.0, %v7748
        %7750 = vmatmul.f32.gmra.mxu0 %v7543
        %v7751 = vpop.f32.mrf.mxu0
        %v7752 = vadd.f32 0.0, %v7751
        %7753 = vmatmul.f32.gmra.mxu0 %v7546
        %v7754 = vpop.f32.mrf.mxu0
        %v7755 = vadd.f32 0.0, %v7754
        %7756 = vmatmul.f32.gmra.mxu0 %v7549
        %v7757 = vpop.f32.mrf.mxu0
        %v7758 = vadd.f32 0.0, %v7757
        %7759 = vmatmul.f32.gmra.mxu0 %v7552
        %v7760 = vpop.f32.mrf.mxu0
        %v7761 = vadd.f32 0.0, %v7760
        %7762 = vmatmul.f32.gmra.mxu0 %v7555
        %v7763 = vpop.f32.mrf.mxu0
        %v7764 = vadd.f32 0.0, %v7763
        %7765 = vdwg.mxu0
        %v7766 = vadd.f32 %v7314, %v7575
        %v7767 = vadd.f32 %v7317, %v7578
        %v7768 = vadd.f32 %v7320, %v7581
        %v7769 = vadd.f32 %v7323, %v7584
        %v7770 = vadd.f32 %v7326, %v7587
        %v7771 = vadd.f32 %v7329, %v7590
        %v7772 = vadd.f32 %v7332, %v7593
        %v7773 = vadd.f32 %v7335, %v7596
        %v7774 = vadd.f32 %v7338, %v7599
        %v7775 = vadd.f32 %v7341, %v7602
        %v7776 = vadd.f32 %v7344, %v7605
        %v7777 = vadd.f32 %v7347, %v7608
        %v7778 = vadd.f32 %v7350, %v7611
        %v7779 = vadd.f32 %v7353, %v7614
        %v7780 = vadd.f32 %v7356, %v7617
        %v7781 = vadd.f32 %v7359, %v7620
        %v7782 = vadd.f32 %v7362, %v7623
        %v7783 = vadd.f32 %v7365, %v7626
        %v7784 = vadd.f32 %v7368, %v7629
        %v7785 = vadd.f32 %v7371, %v7632
        %v7786 = vadd.f32 %v7374, %v7635
        %v7787 = vadd.f32 %v7377, %v7638
        %v7788 = vadd.f32 %v7380, %v7641
        %v7789 = vadd.f32 %v7383, %v7644
        %v7790 = vadd.f32 %v7386, %v7647
        %v7791 = vadd.f32 %v7389, %v7650
        %v7792 = vadd.f32 %v7392, %v7653
        %v7793 = vadd.f32 %v7395, %v7656
        %v7794 = vadd.f32 %v7398, %v7659
        %v7795 = vadd.f32 %v7401, %v7662
        %v7796 = vadd.f32 %v7404, %v7665
        %v7797 = vadd.f32 %v7407, %v7668
        %v7798 = vadd.f32 %v7410, %v7671
        %v7799 = vadd.f32 %v7413, %v7674
        %v7800 = vadd.f32 %v7416, %v7677
        %v7801 = vadd.f32 %v7419, %v7680
        %v7802 = vadd.f32 %v7422, %v7683
        %v7803 = vadd.f32 %v7425, %v7686
        %v7804 = vadd.f32 %v7428, %v7689
        %v7805 = vadd.f32 %v7431, %v7692
        %v7806 = vadd.f32 %v7434, %v7695
        %v7807 = vadd.f32 %v7437, %v7698
        %v7808 = vadd.f32 %v7440, %v7701
        %v7809 = vadd.f32 %v7443, %v7704
        %v7810 = vadd.f32 %v7446, %v7707
        %v7811 = vadd.f32 %v7449, %v7710
        %v7812 = vadd.f32 %v7452, %v7713
        %v7813 = vadd.f32 %v7455, %v7716
        %v7814 = vadd.f32 %v7458, %v7719
        %v7815 = vadd.f32 %v7461, %v7722
        %v7816 = vadd.f32 %v7464, %v7725
        %v7817 = vadd.f32 %v7467, %v7728
        %v7818 = vadd.f32 %v7470, %v7731
        %v7819 = vadd.f32 %v7473, %v7734
        %v7820 = vadd.f32 %v7476, %v7737
        %v7821 = vadd.f32 %v7479, %v7740
        %v7822 = vadd.f32 %v7482, %v7743
        %v7823 = vadd.f32 %v7485, %v7746
        %v7824 = vadd.f32 %v7488, %v7749
        %v7825 = vadd.f32 %v7491, %v7752
        %v7826 = vadd.f32 %v7494, %v7755
        %v7827 = vadd.f32 %v7497, %v7758
        %v7828 = vadd.f32 %v7500, %v7761
        %v7829 = vadd.f32 %v7503, %v7764
        %s7830 = scalar_lea.vmem %s3, 72
        %v7831 = vld [vmem:[%s7830] sm:$0xff]
        %v7832 = vld [vmem:[%s7830 + $0x8] sm:$0xff]
        %v7833 = vld [vmem:[%s7830 + $0x10] sm:$0xff]
        %v7835 = vsel %vm6846, %v6807, 0
        %v7838 = vsel %vm6846, %v6808, 0
        %v7841 = vsel %vm6846, %v6809, 0
        %v7844 = vsel %vm6846, %v6810, 0
        %v7847 = vsel %vm6846, %v6811, 0
        %v7850 = vsel %vm6846, %v6812, 0
        %v7853 = vsel %vm6846, %v6813, 0
        %v7856 = vsel %vm6846, %v6814, 0
        %v7859 = vsel %vm6846, %v6815, 0
        %v7862 = vsel %vm6846, %v6816, 0
        %v7865 = vsel %vm6846, %v6817, 0
        %v7868 = vsel %vm6846, %v6818, 0
        %v7871 = vsel %vm6846, %v6819, 0
        %v7874 = vsel %vm6846, %v6820, 0
        %v7877 = vsel %vm6846, %v6821, 0
        %v7880 = vsel %vm6846, %v6822, 0
        %7882 = vmatpush.msra.mxu0 0.0
        %7883 = vmatpush.msra.mxu0 0.0
        %7884 = vmatpush.msra.mxu0 0.0
        %7885 = vmatpush.msra.mxu0 0.0
        %7886 = vmatpush.msra.mxu0 0.0
        %7887 = vmatpush.msra.mxu0 0.0
        %7888 = vmatpush.msra.mxu0 0.0
        %7889 = vmatpush.msra.mxu0 0.0
        %7890 = vmatpush.msra.mxu0 0.0
        %7891 = vmatpush.msra.mxu0 0.0
        %7892 = vmatpush.msra.mxu0 0.0
        %7893 = vmatpush.msra.mxu0 0.0
        %7894 = vmatpush.msra.mxu0 0.0
        %7895 = vmatpush.msra.mxu0 %v7833
        %7896 = vmatpush.msra.mxu0 %v7832
        %7897 = vmatpush.msra.mxu0 %v7831
        %7898 = vmatmul.f32.gmra.mxu0 %v6944
        %v7899 = vpop.f32.mrf.mxu0
        %v7900 = vadd.f32 0.0, %v7899
        %7901 = vmatmul.f32.gmra.mxu0 %v6947
        %v7902 = vpop.f32.mrf.mxu0
        %v7903 = vadd.f32 0.0, %v7902
        %7904 = vmatmul.f32.gmra.mxu0 %v6950
        %v7905 = vpop.f32.mrf.mxu0
        %v7906 = vadd.f32 0.0, %v7905
        %7907 = vmatmul.f32.gmra.mxu0 %v6953
        %v7908 = vpop.f32.mrf.mxu0
        %v7909 = vadd.f32 0.0, %v7908
        %7910 = vmatmul.f32.gmra.mxu0 %v6956
        %v7911 = vpop.f32.mrf.mxu0
        %v7912 = vadd.f32 0.0, %v7911
        %7913 = vmatmul.f32.gmra.mxu0 %v6959
        %v7914 = vpop.f32.mrf.mxu0
        %v7915 = vadd.f32 0.0, %v7914
        %7916 = vmatmul.f32.gmra.mxu0 %v6962
        %v7917 = vpop.f32.mrf.mxu0
        %v7918 = vadd.f32 0.0, %v7917
        %7919 = vmatmul.f32.gmra.mxu0 %v6965
        %v7920 = vpop.f32.mrf.mxu0
        %v7921 = vadd.f32 0.0, %v7920
        %7922 = vmatmul.f32.gmra.mxu0 %v6968
        %v7923 = vpop.f32.mrf.mxu0
        %v7924 = vadd.f32 0.0, %v7923
        %7925 = vmatmul.f32.gmra.mxu0 %v6971
        %v7926 = vpop.f32.mrf.mxu0
        %v7927 = vadd.f32 0.0, %v7926
        %7928 = vmatmul.f32.gmra.mxu0 %v6974
        %v7929 = vpop.f32.mrf.mxu0
        %v7930 = vadd.f32 0.0, %v7929
        %7931 = vmatmul.f32.gmra.mxu0 %v6977
        %v7932 = vpop.f32.mrf.mxu0
        %v7933 = vadd.f32 0.0, %v7932
        %7934 = vmatmul.f32.gmra.mxu0 %v6980
        %v7935 = vpop.f32.mrf.mxu0
        %v7936 = vadd.f32 0.0, %v7935
        %7937 = vmatmul.f32.gmra.mxu0 %v6983
        %v7938 = vpop.f32.mrf.mxu0
        %v7939 = vadd.f32 0.0, %v7938
        %7940 = vmatmul.f32.gmra.mxu0 %v6986
        %v7941 = vpop.f32.mrf.mxu0
        %v7942 = vadd.f32 0.0, %v7941
        %7943 = vmatmul.f32.gmra.mxu0 %v6989
        %v7944 = vpop.f32.mrf.mxu0
        %v7945 = vadd.f32 0.0, %v7944
        %7946 = vmatmul.f32.gmra.mxu0 %v6992
        %v7947 = vpop.f32.mrf.mxu0
        %v7948 = vadd.f32 0.0, %v7947
        %7949 = vmatmul.f32.gmra.mxu0 %v6995
        %v7950 = vpop.f32.mrf.mxu0
        %v7951 = vadd.f32 0.0, %v7950
        %7952 = vmatmul.f32.gmra.mxu0 %v6998
        %v7953 = vpop.f32.mrf.mxu0
        %v7954 = vadd.f32 0.0, %v7953
        %7955 = vmatmul.f32.gmra.mxu0 %v7001
        %v7956 = vpop.f32.mrf.mxu0
        %v7957 = vadd.f32 0.0, %v7956
        %7958 = vmatmul.f32.gmra.mxu0 %v7004
        %v7959 = vpop.f32.mrf.mxu0
        %v7960 = vadd.f32 0.0, %v7959
        %7961 = vmatmul.f32.gmra.mxu0 %v7007
        %v7962 = vpop.f32.mrf.mxu0
        %v7963 = vadd.f32 0.0, %v7962
        %7964 = vmatmul.f32.gmra.mxu0 %v7010
        %v7965 = vpop.f32.mrf.mxu0
        %v7966 = vadd.f32 0.0, %v7965
        %7967 = vmatmul.f32.gmra.mxu0 %v7013
        %v7968 = vpop.f32.mrf.mxu0
        %v7969 = vadd.f32 0.0, %v7968
        %7970 = vmatmul.f32.gmra.mxu0 %v7016
        %v7971 = vpop.f32.mrf.mxu0
        %v7972 = vadd.f32 0.0, %v7971
        %7973 = vmatmul.f32.gmra.mxu0 %v7019
        %v7974 = vpop.f32.mrf.mxu0
        %v7975 = vadd.f32 0.0, %v7974
        %7976 = vmatmul.f32.gmra.mxu0 %v7022
        %v7977 = vpop.f32.mrf.mxu0
        %v7978 = vadd.f32 0.0, %v7977
        %7979 = vmatmul.f32.gmra.mxu0 %v7025
        %v7980 = vpop.f32.mrf.mxu0
        %v7981 = vadd.f32 0.0, %v7980
        %7982 = vmatmul.f32.gmra.mxu0 %v7028
        %v7983 = vpop.f32.mrf.mxu0
        %v7984 = vadd.f32 0.0, %v7983
        %7985 = vmatmul.f32.gmra.mxu0 %v7031
        %v7986 = vpop.f32.mrf.mxu0
        %v7987 = vadd.f32 0.0, %v7986
        %7988 = vmatmul.f32.gmra.mxu0 %v7034
        %v7989 = vpop.f32.mrf.mxu0
        %v7990 = vadd.f32 0.0, %v7989
        %7991 = vmatmul.f32.gmra.mxu0 %v7037
        %v7992 = vpop.f32.mrf.mxu0
        %v7993 = vadd.f32 0.0, %v7992
        %7994 = vmatmul.f32.gmra.mxu0 %v7510
        %v7995 = vpop.f32.mrf.mxu0
        %v7996 = vadd.f32 0.0, %v7995
        %7997 = vmatmul.f32.gmra.mxu0 %v7513
        %v7998 = vpop.f32.mrf.mxu0
        %v7999 = vadd.f32 0.0, %v7998
        %8000 = vmatmul.f32.gmra.mxu0 %v7516
        %v8001 = vpop.f32.mrf.mxu0
        %v8002 = vadd.f32 0.0, %v8001
        %8003 = vmatmul.f32.gmra.mxu0 %v7519
        %v8004 = vpop.f32.mrf.mxu0
        %v8005 = vadd.f32 0.0, %v8004
        %8006 = vmatmul.f32.gmra.mxu0 %v7522
        %v8007 = vpop.f32.mrf.mxu0
        %v8008 = vadd.f32 0.0, %v8007
        %8009 = vmatmul.f32.gmra.mxu0 %v7525
        %v8010 = vpop.f32.mrf.mxu0
        %v8011 = vadd.f32 0.0, %v8010
        %8012 = vmatmul.f32.gmra.mxu0 %v7528
        %v8013 = vpop.f32.mrf.mxu0
        %v8014 = vadd.f32 0.0, %v8013
        %8015 = vmatmul.f32.gmra.mxu0 %v7531
        %v8016 = vpop.f32.mrf.mxu0
        %v8017 = vadd.f32 0.0, %v8016
        %8018 = vmatmul.f32.gmra.mxu0 %v7534
        %v8019 = vpop.f32.mrf.mxu0
        %v8020 = vadd.f32 0.0, %v8019
        %8021 = vmatmul.f32.gmra.mxu0 %v7537
        %v8022 = vpop.f32.mrf.mxu0
        %v8023 = vadd.f32 0.0, %v8022
        %8024 = vmatmul.f32.gmra.mxu0 %v7540
        %v8025 = vpop.f32.mrf.mxu0
        %v8026 = vadd.f32 0.0, %v8025
        %8027 = vmatmul.f32.gmra.mxu0 %v7543
        %v8028 = vpop.f32.mrf.mxu0
        %v8029 = vadd.f32 0.0, %v8028
        %8030 = vmatmul.f32.gmra.mxu0 %v7546
        %v8031 = vpop.f32.mrf.mxu0
        %v8032 = vadd.f32 0.0, %v8031
        %8033 = vmatmul.f32.gmra.mxu0 %v7549
        %v8034 = vpop.f32.mrf.mxu0
        %v8035 = vadd.f32 0.0, %v8034
        %8036 = vmatmul.f32.gmra.mxu0 %v7552
        %v8037 = vpop.f32.mrf.mxu0
        %v8038 = vadd.f32 0.0, %v8037
        %8039 = vmatmul.f32.gmra.mxu0 %v7555
        %v8040 = vpop.f32.mrf.mxu0
        %v8041 = vadd.f32 0.0, %v8040
        %8042 = vmatmul.f32.gmra.mxu0 %v7835
        %v8043 = vpop.f32.mrf.mxu0
        %v8044 = vadd.f32 0.0, %v8043
        %8045 = vmatmul.f32.gmra.mxu0 %v7838
        %v8046 = vpop.f32.mrf.mxu0
        %v8047 = vadd.f32 0.0, %v8046
        %8048 = vmatmul.f32.gmra.mxu0 %v7841
        %v8049 = vpop.f32.mrf.mxu0
        %v8050 = vadd.f32 0.0, %v8049
        %8051 = vmatmul.f32.gmra.mxu0 %v7844
        %v8052 = vpop.f32.mrf.mxu0
        %v8053 = vadd.f32 0.0, %v8052
        %8054 = vmatmul.f32.gmra.mxu0 %v7847
        %v8055 = vpop.f32.mrf.mxu0
        %v8056 = vadd.f32 0.0, %v8055
        %8057 = vmatmul.f32.gmra.mxu0 %v7850
        %v8058 = vpop.f32.mrf.mxu0
        %v8059 = vadd.f32 0.0, %v8058
        %8060 = vmatmul.f32.gmra.mxu0 %v7853
        %v8061 = vpop.f32.mrf.mxu0
        %v8062 = vadd.f32 0.0, %v8061
        %8063 = vmatmul.f32.gmra.mxu0 %v7856
        %v8064 = vpop.f32.mrf.mxu0
        %v8065 = vadd.f32 0.0, %v8064
        %8066 = vmatmul.f32.gmra.mxu0 %v7859
        %v8067 = vpop.f32.mrf.mxu0
        %v8068 = vadd.f32 0.0, %v8067
        %8069 = vmatmul.f32.gmra.mxu0 %v7862
        %v8070 = vpop.f32.mrf.mxu0
        %v8071 = vadd.f32 0.0, %v8070
        %8072 = vmatmul.f32.gmra.mxu0 %v7865
        %v8073 = vpop.f32.mrf.mxu0
        %v8074 = vadd.f32 0.0, %v8073
        %8075 = vmatmul.f32.gmra.mxu0 %v7868
        %v8076 = vpop.f32.mrf.mxu0
        %v8077 = vadd.f32 0.0, %v8076
        %8078 = vmatmul.f32.gmra.mxu0 %v7871
        %v8079 = vpop.f32.mrf.mxu0
        %v8080 = vadd.f32 0.0, %v8079
        %8081 = vmatmul.f32.gmra.mxu0 %v7874
        %v8082 = vpop.f32.mrf.mxu0
        %v8083 = vadd.f32 0.0, %v8082
        %8084 = vmatmul.f32.gmra.mxu0 %v7877
        %v8085 = vpop.f32.mrf.mxu0
        %v8086 = vadd.f32 0.0, %v8085
        %8087 = vmatmul.f32.gmra.mxu0 %v7880
        %v8088 = vpop.f32.mrf.mxu0
        %v8089 = vadd.f32 0.0, %v8088
        %8090 = vdwg.mxu0
        %v8091 = vadd.f32 %v7766, %v7900
        %v8092 = vadd.f32 %v7767, %v7903
        %v8093 = vadd.f32 %v7768, %v7906
        %v8094 = vadd.f32 %v7769, %v7909
        %v8095 = vadd.f32 %v7770, %v7912
        %v8096 = vadd.f32 %v7771, %v7915
        %v8097 = vadd.f32 %v7772, %v7918
        %v8098 = vadd.f32 %v7773, %v7921
        %v8099 = vadd.f32 %v7774, %v7924
        %v8100 = vadd.f32 %v7775, %v7927
        %v8101 = vadd.f32 %v7776, %v7930
        %v8102 = vadd.f32 %v7777, %v7933
        %v8103 = vadd.f32 %v7778, %v7936
        %v8104 = vadd.f32 %v7779, %v7939
        %v8105 = vadd.f32 %v7780, %v7942
        %v8106 = vadd.f32 %v7781, %v7945
        %v8107 = vadd.f32 %v7782, %v7948
        %v8108 = vadd.f32 %v7783, %v7951
        %v8109 = vadd.f32 %v7784, %v7954
        %v8110 = vadd.f32 %v7785, %v7957
        %v8111 = vadd.f32 %v7786, %v7960
        %v8112 = vadd.f32 %v7787, %v7963
        %v8113 = vadd.f32 %v7788, %v7966
        %v8114 = vadd.f32 %v7789, %v7969
        %v8115 = vadd.f32 %v7790, %v7972
        %v8116 = vadd.f32 %v7791, %v7975
        %v8117 = vadd.f32 %v7792, %v7978
        %v8118 = vadd.f32 %v7793, %v7981
        %v8119 = vadd.f32 %v7794, %v7984
        %v8120 = vadd.f32 %v7795, %v7987
        %v8121 = vadd.f32 %v7796, %v7990
        %v8122 = vadd.f32 %v7797, %v7993
        %v8123 = vadd.f32 %v7798, %v7996
        %v8124 = vadd.f32 %v7799, %v7999
        %v8125 = vadd.f32 %v7800, %v8002
        %v8126 = vadd.f32 %v7801, %v8005
        %v8127 = vadd.f32 %v7802, %v8008
        %v8128 = vadd.f32 %v7803, %v8011
        %v8129 = vadd.f32 %v7804, %v8014
        %v8130 = vadd.f32 %v7805, %v8017
        %v8131 = vadd.f32 %v7806, %v8020
        %v8132 = vadd.f32 %v7807, %v8023
        %v8133 = vadd.f32 %v7808, %v8026
        %v8134 = vadd.f32 %v7809, %v8029
        %v8135 = vadd.f32 %v7810, %v8032
        %v8136 = vadd.f32 %v7811, %v8035
        %v8137 = vadd.f32 %v7812, %v8038
        %v8138 = vadd.f32 %v7813, %v8041
        %v8139 = vadd.f32 %v7814, %v8044
        %v8140 = vadd.f32 %v7815, %v8047
        %v8141 = vadd.f32 %v7816, %v8050
        %v8142 = vadd.f32 %v7817, %v8053
        %v8143 = vadd.f32 %v7818, %v8056
        %v8144 = vadd.f32 %v7819, %v8059
        %v8145 = vadd.f32 %v7820, %v8062
        %v8146 = vadd.f32 %v7821, %v8065
        %v8147 = vadd.f32 %v7822, %v8068
        %v8148 = vadd.f32 %v7823, %v8071
        %v8149 = vadd.f32 %v7824, %v8074
        %v8150 = vadd.f32 %v7825, %v8077
        %v8151 = vadd.f32 %v7826, %v8080
        %v8152 = vadd.f32 %v7827, %v8083
        %v8153 = vadd.f32 %v7828, %v8086
        %v8154 = vadd.f32 %v7829, %v8089
        %s8155 = scalar_lea.vmem %s3, 96
        %v8156 = vld [vmem:[%s8155] sm:$0xff]
        %v8157 = vld [vmem:[%s8155 + $0x8] sm:$0xff]
        %v8158 = vld [vmem:[%s8155 + $0x10] sm:$0xff]
        %v8160 = vsel %vm6846, %v6823, 0
        %v8163 = vsel %vm6846, %v6824, 0
        %v8166 = vsel %vm6846, %v6825, 0
        %v8169 = vsel %vm6846, %v6826, 0
        %v8172 = vsel %vm6846, %v6827, 0
        %v8175 = vsel %vm6846, %v6828, 0
        %v8178 = vsel %vm6846, %v6829, 0
        %v8181 = vsel %vm6846, %v6830, 0
        %v8184 = vsel %vm6846, %v6831, 0
        %v8187 = vsel %vm6846, %v6832, 0
        %v8190 = vsel %vm6846, %v6833, 0
        %v8193 = vsel %vm6846, %v6834, 0
        %v8196 = vsel %vm6846, %v6835, 0
        %v8199 = vsel %vm6846, %v6836, 0
        %v8202 = vsel %vm6846, %v6837, 0
        %v8205 = vsel %vm6846, %v6838, 0
        %8207 = vmatpush.msra.mxu0 0.0
        %8208 = vmatpush.msra.mxu0 0.0
        %8209 = vmatpush.msra.mxu0 0.0
        %8210 = vmatpush.msra.mxu0 0.0
        %8211 = vmatpush.msra.mxu0 0.0
        %8212 = vmatpush.msra.mxu0 0.0
        %8213 = vmatpush.msra.mxu0 0.0
        %8214 = vmatpush.msra.mxu0 0.0
        %8215 = vmatpush.msra.mxu0 0.0
        %8216 = vmatpush.msra.mxu0 0.0
        %8217 = vmatpush.msra.mxu0 0.0
        %8218 = vmatpush.msra.mxu0 0.0
        %8219 = vmatpush.msra.mxu0 0.0
        %8220 = vmatpush.msra.mxu0 %v8158
        %8221 = vmatpush.msra.mxu0 %v8157
        %8222 = vmatpush.msra.mxu0 %v8156
        %8223 = vmatmul.f32.gmra.mxu0 %v6992
        %v8224 = vpop.f32.mrf.mxu0
        %v8225 = vadd.f32 0.0, %v8224
        %8226 = vmatmul.f32.gmra.mxu0 %v6995
        %v8227 = vpop.f32.mrf.mxu0
        %v8228 = vadd.f32 0.0, %v8227
        %8229 = vmatmul.f32.gmra.mxu0 %v6998
        %v8230 = vpop.f32.mrf.mxu0
        %v8231 = vadd.f32 0.0, %v8230
        %8232 = vmatmul.f32.gmra.mxu0 %v7001
        %v8233 = vpop.f32.mrf.mxu0
        %v8234 = vadd.f32 0.0, %v8233
        %8235 = vmatmul.f32.gmra.mxu0 %v7004
        %v8236 = vpop.f32.mrf.mxu0
        %v8237 = vadd.f32 0.0, %v8236
        %8238 = vmatmul.f32.gmra.mxu0 %v7007
        %v8239 = vpop.f32.mrf.mxu0
        %v8240 = vadd.f32 0.0, %v8239
        %8241 = vmatmul.f32.gmra.mxu0 %v7010
        %v8242 = vpop.f32.mrf.mxu0
        %v8243 = vadd.f32 0.0, %v8242
        %8244 = vmatmul.f32.gmra.mxu0 %v7013
        %v8245 = vpop.f32.mrf.mxu0
        %v8246 = vadd.f32 0.0, %v8245
        %8247 = vmatmul.f32.gmra.mxu0 %v7016
        %v8248 = vpop.f32.mrf.mxu0
        %v8249 = vadd.f32 0.0, %v8248
        %8250 = vmatmul.f32.gmra.mxu0 %v7019
        %v8251 = vpop.f32.mrf.mxu0
        %v8252 = vadd.f32 0.0, %v8251
        %8253 = vmatmul.f32.gmra.mxu0 %v7022
        %v8254 = vpop.f32.mrf.mxu0
        %v8255 = vadd.f32 0.0, %v8254
        %8256 = vmatmul.f32.gmra.mxu0 %v7025
        %v8257 = vpop.f32.mrf.mxu0
        %v8258 = vadd.f32 0.0, %v8257
        %8259 = vmatmul.f32.gmra.mxu0 %v7028
        %v8260 = vpop.f32.mrf.mxu0
        %v8261 = vadd.f32 0.0, %v8260
        %8262 = vmatmul.f32.gmra.mxu0 %v7031
        %v8263 = vpop.f32.mrf.mxu0
        %v8264 = vadd.f32 0.0, %v8263
        %8265 = vmatmul.f32.gmra.mxu0 %v7034
        %v8266 = vpop.f32.mrf.mxu0
        %v8267 = vadd.f32 0.0, %v8266
        %8268 = vmatmul.f32.gmra.mxu0 %v7037
        %v8269 = vpop.f32.mrf.mxu0
        %v8270 = vadd.f32 0.0, %v8269
        %8271 = vmatmul.f32.gmra.mxu0 %v7510
        %v8272 = vpop.f32.mrf.mxu0
        %v8273 = vadd.f32 0.0, %v8272
        %8274 = vmatmul.f32.gmra.mxu0 %v7513
        %v8275 = vpop.f32.mrf.mxu0
        %v8276 = vadd.f32 0.0, %v8275
        %8277 = vmatmul.f32.gmra.mxu0 %v7516
        %v8278 = vpop.f32.mrf.mxu0
        %v8279 = vadd.f32 0.0, %v8278
        %8280 = vmatmul.f32.gmra.mxu0 %v7519
        %v8281 = vpop.f32.mrf.mxu0
        %v8282 = vadd.f32 0.0, %v8281
        %8283 = vmatmul.f32.gmra.mxu0 %v7522
        %v8284 = vpop.f32.mrf.mxu0
        %v8285 = vadd.f32 0.0, %v8284
        %8286 = vmatmul.f32.gmra.mxu0 %v7525
        %v8287 = vpop.f32.mrf.mxu0
        %v8288 = vadd.f32 0.0, %v8287
        %8289 = vmatmul.f32.gmra.mxu0 %v7528
        %v8290 = vpop.f32.mrf.mxu0
        %v8291 = vadd.f32 0.0, %v8290
        %8292 = vmatmul.f32.gmra.mxu0 %v7531
        %v8293 = vpop.f32.mrf.mxu0
        %v8294 = vadd.f32 0.0, %v8293
        %8295 = vmatmul.f32.gmra.mxu0 %v7534
        %v8296 = vpop.f32.mrf.mxu0
        %v8297 = vadd.f32 0.0, %v8296
        %8298 = vmatmul.f32.gmra.mxu0 %v7537
        %v8299 = vpop.f32.mrf.mxu0
        %v8300 = vadd.f32 0.0, %v8299
        %8301 = vmatmul.f32.gmra.mxu0 %v7540
        %v8302 = vpop.f32.mrf.mxu0
        %v8303 = vadd.f32 0.0, %v8302
        %8304 = vmatmul.f32.gmra.mxu0 %v7543
        %v8305 = vpop.f32.mrf.mxu0
        %v8306 = vadd.f32 0.0, %v8305
        %8307 = vmatmul.f32.gmra.mxu0 %v7546
        %v8308 = vpop.f32.mrf.mxu0
        %v8309 = vadd.f32 0.0, %v8308
        %8310 = vmatmul.f32.gmra.mxu0 %v7549
        %v8311 = vpop.f32.mrf.mxu0
        %v8312 = vadd.f32 0.0, %v8311
        %8313 = vmatmul.f32.gmra.mxu0 %v7552
        %v8314 = vpop.f32.mrf.mxu0
        %v8315 = vadd.f32 0.0, %v8314
        %8316 = vmatmul.f32.gmra.mxu0 %v7555
        %v8317 = vpop.f32.mrf.mxu0
        %v8318 = vadd.f32 0.0, %v8317
        %8319 = vmatmul.f32.gmra.mxu0 %v7835
        %v8320 = vpop.f32.mrf.mxu0
        %v8321 = vadd.f32 0.0, %v8320
        %8322 = vmatmul.f32.gmra.mxu0 %v7838
        %v8323 = vpop.f32.mrf.mxu0
        %v8324 = vadd.f32 0.0, %v8323
        %8325 = vmatmul.f32.gmra.mxu0 %v7841
        %v8326 = vpop.f32.mrf.mxu0
        %v8327 = vadd.f32 0.0, %v8326
        %8328 = vmatmul.f32.gmra.mxu0 %v7844
        %v8329 = vpop.f32.mrf.mxu0
        %v8330 = vadd.f32 0.0, %v8329
        %8331 = vmatmul.f32.gmra.mxu0 %v7847
        %v8332 = vpop.f32.mrf.mxu0
        %v8333 = vadd.f32 0.0, %v8332
        %8334 = vmatmul.f32.gmra.mxu0 %v7850
        %v8335 = vpop.f32.mrf.mxu0
        %v8336 = vadd.f32 0.0, %v8335
        %8337 = vmatmul.f32.gmra.mxu0 %v7853
        %v8338 = vpop.f32.mrf.mxu0
        %v8339 = vadd.f32 0.0, %v8338
        %8340 = vmatmul.f32.gmra.mxu0 %v7856
        %v8341 = vpop.f32.mrf.mxu0
        %v8342 = vadd.f32 0.0, %v8341
        %8343 = vmatmul.f32.gmra.mxu0 %v7859
        %v8344 = vpop.f32.mrf.mxu0
        %v8345 = vadd.f32 0.0, %v8344
        %8346 = vmatmul.f32.gmra.mxu0 %v7862
        %v8347 = vpop.f32.mrf.mxu0
        %v8348 = vadd.f32 0.0, %v8347
        %8349 = vmatmul.f32.gmra.mxu0 %v7865
        %v8350 = vpop.f32.mrf.mxu0
        %v8351 = vadd.f32 0.0, %v8350
        %8352 = vmatmul.f32.gmra.mxu0 %v7868
        %v8353 = vpop.f32.mrf.mxu0
        %v8354 = vadd.f32 0.0, %v8353
        %8355 = vmatmul.f32.gmra.mxu0 %v7871
        %v8356 = vpop.f32.mrf.mxu0
        %v8357 = vadd.f32 0.0, %v8356
        %8358 = vmatmul.f32.gmra.mxu0 %v7874
        %v8359 = vpop.f32.mrf.mxu0
        %v8360 = vadd.f32 0.0, %v8359
        %8361 = vmatmul.f32.gmra.mxu0 %v7877
        %v8362 = vpop.f32.mrf.mxu0
        %v8363 = vadd.f32 0.0, %v8362
        %8364 = vmatmul.f32.gmra.mxu0 %v7880
        %v8365 = vpop.f32.mrf.mxu0
        %v8366 = vadd.f32 0.0, %v8365
        %8367 = vmatmul.f32.gmra.mxu0 %v8160
        %v8368 = vpop.f32.mrf.mxu0
        %v8369 = vadd.f32 0.0, %v8368
        %8370 = vmatmul.f32.gmra.mxu0 %v8163
        %v8371 = vpop.f32.mrf.mxu0
        %v8372 = vadd.f32 0.0, %v8371
        %8373 = vmatmul.f32.gmra.mxu0 %v8166
        %v8374 = vpop.f32.mrf.mxu0
        %v8375 = vadd.f32 0.0, %v8374
        %8376 = vmatmul.f32.gmra.mxu0 %v8169
        %v8377 = vpop.f32.mrf.mxu0
        %v8378 = vadd.f32 0.0, %v8377
        %8379 = vmatmul.f32.gmra.mxu0 %v8172
        %v8380 = vpop.f32.mrf.mxu0
        %v8381 = vadd.f32 0.0, %v8380
        %8382 = vmatmul.f32.gmra.mxu0 %v8175
        %v8383 = vpop.f32.mrf.mxu0
        %v8384 = vadd.f32 0.0, %v8383
        %8385 = vmatmul.f32.gmra.mxu0 %v8178
        %v8386 = vpop.f32.mrf.mxu0
        %v8387 = vadd.f32 0.0, %v8386
        %8388 = vmatmul.f32.gmra.mxu0 %v8181
        %v8389 = vpop.f32.mrf.mxu0
        %v8390 = vadd.f32 0.0, %v8389
        %8391 = vmatmul.f32.gmra.mxu0 %v8184
        %v8392 = vpop.f32.mrf.mxu0
        %v8393 = vadd.f32 0.0, %v8392
        %8394 = vmatmul.f32.gmra.mxu0 %v8187
        %v8395 = vpop.f32.mrf.mxu0
        %v8396 = vadd.f32 0.0, %v8395
        %8397 = vmatmul.f32.gmra.mxu0 %v8190
        %v8398 = vpop.f32.mrf.mxu0
        %v8399 = vadd.f32 0.0, %v8398
        %8400 = vmatmul.f32.gmra.mxu0 %v8193
        %v8401 = vpop.f32.mrf.mxu0
        %v8402 = vadd.f32 0.0, %v8401
        %8403 = vmatmul.f32.gmra.mxu0 %v8196
        %v8404 = vpop.f32.mrf.mxu0
        %v8405 = vadd.f32 0.0, %v8404
        %8406 = vmatmul.f32.gmra.mxu0 %v8199
        %v8407 = vpop.f32.mrf.mxu0
        %v8408 = vadd.f32 0.0, %v8407
        %8409 = vmatmul.f32.gmra.mxu0 %v8202
        %v8410 = vpop.f32.mrf.mxu0
        %v8411 = vadd.f32 0.0, %v8410
        %8412 = vmatmul.f32.gmra.mxu0 %v8205
        %v8413 = vpop.f32.mrf.mxu0
        %v8414 = vadd.f32 0.0, %v8413
        %8415 = vdwg.mxu0
        %v8416 = vadd.f32 %v8091, %v8225
        %v8417 = vadd.f32 %v8092, %v8228
        %v8418 = vadd.f32 %v8093, %v8231
        %v8419 = vadd.f32 %v8094, %v8234
        %v8420 = vadd.f32 %v8095, %v8237
        %v8421 = vadd.f32 %v8096, %v8240
        %v8422 = vadd.f32 %v8097, %v8243
        %v8423 = vadd.f32 %v8098, %v8246
        %v8424 = vadd.f32 %v8099, %v8249
        %v8425 = vadd.f32 %v8100, %v8252
        %v8426 = vadd.f32 %v8101, %v8255
        %v8427 = vadd.f32 %v8102, %v8258
        %v8428 = vadd.f32 %v8103, %v8261
        %v8429 = vadd.f32 %v8104, %v8264
        %v8430 = vadd.f32 %v8105, %v8267
        %v8431 = vadd.f32 %v8106, %v8270
        %v8432 = vadd.f32 %v8107, %v8273
        %v8433 = vadd.f32 %v8108, %v8276
        %v8434 = vadd.f32 %v8109, %v8279
        %v8435 = vadd.f32 %v8110, %v8282
        %v8436 = vadd.f32 %v8111, %v8285
        %v8437 = vadd.f32 %v8112, %v8288
        %v8438 = vadd.f32 %v8113, %v8291
        %v8439 = vadd.f32 %v8114, %v8294
        %v8440 = vadd.f32 %v8115, %v8297
        %v8441 = vadd.f32 %v8116, %v8300
        %v8442 = vadd.f32 %v8117, %v8303
        %v8443 = vadd.f32 %v8118, %v8306
        %v8444 = vadd.f32 %v8119, %v8309
        %v8445 = vadd.f32 %v8120, %v8312
        %v8446 = vadd.f32 %v8121, %v8315
        %v8447 = vadd.f32 %v8122, %v8318
        %v8448 = vadd.f32 %v8123, %v8321
        %v8449 = vadd.f32 %v8124, %v8324
        %v8450 = vadd.f32 %v8125, %v8327
        %v8451 = vadd.f32 %v8126, %v8330
        %v8452 = vadd.f32 %v8127, %v8333
        %v8453 = vadd.f32 %v8128, %v8336
        %v8454 = vadd.f32 %v8129, %v8339
        %v8455 = vadd.f32 %v8130, %v8342
        %v8456 = vadd.f32 %v8131, %v8345
        %v8457 = vadd.f32 %v8132, %v8348
        %v8458 = vadd.f32 %v8133, %v8351
        %v8459 = vadd.f32 %v8134, %v8354
        %v8460 = vadd.f32 %v8135, %v8357
        %v8461 = vadd.f32 %v8136, %v8360
        %v8462 = vadd.f32 %v8137, %v8363
        %v8463 = vadd.f32 %v8138, %v8366
        %v8464 = vadd.f32 %v8139, %v8369
        %v8465 = vadd.f32 %v8140, %v8372
        %v8466 = vadd.f32 %v8141, %v8375
        %v8467 = vadd.f32 %v8142, %v8378
        %v8468 = vadd.f32 %v8143, %v8381
        %v8469 = vadd.f32 %v8144, %v8384
        %v8470 = vadd.f32 %v8145, %v8387
        %v8471 = vadd.f32 %v8146, %v8390
        %v8472 = vadd.f32 %v8147, %v8393
        %v8473 = vadd.f32 %v8148, %v8396
        %v8474 = vadd.f32 %v8149, %v8399
        %v8475 = vadd.f32 %v8150, %v8402
        %v8476 = vadd.f32 %v8151, %v8405
        %v8477 = vadd.f32 %v8152, %v8408
        %v8478 = vadd.f32 %v8153, %v8411
        %v8479 = vadd.f32 %v8154, %v8414
        %v8480 = vld [vmem:[%s4] sm:$0x1]
        %v8482 = vperm.slane %v8480, 0
        %v8484 = vadd.f32 %v8416, %v8482
        %v8485 = vadd.f32 %v8417, %v8482
        %v8486 = vadd.f32 %v8418, %v8482
        %v8487 = vadd.f32 %v8419, %v8482
        %v8488 = vadd.f32 %v8420, %v8482
        %v8489 = vadd.f32 %v8421, %v8482
        %v8490 = vadd.f32 %v8422, %v8482
        %v8491 = vadd.f32 %v8423, %v8482
        %v8492 = vadd.f32 %v8424, %v8482
        %v8493 = vadd.f32 %v8425, %v8482
        %v8494 = vadd.f32 %v8426, %v8482
        %v8495 = vadd.f32 %v8427, %v8482
        %v8496 = vadd.f32 %v8428, %v8482
        %v8497 = vadd.f32 %v8429, %v8482
        %v8498 = vadd.f32 %v8430, %v8482
        %v8499 = vadd.f32 %v8431, %v8482
        %v8500 = vadd.f32 %v8432, %v8482
        %v8501 = vadd.f32 %v8433, %v8482
        %v8502 = vadd.f32 %v8434, %v8482
        %v8503 = vadd.f32 %v8435, %v8482
        %v8504 = vadd.f32 %v8436, %v8482
        %v8505 = vadd.f32 %v8437, %v8482
        %v8506 = vadd.f32 %v8438, %v8482
        %v8507 = vadd.f32 %v8439, %v8482
        %v8508 = vadd.f32 %v8440, %v8482
        %v8509 = vadd.f32 %v8441, %v8482
        %v8510 = vadd.f32 %v8442, %v8482
        %v8511 = vadd.f32 %v8443, %v8482
        %v8512 = vadd.f32 %v8444, %v8482
        %v8513 = vadd.f32 %v8445, %v8482
        %v8514 = vadd.f32 %v8446, %v8482
        %v8515 = vadd.f32 %v8447, %v8482
        %v8516 = vadd.f32 %v8448, %v8482
        %v8517 = vadd.f32 %v8449, %v8482
        %v8518 = vadd.f32 %v8450, %v8482
        %v8519 = vadd.f32 %v8451, %v8482
        %v8520 = vadd.f32 %v8452, %v8482
        %v8521 = vadd.f32 %v8453, %v8482
        %v8522 = vadd.f32 %v8454, %v8482
        %v8523 = vadd.f32 %v8455, %v8482
        %v8524 = vadd.f32 %v8456, %v8482
        %v8525 = vadd.f32 %v8457, %v8482
        %v8526 = vadd.f32 %v8458, %v8482
        %v8527 = vadd.f32 %v8459, %v8482
        %v8528 = vadd.f32 %v8460, %v8482
        %v8529 = vadd.f32 %v8461, %v8482
        %v8530 = vadd.f32 %v8462, %v8482
        %v8531 = vadd.f32 %v8463, %v8482
        %v8532 = vadd.f32 %v8464, %v8482
        %v8533 = vadd.f32 %v8465, %v8482
        %v8534 = vadd.f32 %v8466, %v8482
        %v8535 = vadd.f32 %v8467, %v8482
        %v8536 = vadd.f32 %v8468, %v8482
        %v8537 = vadd.f32 %v8469, %v8482
        %v8538 = vadd.f32 %v8470, %v8482
        %v8539 = vadd.f32 %v8471, %v8482
        %v8540 = vadd.f32 %v8472, %v8482
        %v8541 = vadd.f32 %v8473, %v8482
        %v8542 = vadd.f32 %v8474, %v8482
        %v8543 = vadd.f32 %v8475, %v8482
        %v8544 = vadd.f32 %v8476, %v8482
        %v8545 = vadd.f32 %v8477, %v8482
        %v8546 = vadd.f32 %v8478, %v8482
        %v8547 = vadd.f32 %v8479, %v8482
        %v8548 = vmax.f32 %v8484, 0.0
        %v8549 = vmax.f32 %v8485, 0.0
        %v8550 = vmax.f32 %v8486, 0.0
        %v8551 = vmax.f32 %v8487, 0.0
        %v8552 = vmax.f32 %v8488, 0.0
        %v8553 = vmax.f32 %v8489, 0.0
        %v8554 = vmax.f32 %v8490, 0.0
        %v8555 = vmax.f32 %v8491, 0.0
        %v8556 = vmax.f32 %v8492, 0.0
        %v8557 = vmax.f32 %v8493, 0.0
        %v8558 = vmax.f32 %v8494, 0.0
        %v8559 = vmax.f32 %v8495, 0.0
        %v8560 = vmax.f32 %v8496, 0.0
        %v8561 = vmax.f32 %v8497, 0.0
        %v8562 = vmax.f32 %v8498, 0.0
        %v8563 = vmax.f32 %v8499, 0.0
        %v8564 = vmax.f32 %v8500, 0.0
        %v8565 = vmax.f32 %v8501, 0.0
        %v8566 = vmax.f32 %v8502, 0.0
        %v8567 = vmax.f32 %v8503, 0.0
        %v8568 = vmax.f32 %v8504, 0.0
        %v8569 = vmax.f32 %v8505, 0.0
        %v8570 = vmax.f32 %v8506, 0.0
        %v8571 = vmax.f32 %v8507, 0.0
        %v8572 = vmax.f32 %v8508, 0.0
        %v8573 = vmax.f32 %v8509, 0.0
        %v8574 = vmax.f32 %v8510, 0.0
        %v8575 = vmax.f32 %v8511, 0.0
        %v8576 = vmax.f32 %v8512, 0.0
        %v8577 = vmax.f32 %v8513, 0.0
        %v8578 = vmax.f32 %v8514, 0.0
        %v8579 = vmax.f32 %v8515, 0.0
        %v8580 = vmax.f32 %v8516, 0.0
        %v8581 = vmax.f32 %v8517, 0.0
        %v8582 = vmax.f32 %v8518, 0.0
        %v8583 = vmax.f32 %v8519, 0.0
        %v8584 = vmax.f32 %v8520, 0.0
        %v8585 = vmax.f32 %v8521, 0.0
        %v8586 = vmax.f32 %v8522, 0.0
        %v8587 = vmax.f32 %v8523, 0.0
        %v8588 = vmax.f32 %v8524, 0.0
        %v8589 = vmax.f32 %v8525, 0.0
        %v8590 = vmax.f32 %v8526, 0.0
        %v8591 = vmax.f32 %v8527, 0.0
        %v8592 = vmax.f32 %v8528, 0.0
        %v8593 = vmax.f32 %v8529, 0.0
        %v8594 = vmax.f32 %v8530, 0.0
        %v8595 = vmax.f32 %v8531, 0.0
        %v8596 = vmax.f32 %v8532, 0.0
        %v8597 = vmax.f32 %v8533, 0.0
        %v8598 = vmax.f32 %v8534, 0.0
        %v8599 = vmax.f32 %v8535, 0.0
        %v8600 = vmax.f32 %v8536, 0.0
        %v8601 = vmax.f32 %v8537, 0.0
        %v8602 = vmax.f32 %v8538, 0.0
        %v8603 = vmax.f32 %v8539, 0.0
        %v8604 = vmax.f32 %v8540, 0.0
        %v8605 = vmax.f32 %v8541, 0.0
        %v8606 = vmax.f32 %v8542, 0.0
        %v8607 = vmax.f32 %v8543, 0.0
        %v8608 = vmax.f32 %v8544, 0.0
        %v8609 = vmax.f32 %v8545, 0.0
        %v8610 = vmax.f32 %v8546, 0.0
        %v8611 = vmax.f32 %v8547, 0.0
        %v8612 = vld [vmem:[%s5] sm:$0xff]
        %v8613 = vld [vmem:[%s5 + $0x8] sm:$0xff]
        %v8614 = vld [vmem:[%s5 + $0x10] sm:$0xff]
        %v8615 = vld [vmem:[%s5 + $0x18] sm:$0xff]
        %v8616 = vld [vmem:[%s5 + $0x20] sm:$0xff]
        %v8617 = vld [vmem:[%s5 + $0x28] sm:$0xff]
        %s8618 = scalar_lea.vmem %s5, 48
        %v8619 = vld [vmem:[%s8618] sm:$0xff]
        %v8620 = vld [vmem:[%s8618 + $0x8] sm:$0xff]
        %v8621 = vld [vmem:[%s8618 + $0x10] sm:$0xff]
        %v8622 = vld [vmem:[%s8618 + $0x18] sm:$0xff]
        %v8623 = vld [vmem:[%s8618 + $0x20] sm:$0xff]
        %v8624 = vld [vmem:[%s8618 + $0x28] sm:$0xff]
        %vm8625 = vcmask 392192
        %v8627 = vsel %vm8625, %v8564, 0
        %v8630 = vsel %vm8625, %v8565, 0
        %v8633 = vsel %vm8625, %v8566, 0
        %v8636 = vsel %vm8625, %v8567, 0
        %v8639 = vsel %vm8625, %v8568, 0
        %v8642 = vsel %vm8625, %v8569, 0
        %v8645 = vsel %vm8625, %v8570, 0
        %v8648 = vsel %vm8625, %v8571, 0
        %v8651 = vsel %vm8625, %v8572, 0
        %v8654 = vsel %vm8625, %v8573, 0
        %v8657 = vsel %vm8625, %v8574, 0
        %v8660 = vsel %vm8625, %v8575, 0
        %v8663 = vsel %vm8625, %v8576, 0
        %v8666 = vsel %vm8625, %v8577, 0
        %v8669 = vsel %vm8625, %v8578, 0
        %v8672 = vsel %vm8625, %v8579, 0
        %v8675 = vsel %vm8625, %v8580, 0
        %v8678 = vsel %vm8625, %v8581, 0
        %v8681 = vsel %vm8625, %v8582, 0
        %v8684 = vsel %vm8625, %v8583, 0
        %v8687 = vsel %vm8625, %v8584, 0
        %v8690 = vsel %vm8625, %v8585, 0
        %v8693 = vsel %vm8625, %v8586, 0
        %v8696 = vsel %vm8625, %v8587, 0
        %v8699 = vsel %vm8625, %v8588, 0
        %v8702 = vsel %vm8625, %v8589, 0
        %v8705 = vsel %vm8625, %v8590, 0
        %v8708 = vsel %vm8625, %v8591, 0
        %v8711 = vsel %vm8625, %v8592, 0
        %v8714 = vsel %vm8625, %v8593, 0
        %v8717 = vsel %vm8625, %v8594, 0
        %v8720 = vsel %vm8625, %v8595, 0
        %8722 = vmatpush.msra.mxu0 0.0
        %8723 = vmatpush.msra.mxu0 0.0
        %8724 = vmatpush.msra.mxu0 0.0
        %8725 = vmatpush.msra.mxu0 0.0
        %8726 = vmatpush.msra.mxu0 0.0
        %8727 = vmatpush.msra.mxu0 0.0
        %8728 = vmatpush.msra.mxu0 0.0
        %8729 = vmatpush.msra.mxu0 0.0
        %8730 = vmatpush.msra.mxu0 0.0
        %8731 = vmatpush.msra.mxu0 0.0
        %8732 = vmatpush.msra.mxu0 %v8624
        %8733 = vmatpush.msra.mxu0 %v8623
        %8734 = vmatpush.msra.mxu0 %v8622
        %8735 = vmatpush.msra.mxu0 %v8621
        %8736 = vmatpush.msra.mxu0 %v8620
        %8737 = vmatpush.msra.mxu0 %v8619
        %8738 = vmatmul.f32.gmra.mxu0 %v8627
        %v8739 = vpop.f32.mrf.mxu0
        %v8740 = vadd.f32 0.0, %v8739
        %8741 = vmatmul.f32.gmra.mxu0 %v8630
        %v8742 = vpop.f32.mrf.mxu0
        %v8743 = vadd.f32 0.0, %v8742
        %8744 = vmatmul.f32.gmra.mxu0 %v8633
        %v8745 = vpop.f32.mrf.mxu0
        %v8746 = vadd.f32 0.0, %v8745
        %8747 = vmatmul.f32.gmra.mxu0 %v8636
        %v8748 = vpop.f32.mrf.mxu0
        %v8749 = vadd.f32 0.0, %v8748
        %8750 = vmatmul.f32.gmra.mxu0 %v8639
        %v8751 = vpop.f32.mrf.mxu0
        %v8752 = vadd.f32 0.0, %v8751
        %8753 = vmatmul.f32.gmra.mxu0 %v8642
        %v8754 = vpop.f32.mrf.mxu0
        %v8755 = vadd.f32 0.0, %v8754
        %8756 = vmatmul.f32.gmra.mxu0 %v8645
        %v8757 = vpop.f32.mrf.mxu0
        %v8758 = vadd.f32 0.0, %v8757
        %8759 = vmatmul.f32.gmra.mxu0 %v8648
        %v8760 = vpop.f32.mrf.mxu0
        %v8761 = vadd.f32 0.0, %v8760
        %8762 = vmatmul.f32.gmra.mxu0 %v8651
        %v8763 = vpop.f32.mrf.mxu0
        %v8764 = vadd.f32 0.0, %v8763
        %8765 = vmatmul.f32.gmra.mxu0 %v8654
        %v8766 = vpop.f32.mrf.mxu0
        %v8767 = vadd.f32 0.0, %v8766
        %8768 = vmatmul.f32.gmra.mxu0 %v8657
        %v8769 = vpop.f32.mrf.mxu0
        %v8770 = vadd.f32 0.0, %v8769
        %8771 = vmatmul.f32.gmra.mxu0 %v8660
        %v8772 = vpop.f32.mrf.mxu0
        %v8773 = vadd.f32 0.0, %v8772
        %8774 = vmatmul.f32.gmra.mxu0 %v8663
        %v8775 = vpop.f32.mrf.mxu0
        %v8776 = vadd.f32 0.0, %v8775
        %8777 = vmatmul.f32.gmra.mxu0 %v8666
        %v8778 = vpop.f32.mrf.mxu0
        %v8779 = vadd.f32 0.0, %v8778
        %8780 = vmatmul.f32.gmra.mxu0 %v8669
        %v8781 = vpop.f32.mrf.mxu0
        %v8782 = vadd.f32 0.0, %v8781
        %8783 = vmatmul.f32.gmra.mxu0 %v8672
        %v8784 = vpop.f32.mrf.mxu0
        %v8785 = vadd.f32 0.0, %v8784
        %8786 = vmatmul.f32.gmra.mxu0 %v8675
        %v8787 = vpop.f32.mrf.mxu0
        %v8788 = vadd.f32 0.0, %v8787
        %8789 = vmatmul.f32.gmra.mxu0 %v8678
        %v8790 = vpop.f32.mrf.mxu0
        %v8791 = vadd.f32 0.0, %v8790
        %8792 = vmatmul.f32.gmra.mxu0 %v8681
        %v8793 = vpop.f32.mrf.mxu0
        %v8794 = vadd.f32 0.0, %v8793
        %8795 = vmatmul.f32.gmra.mxu0 %v8684
        %v8796 = vpop.f32.mrf.mxu0
        %v8797 = vadd.f32 0.0, %v8796
        %8798 = vmatmul.f32.gmra.mxu0 %v8687
        %v8799 = vpop.f32.mrf.mxu0
        %v8800 = vadd.f32 0.0, %v8799
        %8801 = vmatmul.f32.gmra.mxu0 %v8690
        %v8802 = vpop.f32.mrf.mxu0
        %v8803 = vadd.f32 0.0, %v8802
        %8804 = vmatmul.f32.gmra.mxu0 %v8693
        %v8805 = vpop.f32.mrf.mxu0
        %v8806 = vadd.f32 0.0, %v8805
        %8807 = vmatmul.f32.gmra.mxu0 %v8696
        %v8808 = vpop.f32.mrf.mxu0
        %v8809 = vadd.f32 0.0, %v8808
        %8810 = vmatmul.f32.gmra.mxu0 %v8699
        %v8811 = vpop.f32.mrf.mxu0
        %v8812 = vadd.f32 0.0, %v8811
        %8813 = vmatmul.f32.gmra.mxu0 %v8702
        %v8814 = vpop.f32.mrf.mxu0
        %v8815 = vadd.f32 0.0, %v8814
        %8816 = vmatmul.f32.gmra.mxu0 %v8705
        %v8817 = vpop.f32.mrf.mxu0
        %v8818 = vadd.f32 0.0, %v8817
        %8819 = vmatmul.f32.gmra.mxu0 %v8708
        %v8820 = vpop.f32.mrf.mxu0
        %v8821 = vadd.f32 0.0, %v8820
        %8822 = vmatmul.f32.gmra.mxu0 %v8711
        %v8823 = vpop.f32.mrf.mxu0
        %v8824 = vadd.f32 0.0, %v8823
        %8825 = vmatmul.f32.gmra.mxu0 %v8714
        %v8826 = vpop.f32.mrf.mxu0
        %v8827 = vadd.f32 0.0, %v8826
        %8828 = vmatmul.f32.gmra.mxu0 %v8717
        %v8829 = vpop.f32.mrf.mxu0
        %v8830 = vadd.f32 0.0, %v8829
        %8831 = vmatmul.f32.gmra.mxu0 %v8720
        %v8832 = vpop.f32.mrf.mxu0
        %v8833 = vadd.f32 0.0, %v8832
        %8834 = vdwg.mxu0
        %v8836 = vsel %vm8625, %v8548, 0
        %v8839 = vsel %vm8625, %v8549, 0
        %v8842 = vsel %vm8625, %v8550, 0
        %v8845 = vsel %vm8625, %v8551, 0
        %v8848 = vsel %vm8625, %v8552, 0
        %v8851 = vsel %vm8625, %v8553, 0
        %v8854 = vsel %vm8625, %v8554, 0
        %v8857 = vsel %vm8625, %v8555, 0
        %v8860 = vsel %vm8625, %v8556, 0
        %v8863 = vsel %vm8625, %v8557, 0
        %v8866 = vsel %vm8625, %v8558, 0
        %v8869 = vsel %vm8625, %v8559, 0
        %v8872 = vsel %vm8625, %v8560, 0
        %v8875 = vsel %vm8625, %v8561, 0
        %v8878 = vsel %vm8625, %v8562, 0
        %v8881 = vsel %vm8625, %v8563, 0
        %8883 = vmatpush.msra.mxu0 0.0
        %8884 = vmatpush.msra.mxu0 0.0
        %8885 = vmatpush.msra.mxu0 0.0
        %8886 = vmatpush.msra.mxu0 0.0
        %8887 = vmatpush.msra.mxu0 0.0
        %8888 = vmatpush.msra.mxu0 0.0
        %8889 = vmatpush.msra.mxu0 0.0
        %8890 = vmatpush.msra.mxu0 0.0
        %8891 = vmatpush.msra.mxu0 0.0
        %8892 = vmatpush.msra.mxu0 0.0
        %8893 = vmatpush.msra.mxu0 %v8617
        %8894 = vmatpush.msra.mxu0 %v8616
        %8895 = vmatpush.msra.mxu0 %v8615
        %8896 = vmatpush.msra.mxu0 %v8614
        %8897 = vmatpush.msra.mxu0 %v8613
        %8898 = vmatpush.msra.mxu0 %v8612
        %8899 = vmatmul.f32.gmra.mxu0 %v8836
        %v8900 = vpop.f32.mrf.mxu0
        %v8901 = vadd.f32 %v8740, %v8900
        %8902 = vmatmul.f32.gmra.mxu0 %v8839
        %v8903 = vpop.f32.mrf.mxu0
        %v8904 = vadd.f32 %v8743, %v8903
        %8905 = vmatmul.f32.gmra.mxu0 %v8842
        %v8906 = vpop.f32.mrf.mxu0
        %v8907 = vadd.f32 %v8746, %v8906
        %8908 = vmatmul.f32.gmra.mxu0 %v8845
        %v8909 = vpop.f32.mrf.mxu0
        %v8910 = vadd.f32 %v8749, %v8909
        %8911 = vmatmul.f32.gmra.mxu0 %v8848
        %v8912 = vpop.f32.mrf.mxu0
        %v8913 = vadd.f32 %v8752, %v8912
        %8914 = vmatmul.f32.gmra.mxu0 %v8851
        %v8915 = vpop.f32.mrf.mxu0
        %v8916 = vadd.f32 %v8755, %v8915
        %8917 = vmatmul.f32.gmra.mxu0 %v8854
        %v8918 = vpop.f32.mrf.mxu0
        %v8919 = vadd.f32 %v8758, %v8918
        %8920 = vmatmul.f32.gmra.mxu0 %v8857
        %v8921 = vpop.f32.mrf.mxu0
        %v8922 = vadd.f32 %v8761, %v8921
        %8923 = vmatmul.f32.gmra.mxu0 %v8860
        %v8924 = vpop.f32.mrf.mxu0
        %v8925 = vadd.f32 %v8764, %v8924
        %8926 = vmatmul.f32.gmra.mxu0 %v8863
        %v8927 = vpop.f32.mrf.mxu0
        %v8928 = vadd.f32 %v8767, %v8927
        %8929 = vmatmul.f32.gmra.mxu0 %v8866
        %v8930 = vpop.f32.mrf.mxu0
        %v8931 = vadd.f32 %v8770, %v8930
        %8932 = vmatmul.f32.gmra.mxu0 %v8869
        %v8933 = vpop.f32.mrf.mxu0
        %v8934 = vadd.f32 %v8773, %v8933
        %8935 = vmatmul.f32.gmra.mxu0 %v8872
        %v8936 = vpop.f32.mrf.mxu0
        %v8937 = vadd.f32 %v8776, %v8936
        %8938 = vmatmul.f32.gmra.mxu0 %v8875
        %v8939 = vpop.f32.mrf.mxu0
        %v8940 = vadd.f32 %v8779, %v8939
        %8941 = vmatmul.f32.gmra.mxu0 %v8878
        %v8942 = vpop.f32.mrf.mxu0
        %v8943 = vadd.f32 %v8782, %v8942
        %8944 = vmatmul.f32.gmra.mxu0 %v8881
        %v8945 = vpop.f32.mrf.mxu0
        %v8946 = vadd.f32 %v8785, %v8945
        %8947 = vmatmul.f32.gmra.mxu0 %v8627
        %v8948 = vpop.f32.mrf.mxu0
        %v8949 = vadd.f32 %v8788, %v8948
        %8950 = vmatmul.f32.gmra.mxu0 %v8630
        %v8951 = vpop.f32.mrf.mxu0
        %v8952 = vadd.f32 %v8791, %v8951
        %8953 = vmatmul.f32.gmra.mxu0 %v8633
        %v8954 = vpop.f32.mrf.mxu0
        %v8955 = vadd.f32 %v8794, %v8954
        %8956 = vmatmul.f32.gmra.mxu0 %v8636
        %v8957 = vpop.f32.mrf.mxu0
        %v8958 = vadd.f32 %v8797, %v8957
        %8959 = vmatmul.f32.gmra.mxu0 %v8639
        %v8960 = vpop.f32.mrf.mxu0
        %v8961 = vadd.f32 %v8800, %v8960
        %8962 = vmatmul.f32.gmra.mxu0 %v8642
        %v8963 = vpop.f32.mrf.mxu0
        %v8964 = vadd.f32 %v8803, %v8963
        %8965 = vmatmul.f32.gmra.mxu0 %v8645
        %v8966 = vpop.f32.mrf.mxu0
        %v8967 = vadd.f32 %v8806, %v8966
        %8968 = vmatmul.f32.gmra.mxu0 %v8648
        %v8969 = vpop.f32.mrf.mxu0
        %v8970 = vadd.f32 %v8809, %v8969
        %8971 = vmatmul.f32.gmra.mxu0 %v8651
        %v8972 = vpop.f32.mrf.mxu0
        %v8973 = vadd.f32 %v8812, %v8972
        %8974 = vmatmul.f32.gmra.mxu0 %v8654
        %v8975 = vpop.f32.mrf.mxu0
        %v8976 = vadd.f32 %v8815, %v8975
        %8977 = vmatmul.f32.gmra.mxu0 %v8657
        %v8978 = vpop.f32.mrf.mxu0
        %v8979 = vadd.f32 %v8818, %v8978
        %8980 = vmatmul.f32.gmra.mxu0 %v8660
        %v8981 = vpop.f32.mrf.mxu0
        %v8982 = vadd.f32 %v8821, %v8981
        %8983 = vmatmul.f32.gmra.mxu0 %v8663
        %v8984 = vpop.f32.mrf.mxu0
        %v8985 = vadd.f32 %v8824, %v8984
        %8986 = vmatmul.f32.gmra.mxu0 %v8666
        %v8987 = vpop.f32.mrf.mxu0
        %v8988 = vadd.f32 %v8827, %v8987
        %8989 = vmatmul.f32.gmra.mxu0 %v8669
        %v8990 = vpop.f32.mrf.mxu0
        %v8991 = vadd.f32 %v8830, %v8990
        %8992 = vmatmul.f32.gmra.mxu0 %v8672
        %v8993 = vpop.f32.mrf.mxu0
        %v8994 = vadd.f32 %v8833, %v8993
        %8995 = vdwg.mxu0
        %s8996 = scalar_lea.vmem %s5, 96
        %v8997 = vld [vmem:[%s8996] sm:$0xff]
        %v8998 = vld [vmem:[%s8996 + $0x8] sm:$0xff]
        %v8999 = vld [vmem:[%s8996 + $0x10] sm:$0xff]
        %v9000 = vld [vmem:[%s8996 + $0x18] sm:$0xff]
        %v9001 = vld [vmem:[%s8996 + $0x20] sm:$0xff]
        %v9002 = vld [vmem:[%s8996 + $0x28] sm:$0xff]
        %v9004 = vsel %vm8625, %v8596, 0
        %v9007 = vsel %vm8625, %v8597, 0
        %v9010 = vsel %vm8625, %v8598, 0
        %v9013 = vsel %vm8625, %v8599, 0
        %v9016 = vsel %vm8625, %v8600, 0
        %v9019 = vsel %vm8625, %v8601, 0
        %v9022 = vsel %vm8625, %v8602, 0
        %v9025 = vsel %vm8625, %v8603, 0
        %v9028 = vsel %vm8625, %v8604, 0
        %v9031 = vsel %vm8625, %v8605, 0
        %v9034 = vsel %vm8625, %v8606, 0
        %v9037 = vsel %vm8625, %v8607, 0
        %v9040 = vsel %vm8625, %v8608, 0
        %v9043 = vsel %vm8625, %v8609, 0
        %v9046 = vsel %vm8625, %v8610, 0
        %v9049 = vsel %vm8625, %v8611, 0
        %9051 = vmatpush.msra.mxu0 0.0
        %9052 = vmatpush.msra.mxu0 0.0
        %9053 = vmatpush.msra.mxu0 0.0
        %9054 = vmatpush.msra.mxu0 0.0
        %9055 = vmatpush.msra.mxu0 0.0
        %9056 = vmatpush.msra.mxu0 0.0
        %9057 = vmatpush.msra.mxu0 0.0
        %9058 = vmatpush.msra.mxu0 0.0
        %9059 = vmatpush.msra.mxu0 0.0
        %9060 = vmatpush.msra.mxu0 0.0
        %9061 = vmatpush.msra.mxu0 %v9002
        %9062 = vmatpush.msra.mxu0 %v9001
        %9063 = vmatpush.msra.mxu0 %v9000
        %9064 = vmatpush.msra.mxu0 %v8999
        %9065 = vmatpush.msra.mxu0 %v8998
        %9066 = vmatpush.msra.mxu0 %v8997
        %9067 = vmatmul.f32.gmra.mxu0 %v8675
        %v9068 = vpop.f32.mrf.mxu0
        %v9069 = vadd.f32 0.0, %v9068
        %9070 = vmatmul.f32.gmra.mxu0 %v8678
        %v9071 = vpop.f32.mrf.mxu0
        %v9072 = vadd.f32 0.0, %v9071
        %9073 = vmatmul.f32.gmra.mxu0 %v8681
        %v9074 = vpop.f32.mrf.mxu0
        %v9075 = vadd.f32 0.0, %v9074
        %9076 = vmatmul.f32.gmra.mxu0 %v8684
        %v9077 = vpop.f32.mrf.mxu0
        %v9078 = vadd.f32 0.0, %v9077
        %9079 = vmatmul.f32.gmra.mxu0 %v8687
        %v9080 = vpop.f32.mrf.mxu0
        %v9081 = vadd.f32 0.0, %v9080
        %9082 = vmatmul.f32.gmra.mxu0 %v8690
        %v9083 = vpop.f32.mrf.mxu0
        %v9084 = vadd.f32 0.0, %v9083
        %9085 = vmatmul.f32.gmra.mxu0 %v8693
        %v9086 = vpop.f32.mrf.mxu0
        %v9087 = vadd.f32 0.0, %v9086
        %9088 = vmatmul.f32.gmra.mxu0 %v8696
        %v9089 = vpop.f32.mrf.mxu0
        %v9090 = vadd.f32 0.0, %v9089
        %9091 = vmatmul.f32.gmra.mxu0 %v8699
        %v9092 = vpop.f32.mrf.mxu0
        %v9093 = vadd.f32 0.0, %v9092
        %9094 = vmatmul.f32.gmra.mxu0 %v8702
        %v9095 = vpop.f32.mrf.mxu0
        %v9096 = vadd.f32 0.0, %v9095
        %9097 = vmatmul.f32.gmra.mxu0 %v8705
        %v9098 = vpop.f32.mrf.mxu0
        %v9099 = vadd.f32 0.0, %v9098
        %9100 = vmatmul.f32.gmra.mxu0 %v8708
        %v9101 = vpop.f32.mrf.mxu0
        %v9102 = vadd.f32 0.0, %v9101
        %9103 = vmatmul.f32.gmra.mxu0 %v8711
        %v9104 = vpop.f32.mrf.mxu0
        %v9105 = vadd.f32 0.0, %v9104
        %9106 = vmatmul.f32.gmra.mxu0 %v8714
        %v9107 = vpop.f32.mrf.mxu0
        %v9108 = vadd.f32 0.0, %v9107
        %9109 = vmatmul.f32.gmra.mxu0 %v8717
        %v9110 = vpop.f32.mrf.mxu0
        %v9111 = vadd.f32 0.0, %v9110
        %9112 = vmatmul.f32.gmra.mxu0 %v8720
        %v9113 = vpop.f32.mrf.mxu0
        %v9114 = vadd.f32 0.0, %v9113
        %9115 = vmatmul.f32.gmra.mxu0 %v9004
        %v9116 = vpop.f32.mrf.mxu0
        %v9117 = vadd.f32 0.0, %v9116
        %9118 = vmatmul.f32.gmra.mxu0 %v9007
        %v9119 = vpop.f32.mrf.mxu0
        %v9120 = vadd.f32 0.0, %v9119
        %9121 = vmatmul.f32.gmra.mxu0 %v9010
        %v9122 = vpop.f32.mrf.mxu0
        %v9123 = vadd.f32 0.0, %v9122
        %9124 = vmatmul.f32.gmra.mxu0 %v9013
        %v9125 = vpop.f32.mrf.mxu0
        %v9126 = vadd.f32 0.0, %v9125
        %9127 = vmatmul.f32.gmra.mxu0 %v9016
        %v9128 = vpop.f32.mrf.mxu0
        %v9129 = vadd.f32 0.0, %v9128
        %9130 = vmatmul.f32.gmra.mxu0 %v9019
        %v9131 = vpop.f32.mrf.mxu0
        %v9132 = vadd.f32 0.0, %v9131
        %9133 = vmatmul.f32.gmra.mxu0 %v9022
        %v9134 = vpop.f32.mrf.mxu0
        %v9135 = vadd.f32 0.0, %v9134
        %9136 = vmatmul.f32.gmra.mxu0 %v9025
        %v9137 = vpop.f32.mrf.mxu0
        %v9138 = vadd.f32 0.0, %v9137
        %9139 = vmatmul.f32.gmra.mxu0 %v9028
        %v9140 = vpop.f32.mrf.mxu0
        %v9141 = vadd.f32 0.0, %v9140
        %9142 = vmatmul.f32.gmra.mxu0 %v9031
        %v9143 = vpop.f32.mrf.mxu0
        %v9144 = vadd.f32 0.0, %v9143
        %9145 = vmatmul.f32.gmra.mxu0 %v9034
        %v9146 = vpop.f32.mrf.mxu0
        %v9147 = vadd.f32 0.0, %v9146
        %9148 = vmatmul.f32.gmra.mxu0 %v9037
        %v9149 = vpop.f32.mrf.mxu0
        %v9150 = vadd.f32 0.0, %v9149
        %9151 = vmatmul.f32.gmra.mxu0 %v9040
        %v9152 = vpop.f32.mrf.mxu0
        %v9153 = vadd.f32 0.0, %v9152
        %9154 = vmatmul.f32.gmra.mxu0 %v9043
        %v9155 = vpop.f32.mrf.mxu0
        %v9156 = vadd.f32 0.0, %v9155
        %9157 = vmatmul.f32.gmra.mxu0 %v9046
        %v9158 = vpop.f32.mrf.mxu0
        %v9159 = vadd.f32 0.0, %v9158
        %9160 = vmatmul.f32.gmra.mxu0 %v9049
        %v9161 = vpop.f32.mrf.mxu0
        %v9162 = vadd.f32 0.0, %v9161
        %9163 = vdwg.mxu0
        %v9164 = vadd.f32 %v8901, %v9069
        %v9165 = vadd.f32 %v8904, %v9072
        %v9166 = vadd.f32 %v8907, %v9075
        %v9167 = vadd.f32 %v8910, %v9078
        %v9168 = vadd.f32 %v8913, %v9081
        %v9169 = vadd.f32 %v8916, %v9084
        %v9170 = vadd.f32 %v8919, %v9087
        %v9171 = vadd.f32 %v8922, %v9090
        %v9172 = vadd.f32 %v8925, %v9093
        %v9173 = vadd.f32 %v8928, %v9096
        %v9174 = vadd.f32 %v8931, %v9099
        %v9175 = vadd.f32 %v8934, %v9102
        %v9176 = vadd.f32 %v8937, %v9105
        %v9177 = vadd.f32 %v8940, %v9108
        %v9178 = vadd.f32 %v8943, %v9111
        %v9179 = vadd.f32 %v8946, %v9114
        %v9180 = vadd.f32 %v8949, %v9117
        %v9181 = vadd.f32 %v8952, %v9120
        %v9182 = vadd.f32 %v8955, %v9123
        %v9183 = vadd.f32 %v8958, %v9126
        %v9184 = vadd.f32 %v8961, %v9129
        %v9185 = vadd.f32 %v8964, %v9132
        %v9186 = vadd.f32 %v8967, %v9135
        %v9187 = vadd.f32 %v8970, %v9138
        %v9188 = vadd.f32 %v8973, %v9141
        %v9189 = vadd.f32 %v8976, %v9144
        %v9190 = vadd.f32 %v8979, %v9147
        %v9191 = vadd.f32 %v8982, %v9150
        %v9192 = vadd.f32 %v8985, %v9153
        %v9193 = vadd.f32 %v8988, %v9156
        %v9194 = vadd.f32 %v8991, %v9159
        %v9195 = vadd.f32 %v8994, %v9162
        %v9196 = vld [vmem:[%s6] sm:$0x1]
        %v9198 = vperm.slane %v9196, 0
        %v9200 = vadd.f32 %v9164, %v9198
        %v9201 = vadd.f32 %v9165, %v9198
        %v9202 = vadd.f32 %v9166, %v9198
        %v9203 = vadd.f32 %v9167, %v9198
        %v9204 = vadd.f32 %v9168, %v9198
        %v9205 = vadd.f32 %v9169, %v9198
        %v9206 = vadd.f32 %v9170, %v9198
        %v9207 = vadd.f32 %v9171, %v9198
        %v9208 = vadd.f32 %v9172, %v9198
        %v9209 = vadd.f32 %v9173, %v9198
        %v9210 = vadd.f32 %v9174, %v9198
        %v9211 = vadd.f32 %v9175, %v9198
        %v9212 = vadd.f32 %v9176, %v9198
        %v9213 = vadd.f32 %v9177, %v9198
        %v9214 = vadd.f32 %v9178, %v9198
        %v9215 = vadd.f32 %v9179, %v9198
        %v9216 = vadd.f32 %v9180, %v9198
        %v9217 = vadd.f32 %v9181, %v9198
        %v9218 = vadd.f32 %v9182, %v9198
        %v9219 = vadd.f32 %v9183, %v9198
        %v9220 = vadd.f32 %v9184, %v9198
        %v9221 = vadd.f32 %v9185, %v9198
        %v9222 = vadd.f32 %v9186, %v9198
        %v9223 = vadd.f32 %v9187, %v9198
        %v9224 = vadd.f32 %v9188, %v9198
        %v9225 = vadd.f32 %v9189, %v9198
        %v9226 = vadd.f32 %v9190, %v9198
        %v9227 = vadd.f32 %v9191, %v9198
        %v9228 = vadd.f32 %v9192, %v9198
        %v9229 = vadd.f32 %v9193, %v9198
        %v9230 = vadd.f32 %v9194, %v9198
        %v9231 = vadd.f32 %v9195, %v9198
        %v9232 = vmax.f32 %v9200, 0.0
        %v9233 = vmax.f32 %v9201, 0.0
        %v9234 = vmax.f32 %v9202, 0.0
        %v9235 = vmax.f32 %v9203, 0.0
        %v9236 = vmax.f32 %v9204, 0.0
        %v9237 = vmax.f32 %v9205, 0.0
        %v9238 = vmax.f32 %v9206, 0.0
        %v9239 = vmax.f32 %v9207, 0.0
        %v9240 = vmax.f32 %v9208, 0.0
        %v9241 = vmax.f32 %v9209, 0.0
        %v9242 = vmax.f32 %v9210, 0.0
        %v9243 = vmax.f32 %v9211, 0.0
        %v9244 = vmax.f32 %v9212, 0.0
        %v9245 = vmax.f32 %v9213, 0.0
        %v9246 = vmax.f32 %v9214, 0.0
        %v9247 = vmax.f32 %v9215, 0.0
        %v9248 = vmax.f32 %v9216, 0.0
        %v9249 = vmax.f32 %v9217, 0.0
        %v9250 = vmax.f32 %v9218, 0.0
        %v9251 = vmax.f32 %v9219, 0.0
        %v9252 = vmax.f32 %v9220, 0.0
        %v9253 = vmax.f32 %v9221, 0.0
        %v9254 = vmax.f32 %v9222, 0.0
        %v9255 = vmax.f32 %v9223, 0.0
        %v9256 = vmax.f32 %v9224, 0.0
        %v9257 = vmax.f32 %v9225, 0.0
        %v9258 = vmax.f32 %v9226, 0.0
        %v9259 = vmax.f32 %v9227, 0.0
        %v9260 = vmax.f32 %v9228, 0.0
        %v9261 = vmax.f32 %v9229, 0.0
        %v9262 = vmax.f32 %v9230, 0.0
        %v9263 = vmax.f32 %v9231, 0.0
        %v9264 = vld [vmem:[%s7] sm:$0xff]
        %v9265 = vld [vmem:[%s7 + $0x8] sm:$0xff]
        %v9266 = vld [vmem:[%s7 + $0x10] sm:$0xff]
        %v9267 = vld [vmem:[%s7 + $0x18] sm:$0xff]
        %v9268 = vld [vmem:[%s7 + $0x20] sm:$0xff]
        %v9269 = vld [vmem:[%s7 + $0x28] sm:$0xff]
        %v9270 = vld [vmem:[%s7 + $0x30] sm:$0xff]
        %v9271 = vld [vmem:[%s7 + $0x38] sm:$0xff]
        %v9272 = vld [vmem:[%s7 + $0x40] sm:$0xff]
        %v9273 = vld [vmem:[%s7 + $0x48] sm:$0xff]
        %v9274 = vld [vmem:[%s7 + $0x50] sm:$0xff]
        %v9275 = vld [vmem:[%s7 + $0x58] sm:$0xff]
        %v9276 = vld [vmem:[%s7 + $0x60] sm:$0xff]
        %v9277 = vld [vmem:[%s7 + $0x68] sm:$0xff]
        %v9278 = vld [vmem:[%s7 + $0x70] sm:$0xff]
        %v9279 = vld [vmem:[%s7 + $0x78] sm:$0xff]
        %v9280 = vld [vmem:[%s7 + $0x80] sm:$0xff]
        %v9281 = vld [vmem:[%s7 + $0x88] sm:$0xff]
        %v9282 = vld [vmem:[%s7 + $0x90] sm:$0xff]
        %v9283 = vld [vmem:[%s7 + $0x98] sm:$0xff]
        %v9284 = vld [vmem:[%s7 + $0xa0] sm:$0xff]
        %v9285 = vld [vmem:[%s7 + $0xa8] sm:$0xff]
        %v9286 = vld [vmem:[%s7 + $0xb0] sm:$0xff]
        %v9287 = vld [vmem:[%s7 + $0xb8] sm:$0xff]
        %v9288 = vld [vmem:[%s7 + $0xc0] sm:$0xff]
        %v9289 = vld [vmem:[%s7 + $0xc8] sm:$0xff]
        %v9290 = vld [vmem:[%s7 + $0xd0] sm:$0xff]
        %v9291 = vld [vmem:[%s7 + $0xd8] sm:$0xff]
        %v9292 = vld [vmem:[%s7 + $0xe0] sm:$0xff]
        %v9293 = vld [vmem:[%s7 + $0xe8] sm:$0xff]
        %v9294 = vld [vmem:[%s7 + $0xf0] sm:$0xff]
        %v9295 = vld [vmem:[%s7 + $0xf8] sm:$0xff]
        %v9296 = vld [vmem:[%s7 + $0x100] sm:$0xff]
        %v9297 = vld [vmem:[%s7 + $0x108] sm:$0xff]
        %v9298 = vld [vmem:[%s7 + $0x110] sm:$0xff]
        %v9299 = vld [vmem:[%s7 + $0x118] sm:$0xff]
        %v9300 = vld [vmem:[%s7 + $0x120] sm:$0xff]
        %v9301 = vld [vmem:[%s7 + $0x128] sm:$0xff]
        %v9302 = vld [vmem:[%s7 + $0x130] sm:$0xff]
        %v9303 = vld [vmem:[%s7 + $0x138] sm:$0xff]
        %v9304 = vld [vmem:[%s7 + $0x140] sm:$0xff]
        %v9305 = vld [vmem:[%s7 + $0x148] sm:$0xff]
        %v9306 = vld [vmem:[%s7 + $0x150] sm:$0xff]
        %v9307 = vld [vmem:[%s7 + $0x158] sm:$0xff]
        %v9308 = vld [vmem:[%s7 + $0x160] sm:$0xff]
        %v9309 = vld [vmem:[%s7 + $0x168] sm:$0xff]
        %v9310 = vld [vmem:[%s7 + $0x170] sm:$0xff]
        %v9311 = vld [vmem:[%s7 + $0x178] sm:$0xff]
        %vm9312 = vcmask 785408
        %v9314 = vsel %vm9312, %v9248, 0
        %v9317 = vsel %vm9312, %v9249, 0
        %v9320 = vsel %vm9312, %v9250, 0
        %v9323 = vsel %vm9312, %v9251, 0
        %v9326 = vsel %vm9312, %v9252, 0
        %v9329 = vsel %vm9312, %v9253, 0
        %v9332 = vsel %vm9312, %v9254, 0
        %v9335 = vsel %vm9312, %v9255, 0
        %v9338 = vsel %vm9312, %v9256, 0
        %v9341 = vsel %vm9312, %v9257, 0
        %v9344 = vsel %vm9312, %v9258, 0
        %v9347 = vsel %vm9312, %v9259, 0
        %v9350 = vsel %vm9312, %v9260, 0
        %v9353 = vsel %vm9312, %v9261, 0
        %v9356 = vsel %vm9312, %v9262, 0
        %v9359 = vsel %vm9312, %v9263, 0
        %9361 = vmatpush.msra.mxu0 0.0
        %9362 = vmatpush.msra.mxu0 0.0
        %9363 = vmatpush.msra.mxu0 0.0
        %9364 = vmatpush.msra.mxu0 0.0
        %9365 = vmatpush.msra.mxu0 %v9310
        %9366 = vmatpush.msra.mxu0 %v9308
        %9367 = vmatpush.msra.mxu0 %v9306
        %9368 = vmatpush.msra.mxu0 %v9304
        %9369 = vmatpush.msra.mxu0 %v9302
        %9370 = vmatpush.msra.mxu0 %v9300
        %9371 = vmatpush.msra.mxu0 %v9298
        %9372 = vmatpush.msra.mxu0 %v9296
        %9373 = vmatpush.msra.mxu0 %v9294
        %9374 = vmatpush.msra.mxu0 %v9292
        %9375 = vmatpush.msra.mxu0 %v9290
        %9376 = vmatpush.msra.mxu0 %v9288
        %9377 = vmatmul.f32.gmra.mxu0 %v9314
        %v9378 = vpop.f32.mrf.mxu0
        %v9379 = vadd.f32 0.0, %v9378
        %9380 = vmatmul.f32.gmra.mxu0 %v9317
        %v9381 = vpop.f32.mrf.mxu0
        %v9382 = vadd.f32 0.0, %v9381
        %9383 = vmatmul.f32.gmra.mxu0 %v9320
        %v9384 = vpop.f32.mrf.mxu0
        %v9385 = vadd.f32 0.0, %v9384
        %9386 = vmatmul.f32.gmra.mxu0 %v9323
        %v9387 = vpop.f32.mrf.mxu0
        %v9388 = vadd.f32 0.0, %v9387
        %9389 = vmatmul.f32.gmra.mxu0 %v9326
        %v9390 = vpop.f32.mrf.mxu0
        %v9391 = vadd.f32 0.0, %v9390
        %9392 = vmatmul.f32.gmra.mxu0 %v9329
        %v9393 = vpop.f32.mrf.mxu0
        %v9394 = vadd.f32 0.0, %v9393
        %9395 = vmatmul.f32.gmra.mxu0 %v9332
        %v9396 = vpop.f32.mrf.mxu0
        %v9397 = vadd.f32 0.0, %v9396
        %9398 = vmatmul.f32.gmra.mxu0 %v9335
        %v9399 = vpop.f32.mrf.mxu0
        %v9400 = vadd.f32 0.0, %v9399
        %9401 = vmatmul.f32.gmra.mxu0 %v9338
        %v9402 = vpop.f32.mrf.mxu0
        %v9403 = vadd.f32 0.0, %v9402
        %9404 = vmatmul.f32.gmra.mxu0 %v9341
        %v9405 = vpop.f32.mrf.mxu0
        %v9406 = vadd.f32 0.0, %v9405
        %9407 = vmatmul.f32.gmra.mxu0 %v9344
        %v9408 = vpop.f32.mrf.mxu0
        %v9409 = vadd.f32 0.0, %v9408
        %9410 = vmatmul.f32.gmra.mxu0 %v9347
        %v9411 = vpop.f32.mrf.mxu0
        %v9412 = vadd.f32 0.0, %v9411
        %9413 = vmatmul.f32.gmra.mxu0 %v9350
        %v9414 = vpop.f32.mrf.mxu0
        %v9415 = vadd.f32 0.0, %v9414
        %9416 = vmatmul.f32.gmra.mxu0 %v9353
        %v9417 = vpop.f32.mrf.mxu0
        %v9418 = vadd.f32 0.0, %v9417
        %9419 = vmatmul.f32.gmra.mxu0 %v9356
        %v9420 = vpop.f32.mrf.mxu0
        %v9421 = vadd.f32 0.0, %v9420
        %9422 = vmatmul.f32.gmra.mxu0 %v9359
        %v9423 = vpop.f32.mrf.mxu0
        %v9424 = vadd.f32 0.0, %v9423
        %9425 = vdwg.mxu0
        %9426 = vmatpush.msra.mxu0 0.0
        %9427 = vmatpush.msra.mxu0 0.0
        %9428 = vmatpush.msra.mxu0 0.0
        %9429 = vmatpush.msra.mxu0 0.0
        %9430 = vmatpush.msra.mxu0 %v9311
        %9431 = vmatpush.msra.mxu0 %v9309
        %9432 = vmatpush.msra.mxu0 %v9307
        %9433 = vmatpush.msra.mxu0 %v9305
        %9434 = vmatpush.msra.mxu0 %v9303
        %9435 = vmatpush.msra.mxu0 %v9301
        %9436 = vmatpush.msra.mxu0 %v9299
        %9437 = vmatpush.msra.mxu0 %v9297
        %9438 = vmatpush.msra.mxu0 %v9295
        %9439 = vmatpush.msra.mxu0 %v9293
        %9440 = vmatpush.msra.mxu0 %v9291
        %9441 = vmatpush.msra.mxu0 %v9289
        %9442 = vmatmul.f32.gmra.mxu0 %v9314
        %v9443 = vpop.f32.mrf.mxu0
        %v9444 = vadd.f32 0.0, %v9443
        %9445 = vmatmul.f32.gmra.mxu0 %v9317
        %v9446 = vpop.f32.mrf.mxu0
        %v9447 = vadd.f32 0.0, %v9446
        %9448 = vmatmul.f32.gmra.mxu0 %v9320
        %v9449 = vpop.f32.mrf.mxu0
        %v9450 = vadd.f32 0.0, %v9449
        %9451 = vmatmul.f32.gmra.mxu0 %v9323
        %v9452 = vpop.f32.mrf.mxu0
        %v9453 = vadd.f32 0.0, %v9452
        %9454 = vmatmul.f32.gmra.mxu0 %v9326
        %v9455 = vpop.f32.mrf.mxu0
        %v9456 = vadd.f32 0.0, %v9455
        %9457 = vmatmul.f32.gmra.mxu0 %v9329
        %v9458 = vpop.f32.mrf.mxu0
        %v9459 = vadd.f32 0.0, %v9458
        %9460 = vmatmul.f32.gmra.mxu0 %v9332
        %v9461 = vpop.f32.mrf.mxu0
        %v9462 = vadd.f32 0.0, %v9461
        %9463 = vmatmul.f32.gmra.mxu0 %v9335
        %v9464 = vpop.f32.mrf.mxu0
        %v9465 = vadd.f32 0.0, %v9464
        %9466 = vmatmul.f32.gmra.mxu0 %v9338
        %v9467 = vpop.f32.mrf.mxu0
        %v9468 = vadd.f32 0.0, %v9467
        %9469 = vmatmul.f32.gmra.mxu0 %v9341
        %v9470 = vpop.f32.mrf.mxu0
        %v9471 = vadd.f32 0.0, %v9470
        %9472 = vmatmul.f32.gmra.mxu0 %v9344
        %v9473 = vpop.f32.mrf.mxu0
        %v9474 = vadd.f32 0.0, %v9473
        %9475 = vmatmul.f32.gmra.mxu0 %v9347
        %v9476 = vpop.f32.mrf.mxu0
        %v9477 = vadd.f32 0.0, %v9476
        %9478 = vmatmul.f32.gmra.mxu0 %v9350
        %v9479 = vpop.f32.mrf.mxu0
        %v9480 = vadd.f32 0.0, %v9479
        %9481 = vmatmul.f32.gmra.mxu0 %v9353
        %v9482 = vpop.f32.mrf.mxu0
        %v9483 = vadd.f32 0.0, %v9482
        %9484 = vmatmul.f32.gmra.mxu0 %v9356
        %v9485 = vpop.f32.mrf.mxu0
        %v9486 = vadd.f32 0.0, %v9485
        %9487 = vmatmul.f32.gmra.mxu0 %v9359
        %v9488 = vpop.f32.mrf.mxu0
        %v9489 = vadd.f32 0.0, %v9488
        %9490 = vdwg.mxu0
        %v9492 = vsel %vm9312, %v9232, 0
        %v9495 = vsel %vm9312, %v9233, 0
        %v9498 = vsel %vm9312, %v9234, 0
        %v9501 = vsel %vm9312, %v9235, 0
        %v9504 = vsel %vm9312, %v9236, 0
        %v9507 = vsel %vm9312, %v9237, 0
        %v9510 = vsel %vm9312, %v9238, 0
        %v9513 = vsel %vm9312, %v9239, 0
        %v9516 = vsel %vm9312, %v9240, 0
        %v9519 = vsel %vm9312, %v9241, 0
        %v9522 = vsel %vm9312, %v9242, 0
        %v9525 = vsel %vm9312, %v9243, 0
        %v9528 = vsel %vm9312, %v9244, 0
        %v9531 = vsel %vm9312, %v9245, 0
        %v9534 = vsel %vm9312, %v9246, 0
        %v9537 = vsel %vm9312, %v9247, 0
        %9539 = vmatpush.msra.mxu0 0.0
        %9540 = vmatpush.msra.mxu0 0.0
        %9541 = vmatpush.msra.mxu0 0.0
        %9542 = vmatpush.msra.mxu0 0.0
        %9543 = vmatpush.msra.mxu0 %v9286
        %9544 = vmatpush.msra.mxu0 %v9284
        %9545 = vmatpush.msra.mxu0 %v9282
        %9546 = vmatpush.msra.mxu0 %v9280
        %9547 = vmatpush.msra.mxu0 %v9278
        %9548 = vmatpush.msra.mxu0 %v9276
        %9549 = vmatpush.msra.mxu0 %v9274
        %9550 = vmatpush.msra.mxu0 %v9272
        %9551 = vmatpush.msra.mxu0 %v9270
        %9552 = vmatpush.msra.mxu0 %v9268
        %9553 = vmatpush.msra.mxu0 %v9266
        %9554 = vmatpush.msra.mxu0 %v9264
        %9555 = vmatmul.f32.gmra.mxu0 %v9492
        %v9556 = vpop.f32.mrf.mxu0
        %v9557 = vadd.f32 %v9379, %v9556
        %9558 = vmatmul.f32.gmra.mxu0 %v9495
        %v9559 = vpop.f32.mrf.mxu0
        %v9560 = vadd.f32 %v9382, %v9559
        %9561 = vmatmul.f32.gmra.mxu0 %v9498
        %v9562 = vpop.f32.mrf.mxu0
        %v9563 = vadd.f32 %v9385, %v9562
        %9564 = vmatmul.f32.gmra.mxu0 %v9501
        %v9565 = vpop.f32.mrf.mxu0
        %v9566 = vadd.f32 %v9388, %v9565
        %9567 = vmatmul.f32.gmra.mxu0 %v9504
        %v9568 = vpop.f32.mrf.mxu0
        %v9569 = vadd.f32 %v9391, %v9568
        %9570 = vmatmul.f32.gmra.mxu0 %v9507
        %v9571 = vpop.f32.mrf.mxu0
        %v9572 = vadd.f32 %v9394, %v9571
        %9573 = vmatmul.f32.gmra.mxu0 %v9510
        %v9574 = vpop.f32.mrf.mxu0
        %v9575 = vadd.f32 %v9397, %v9574
        %9576 = vmatmul.f32.gmra.mxu0 %v9513
        %v9577 = vpop.f32.mrf.mxu0
        %v9578 = vadd.f32 %v9400, %v9577
        %9579 = vmatmul.f32.gmra.mxu0 %v9516
        %v9580 = vpop.f32.mrf.mxu0
        %v9581 = vadd.f32 %v9403, %v9580
        %9582 = vmatmul.f32.gmra.mxu0 %v9519
        %v9583 = vpop.f32.mrf.mxu0
        %v9584 = vadd.f32 %v9406, %v9583
        %9585 = vmatmul.f32.gmra.mxu0 %v9522
        %v9586 = vpop.f32.mrf.mxu0
        %v9587 = vadd.f32 %v9409, %v9586
        %9588 = vmatmul.f32.gmra.mxu0 %v9525
        %v9589 = vpop.f32.mrf.mxu0
        %v9590 = vadd.f32 %v9412, %v9589
        %9591 = vmatmul.f32.gmra.mxu0 %v9528
        %v9592 = vpop.f32.mrf.mxu0
        %v9593 = vadd.f32 %v9415, %v9592
        %9594 = vmatmul.f32.gmra.mxu0 %v9531
        %v9595 = vpop.f32.mrf.mxu0
        %v9596 = vadd.f32 %v9418, %v9595
        %9597 = vmatmul.f32.gmra.mxu0 %v9534
        %v9598 = vpop.f32.mrf.mxu0
        %v9599 = vadd.f32 %v9421, %v9598
        %9600 = vmatmul.f32.gmra.mxu0 %v9537
        %v9601 = vpop.f32.mrf.mxu0
        %v9602 = vadd.f32 %v9424, %v9601
        %9603 = vdwg.mxu0
        %9604 = vmatpush.msra.mxu0 0.0
        %9605 = vmatpush.msra.mxu0 0.0
        %9606 = vmatpush.msra.mxu0 0.0
        %9607 = vmatpush.msra.mxu0 0.0
        %9608 = vmatpush.msra.mxu0 %v9287
        %9609 = vmatpush.msra.mxu0 %v9285
        %9610 = vmatpush.msra.mxu0 %v9283
        %9611 = vmatpush.msra.mxu0 %v9281
        %9612 = vmatpush.msra.mxu0 %v9279
        %9613 = vmatpush.msra.mxu0 %v9277
        %9614 = vmatpush.msra.mxu0 %v9275
        %9615 = vmatpush.msra.mxu0 %v9273
        %9616 = vmatpush.msra.mxu0 %v9271
        %9617 = vmatpush.msra.mxu0 %v9269
        %9618 = vmatpush.msra.mxu0 %v9267
        %9619 = vmatpush.msra.mxu0 %v9265
        %9620 = vmatmul.f32.gmra.mxu0 %v9492
        %v9621 = vpop.f32.mrf.mxu0
        %v9622 = vadd.f32 %v9444, %v9621
        %9623 = vmatmul.f32.gmra.mxu0 %v9495
        %v9624 = vpop.f32.mrf.mxu0
        %v9625 = vadd.f32 %v9447, %v9624
        %9626 = vmatmul.f32.gmra.mxu0 %v9498
        %v9627 = vpop.f32.mrf.mxu0
        %v9628 = vadd.f32 %v9450, %v9627
        %9629 = vmatmul.f32.gmra.mxu0 %v9501
        %v9630 = vpop.f32.mrf.mxu0
        %v9631 = vadd.f32 %v9453, %v9630
        %9632 = vmatmul.f32.gmra.mxu0 %v9504
        %v9633 = vpop.f32.mrf.mxu0
        %v9634 = vadd.f32 %v9456, %v9633
        %9635 = vmatmul.f32.gmra.mxu0 %v9507
        %v9636 = vpop.f32.mrf.mxu0
        %v9637 = vadd.f32 %v9459, %v9636
        %9638 = vmatmul.f32.gmra.mxu0 %v9510
        %v9639 = vpop.f32.mrf.mxu0
        %v9640 = vadd.f32 %v9462, %v9639
        %9641 = vmatmul.f32.gmra.mxu0 %v9513
        %v9642 = vpop.f32.mrf.mxu0
        %v9643 = vadd.f32 %v9465, %v9642
        %9644 = vmatmul.f32.gmra.mxu0 %v9516
        %v9645 = vpop.f32.mrf.mxu0
        %v9646 = vadd.f32 %v9468, %v9645
        %9647 = vmatmul.f32.gmra.mxu0 %v9519
        %v9648 = vpop.f32.mrf.mxu0
        %v9649 = vadd.f32 %v9471, %v9648
        %9650 = vmatmul.f32.gmra.mxu0 %v9522
        %v9651 = vpop.f32.mrf.mxu0
        %v9652 = vadd.f32 %v9474, %v9651
        %9653 = vmatmul.f32.gmra.mxu0 %v9525
        %v9654 = vpop.f32.mrf.mxu0
        %v9655 = vadd.f32 %v9477, %v9654
        %9656 = vmatmul.f32.gmra.mxu0 %v9528
        %v9657 = vpop.f32.mrf.mxu0
        %v9658 = vadd.f32 %v9480, %v9657
        %9659 = vmatmul.f32.gmra.mxu0 %v9531
        %v9660 = vpop.f32.mrf.mxu0
        %v9661 = vadd.f32 %v9483, %v9660
        %9662 = vmatmul.f32.gmra.mxu0 %v9534
        %v9663 = vpop.f32.mrf.mxu0
        %v9664 = vadd.f32 %v9486, %v9663
        %9665 = vmatmul.f32.gmra.mxu0 %v9537
        %v9666 = vpop.f32.mrf.mxu0
        %v9667 = vadd.f32 %v9489, %v9666
        %9668 = vdwg.mxu0
        %v9669 = vld [vmem:[%s8] sm:$0x3]
        %v9671 = vperm.slane %v9669, 0
        %v9672 = vperm.slane %v9669, 1
        %v9675 = vadd.f32 %v9557, %v9671
        %v9676 = vadd.f32 %v9622, %v9672
        %v9677 = vadd.f32 %v9560, %v9671
        %v9678 = vadd.f32 %v9625, %v9672
        %v9679 = vadd.f32 %v9563, %v9671
        %v9680 = vadd.f32 %v9628, %v9672
        %v9681 = vadd.f32 %v9566, %v9671
        %v9682 = vadd.f32 %v9631, %v9672
        %v9683 = vadd.f32 %v9569, %v9671
        %v9684 = vadd.f32 %v9634, %v9672
        %v9685 = vadd.f32 %v9572, %v9671
        %v9686 = vadd.f32 %v9637, %v9672
        %v9687 = vadd.f32 %v9575, %v9671
        %v9688 = vadd.f32 %v9640, %v9672
        %v9689 = vadd.f32 %v9578, %v9671
        %v9690 = vadd.f32 %v9643, %v9672
        %v9691 = vadd.f32 %v9581, %v9671
        %v9692 = vadd.f32 %v9646, %v9672
        %v9693 = vadd.f32 %v9584, %v9671
        %v9694 = vadd.f32 %v9649, %v9672
        %v9695 = vadd.f32 %v9587, %v9671
        %v9696 = vadd.f32 %v9652, %v9672
        %v9697 = vadd.f32 %v9590, %v9671
        %v9698 = vadd.f32 %v9655, %v9672
        %v9699 = vadd.f32 %v9593, %v9671
        %v9700 = vadd.f32 %v9658, %v9672
        %v9701 = vadd.f32 %v9596, %v9671
        %v9702 = vadd.f32 %v9661, %v9672
        %v9703 = vadd.f32 %v9599, %v9671
        %v9704 = vadd.f32 %v9664, %v9672
        %v9705 = vadd.f32 %v9602, %v9671
        %v9706 = vadd.f32 %v9667, %v9672
        %v9707 = vmax.f32 %v9675, 0.0
        %v9708 = vmax.f32 %v9676, 0.0
        %v9709 = vmax.f32 %v9677, 0.0
        %v9710 = vmax.f32 %v9678, 0.0
        %v9711 = vmax.f32 %v9679, 0.0
        %v9712 = vmax.f32 %v9680, 0.0
        %v9713 = vmax.f32 %v9681, 0.0
        %v9714 = vmax.f32 %v9682, 0.0
        %v9715 = vmax.f32 %v9683, 0.0
        %v9716 = vmax.f32 %v9684, 0.0
        %v9717 = vmax.f32 %v9685, 0.0
        %v9718 = vmax.f32 %v9686, 0.0
        %v9719 = vmax.f32 %v9687, 0.0
        %v9720 = vmax.f32 %v9688, 0.0
        %v9721 = vmax.f32 %v9689, 0.0
        %v9722 = vmax.f32 %v9690, 0.0
        %v9723 = vmax.f32 %v9691, 0.0
        %v9724 = vmax.f32 %v9692, 0.0
        %v9725 = vmax.f32 %v9693, 0.0
        %v9726 = vmax.f32 %v9694, 0.0
        %v9727 = vmax.f32 %v9695, 0.0
        %v9728 = vmax.f32 %v9696, 0.0
        %v9729 = vmax.f32 %v9697, 0.0
        %v9730 = vmax.f32 %v9698, 0.0
        %v9731 = vmax.f32 %v9699, 0.0
        %v9732 = vmax.f32 %v9700, 0.0
        %v9733 = vmax.f32 %v9701, 0.0
        %v9734 = vmax.f32 %v9702, 0.0
        %v9735 = vmax.f32 %v9703, 0.0
        %v9736 = vmax.f32 %v9704, 0.0
        %v9737 = vmax.f32 %v9705, 0.0
        %v9738 = vmax.f32 %v9706, 0.0
        %v9739 = vld [vmem:[%s9] sm:$0xff]
        %v9740 = vld [vmem:[%s9 + $0x8] sm:$0xff]
        %v9741 = vld [vmem:[%s9 + $0x10] sm:$0xff]
        %v9742 = vld [vmem:[%s9 + $0x18] sm:$0xff]
        %v9743 = vld [vmem:[%s9 + $0x20] sm:$0xff]
        %v9744 = vld [vmem:[%s9 + $0x28] sm:$0xff]
        %v9745 = vld [vmem:[%s9 + $0x30] sm:$0xff]
        %v9746 = vld [vmem:[%s9 + $0x38] sm:$0xff]
        %v9747 = vld [vmem:[%s9 + $0x40] sm:$0xff]
        %v9748 = vld [vmem:[%s9 + $0x48] sm:$0xff]
        %v9749 = vld [vmem:[%s9 + $0x50] sm:$0xff]
        %v9750 = vld [vmem:[%s9 + $0x58] sm:$0xff]
        %v9751 = vld [vmem:[%s9 + $0x60] sm:$0xff]
        %v9752 = vld [vmem:[%s9 + $0x68] sm:$0xff]
        %v9753 = vld [vmem:[%s9 + $0x70] sm:$0xff]
        %v9754 = vld [vmem:[%s9 + $0x78] sm:$0xff]
        %v9755 = vld [vmem:[%s9 + $0x80] sm:$0xff]
        %v9756 = vld [vmem:[%s9 + $0x88] sm:$0xff]
        %v9757 = vld [vmem:[%s9 + $0x90] sm:$0xff]
        %v9758 = vld [vmem:[%s9 + $0x98] sm:$0xff]
        %v9759 = vld [vmem:[%s9 + $0xa0] sm:$0xff]
        %v9760 = vld [vmem:[%s9 + $0xa8] sm:$0xff]
        %v9761 = vld [vmem:[%s9 + $0xb0] sm:$0xff]
        %v9762 = vld [vmem:[%s9 + $0xb8] sm:$0xff]
        %v9763 = vld [vmem:[%s10] sm:$0x1]
        %v9765 = vperm.slane %v9763, 0
        %vm9767 = vcmask 523264
        %v9769 = vsel %vm9767, %v9708, 0
        %v9772 = vsel %vm9767, %v9710, 0
        %v9775 = vsel %vm9767, %v9712, 0
        %v9778 = vsel %vm9767, %v9714, 0
        %v9781 = vsel %vm9767, %v9716, 0
        %v9784 = vsel %vm9767, %v9718, 0
        %v9787 = vsel %vm9767, %v9720, 0
        %v9790 = vsel %vm9767, %v9722, 0
        %v9793 = vsel %vm9767, %v9724, 0
        %v9796 = vsel %vm9767, %v9726, 0
        %v9799 = vsel %vm9767, %v9728, 0
        %v9802 = vsel %vm9767, %v9730, 0
        %v9805 = vsel %vm9767, %v9732, 0
        %v9808 = vsel %vm9767, %v9734, 0
        %v9811 = vsel %vm9767, %v9736, 0
        %v9814 = vsel %vm9767, %v9738, 0
        %9816 = vmatpush.msra.mxu0 %v9754
        %9817 = vmatpush.msra.mxu0 %v9753
        %9818 = vmatpush.msra.mxu0 %v9752
        %9819 = vmatpush.msra.mxu0 %v9751
        %9820 = vmatpush.msra.mxu0 %v9750
        %9821 = vmatpush.msra.mxu0 %v9749
        %9822 = vmatpush.msra.mxu0 %v9748
        %9823 = vmatpush.msra.mxu0 %v9747
        %9824 = vmatpush.msra.mxu0 %v9746
        %9825 = vmatpush.msra.mxu0 %v9745
        %9826 = vmatpush.msra.mxu0 %v9744
        %9827 = vmatpush.msra.mxu0 %v9743
        %9828 = vmatpush.msra.mxu0 %v9742
        %9829 = vmatpush.msra.mxu0 %v9741
        %9830 = vmatpush.msra.mxu0 %v9740
        %9831 = vmatpush.msra.mxu0 %v9739
        %9832 = vmatmul.f32.gmra.mxu0 %v9707
        %v9833 = vpop.f32.mrf.mxu0
        %v9834 = vadd.f32 %v9765, %v9833
        %9835 = vmatmul.f32.gmra.mxu0 %v9709
        %v9836 = vpop.f32.mrf.mxu0
        %v9837 = vadd.f32 %v9765, %v9836
        %9838 = vmatmul.f32.gmra.mxu0 %v9711
        %v9839 = vpop.f32.mrf.mxu0
        %v9840 = vadd.f32 %v9765, %v9839
        %9841 = vmatmul.f32.gmra.mxu0 %v9713
        %v9842 = vpop.f32.mrf.mxu0
        %v9843 = vadd.f32 %v9765, %v9842
        %9844 = vmatmul.f32.gmra.mxu0 %v9715
        %v9845 = vpop.f32.mrf.mxu0
        %v9846 = vadd.f32 %v9765, %v9845
        %9847 = vmatmul.f32.gmra.mxu0 %v9717
        %v9848 = vpop.f32.mrf.mxu0
        %v9849 = vadd.f32 %v9765, %v9848
        %9850 = vmatmul.f32.gmra.mxu0 %v9719
        %v9851 = vpop.f32.mrf.mxu0
        %v9852 = vadd.f32 %v9765, %v9851
        %9853 = vmatmul.f32.gmra.mxu0 %v9721
        %v9854 = vpop.f32.mrf.mxu0
        %v9855 = vadd.f32 %v9765, %v9854
        %9856 = vmatmul.f32.gmra.mxu0 %v9723
        %v9857 = vpop.f32.mrf.mxu0
        %v9858 = vadd.f32 %v9765, %v9857
        %9859 = vmatmul.f32.gmra.mxu0 %v9725
        %v9860 = vpop.f32.mrf.mxu0
        %v9861 = vadd.f32 %v9765, %v9860
        %9862 = vmatmul.f32.gmra.mxu0 %v9727
        %v9863 = vpop.f32.mrf.mxu0
        %v9864 = vadd.f32 %v9765, %v9863
        %9865 = vmatmul.f32.gmra.mxu0 %v9729
        %v9866 = vpop.f32.mrf.mxu0
        %v9867 = vadd.f32 %v9765, %v9866
        %9868 = vmatmul.f32.gmra.mxu0 %v9731
        %v9869 = vpop.f32.mrf.mxu0
        %v9870 = vadd.f32 %v9765, %v9869
        %9871 = vmatmul.f32.gmra.mxu0 %v9733
        %v9872 = vpop.f32.mrf.mxu0
        %v9873 = vadd.f32 %v9765, %v9872
        %9874 = vmatmul.f32.gmra.mxu0 %v9735
        %v9875 = vpop.f32.mrf.mxu0
        %v9876 = vadd.f32 %v9765, %v9875
        %9877 = vmatmul.f32.gmra.mxu0 %v9737
        %v9878 = vpop.f32.mrf.mxu0
        %v9879 = vadd.f32 %v9765, %v9878
        %9880 = vdwg.mxu0
        %9881 = vmatpush.msra.mxu0 0.0
        %9882 = vmatpush.msra.mxu0 0.0
        %9883 = vmatpush.msra.mxu0 0.0
        %9884 = vmatpush.msra.mxu0 0.0
        %9885 = vmatpush.msra.mxu0 0.0
        %9886 = vmatpush.msra.mxu0 0.0
        %9887 = vmatpush.msra.mxu0 0.0
        %9888 = vmatpush.msra.mxu0 0.0
        %9889 = vmatpush.msra.mxu0 %v9762
        %9890 = vmatpush.msra.mxu0 %v9761
        %9891 = vmatpush.msra.mxu0 %v9760
        %9892 = vmatpush.msra.mxu0 %v9759
        %9893 = vmatpush.msra.mxu0 %v9758
        %9894 = vmatpush.msra.mxu0 %v9757
        %9895 = vmatpush.msra.mxu0 %v9756
        %9896 = vmatpush.msra.mxu0 %v9755
        %9897 = vmatmul.f32.gmra.mxu0 %v9769
        %v9898 = vpop.f32.mrf.mxu0
        %v9899 = vadd.f32 %v9834, %v9898
        %9900 = vmatmul.f32.gmra.mxu0 %v9772
        %v9901 = vpop.f32.mrf.mxu0
        %v9902 = vadd.f32 %v9837, %v9901
        %9903 = vmatmul.f32.gmra.mxu0 %v9775
        %v9904 = vpop.f32.mrf.mxu0
        %v9905 = vadd.f32 %v9840, %v9904
        %9906 = vmatmul.f32.gmra.mxu0 %v9778
        %v9907 = vpop.f32.mrf.mxu0
        %v9908 = vadd.f32 %v9843, %v9907
        %9909 = vmatmul.f32.gmra.mxu0 %v9781
        %v9910 = vpop.f32.mrf.mxu0
        %v9911 = vadd.f32 %v9846, %v9910
        %9912 = vmatmul.f32.gmra.mxu0 %v9784
        %v9913 = vpop.f32.mrf.mxu0
        %v9914 = vadd.f32 %v9849, %v9913
        %9915 = vmatmul.f32.gmra.mxu0 %v9787
        %v9916 = vpop.f32.mrf.mxu0
        %v9917 = vadd.f32 %v9852, %v9916
        %9918 = vmatmul.f32.gmra.mxu0 %v9790
        %v9919 = vpop.f32.mrf.mxu0
        %v9920 = vadd.f32 %v9855, %v9919
        %9921 = vmatmul.f32.gmra.mxu0 %v9793
        %v9922 = vpop.f32.mrf.mxu0
        %v9923 = vadd.f32 %v9858, %v9922
        %9924 = vmatmul.f32.gmra.mxu0 %v9796
        %v9925 = vpop.f32.mrf.mxu0
        %v9926 = vadd.f32 %v9861, %v9925
        %9927 = vmatmul.f32.gmra.mxu0 %v9799
        %v9928 = vpop.f32.mrf.mxu0
        %v9929 = vadd.f32 %v9864, %v9928
        %9930 = vmatmul.f32.gmra.mxu0 %v9802
        %v9931 = vpop.f32.mrf.mxu0
        %v9932 = vadd.f32 %v9867, %v9931
        %9933 = vmatmul.f32.gmra.mxu0 %v9805
        %v9934 = vpop.f32.mrf.mxu0
        %v9935 = vadd.f32 %v9870, %v9934
        %9936 = vmatmul.f32.gmra.mxu0 %v9808
        %v9937 = vpop.f32.mrf.mxu0
        %v9938 = vadd.f32 %v9873, %v9937
        %9939 = vmatmul.f32.gmra.mxu0 %v9811
        %v9940 = vpop.f32.mrf.mxu0
        %v9941 = vadd.f32 %v9876, %v9940
        %9942 = vmatmul.f32.gmra.mxu0 %v9814
        %v9943 = vpop.f32.mrf.mxu0
        %v9944 = vadd.f32 %v9879, %v9943
        %9945 = vdwg.mxu0
        %9946 = vst [vmem:[%s380] sm:$0xff] %v9899
        %9947 = vst [vmem:[%s380 + $0x8] sm:$0xff] %v9902
        %9948 = vst [vmem:[%s380 + $0x10] sm:$0xff] %v9905
        %9949 = vst [vmem:[%s380 + $0x18] sm:$0xff] %v9908
        %9950 = vst [vmem:[%s380 + $0x20] sm:$0xff] %v9911
        %9951 = vst [vmem:[%s380 + $0x28] sm:$0xff] %v9914
        %9952 = vst [vmem:[%s380 + $0x30] sm:$0xff] %v9917
        %9953 = vst [vmem:[%s380 + $0x38] sm:$0xff] %v9920
        %9954 = vst [vmem:[%s380 + $0x40] sm:$0xff] %v9923
        %9955 = vst [vmem:[%s380 + $0x48] sm:$0xff] %v9926
        %9956 = vst [vmem:[%s380 + $0x50] sm:$0xff] %v9929
        %9957 = vst [vmem:[%s380 + $0x58] sm:$0xff] %v9932
        %9958 = vst [vmem:[%s380 + $0x60] sm:$0xff] %v9935
        %9959 = vst [vmem:[%s380 + $0x68] sm:$0xff] %v9938
        %9960 = vst [vmem:[%s380 + $0x70] sm:$0xff] %v9941
        %9961 = vst [vmem:[%s380 + $0x78] sm:$0xff] %v9944
        %s9962 = sand.u32 %s269, 1
        %s9963 = scalar_lea.sflag [#allocation3], %s9962
        %s9964 = sand.u32 %s269, 1
        %s9965 = smul.addr %s9964, 128
        %s9966 = scalar_lea.vmem [#allocation2], %s9965
        // Predicated region
        $region65: #{tpu_custom_call.1} parent=63 // pred_check
          %p9967 = pneg %p279
        $region66: #{tpu_custom_call.1} parent=63 // pred_check_branch
          %9969 = sbr.rel (%p9967) target = $region68
        $region67: #{tpu_custom_call.1} parent=63 // pred_region
          %s9970 = smul.u32 16, %s25
          %9972 = vsyncadd %s9963, 0
          %s9973 = smul.addr %s9970, 8
          %s9974 = scalar_lea.hbm %s11, %s9973
          %s9975 = sshll.u32 %s9966, 4
          %s9976 = int_to_ptr.vmem [resolvable:$true] %s9975
          %s9977 = sshll.u32 %s9974, 4
          %s9978 = int_to_ptr.hbm [resolvable:$true] %s9977
          %9983 = dma.vmem_to_hbm [thread:$0]  %s9976, 2048, %s9978, %s9963, 128, 128, 8
        $region68: #{tpu_custom_call.1} parent=63 // pred_fallthru
          _
      $region64: #{tpu_custom_call.1} parent=5 // pred_fallthru
        _
      %p9984 = scmp.le.s32.totalorder 2, %s20
      // Predicated region
      $region69: #{tpu_custom_call.1} parent=5 // pred_check
        %p9985 = pneg %p9984
      $region70: #{tpu_custom_call.1} parent=5 // pred_check_branch
        %9987 = sbr.rel (%p9985) target = $region72
      $region71: #{tpu_custom_call.1} parent=5 // pred_region
        %s9988 = ssub.s32 %s20, 2
        // Predicated region
        $region73: #{tpu_custom_call.1} parent=71 // pred_check
          %p9989 = pneg %p285
        $region74: #{tpu_custom_call.1} parent=71 // pred_check_branch
          %9991 = sbr.rel (%p9989) target = $region76
        $region75: #{tpu_custom_call.1} parent=71 // pred_region
          %s9992 = sand.u32 %s270, 1
          %s9993 = scalar_lea.sflag [#allocation3], %s9992
          %s9994 = sand.u32 %s270, 1
          %s9995 = smul.addr %s9994, 128
          %s9996 = scalar_lea.vmem [#allocation2], %s9995
          %9998 = dma.done %s9993, 2048
        $region76: #{tpu_custom_call.1} parent=71 // pred_fallthru
          _
      $region72: #{tpu_custom_call.1} parent=5 // pred_fallthru
        _
    $region6: #{tpu_custom_call.1} parent=1 // loop_footer
      %s24 = sadd.s32 1, %s20
    $region7: #{tpu_custom_call.1} parent=1 // loop_footer_branch
      %19 = sbr.rel target = $region3
    $region8: #{tpu_custom_call.1} parent=1 // loop_exit
      _
    %9999 = vsyncpa [#allocation3], 1
    %s10000 = scalar_lea.sflag [#allocation3], 1
    %10001 = vsyncpa %s10000, 1

</llo_original>
